<compile_context>
chip_gen: v6e
topology: v6e:2x2x1
jax: 0.10.0
libtpu: 0.0.40
codegen_flags: <defaults>
</compile_context>

<pallas_src>
import jax
import jax.numpy as jnp
import numpy as np
from jax.experimental import pallas as pl
from jax.experimental.pallas import tpu as pltpu

_NEG_BIG = -1e30  # finite "-inf" for the self-position mask; exp underflows to 0


def _cca_kernel(x_ref, wqkv_ref, bqkv_ref, gamma_ref, o_ref):
    H, W, C = x_ref.shape
    ctot = wqkv_ref.shape[1]
    C8 = (ctot - C) // 2

    x = x_ref[...]                                      # (H, W, C) f32
    xf = x.reshape(H * W, C).astype(jnp.bfloat16)

    # Fused 1x1-conv projections: one wide MXU matmul, f32 accumulation.
    qkv = jnp.dot(xf, wqkv_ref[...],
                  preferred_element_type=jnp.float32) + bqkv_ref[...]
    v = qkv[:, :C].reshape(H, W, C)                     # (H, W, C)
    q = qkv[:, C:C + C8].reshape(H, W, C8)              # (H, W, C//8)
    k = qkv[:, C + C8:].reshape(H, W, C8)               # (H, W, C//8)

    q16 = q.astype(jnp.bfloat16)
    k16 = k.astype(jnp.bfloat16)
    v16 = v.astype(jnp.bfloat16)

    # ----- H (column) branch in W-major layout: batch dim = w -----
    q_w = jnp.transpose(q16, (1, 0, 2))                 # (W, H, C8)
    k_w = jnp.transpose(k16, (1, 0, 2))                 # (W, H, C8)
    v_w = jnp.transpose(v16, (1, 0, 2))                 # (W, H, C)
    e_h = jnp.einsum('whc,wgc->whg', q_w, k_w,
                     preferred_element_type=jnp.float32)          # (W, H, H)
    diag = (jax.lax.broadcasted_iota(jnp.int32, (1, H, H), 1)
            == jax.lax.broadcasted_iota(jnp.int32, (1, H, H), 2))
    e_h = jnp.where(diag, _NEG_BIG, e_h)                # exclude self position

    # ----- W (row) branch in natural H-major layout: batch dim = h -----
    e_w = jnp.einsum('hwc,hgc->hwg', q16, k16,
                     preferred_element_type=jnp.float32)          # (H, W, W)

    # ----- joint softmax over the H + W candidates, no concat / lane slices ---
    m = jnp.maximum(jnp.max(e_h, axis=-1).T, jnp.max(e_w, axis=-1))   # (H, W)
    p_h = jnp.exp(e_h - m.T[:, :, None])                # (W, H, H)
    p_w = jnp.exp(e_w - m[:, :, None])                  # (H, W, W)
    denom = jnp.sum(p_h, axis=-1).T + jnp.sum(p_w, axis=-1)           # (H, W)

    out_h = jnp.einsum('whg,wgc->whc', p_h.astype(jnp.bfloat16), v_w,
                       preferred_element_type=jnp.float32)        # (W, H, C)
    out_w = jnp.einsum('hwg,hgc->hwc', p_w.astype(jnp.bfloat16), v16,
                       preferred_element_type=jnp.float32)        # (H, W, C)
    out = jnp.transpose(out_h, (1, 0, 2)) + out_w       # (H, W, C)

    inv = pl.reciprocal(denom, approx=True)             # EUP slot, ~free
    gamma = gamma_ref[0]
    o_ref[...] = (gamma * (out * inv[:, :, None]) + x).astype(o_ref.dtype)


def criss_cross_attention(x_nchw, wq, bq, wk, bk, wv, bv, gamma):
    """x_nchw: (B, C, H, W) f32.  wq/wk: (C, C//8); wv: (C, C); b*: (Cout,)."""
    B, C, H, W = x_nchw.shape
    C8 = wq.shape[1]
    ctot = C + 2 * C8

    # TODO(synk): accept/produce NHWC upstream to drop these boundary transposes.
    x = jnp.transpose(x_nchw, (0, 2, 3, 1))             # (B, H, W, C)

    # Fused [v | q | k] projection (v first keeps the widest slice lane-aligned).
    wqkv = jnp.concatenate([wv, wq, wk], axis=1).astype(jnp.bfloat16)   # (C, ctot)
    bqkv = jnp.concatenate([bv, bq, bk]).reshape(1, ctot).astype(jnp.float32)
    g = jnp.asarray(gamma, jnp.float32).reshape(1)

    out_nhwc = pl.pallas_call(
        _cca_kernel,
        out_shape=jax.ShapeDtypeStruct((B, H, W, C), x.dtype),
        grid_spec=pltpu.PrefetchScalarGridSpec(
            num_scalar_prefetch=0,
            grid=(B,),
            in_specs=[
                pl.BlockSpec((None, H, W, C), lambda b: (b, 0, 0, 0)),   # x
                pl.BlockSpec((C, ctot), lambda b: (0, 0)),               # wqkv
                pl.BlockSpec((1, ctot), lambda b: (0, 0)),               # bqkv
                pl.BlockSpec(memory_space=pltpu.MemorySpace.SMEM),       # gamma
            ],
            out_specs=pl.BlockSpec((None, H, W, C), lambda b: (b, 0, 0, 0)),
        ),
        # TODO(synk): for production CCNet shapes on v7x (64 MiB VMEM), add a
        # query W-tile grid axis (k/v stay whole-image) instead of one-image blocks.
        compiler_params=pltpu.CompilerParams(
            dimension_semantics=("parallel",),
            vmem_limit_bytes=32 * 1024 * 1024),
    )(x, wqkv, bqkv, g)
    return jnp.transpose(out_nhwc, (0, 3, 1, 2))        # back to NCHW


def _reference(x_nchw, wq, bq, wk, bk, wv, bv, gamma):
    """Pure-JAX (f32) mirror of the PyTorch forward, for validation."""
    B, C, H, W = x_nchw.shape
    x = jnp.transpose(x_nchw, (0, 2, 3, 1))
    q = jnp.einsum('bhwc,cd->bhwd', x, wq) + bq
    k = jnp.einsum('bhwc,cd->bhwd', x, wk) + bk
    v = jnp.einsum('bhwc,cd->bhwd', x, wv) + bv
    e_h = jnp.einsum('bhwc,bgwc->bhwg', q, k)
    diag = jnp.eye(H, dtype=bool)[None, :, None, :]
    e_h = jnp.where(diag, -jnp.inf, e_h)
    e_w = jnp.einsum('bhwc,bhgc->bhwg', q, k)
    att = jax.nn.softmax(jnp.concatenate([e_h, e_w], axis=-1), axis=-1)
    out_h = jnp.einsum('bgwc,bhwg->bhwc', v, att[..., :H])
    out_w = jnp.einsum('bhgc,bhwg->bhwc', v, att[..., H:])
    out = gamma * (out_h + out_w) + x
    return jnp.transpose(out, (0, 3, 1, 2))


if __name__ == "__main__":
    # in_dim must be >= 8 for the //8 query/key projection to be non-empty.
    B, C, H, W = 2, 64, 16, 16
    C8 = C // 8

    key = jax.random.PRNGKey(0)
    kx, kq, kk, kv, kbq, kbk, kbv = jax.random.split(key, 7)

    x = jax.random.normal(kx, (B, C, H, W), dtype=jnp.float32)
    # Deterministic parameter init (Conv2d 1x1 weights folded to matrices).
    wq = jax.random.normal(kq, (C, C8), dtype=jnp.float32) / np.sqrt(C)
    wk = jax.random.normal(kk, (C, C8), dtype=jnp.float32) / np.sqrt(C)
    wv = jax.random.normal(kv, (C, C), dtype=jnp.float32) / np.sqrt(C)
    bq = jax.random.normal(kbq, (C8,), dtype=jnp.float32) * 0.01
    bk = jax.random.normal(kbk, (C8,), dtype=jnp.float32) * 0.01
    bv = jax.random.normal(kbv, (C,), dtype=jnp.float32) * 0.01
    # Module __init__ sets gamma = 0 (output == x); use a nonzero value so the
    # attention path is actually exercised / validated.
    gamma = 0.1

    out = criss_cross_attention(x, wq, bq, wk, bk, wv, bv, gamma)
    out = jax.block_until_ready(out)

    ref = _reference(x, wq, bq, wk, bk, wv, bv, gamma)
    # Tolerance accounts for bf16 MXU operands (f32 accumulation) in the kernel
    # vs. the pure-f32 reference.
    np.testing.assert_allclose(np.asarray(out), np.asarray(ref),
                               rtol=2e-2, atol=2e-2)
    print("KERNEL_OK")
</pallas_src>

<mosaic_0001>
module attributes {stable_mosaic.version = 11 : i64} {
  func.func @_cca_kernel(%arg0: i32, %arg1: memref<1x16x16x64xf32, #tpu.memory_space<vmem>>, %arg2: memref<64x80xbf16, #tpu.memory_space<vmem>>, %arg3: memref<1x80xf32, #tpu.memory_space<vmem>>, %arg4: memref<1xf32, #tpu.memory_space<smem>>, %arg5: memref<1x16x16x64xf32, #tpu.memory_space<vmem>>) attributes {dimension_semantics = [#tpu.dimension_semantics<parallel>], iteration_bounds = array<i64: 2>, scalar_prefetch = 0 : i64, scratch_operands = 0 : i64, tpu.core_type = #tpu.core_type<tc>, window_params = [{transform_indices = @transform_0, window_bounds = array<i64: 1, 16, 16, 64>}, {pipeline_mode = #tpu.pipeline_mode<synchronous>, transform_indices = @transform_1, window_bounds = array<i64: 64, 80>}, {pipeline_mode = #tpu.pipeline_mode<synchronous>, transform_indices = @transform_2, window_bounds = array<i64: 1, 80>}, {transform_indices = @transform_3, window_bounds = array<i64: 1>}, {transform_indices = @transform_4, window_bounds = array<i64: 1, 16, 16, 64>}]} {
    %c0 = arith.constant 0 : index
    %c0_0 = arith.constant 0 : index
    %c0_1 = arith.constant 0 : index
    %c0_2 = arith.constant 0 : index
    %0 = vector.load %arg1[%c0, %c0_0, %c0_1, %c0_2] : memref<1x16x16x64xf32, #tpu.memory_space<vmem>>, vector<1x16x16x64xf32>
    %1 = vector.shape_cast %0 : vector<1x16x16x64xf32> to vector<16x16x64xf32>
    %2 = vector.shape_cast %1 : vector<16x16x64xf32> to vector<256x64xf32>
    %3 = arith.truncf %2 : vector<256x64xf32> to vector<256x64xbf16>
    %c0_3 = arith.constant 0 : index
    %c0_4 = arith.constant 0 : index
    %4 = vector.load %arg2[%c0_3, %c0_4] : memref<64x80xbf16, #tpu.memory_space<vmem>>, vector<64x80xbf16>
    %cst = arith.constant dense<0.000000e+00> : vector<256x80xf32>
    %5 = tpu.matmul %3, %4, %cst {dimension_numbers = #tpu.dot_dimension_numbers<[1], [0], [0], [1], [0, 0, 1, 1], [], []>} : vector<256x64xbf16>, vector<64x80xbf16>, vector<256x80xf32> -> vector<256x80xf32>
    %c0_5 = arith.constant 0 : index
    %c0_6 = arith.constant 0 : index
    %6 = vector.load %arg3[%c0_5, %c0_6] : memref<1x80xf32, #tpu.memory_space<vmem>>, vector<1x80xf32>
    %7 = vector.broadcast %6 : vector<1x80xf32> to vector<256x80xf32>
    %8 = arith.addf %5, %7 : vector<256x80xf32>
    %9 = vector.extract_strided_slice %8 {offsets = [0, 0], sizes = [256, 64], strides = [1, 1]} : vector<256x80xf32> to vector<256x64xf32>
    %10 = vector.shape_cast %9 : vector<256x64xf32> to vector<16x16x64xf32>
    %11 = vector.extract_strided_slice %8 {offsets = [0, 64], sizes = [256, 8], strides = [1, 1]} : vector<256x80xf32> to vector<256x8xf32>
    %12 = vector.shape_cast %11 : vector<256x8xf32> to vector<16x16x8xf32>
    %13 = vector.extract_strided_slice %8 {offsets = [0, 72], sizes = [256, 8], strides = [1, 1]} : vector<256x80xf32> to vector<256x8xf32>
    %14 = vector.shape_cast %13 : vector<256x8xf32> to vector<16x16x8xf32>
    %15 = arith.truncf %12 : vector<16x16x8xf32> to vector<16x16x8xbf16>
    %16 = arith.truncf %14 : vector<16x16x8xf32> to vector<16x16x8xbf16>
    %17 = arith.truncf %10 : vector<16x16x64xf32> to vector<16x16x64xbf16>
    %18 = tpu.transpose %15, [1, 0, 2] : vector<16x16x8xbf16> -> vector<16x16x8xbf16>
    %19 = tpu.transpose %16, [1, 0, 2] : vector<16x16x8xbf16> -> vector<16x16x8xbf16>
    %20 = tpu.transpose %17, [1, 0, 2] : vector<16x16x64xbf16> -> vector<16x16x64xbf16>
    "tpu.trace_start"() <{level = 10 : i32, message = "whc,wgc->whg"}> : () -> ()
    %cst_7 = arith.constant dense<0.000000e+00> : vector<16x16x16xf32>
    %21 = tpu.matmul %18, %19, %cst_7 {dimension_numbers = #tpu.dot_dimension_numbers<[2], [2], [1], [1], [0, 0, 0, 1, 1, 1], [0], [0]>} : vector<16x16x8xbf16>, vector<16x16x8xbf16>, vector<16x16x16xf32> -> vector<16x16x16xf32>
    "tpu.trace_stop"() : () -> ()
    %22 = tpu.iota {dimensions = array<i32: 1>} : vector<1x16x16xi32>
    %23 = tpu.iota {dimensions = array<i32: 2>} : vector<1x16x16xi32>
    %24 = arith.cmpi eq, %22, %23 : vector<1x16x16xi32>
    %cst_8 = arith.constant -1.000000e+30 : f32
    %25 = vector.shape_cast %24 : vector<1x16x16xi1> to vector<1x16x16xi1>
    %26 = vector.broadcast %25 : vector<1x16x16xi1> to vector<16x16x16xi1>
    %27 = vector.broadcast %cst_8 : f32 to vector<16x16x16xf32>
    %28 = arith.select %26, %27, %21 : vector<16x16x16xi1>, vector<16x16x16xf32>
    "tpu.trace_start"() <{level = 10 : i32, message = "hwc,hgc->hwg"}> : () -> ()
    %cst_9 = arith.constant dense<0.000000e+00> : vector<16x16x16xf32>
    %29 = tpu.matmul %15, %16, %cst_9 {dimension_numbers = #tpu.dot_dimension_numbers<[2], [2], [1], [1], [0, 0, 0, 1, 1, 1], [0], [0]>} : vector<16x16x8xbf16>, vector<16x16x8xbf16>, vector<16x16x16xf32> -> vector<16x16x16xf32>
    "tpu.trace_stop"() : () -> ()
    %cst_10 = arith.constant dense<0xFF800000> : vector<16x16xf32>
    %30 = vector.multi_reduction <maximumf>, %28, %cst_10 [2] : vector<16x16x16xf32> to vector<16x16xf32>
    %31 = tpu.transpose %30, [1, 0] : vector<16x16xf32> -> vector<16x16xf32>
    %cst_11 = arith.constant dense<0xFF800000> : vector<16x16xf32>
    %32 = vector.multi_reduction <maximumf>, %29, %cst_11 [2] : vector<16x16x16xf32> to vector<16x16xf32>
    %33 = arith.maximumf %31, %32 : vector<16x16xf32>
    %34 = tpu.transpose %33, [1, 0] : vector<16x16xf32> -> vector<16x16xf32>
    %35 = vector.shape_cast %34 : vector<16x16xf32> to vector<16x16x1xf32>
    %36 = vector.broadcast %35 : vector<16x16x1xf32> to vector<16x16x16xf32>
    %37 = arith.subf %28, %36 : vector<16x16x16xf32>
    %38 = math.exp %37 : vector<16x16x16xf32>
    %39 = vector.shape_cast %33 : vector<16x16xf32> to vector<16x16x1xf32>
    %40 = vector.broadcast %39 : vector<16x16x1xf32> to vector<16x16x16xf32>
    %41 = arith.subf %29, %40 : vector<16x16x16xf32>
    %42 = math.exp %41 : vector<16x16x16xf32>
    %cst_12 = arith.constant dense<0.000000e+00> : vector<16x16xf32>
    %43 = vector.multi_reduction <add>, %38, %cst_12 [2] : vector<16x16x16xf32> to vector<16x16xf32>
    %44 = tpu.transpose %43, [1, 0] : vector<16x16xf32> -> vector<16x16xf32>
    %cst_13 = arith.constant dense<0.000000e+00> : vector<16x16xf32>
    %45 = vector.multi_reduction <add>, %42, %cst_13 [2] : vector<16x16x16xf32> to vector<16x16xf32>
    %46 = arith.addf %44, %45 : vector<16x16xf32>
    %47 = arith.truncf %38 : vector<16x16x16xf32> to vector<16x16x16xbf16>
    "tpu.trace_start"() <{level = 10 : i32, message = "whg,wgc->whc"}> : () -> ()
    %cst_14 = arith.constant dense<0.000000e+00> : vector<16x16x64xf32>
    %48 = tpu.matmul %47, %20, %cst_14 {dimension_numbers = #tpu.dot_dimension_numbers<[2], [1], [1], [2], [0, 0, 0, 1, 1, 2], [0], [0]>} : vector<16x16x16xbf16>, vector<16x16x64xbf16>, vector<16x16x64xf32> -> vector<16x16x64xf32>
    "tpu.trace_stop"() : () -> ()
    %49 = arith.truncf %42 : vector<16x16x16xf32> to vector<16x16x16xbf16>
    "tpu.trace_start"() <{level = 10 : i32, message = "hwg,hgc->hwc"}> : () -> ()
    %cst_15 = arith.constant dense<0.000000e+00> : vector<16x16x64xf32>
    %50 = tpu.matmul %49, %17, %cst_15 {dimension_numbers = #tpu.dot_dimension_numbers<[2], [1], [1], [2], [0, 0, 0, 1, 1, 2], [0], [0]>} : vector<16x16x16xbf16>, vector<16x16x64xbf16>, vector<16x16x64xf32> -> vector<16x16x64xf32>
    "tpu.trace_stop"() : () -> ()
    %51 = tpu.transpose %48, [1, 0, 2] : vector<16x16x64xf32> -> vector<16x16x64xf32>
    %52 = arith.addf %51, %50 : vector<16x16x64xf32>
    %53 = tpu.reciprocal %46 {approx = true} : vector<16x16xf32> -> vector<16x16xf32>
    %c0_16 = arith.constant 0 : index
    %54 = memref.load %arg4[%c0_16] : memref<1xf32, #tpu.memory_space<smem>>
    %55 = vector.shape_cast %53 : vector<16x16xf32> to vector<16x16x1xf32>
    %56 = vector.broadcast %55 : vector<16x16x1xf32> to vector<16x16x64xf32>
    %57 = arith.mulf %52, %56 : vector<16x16x64xf32>
    %58 = vector.broadcast %54 : f32 to vector<16x16x64xf32>
    %59 = arith.mulf %58, %57 : vector<16x16x64xf32>
    %60 = arith.addf %59, %1 : vector<16x16x64xf32>
    %c0_17 = arith.constant 0 : index
    %c0_18 = arith.constant 0 : index
    %c0_19 = arith.constant 0 : index
    %c0_20 = arith.constant 0 : index
    %61 = vector.load %arg5[%c0_17, %c0_18, %c0_19, %c0_20] : memref<1x16x16x64xf32, #tpu.memory_space<vmem>>, vector<1x16x16x64xf32>
    %62 = vector.shape_cast %61 : vector<1x16x16x64xf32> to vector<16x16x64xf32>
    %63 = vector.shape_cast %60 : vector<16x16x64xf32> to vector<1x16x16x64xf32>
    tpu.vector_store %arg5[%c0_17, %c0_18, %c0_19, %c0_20], %63 {strides = array<i32>} : memref<1x16x16x64xf32, #tpu.memory_space<vmem>>, vector<1x16x16x64xf32>,
    return
  }
  func.func @transform_0(%arg0: i32) -> (i32, i32, i32, i32) {
    %c0_i32 = arith.constant 0 : i32
    %c0_i32_0 = arith.constant 0 : i32
    %c0_i32_1 = arith.constant 0 : i32
    %c0_i32_2 = arith.constant 0 : i32
    return %arg0, %c0_i32, %c0_i32_0, %c0_i32_1 : i32, i32, i32, i32
  }
  func.func @transform_1(%arg0: i32) -> (i32, i32) {
    %c0_i32 = arith.constant 0 : i32
    %c0_i32_0 = arith.constant 0 : i32
    %c0_i32_1 = arith.constant 0 : i32
    return %c0_i32, %c0_i32_0 : i32, i32
  }
  func.func @transform_2(%arg0: i32) -> (i32, i32) {
    %c0_i32 = arith.constant 0 : i32
    %c0_i32_0 = arith.constant 0 : i32
    %c0_i32_1 = arith.constant 0 : i32
    return %c0_i32, %c0_i32_0 : i32, i32
  }
  func.func @transform_3(%arg0: i32) -> i32 {
    %c0_i32 = arith.constant 0 : i32
    %c0_i32_0 = arith.constant 0 : i32
    return %c0_i32 : i32
  }
  func.func @transform_4(%arg0: i32) -> (i32, i32, i32, i32) {
    %c0_i32 = arith.constant 0 : i32
    %c0_i32_0 = arith.constant 0 : i32
    %c0_i32_1 = arith.constant 0 : i32
    %c0_i32_2 = arith.constant 0 : i32
    return %arg0, %c0_i32, %c0_i32_0, %c0_i32_1 : i32, i32, i32, i32
  }
}

</mosaic_0001>

<llo_original>
// kernel: tpu_custom_call.1
$region0: #{tpu_custom_call.1}
  #allocation0 [shape = 'u32[]', space=smem, size = 0x4, offset = 0x4, fixed_abs, tag = 'smem constant byte address 0x4 - core index']
  #allocation1 [shape = 'u32[144,128]{1,0:T(1,128)}', space=vmem, size = 0x12000, scoped, tag = 'internal scratch']
  #allocation2 [shape = 'f32[1]{0:T(128)S(6)}', space=smem, size = 0x200, scoped, tag = 'scoped memory for tpu_custom_call.1']
  %s0 = inlined_call_operand.hbm [shape: f32[2,16,16,64], index: 0, kind: input, shape index: {}]
  %s1 = inlined_call_operand.hbm [shape: bf16[64,80], index: 1, kind: input, shape index: {}]
  %s2 = inlined_call_operand.vmem [shape: f32[1,80], index: 2, kind: input, shape index: {}]
  %s3 = inlined_call_operand.<no memory space> [shape: f32[1], index: 3, kind: input, shape index: {}]
  %s4 = inlined_call_operand.hbm [shape: f32[2,16,16,64], index: 4, kind: output, shape index: {}]
  %s5 = sld [smem:[#allocation0]]
  $region57: #{tpu_custom_call.1} parent=0
    _
  %s7 = ssub.s32 1, %s5
  %s8 = scalar_select 0, %s7, %s5
  %9 = sst [smem:[#allocation2]] %s3
  $region1: #{tpu_custom_call.1} parent=0
    #allocation3 [shape = 'u8[262144]{0}', space=vmem, size = 0x40000, scoped, tag = 'input window, operand 0']
    #allocation4 [shape = 's32[2]{0}', space=sflag, size = 0x8, scoped, tag = 'scoped memory for tpu_custom_call.1']
    #allocation5 [shape = 's32[2]{0}', space=sflag, size = 0x8, scoped, tag = 'scoped memory for tpu_custom_call.1']
    #allocation6 [shape = 'u8[16384]{0}', space=vmem, size = 0x4000, scoped, tag = 'input window, operand 1, single buffered']
    #allocation7 [shape = 's32[1]{0}', space=sflag, size = 0x4, scoped, tag = 'scoped memory for tpu_custom_call.1']
    #allocation8 [shape = 'u8[262144]{0}', space=vmem, size = 0x40000, scoped, tag = 'output window, operand 0']
    %10 = vsyncpa [#allocation4], 0
    %s11 = scalar_lea.sflag [#allocation4], 1
    %12 = vsyncpa %s11, 0
    %13 = vsyncpa [#allocation7], 0
    %14 = vsyncpa [#allocation5], 0
    %s15 = scalar_lea.sflag [#allocation5], 1
    %16 = vsyncpa %s15, 0
    loop: start=0, step=1, limit=4
    $region2: #{tpu_custom_call.1} parent=1 // loop_pre_header
      _
    $region3: #{tpu_custom_call.1} parent=1 // loop_header
      %s18 = sphi 0, %s22
      %p19 = scmp.ge.s32.totalorder %s18, 4
      %s28 = sphi 0, %s30
      %s31 = sphi 0, %s28
      %s32 = sphi 0, %s31
      %s48 = sphi 0, %s32
      %s52 = sphi 0, %s52
      %s54 = sphi 0, %s52
      %s55 = sphi 0, %s54
      %s69 = sphi 0, %s55
      %s73 = sphi 0, %s73
      %s75 = sphi 0, %s73
      %s76 = sphi 0, %s75
      %s90 = sphi 0, %s76
      %s94 = sphi 0, %s94
      %s96 = sphi 0, %s94
      %s97 = sphi 0, %s96
      %s111 = sphi 0, %s97
      %s117 = sphi 0, %s119
      %s120 = sphi 0, %s117
      %s121 = sphi 0, %s120
      %s137 = sphi 0, %s121
    $region4: #{tpu_custom_call.1} parent=1 // loop_header_branch
      %21 = sbr.rel (%p19) target = $region8
    $region5: #{tpu_custom_call.1} parent=1 // loop_body
      %s23 = ssub.s32 %s18, 1
      %s24 = ssub.s32 %s18, 2
      %s25 = sadd.s32 %s18, 1
      %s26 = ssub.s32 %s18, %s25
      %p27 = scmp.eq.s32.totalorder %s26, 0
      %s29 = sadd.s32 %s28, 1
      %s30 = scalar_select %p27, %s28, %s29
      %p33 = pneg %p27
      %p34 = scmp.eq.s32.totalorder %s18, 1
      %p35 = por %p33, %p34
      %p36 = scmp.ne.s32.totalorder %s28, %s31
      %p37 = scmp.eq.s32.totalorder %s18, 0
      %p38 = por %p36, %p37
      %p39 = scmp.ne.s32.totalorder %s28, %s31
      %p40 = scmp.eq.s32.totalorder %s23, 1
      %p41 = por %p39, %p40
      %p42 = scmp.ne.s32.totalorder %s31, %s32
      %p43 = scmp.eq.s32.totalorder %s23, 0
      %p44 = por %p42, %p43
      %p45 = scmp.ne.s32.totalorder %s31, %s32
      %p46 = scmp.eq.s32.totalorder %s24, 1
      %p47 = por %p45, %p46
      %p49 = scmp.ne.s32.totalorder %s32, %s48
      %p50 = scmp.eq.s32.totalorder %s24, 0
      %p51 = por %p49, %p50
      %s53 = sadd.s32 %s52, 1
      %p56 = scmp.eq.s32.totalorder %s18, 1
      %p57 = scmp.ne.s32.totalorder %s52, %s54
      %p58 = scmp.eq.s32.totalorder %s18, 0
      %p59 = por %p57, %p58
      %p60 = scmp.ne.s32.totalorder %s52, %s54
      %p61 = scmp.eq.s32.totalorder %s23, 1
      %p62 = por %p60, %p61
      %p63 = scmp.ne.s32.totalorder %s54, %s55
      %p64 = scmp.eq.s32.totalorder %s23, 0
      %p65 = por %p63, %p64
      %p66 = scmp.ne.s32.totalorder %s54, %s55
      %p67 = scmp.eq.s32.totalorder %s24, 1
      %p68 = por %p66, %p67
      %p70 = scmp.ne.s32.totalorder %s55, %s69
      %p71 = scmp.eq.s32.totalorder %s24, 0
      %p72 = por %p70, %p71
      %s74 = sadd.s32 %s73, 1
      %p77 = scmp.eq.s32.totalorder %s18, 1
      %p78 = scmp.ne.s32.totalorder %s73, %s75
      %p79 = scmp.eq.s32.totalorder %s18, 0
      %p80 = por %p78, %p79
      %p81 = scmp.ne.s32.totalorder %s73, %s75
      %p82 = scmp.eq.s32.totalorder %s23, 1
      %p83 = por %p81, %p82
      %p84 = scmp.ne.s32.totalorder %s75, %s76
      %p85 = scmp.eq.s32.totalorder %s23, 0
      %p86 = por %p84, %p85
      %p87 = scmp.ne.s32.totalorder %s75, %s76
      %p88 = scmp.eq.s32.totalorder %s24, 1
      %p89 = por %p87, %p88
      %p91 = scmp.ne.s32.totalorder %s76, %s90
      %p92 = scmp.eq.s32.totalorder %s24, 0
      %p93 = por %p91, %p92
      %s95 = sadd.s32 %s94, 1
      %p98 = scmp.eq.s32.totalorder %s18, 1
      %p99 = scmp.ne.s32.totalorder %s94, %s96
      %p100 = scmp.eq.s32.totalorder %s18, 0
      %p101 = por %p99, %p100
      %p102 = scmp.ne.s32.totalorder %s94, %s96
      %p103 = scmp.eq.s32.totalorder %s23, 1
      %p104 = por %p102, %p103
      %p105 = scmp.ne.s32.totalorder %s96, %s97
      %p106 = scmp.eq.s32.totalorder %s23, 0
      %p107 = por %p105, %p106
      %p108 = scmp.ne.s32.totalorder %s96, %s97
      %p109 = scmp.eq.s32.totalorder %s24, 1
      %p110 = por %p108, %p109
      %p112 = scmp.ne.s32.totalorder %s97, %s111
      %p113 = scmp.eq.s32.totalorder %s24, 0
      %p114 = por %p112, %p113
      %s115 = ssub.s32 %s18, %s25
      %p116 = scmp.eq.s32.totalorder %s115, 0
      %s118 = sadd.s32 %s117, 1
      %s119 = scalar_select %p116, %s117, %s118
      %p122 = pneg %p116
      %p123 = scmp.eq.s32.totalorder %s18, 1
      %p124 = por %p122, %p123
      %p125 = scmp.ne.s32.totalorder %s117, %s120
      %p126 = scmp.eq.s32.totalorder %s18, 0
      %p127 = por %p125, %p126
      %p128 = scmp.ne.s32.totalorder %s117, %s120
      %p129 = scmp.eq.s32.totalorder %s23, 1
      %p130 = por %p128, %p129
      %p131 = scmp.ne.s32.totalorder %s120, %s121
      %p132 = scmp.eq.s32.totalorder %s23, 0
      %p133 = por %p131, %p132
      %p134 = scmp.ne.s32.totalorder %s120, %s121
      %p135 = scmp.eq.s32.totalorder %s24, 1
      %p136 = por %p134, %p135
      %p138 = scmp.ne.s32.totalorder %s121, %s137
      %p139 = scmp.eq.s32.totalorder %s24, 0
      %p140 = por %p138, %p139
      %p141 = scmp.le.s32.totalorder 1, %s18
      %p142 = scmp.lt.s32.totalorder %s18, 3
      %p143 = pnand %p141, %p142
      %p144 = pneg %p143
      // Predicated region
      $region9: #{tpu_custom_call.1} parent=5 // pred_check
        _
      $region10: #{tpu_custom_call.1} parent=5 // pred_check_branch
        %146 = sbr.rel (%p143) target = $region12
      $region11: #{tpu_custom_call.1} parent=5 // pred_region
        %s147 = ssub.s32 %s18, 1
        // Predicated region
        $region13: #{tpu_custom_call.1} parent=11 // pred_check
          %p148 = pneg %p65
        $region14: #{tpu_custom_call.1} parent=11 // pred_check_branch
          %150 = sbr.rel (%p148) target = $region16
        $region15: #{tpu_custom_call.1} parent=11 // pred_region
          %s152 = ssub.s32 512, 512
          %153 = vsyncadd [#allocation7], %s152
          %s154 = sshll.u32 [#allocation6], 4
          %s155 = int_to_ptr.vmem [resolvable:$true] %s154
          %160 = dma.hbm_to_vmem [thread:$0]  %s1, 512, %s155, [#allocation7], 64, 64, 4
        $region16: #{tpu_custom_call.1} parent=11 // pred_fallthru
          _
        // Predicated region
        $region17: #{tpu_custom_call.1} parent=11 // pred_check
          %p161 = pneg %p86
        $region18: #{tpu_custom_call.1} parent=11 // pred_check_branch
          %163 = sbr.rel (%p161) target = $region20
        $region19: #{tpu_custom_call.1} parent=11 // pred_region
          _
        $region20: #{tpu_custom_call.1} parent=11 // pred_fallthru
          _
        // Predicated region
        $region21: #{tpu_custom_call.1} parent=11 // pred_check
          %p164 = pneg %p107
        $region22: #{tpu_custom_call.1} parent=11 // pred_check_branch
          %166 = sbr.rel (%p164) target = $region24
        $region23: #{tpu_custom_call.1} parent=11 // pred_region
          _
        $region24: #{tpu_custom_call.1} parent=11 // pred_fallthru
          _
      $region12: #{tpu_custom_call.1} parent=5 // pred_fallthru
        _
      %p167 = scmp.lt.s32.totalorder %s18, 2
      // Predicated region
      $region25: #{tpu_custom_call.1} parent=5 // pred_check
        %p168 = pneg %p167
      $region26: #{tpu_custom_call.1} parent=5 // pred_check_branch
        %170 = sbr.rel (%p168) target = $region28
      $region27: #{tpu_custom_call.1} parent=5 // pred_region
        // Predicated region
        $region29: #{tpu_custom_call.1} parent=27 // pred_check
          %p171 = pneg %p38
        $region30: #{tpu_custom_call.1} parent=27 // pred_check_branch
          %173 = sbr.rel (%p171) target = $region32
        $region31: #{tpu_custom_call.1} parent=27 // pred_region
          %s174 = sand.u32 %s28, 1
          %s175 = scalar_lea.sflag [#allocation4], %s174
          %s176 = sand.u32 %s28, 1
          %s177 = smul.addr %s176, 256
          %s178 = scalar_lea.vmem [#allocation3], %s177
          %s180 = ssub.s32 4096, 4096
          %181 = vsyncadd %s175, %s180
          %s182 = smul.addr %s18, 32
          %s183 = smul.addr %s182, 128
          %s184 = scalar_lea.hbm %s0, %s183
          %s185 = sshll.u32 %s178, 4
          %s186 = int_to_ptr.vmem [resolvable:$true] %s185
          %191 = dma.hbm_to_vmem [thread:$0]  %s184, 4096, %s186, %s175, 128, 128, 8
        $region32: #{tpu_custom_call.1} parent=27 // pred_fallthru
          _
      $region28: #{tpu_custom_call.1} parent=5 // pred_fallthru
        _
      %p192 = scmp.le.s32.totalorder 1, %s18
      %p193 = scmp.lt.s32.totalorder %s18, 3
      %p194 = pnand %p192, %p193
      %p195 = pneg %p194
      // Predicated region
      $region33: #{tpu_custom_call.1} parent=5 // pred_check
        _
      $region34: #{tpu_custom_call.1} parent=5 // pred_check_branch
        %197 = sbr.rel (%p194) target = $region36
      $region35: #{tpu_custom_call.1} parent=5 // pred_region
        %s198 = ssub.s32 %s18, 1
        %s199 = sand.u32 %s31, 1
        %s200 = scalar_lea.sflag [#allocation4], %s199
        %s201 = sand.u32 %s31, 1
        %s202 = smul.addr %s201, 256
        %s203 = scalar_lea.vmem [#allocation3], %s202
        // Predicated region
        $region37: #{tpu_custom_call.1} parent=35 // pred_check
          %p204 = pneg %p44
        $region38: #{tpu_custom_call.1} parent=35 // pred_check_branch
          %206 = sbr.rel (%p204) target = $region40
        $region39: #{tpu_custom_call.1} parent=35 // pred_region
          %207 = dma.done %s200, 4096
        $region40: #{tpu_custom_call.1} parent=35 // pred_fallthru
          _
        // Predicated region
        $region41: #{tpu_custom_call.1} parent=35 // pred_check
          %p208 = pneg %p65
        $region42: #{tpu_custom_call.1} parent=35 // pred_check_branch
          %210 = sbr.rel (%p208) target = $region44
        $region43: #{tpu_custom_call.1} parent=35 // pred_region
          %211 = dma.done [#allocation7], 512
        $region44: #{tpu_custom_call.1} parent=35 // pred_fallthru
          _
        %s212 = sand.u32 %s31, 1
        %s213 = scalar_lea.sflag [#allocation4], %s212
        %s214 = sand.u32 %s31, 1
        %s215 = smul.addr %s214, 256
        %s216 = scalar_lea.vmem [#allocation3], %s215
        %p217 = pneg %p44
        %p218 = pneg %p41
        %p219 = pneg %p65
        %p220 = pneg %p62
        %p221 = pneg %p86
        %p222 = pneg %p83
        %p223 = pneg %p107
        %p224 = pneg %p104
        %p225 = pneg %p133
        %p226 = pneg %p130
        %s227 = sand.u32 %s120, 1
        %s228 = scalar_lea.sflag [#allocation5], %s227
        %s229 = sand.u32 %s120, 1
        %s230 = smul.addr %s229, 256
        %s231 = scalar_lea.vmem [#allocation8], %s230
        %v233 = vld [vmem:[%s203] sm:$0xff]
        %v234 = vld [vmem:[%s203 + $0x8] sm:$0xff]
        %v235 = vld [vmem:[%s203 + $0x10] sm:$0xff]
        %v236 = vld [vmem:[%s203 + $0x18] sm:$0xff]
        %v237 = vld [vmem:[%s203 + $0x20] sm:$0xff]
        %v238 = vld [vmem:[%s203 + $0x28] sm:$0xff]
        %v239 = vld [vmem:[%s203 + $0x30] sm:$0xff]
        %v240 = vld [vmem:[%s203 + $0x38] sm:$0xff]
        %v241 = vld [vmem:[%s203 + $0x40] sm:$0xff]
        %v242 = vld [vmem:[%s203 + $0x48] sm:$0xff]
        %v243 = vld [vmem:[%s203 + $0x50] sm:$0xff]
        %v244 = vld [vmem:[%s203 + $0x58] sm:$0xff]
        %v245 = vld [vmem:[%s203 + $0x60] sm:$0xff]
        %v246 = vld [vmem:[%s203 + $0x68] sm:$0xff]
        %v247 = vld [vmem:[%s203 + $0x70] sm:$0xff]
        %v248 = vld [vmem:[%s203 + $0x78] sm:$0xff]
        %v249 = vld [vmem:[%s203 + $0x80] sm:$0xff]
        %v250 = vld [vmem:[%s203 + $0x88] sm:$0xff]
        %v251 = vld [vmem:[%s203 + $0x90] sm:$0xff]
        %v252 = vld [vmem:[%s203 + $0x98] sm:$0xff]
        %v253 = vld [vmem:[%s203 + $0xa0] sm:$0xff]
        %v254 = vld [vmem:[%s203 + $0xa8] sm:$0xff]
        %v255 = vld [vmem:[%s203 + $0xb0] sm:$0xff]
        %v256 = vld [vmem:[%s203 + $0xb8] sm:$0xff]
        %v257 = vld [vmem:[%s203 + $0xc0] sm:$0xff]
        %v258 = vld [vmem:[%s203 + $0xc8] sm:$0xff]
        %v259 = vld [vmem:[%s203 + $0xd0] sm:$0xff]
        %v260 = vld [vmem:[%s203 + $0xd8] sm:$0xff]
        %v261 = vld [vmem:[%s203 + $0xe0] sm:$0xff]
        %v262 = vld [vmem:[%s203 + $0xe8] sm:$0xff]
        %v263 = vld [vmem:[%s203 + $0xf0] sm:$0xff]
        %v264 = vld [vmem:[%s203 + $0xf8] sm:$0xff]
        %v265 = vpack.c.bf16 %v234, %v233
        %v266 = vpack.c.bf16 %v236, %v235
        %v267 = vpack.c.bf16 %v238, %v237
        %v268 = vpack.c.bf16 %v240, %v239
        %v269 = vpack.c.bf16 %v242, %v241
        %v270 = vpack.c.bf16 %v244, %v243
        %v271 = vpack.c.bf16 %v246, %v245
        %v272 = vpack.c.bf16 %v248, %v247
        %v273 = vpack.c.bf16 %v250, %v249
        %v274 = vpack.c.bf16 %v252, %v251
        %v275 = vpack.c.bf16 %v254, %v253
        %v276 = vpack.c.bf16 %v256, %v255
        %v277 = vpack.c.bf16 %v258, %v257
        %v278 = vpack.c.bf16 %v260, %v259
        %v279 = vpack.c.bf16 %v262, %v261
        %v280 = vpack.c.bf16 %v264, %v263
        %v281 = vld [vmem:[#allocation6] sm:$0xf]
        %v282 = vld [vmem:[#allocation6 + $0x4] sm:$0xf]
        %v283 = vld [vmem:[#allocation6 + $0x8] sm:$0xf]
        %v284 = vld [vmem:[#allocation6 + $0xc] sm:$0xf]
        %v285 = vld [vmem:[#allocation6 + $0x10] sm:$0xf]
        %v286 = vld [vmem:[#allocation6 + $0x14] sm:$0xf]
        %v287 = vld [vmem:[#allocation6 + $0x18] sm:$0xf]
        %v288 = vld [vmem:[#allocation6 + $0x1c] sm:$0xf]
        %v289 = vld [vmem:[%s2] sm:$0x1]
        %v291 = vlaneseq
        %v292 = vshrl.u32 %v291, 7
        %v293 = vsub.s32 0, %v292
        %v294 = vrot.slane %v289, %v293
        %v304 = vunpack.c.l.b16 %v281
        %v305 = vunpack.c.l.b16 %v282
        %v306 = vunpack.c.l.b16 %v283
        %v307 = vunpack.c.l.b16 %v284
        %v308 = vunpack.c.l.b16 %v285
        %v309 = vunpack.c.l.b16 %v286
        %v310 = vunpack.c.l.b16 %v287
        %v311 = vunpack.c.l.b16 %v288
        %v312 = vpack.c.b16 %v305, %v304
        %v313 = vpack.c.b16 %v307, %v306
        %v314 = vpack.c.b16 %v309, %v308
        %v315 = vpack.c.b16 %v311, %v310
        %vm320 = vcmask 523264
        %v322 = vsel %vm320, %v265, 0
        %v325 = vsel %vm320, %v266, 0
        %v328 = vsel %vm320, %v267, 0
        %v331 = vsel %vm320, %v268, 0
        %v334 = vsel %vm320, %v269, 0
        %v337 = vsel %vm320, %v270, 0
        %v340 = vsel %vm320, %v271, 0
        %v343 = vsel %vm320, %v272, 0
        %v346 = vsel %vm320, %v273, 0
        %v349 = vsel %vm320, %v274, 0
        %v352 = vsel %vm320, %v275, 0
        %v355 = vsel %vm320, %v276, 0
        %v358 = vsel %vm320, %v277, 0
        %v361 = vsel %vm320, %v278, 0
        %v364 = vsel %vm320, %v279, 0
        %v367 = vsel %vm320, %v280, 0
        %369 = vmatprep.subr.bf16.mxu0 0
        %370 = vmatpush1.bf16.msra.mxu0 0
        %371 = vmatprep.subr.bf16.mxu0 0
        %372 = vmatpush1.bf16.msra.mxu0 0
        %373 = vmatprep.subr.bf16.mxu0 0
        %374 = vmatpush1.bf16.msra.mxu0 0
        %375 = vmatprep.subr.bf16.mxu0 0
        %376 = vmatpush1.bf16.msra.mxu0 0
        %377 = vmatprep.subr.bf16.mxu0 0
        %378 = vmatpush1.bf16.msra.mxu0 %v315
        %379 = vmatprep.subr.bf16.mxu0 0
        %380 = vmatpush1.bf16.msra.mxu0 %v314
        %381 = vmatprep.subr.bf16.mxu0 0
        %382 = vmatpush1.bf16.msra.mxu0 %v313
        %383 = vmatprep.subr.bf16.mxu0 0
        %384 = vmatpush1.bf16.msra.mxu0 %v312
        %385 = vmatprep.subr.bf16.mxu0 0
        %386 = vmatpush2.bf16.msra.mxu0 0
        %387 = vmatprep.subr.bf16.mxu0 0
        %388 = vmatpush2.bf16.msra.mxu0 0
        %389 = vmatprep.subr.bf16.mxu0 0
        %390 = vmatpush2.bf16.msra.mxu0 0
        %391 = vmatprep.subr.bf16.mxu0 0
        %392 = vmatpush2.bf16.msra.mxu0 0
        %393 = vmatprep.subr.bf16.mxu0 0
        %394 = vmatpush2.bf16.msra.mxu0 0
        %395 = vmatprep.subr.bf16.mxu0 0
        %396 = vmatpush2.bf16.msra.mxu0 0
        %397 = vmatprep.subr.bf16.mxu0 0
        %398 = vmatpush2.bf16.msra.mxu0 0
        %399 = vmatprep.subr.bf16.mxu0 0
        %400 = vmatpush2.bf16.msra.mxu0 0
        %401 = vmatprep.mubr.bf16.mxu0 0
        %402 = vmatmul.mubr.bf16.gmra.mxu0 %v322
        %v403 = vpop.f32.mrf.mxu0
        %v404 = vadd.f32 %v294, %v403
        %v405 = vpop.f32.mrf.mxu0
        %v406 = vpop.f32.mrf.mxu0
        %v407 = vadd.f32 %v294, %v406
        %v408 = vpop.f32.mrf.mxu0
        %409 = vmatprep.mubr.bf16.mxu0 0
        %410 = vmatmul.mubr.bf16.gmra.mxu0 %v325
        %v411 = vpop.f32.mrf.mxu0
        %v412 = vadd.f32 %v294, %v411
        %v413 = vpop.f32.mrf.mxu0
        %v414 = vpop.f32.mrf.mxu0
        %v415 = vadd.f32 %v294, %v414
        %v416 = vpop.f32.mrf.mxu0
        %417 = vmatprep.mubr.bf16.mxu0 0
        %418 = vmatmul.mubr.bf16.gmra.mxu0 %v328
        %v419 = vpop.f32.mrf.mxu0
        %v420 = vadd.f32 %v294, %v419
        %v421 = vpop.f32.mrf.mxu0
        %v422 = vpop.f32.mrf.mxu0
        %v423 = vadd.f32 %v294, %v422
        %v424 = vpop.f32.mrf.mxu0
        %425 = vmatprep.mubr.bf16.mxu0 0
        %426 = vmatmul.mubr.bf16.gmra.mxu0 %v331
        %v427 = vpop.f32.mrf.mxu0
        %v428 = vadd.f32 %v294, %v427
        %v429 = vpop.f32.mrf.mxu0
        %v430 = vpop.f32.mrf.mxu0
        %v431 = vadd.f32 %v294, %v430
        %v432 = vpop.f32.mrf.mxu0
        %433 = vmatprep.mubr.bf16.mxu0 0
        %434 = vmatmul.mubr.bf16.gmra.mxu0 %v334
        %v435 = vpop.f32.mrf.mxu0
        %v436 = vadd.f32 %v294, %v435
        %v437 = vpop.f32.mrf.mxu0
        %v438 = vpop.f32.mrf.mxu0
        %v439 = vadd.f32 %v294, %v438
        %v440 = vpop.f32.mrf.mxu0
        %441 = vmatprep.mubr.bf16.mxu0 0
        %442 = vmatmul.mubr.bf16.gmra.mxu0 %v337
        %v443 = vpop.f32.mrf.mxu0
        %v444 = vadd.f32 %v294, %v443
        %v445 = vpop.f32.mrf.mxu0
        %v446 = vpop.f32.mrf.mxu0
        %v447 = vadd.f32 %v294, %v446
        %v448 = vpop.f32.mrf.mxu0
        %449 = vmatprep.mubr.bf16.mxu0 0
        %450 = vmatmul.mubr.bf16.gmra.mxu0 %v340
        %v451 = vpop.f32.mrf.mxu0
        %v452 = vadd.f32 %v294, %v451
        %v453 = vpop.f32.mrf.mxu0
        %v454 = vpop.f32.mrf.mxu0
        %v455 = vadd.f32 %v294, %v454
        %v456 = vpop.f32.mrf.mxu0
        %457 = vmatprep.mubr.bf16.mxu0 0
        %458 = vmatmul.mubr.bf16.gmra.mxu0 %v343
        %v459 = vpop.f32.mrf.mxu0
        %v460 = vadd.f32 %v294, %v459
        %v461 = vpop.f32.mrf.mxu0
        %v462 = vpop.f32.mrf.mxu0
        %v463 = vadd.f32 %v294, %v462
        %v464 = vpop.f32.mrf.mxu0
        %465 = vmatprep.mubr.bf16.mxu0 0
        %466 = vmatmul.mubr.bf16.gmra.mxu0 %v346
        %v467 = vpop.f32.mrf.mxu0
        %v468 = vadd.f32 %v294, %v467
        %v469 = vpop.f32.mrf.mxu0
        %v470 = vpop.f32.mrf.mxu0
        %v471 = vadd.f32 %v294, %v470
        %v472 = vpop.f32.mrf.mxu0
        %473 = vmatprep.mubr.bf16.mxu0 0
        %474 = vmatmul.mubr.bf16.gmra.mxu0 %v349
        %v475 = vpop.f32.mrf.mxu0
        %v476 = vadd.f32 %v294, %v475
        %v477 = vpop.f32.mrf.mxu0
        %v478 = vpop.f32.mrf.mxu0
        %v479 = vadd.f32 %v294, %v478
        %v480 = vpop.f32.mrf.mxu0
        %481 = vmatprep.mubr.bf16.mxu0 0
        %482 = vmatmul.mubr.bf16.gmra.mxu0 %v352
        %v483 = vpop.f32.mrf.mxu0
        %v484 = vadd.f32 %v294, %v483
        %v485 = vpop.f32.mrf.mxu0
        %v486 = vpop.f32.mrf.mxu0
        %v487 = vadd.f32 %v294, %v486
        %v488 = vpop.f32.mrf.mxu0
        %489 = vmatprep.mubr.bf16.mxu0 0
        %490 = vmatmul.mubr.bf16.gmra.mxu0 %v355
        %v491 = vpop.f32.mrf.mxu0
        %v492 = vadd.f32 %v294, %v491
        %v493 = vpop.f32.mrf.mxu0
        %v494 = vpop.f32.mrf.mxu0
        %v495 = vadd.f32 %v294, %v494
        %v496 = vpop.f32.mrf.mxu0
        %497 = vmatprep.mubr.bf16.mxu0 0
        %498 = vmatmul.mubr.bf16.gmra.mxu0 %v358
        %v499 = vpop.f32.mrf.mxu0
        %v500 = vadd.f32 %v294, %v499
        %v501 = vpop.f32.mrf.mxu0
        %v502 = vpop.f32.mrf.mxu0
        %v503 = vadd.f32 %v294, %v502
        %v504 = vpop.f32.mrf.mxu0
        %505 = vmatprep.mubr.bf16.mxu0 0
        %506 = vmatmul.mubr.bf16.gmra.mxu0 %v361
        %v507 = vpop.f32.mrf.mxu0
        %v508 = vadd.f32 %v294, %v507
        %v509 = vpop.f32.mrf.mxu0
        %v510 = vpop.f32.mrf.mxu0
        %v511 = vadd.f32 %v294, %v510
        %v512 = vpop.f32.mrf.mxu0
        %513 = vmatprep.mubr.bf16.mxu0 0
        %514 = vmatmul.mubr.bf16.gmra.mxu0 %v364
        %v515 = vpop.f32.mrf.mxu0
        %v516 = vadd.f32 %v294, %v515
        %v517 = vpop.f32.mrf.mxu0
        %v518 = vpop.f32.mrf.mxu0
        %v519 = vadd.f32 %v294, %v518
        %v520 = vpop.f32.mrf.mxu0
        %521 = vmatprep.mubr.bf16.mxu0 0
        %522 = vmatmul.mubr.bf16.gmra.mxu0 %v367
        %v523 = vpop.f32.mrf.mxu0
        %v524 = vadd.f32 %v294, %v523
        %v525 = vpop.f32.mrf.mxu0
        %v526 = vpop.f32.mrf.mxu0
        %v527 = vadd.f32 %v294, %v526
        %v528 = vpop.f32.mrf.mxu0
        %529 = vdwg.mxu0
        %v530 = vpack.c.bf16 %v407, %v404
        %v531 = vpack.c.bf16 %v415, %v412
        %v532 = vpack.c.bf16 %v423, %v420
        %v533 = vpack.c.bf16 %v431, %v428
        %v534 = vpack.c.bf16 %v439, %v436
        %v535 = vpack.c.bf16 %v447, %v444
        %v536 = vpack.c.bf16 %v455, %v452
        %v537 = vpack.c.bf16 %v463, %v460
        %v538 = vpack.c.bf16 %v471, %v468
        %v539 = vpack.c.bf16 %v479, %v476
        %v540 = vpack.c.bf16 %v487, %v484
        %v541 = vpack.c.bf16 %v495, %v492
        %v542 = vpack.c.bf16 %v503, %v500
        %v543 = vpack.c.bf16 %v511, %v508
        %v544 = vpack.c.bf16 %v519, %v516
        %v545 = vpack.c.bf16 %v527, %v524
        %562 = vrot.lane.b32.xlu0 %v530, 64
        %v563 = vpop.permute.xlu0 %562
        %564 = vrot.lane.b32.xlu0 %v531, 64
        %v565 = vpop.permute.xlu0 %564
        %566 = vrot.lane.b32.xlu0 %v532, 64
        %v567 = vpop.permute.xlu0 %566
        %568 = vrot.lane.b32.xlu0 %v533, 64
        %v569 = vpop.permute.xlu0 %568
        %570 = vrot.lane.b32.xlu0 %v534, 64
        %v571 = vpop.permute.xlu0 %570
        %572 = vrot.lane.b32.xlu0 %v535, 64
        %v573 = vpop.permute.xlu0 %572
        %574 = vrot.lane.b32.xlu0 %v536, 64
        %v575 = vpop.permute.xlu0 %574
        %576 = vrot.lane.b32.xlu0 %v537, 64
        %v577 = vpop.permute.xlu0 %576
        %578 = vrot.lane.b32.xlu0 %v538, 64
        %v579 = vpop.permute.xlu0 %578
        %580 = vrot.lane.b32.xlu0 %v539, 64
        %v581 = vpop.permute.xlu0 %580
        %582 = vrot.lane.b32.xlu0 %v540, 64
        %v583 = vpop.permute.xlu0 %582
        %584 = vrot.lane.b32.xlu0 %v541, 64
        %v585 = vpop.permute.xlu0 %584
        %586 = vrot.lane.b32.xlu0 %v542, 64
        %v587 = vpop.permute.xlu0 %586
        %588 = vrot.lane.b32.xlu0 %v543, 64
        %v589 = vpop.permute.xlu0 %588
        %590 = vrot.lane.b32.xlu0 %v544, 64
        %v591 = vpop.permute.xlu0 %590
        %592 = vrot.lane.b32.xlu0 %v545, 64
        %v593 = vpop.permute.xlu0 %592
        %v610 = vcombine.low %v563, %v571
        %v611 = vcombine.high %v563, %v571
        %v613 = vunpack.c.l.s4 1983009808
        %v614 = vunpack.c.0.s8 %v613
        %v615 = vlaneseq
        %v616 = vshrl.u32 %v615, 7
        %v617 = vsub.s32 %v614, %v616
        %v618 = vrot.slane %v610, %v617
        %v620 = vunpack.c.l.s4 1983009808
        %v621 = vunpack.c.0.s8 %v620
        %v622 = vlaneseq
        %v623 = vshrl.u32 %v622, 7
        %v624 = vsub.s32 %v621, %v623
        %v625 = vrot.slane %v611, %v624
        %v626 = vcombine.low %v567, %v575
        %v627 = vcombine.high %v567, %v575
        %v629 = vunpack.c.l.s4 1983009808
        %v630 = vunpack.c.0.s8 %v629
        %v631 = vlaneseq
        %v632 = vshrl.u32 %v631, 7
        %v633 = vsub.s32 %v630, %v632
        %v634 = vrot.slane %v626, %v633
        %v636 = vunpack.c.l.s4 1983009808
        %v637 = vunpack.c.0.s8 %v636
        %v638 = vlaneseq
        %v639 = vshrl.u32 %v638, 7
        %v640 = vsub.s32 %v637, %v639
        %v641 = vrot.slane %v627, %v640
        %v642 = vcombine.low %v579, %v587
        %v643 = vcombine.high %v579, %v587
        %v645 = vunpack.c.l.s4 1983009808
        %v646 = vunpack.c.0.s8 %v645
        %v647 = vlaneseq
        %v648 = vshrl.u32 %v647, 7
        %v649 = vsub.s32 %v646, %v648
        %v650 = vrot.slane %v642, %v649
        %v652 = vunpack.c.l.s4 1983009808
        %v653 = vunpack.c.0.s8 %v652
        %v654 = vlaneseq
        %v655 = vshrl.u32 %v654, 7
        %v656 = vsub.s32 %v653, %v655
        %v657 = vrot.slane %v643, %v656
        %v658 = vcombine.low %v583, %v591
        %v659 = vcombine.high %v583, %v591
        %v661 = vunpack.c.l.s4 1983009808
        %v662 = vunpack.c.0.s8 %v661
        %v663 = vlaneseq
        %v664 = vshrl.u32 %v663, 7
        %v665 = vsub.s32 %v662, %v664
        %v666 = vrot.slane %v658, %v665
        %v668 = vunpack.c.l.s4 1983009808
        %v669 = vunpack.c.0.s8 %v668
        %v670 = vlaneseq
        %v671 = vshrl.u32 %v670, 7
        %v672 = vsub.s32 %v669, %v671
        %v673 = vrot.slane %v659, %v672
        %v674 = vcombine.low %v618, %v634
        %v675 = vcombine.high %v618, %v634
        %v677 = vunpack.c.l.s4 1934713408
        %v678 = vunpack.c.0.s8 %v677
        %v679 = vlaneseq
        %v680 = vshrl.u32 %v679, 7
        %v681 = vsub.s32 %v678, %v680
        %v682 = vrot.slane %v674, %v681
        %v684 = vunpack.c.l.s4 1934713408
        %v685 = vunpack.c.0.s8 %v684
        %v686 = vlaneseq
        %v687 = vshrl.u32 %v686, 7
        %v688 = vsub.s32 %v685, %v687
        %v689 = vrot.slane %v675, %v688
        %v690 = vcombine.low %v625, %v641
        %v691 = vcombine.high %v625, %v641
        %v693 = vunpack.c.l.s4 1934713408
        %v694 = vunpack.c.0.s8 %v693
        %v695 = vlaneseq
        %v696 = vshrl.u32 %v695, 7
        %v697 = vsub.s32 %v694, %v696
        %v698 = vrot.slane %v690, %v697
        %v700 = vunpack.c.l.s4 1934713408
        %v701 = vunpack.c.0.s8 %v700
        %v702 = vlaneseq
        %v703 = vshrl.u32 %v702, 7
        %v704 = vsub.s32 %v701, %v703
        %v705 = vrot.slane %v691, %v704
        %v706 = vcombine.low %v650, %v666
        %v707 = vcombine.high %v650, %v666
        %v709 = vunpack.c.l.s4 1934713408
        %v710 = vunpack.c.0.s8 %v709
        %v711 = vlaneseq
        %v712 = vshrl.u32 %v711, 7
        %v713 = vsub.s32 %v710, %v712
        %v714 = vrot.slane %v706, %v713
        %v716 = vunpack.c.l.s4 1934713408
        %v717 = vunpack.c.0.s8 %v716
        %v718 = vlaneseq
        %v719 = vshrl.u32 %v718, 7
        %v720 = vsub.s32 %v717, %v719
        %v721 = vrot.slane %v707, %v720
        %v722 = vcombine.low %v657, %v673
        %v723 = vcombine.high %v657, %v673
        %v725 = vunpack.c.l.s4 1934713408
        %v726 = vunpack.c.0.s8 %v725
        %v727 = vlaneseq
        %v728 = vshrl.u32 %v727, 7
        %v729 = vsub.s32 %v726, %v728
        %v730 = vrot.slane %v722, %v729
        %v732 = vunpack.c.l.s4 1934713408
        %v733 = vunpack.c.0.s8 %v732
        %v734 = vlaneseq
        %v735 = vshrl.u32 %v734, 7
        %v736 = vsub.s32 %v733, %v735
        %v737 = vrot.slane %v723, %v736
        %v738 = vcombine.low %v682, %v714
        %v739 = vcombine.high %v682, %v714
        %v740 = vcombine.low %v689, %v721
        %v741 = vcombine.high %v689, %v721
        %v742 = vcombine.low %v698, %v730
        %v743 = vcombine.high %v698, %v730
        %v744 = vcombine.low %v705, %v737
        %v745 = vcombine.high %v705, %v737
        %v746 = vcombine.low %v565, %v573
        %v747 = vcombine.high %v565, %v573
        %v749 = vunpack.c.l.s4 1983009808
        %v750 = vunpack.c.0.s8 %v749
        %v751 = vlaneseq
        %v752 = vshrl.u32 %v751, 7
        %v753 = vsub.s32 %v750, %v752
        %v754 = vrot.slane %v746, %v753
        %v756 = vunpack.c.l.s4 1983009808
        %v757 = vunpack.c.0.s8 %v756
        %v758 = vlaneseq
        %v759 = vshrl.u32 %v758, 7
        %v760 = vsub.s32 %v757, %v759
        %v761 = vrot.slane %v747, %v760
        %v762 = vcombine.low %v569, %v577
        %v763 = vcombine.high %v569, %v577
        %v765 = vunpack.c.l.s4 1983009808
        %v766 = vunpack.c.0.s8 %v765
        %v767 = vlaneseq
        %v768 = vshrl.u32 %v767, 7
        %v769 = vsub.s32 %v766, %v768
        %v770 = vrot.slane %v762, %v769
        %v772 = vunpack.c.l.s4 1983009808
        %v773 = vunpack.c.0.s8 %v772
        %v774 = vlaneseq
        %v775 = vshrl.u32 %v774, 7
        %v776 = vsub.s32 %v773, %v775
        %v777 = vrot.slane %v763, %v776
        %v778 = vcombine.low %v581, %v589
        %v779 = vcombine.high %v581, %v589
        %v781 = vunpack.c.l.s4 1983009808
        %v782 = vunpack.c.0.s8 %v781
        %v783 = vlaneseq
        %v784 = vshrl.u32 %v783, 7
        %v785 = vsub.s32 %v782, %v784
        %v786 = vrot.slane %v778, %v785
        %v788 = vunpack.c.l.s4 1983009808
        %v789 = vunpack.c.0.s8 %v788
        %v790 = vlaneseq
        %v791 = vshrl.u32 %v790, 7
        %v792 = vsub.s32 %v789, %v791
        %v793 = vrot.slane %v779, %v792
        %v794 = vcombine.low %v585, %v593
        %v795 = vcombine.high %v585, %v593
        %v797 = vunpack.c.l.s4 1983009808
        %v798 = vunpack.c.0.s8 %v797
        %v799 = vlaneseq
        %v800 = vshrl.u32 %v799, 7
        %v801 = vsub.s32 %v798, %v800
        %v802 = vrot.slane %v794, %v801
        %v804 = vunpack.c.l.s4 1983009808
        %v805 = vunpack.c.0.s8 %v804
        %v806 = vlaneseq
        %v807 = vshrl.u32 %v806, 7
        %v808 = vsub.s32 %v805, %v807
        %v809 = vrot.slane %v795, %v808
        %v810 = vcombine.low %v754, %v770
        %v811 = vcombine.high %v754, %v770
        %v813 = vunpack.c.l.s4 1934713408
        %v814 = vunpack.c.0.s8 %v813
        %v815 = vlaneseq
        %v816 = vshrl.u32 %v815, 7
        %v817 = vsub.s32 %v814, %v816
        %v818 = vrot.slane %v810, %v817
        %v820 = vunpack.c.l.s4 1934713408
        %v821 = vunpack.c.0.s8 %v820
        %v822 = vlaneseq
        %v823 = vshrl.u32 %v822, 7
        %v824 = vsub.s32 %v821, %v823
        %v825 = vrot.slane %v811, %v824
        %v826 = vcombine.low %v761, %v777
        %v827 = vcombine.high %v761, %v777
        %v829 = vunpack.c.l.s4 1934713408
        %v830 = vunpack.c.0.s8 %v829
        %v831 = vlaneseq
        %v832 = vshrl.u32 %v831, 7
        %v833 = vsub.s32 %v830, %v832
        %v834 = vrot.slane %v826, %v833
        %v836 = vunpack.c.l.s4 1934713408
        %v837 = vunpack.c.0.s8 %v836
        %v838 = vlaneseq
        %v839 = vshrl.u32 %v838, 7
        %v840 = vsub.s32 %v837, %v839
        %v841 = vrot.slane %v827, %v840
        %v842 = vcombine.low %v786, %v802
        %v843 = vcombine.high %v786, %v802
        %v845 = vunpack.c.l.s4 1934713408
        %v846 = vunpack.c.0.s8 %v845
        %v847 = vlaneseq
        %v848 = vshrl.u32 %v847, 7
        %v849 = vsub.s32 %v846, %v848
        %v850 = vrot.slane %v842, %v849
        %v852 = vunpack.c.l.s4 1934713408
        %v853 = vunpack.c.0.s8 %v852
        %v854 = vlaneseq
        %v855 = vshrl.u32 %v854, 7
        %v856 = vsub.s32 %v853, %v855
        %v857 = vrot.slane %v843, %v856
        %v858 = vcombine.low %v793, %v809
        %v859 = vcombine.high %v793, %v809
        %v861 = vunpack.c.l.s4 1934713408
        %v862 = vunpack.c.0.s8 %v861
        %v863 = vlaneseq
        %v864 = vshrl.u32 %v863, 7
        %v865 = vsub.s32 %v862, %v864
        %v866 = vrot.slane %v858, %v865
        %v868 = vunpack.c.l.s4 1934713408
        %v869 = vunpack.c.0.s8 %v868
        %v870 = vlaneseq
        %v871 = vshrl.u32 %v870, 7
        %v872 = vsub.s32 %v869, %v871
        %v873 = vrot.slane %v859, %v872
        %v874 = vcombine.low %v818, %v850
        %v875 = vcombine.high %v818, %v850
        %v876 = vcombine.low %v825, %v857
        %v877 = vcombine.high %v825, %v857
        %v878 = vcombine.low %v834, %v866
        %v879 = vcombine.high %v834, %v866
        %v880 = vcombine.low %v841, %v873
        %v881 = vcombine.high %v841, %v873
        %v884 = vpack.i.b16 %v874, %v738
        %v885 = vshrl.u32 %v738, 16
        %v886 = vshrl.u32 %v874, 16
        %v887 = vpack.i.b16 %v886, %v885
        %v890 = vpack.i.b16 %v875, %v739
        %v891 = vshrl.u32 %v739, 16
        %v892 = vshrl.u32 %v875, 16
        %v893 = vpack.i.b16 %v892, %v891
        %v896 = vpack.i.b16 %v876, %v740
        %v897 = vshrl.u32 %v740, 16
        %v898 = vshrl.u32 %v876, 16
        %v899 = vpack.i.b16 %v898, %v897
        %v902 = vpack.i.b16 %v877, %v741
        %v903 = vshrl.u32 %v741, 16
        %v904 = vshrl.u32 %v877, 16
        %v905 = vpack.i.b16 %v904, %v903
        %v908 = vpack.i.b16 %v878, %v742
        %v909 = vshrl.u32 %v742, 16
        %v910 = vshrl.u32 %v878, 16
        %v911 = vpack.i.b16 %v910, %v909
        %v914 = vpack.i.b16 %v879, %v743
        %v915 = vshrl.u32 %v743, 16
        %v916 = vshrl.u32 %v879, 16
        %v917 = vpack.i.b16 %v916, %v915
        %v920 = vpack.i.b16 %v880, %v744
        %v921 = vshrl.u32 %v744, 16
        %v922 = vshrl.u32 %v880, 16
        %v923 = vpack.i.b16 %v922, %v921
        %v926 = vpack.i.b16 %v881, %v745
        %v927 = vshrl.u32 %v745, 16
        %v928 = vshrl.u32 %v881, 16
        %v929 = vpack.i.b16 %v928, %v927
        %930 = vrot.lane.b32.xlu0 %v530, 56
        %v931 = vpop.permute.xlu0 %930
        %932 = vrot.lane.b32.xlu0 %v531, 56
        %v933 = vpop.permute.xlu0 %932
        %934 = vrot.lane.b32.xlu0 %v532, 56
        %v935 = vpop.permute.xlu0 %934
        %936 = vrot.lane.b32.xlu0 %v533, 56
        %v937 = vpop.permute.xlu0 %936
        %938 = vrot.lane.b32.xlu0 %v534, 56
        %v939 = vpop.permute.xlu0 %938
        %940 = vrot.lane.b32.xlu0 %v535, 56
        %v941 = vpop.permute.xlu0 %940
        %942 = vrot.lane.b32.xlu0 %v536, 56
        %v943 = vpop.permute.xlu0 %942
        %944 = vrot.lane.b32.xlu0 %v537, 56
        %v945 = vpop.permute.xlu0 %944
        %946 = vrot.lane.b32.xlu0 %v538, 56
        %v947 = vpop.permute.xlu0 %946
        %948 = vrot.lane.b32.xlu0 %v539, 56
        %v949 = vpop.permute.xlu0 %948
        %950 = vrot.lane.b32.xlu0 %v540, 56
        %v951 = vpop.permute.xlu0 %950
        %952 = vrot.lane.b32.xlu0 %v541, 56
        %v953 = vpop.permute.xlu0 %952
        %954 = vrot.lane.b32.xlu0 %v542, 56
        %v955 = vpop.permute.xlu0 %954
        %956 = vrot.lane.b32.xlu0 %v543, 56
        %v957 = vpop.permute.xlu0 %956
        %958 = vrot.lane.b32.xlu0 %v544, 56
        %v959 = vpop.permute.xlu0 %958
        %960 = vrot.lane.b32.xlu0 %v545, 56
        %v961 = vpop.permute.xlu0 %960
        %v978 = vcombine.low %v931, %v939
        %v979 = vcombine.high %v931, %v939
        %v981 = vunpack.c.l.s4 1983009808
        %v982 = vunpack.c.0.s8 %v981
        %v983 = vlaneseq
        %v984 = vshrl.u32 %v983, 7
        %v985 = vsub.s32 %v982, %v984
        %v986 = vrot.slane %v978, %v985
        %v988 = vunpack.c.l.s4 1983009808
        %v989 = vunpack.c.0.s8 %v988
        %v990 = vlaneseq
        %v991 = vshrl.u32 %v990, 7
        %v992 = vsub.s32 %v989, %v991
        %v993 = vrot.slane %v979, %v992
        %v994 = vcombine.low %v935, %v943
        %v995 = vcombine.high %v935, %v943
        %v997 = vunpack.c.l.s4 1983009808
        %v998 = vunpack.c.0.s8 %v997
        %v999 = vlaneseq
        %v1000 = vshrl.u32 %v999, 7
        %v1001 = vsub.s32 %v998, %v1000
        %v1002 = vrot.slane %v994, %v1001
        %v1004 = vunpack.c.l.s4 1983009808
        %v1005 = vunpack.c.0.s8 %v1004
        %v1006 = vlaneseq
        %v1007 = vshrl.u32 %v1006, 7
        %v1008 = vsub.s32 %v1005, %v1007
        %v1009 = vrot.slane %v995, %v1008
        %v1010 = vcombine.low %v947, %v955
        %v1011 = vcombine.high %v947, %v955
        %v1013 = vunpack.c.l.s4 1983009808
        %v1014 = vunpack.c.0.s8 %v1013
        %v1015 = vlaneseq
        %v1016 = vshrl.u32 %v1015, 7
        %v1017 = vsub.s32 %v1014, %v1016
        %v1018 = vrot.slane %v1010, %v1017
        %v1020 = vunpack.c.l.s4 1983009808
        %v1021 = vunpack.c.0.s8 %v1020
        %v1022 = vlaneseq
        %v1023 = vshrl.u32 %v1022, 7
        %v1024 = vsub.s32 %v1021, %v1023
        %v1025 = vrot.slane %v1011, %v1024
        %v1026 = vcombine.low %v951, %v959
        %v1027 = vcombine.high %v951, %v959
        %v1029 = vunpack.c.l.s4 1983009808
        %v1030 = vunpack.c.0.s8 %v1029
        %v1031 = vlaneseq
        %v1032 = vshrl.u32 %v1031, 7
        %v1033 = vsub.s32 %v1030, %v1032
        %v1034 = vrot.slane %v1026, %v1033
        %v1036 = vunpack.c.l.s4 1983009808
        %v1037 = vunpack.c.0.s8 %v1036
        %v1038 = vlaneseq
        %v1039 = vshrl.u32 %v1038, 7
        %v1040 = vsub.s32 %v1037, %v1039
        %v1041 = vrot.slane %v1027, %v1040
        %v1042 = vcombine.low %v986, %v1002
        %v1043 = vcombine.high %v986, %v1002
        %v1045 = vunpack.c.l.s4 1934713408
        %v1046 = vunpack.c.0.s8 %v1045
        %v1047 = vlaneseq
        %v1048 = vshrl.u32 %v1047, 7
        %v1049 = vsub.s32 %v1046, %v1048
        %v1050 = vrot.slane %v1042, %v1049
        %v1052 = vunpack.c.l.s4 1934713408
        %v1053 = vunpack.c.0.s8 %v1052
        %v1054 = vlaneseq
        %v1055 = vshrl.u32 %v1054, 7
        %v1056 = vsub.s32 %v1053, %v1055
        %v1057 = vrot.slane %v1043, %v1056
        %v1058 = vcombine.low %v993, %v1009
        %v1059 = vcombine.high %v993, %v1009
        %v1061 = vunpack.c.l.s4 1934713408
        %v1062 = vunpack.c.0.s8 %v1061
        %v1063 = vlaneseq
        %v1064 = vshrl.u32 %v1063, 7
        %v1065 = vsub.s32 %v1062, %v1064
        %v1066 = vrot.slane %v1058, %v1065
        %v1068 = vunpack.c.l.s4 1934713408
        %v1069 = vunpack.c.0.s8 %v1068
        %v1070 = vlaneseq
        %v1071 = vshrl.u32 %v1070, 7
        %v1072 = vsub.s32 %v1069, %v1071
        %v1073 = vrot.slane %v1059, %v1072
        %v1074 = vcombine.low %v1018, %v1034
        %v1075 = vcombine.high %v1018, %v1034
        %v1077 = vunpack.c.l.s4 1934713408
        %v1078 = vunpack.c.0.s8 %v1077
        %v1079 = vlaneseq
        %v1080 = vshrl.u32 %v1079, 7
        %v1081 = vsub.s32 %v1078, %v1080
        %v1082 = vrot.slane %v1074, %v1081
        %v1084 = vunpack.c.l.s4 1934713408
        %v1085 = vunpack.c.0.s8 %v1084
        %v1086 = vlaneseq
        %v1087 = vshrl.u32 %v1086, 7
        %v1088 = vsub.s32 %v1085, %v1087
        %v1089 = vrot.slane %v1075, %v1088
        %v1090 = vcombine.low %v1025, %v1041
        %v1091 = vcombine.high %v1025, %v1041
        %v1093 = vunpack.c.l.s4 1934713408
        %v1094 = vunpack.c.0.s8 %v1093
        %v1095 = vlaneseq
        %v1096 = vshrl.u32 %v1095, 7
        %v1097 = vsub.s32 %v1094, %v1096
        %v1098 = vrot.slane %v1090, %v1097
        %v1100 = vunpack.c.l.s4 1934713408
        %v1101 = vunpack.c.0.s8 %v1100
        %v1102 = vlaneseq
        %v1103 = vshrl.u32 %v1102, 7
        %v1104 = vsub.s32 %v1101, %v1103
        %v1105 = vrot.slane %v1091, %v1104
        %v1106 = vcombine.low %v1050, %v1082
        %v1107 = vcombine.high %v1050, %v1082
        %v1108 = vcombine.low %v1057, %v1089
        %v1109 = vcombine.high %v1057, %v1089
        %v1110 = vcombine.low %v1066, %v1098
        %v1111 = vcombine.high %v1066, %v1098
        %v1112 = vcombine.low %v1073, %v1105
        %v1113 = vcombine.high %v1073, %v1105
        %v1114 = vcombine.low %v933, %v941
        %v1115 = vcombine.high %v933, %v941
        %v1117 = vunpack.c.l.s4 1983009808
        %v1118 = vunpack.c.0.s8 %v1117
        %v1119 = vlaneseq
        %v1120 = vshrl.u32 %v1119, 7
        %v1121 = vsub.s32 %v1118, %v1120
        %v1122 = vrot.slane %v1114, %v1121
        %v1124 = vunpack.c.l.s4 1983009808
        %v1125 = vunpack.c.0.s8 %v1124
        %v1126 = vlaneseq
        %v1127 = vshrl.u32 %v1126, 7
        %v1128 = vsub.s32 %v1125, %v1127
        %v1129 = vrot.slane %v1115, %v1128
        %v1130 = vcombine.low %v937, %v945
        %v1131 = vcombine.high %v937, %v945
        %v1133 = vunpack.c.l.s4 1983009808
        %v1134 = vunpack.c.0.s8 %v1133
        %v1135 = vlaneseq
        %v1136 = vshrl.u32 %v1135, 7
        %v1137 = vsub.s32 %v1134, %v1136
        %v1138 = vrot.slane %v1130, %v1137
        %v1140 = vunpack.c.l.s4 1983009808
        %v1141 = vunpack.c.0.s8 %v1140
        %v1142 = vlaneseq
        %v1143 = vshrl.u32 %v1142, 7
        %v1144 = vsub.s32 %v1141, %v1143
        %v1145 = vrot.slane %v1131, %v1144
        %v1146 = vcombine.low %v949, %v957
        %v1147 = vcombine.high %v949, %v957
        %v1149 = vunpack.c.l.s4 1983009808
        %v1150 = vunpack.c.0.s8 %v1149
        %v1151 = vlaneseq
        %v1152 = vshrl.u32 %v1151, 7
        %v1153 = vsub.s32 %v1150, %v1152
        %v1154 = vrot.slane %v1146, %v1153
        %v1156 = vunpack.c.l.s4 1983009808
        %v1157 = vunpack.c.0.s8 %v1156
        %v1158 = vlaneseq
        %v1159 = vshrl.u32 %v1158, 7
        %v1160 = vsub.s32 %v1157, %v1159
        %v1161 = vrot.slane %v1147, %v1160
        %v1162 = vcombine.low %v953, %v961
        %v1163 = vcombine.high %v953, %v961
        %v1165 = vunpack.c.l.s4 1983009808
        %v1166 = vunpack.c.0.s8 %v1165
        %v1167 = vlaneseq
        %v1168 = vshrl.u32 %v1167, 7
        %v1169 = vsub.s32 %v1166, %v1168
        %v1170 = vrot.slane %v1162, %v1169
        %v1172 = vunpack.c.l.s4 1983009808
        %v1173 = vunpack.c.0.s8 %v1172
        %v1174 = vlaneseq
        %v1175 = vshrl.u32 %v1174, 7
        %v1176 = vsub.s32 %v1173, %v1175
        %v1177 = vrot.slane %v1163, %v1176
        %v1178 = vcombine.low %v1122, %v1138
        %v1179 = vcombine.high %v1122, %v1138
        %v1181 = vunpack.c.l.s4 1934713408
        %v1182 = vunpack.c.0.s8 %v1181
        %v1183 = vlaneseq
        %v1184 = vshrl.u32 %v1183, 7
        %v1185 = vsub.s32 %v1182, %v1184
        %v1186 = vrot.slane %v1178, %v1185
        %v1188 = vunpack.c.l.s4 1934713408
        %v1189 = vunpack.c.0.s8 %v1188
        %v1190 = vlaneseq
        %v1191 = vshrl.u32 %v1190, 7
        %v1192 = vsub.s32 %v1189, %v1191
        %v1193 = vrot.slane %v1179, %v1192
        %v1194 = vcombine.low %v1129, %v1145
        %v1195 = vcombine.high %v1129, %v1145
        %v1197 = vunpack.c.l.s4 1934713408
        %v1198 = vunpack.c.0.s8 %v1197
        %v1199 = vlaneseq
        %v1200 = vshrl.u32 %v1199, 7
        %v1201 = vsub.s32 %v1198, %v1200
        %v1202 = vrot.slane %v1194, %v1201
        %v1204 = vunpack.c.l.s4 1934713408
        %v1205 = vunpack.c.0.s8 %v1204
        %v1206 = vlaneseq
        %v1207 = vshrl.u32 %v1206, 7
        %v1208 = vsub.s32 %v1205, %v1207
        %v1209 = vrot.slane %v1195, %v1208
        %v1210 = vcombine.low %v1154, %v1170
        %v1211 = vcombine.high %v1154, %v1170
        %v1213 = vunpack.c.l.s4 1934713408
        %v1214 = vunpack.c.0.s8 %v1213
        %v1215 = vlaneseq
        %v1216 = vshrl.u32 %v1215, 7
        %v1217 = vsub.s32 %v1214, %v1216
        %v1218 = vrot.slane %v1210, %v1217
        %v1220 = vunpack.c.l.s4 1934713408
        %v1221 = vunpack.c.0.s8 %v1220
        %v1222 = vlaneseq
        %v1223 = vshrl.u32 %v1222, 7
        %v1224 = vsub.s32 %v1221, %v1223
        %v1225 = vrot.slane %v1211, %v1224
        %v1226 = vcombine.low %v1161, %v1177
        %v1227 = vcombine.high %v1161, %v1177
        %v1229 = vunpack.c.l.s4 1934713408
        %v1230 = vunpack.c.0.s8 %v1229
        %v1231 = vlaneseq
        %v1232 = vshrl.u32 %v1231, 7
        %v1233 = vsub.s32 %v1230, %v1232
        %v1234 = vrot.slane %v1226, %v1233
        %v1236 = vunpack.c.l.s4 1934713408
        %v1237 = vunpack.c.0.s8 %v1236
        %v1238 = vlaneseq
        %v1239 = vshrl.u32 %v1238, 7
        %v1240 = vsub.s32 %v1237, %v1239
        %v1241 = vrot.slane %v1227, %v1240
        %v1242 = vcombine.low %v1186, %v1218
        %v1243 = vcombine.high %v1186, %v1218
        %v1244 = vcombine.low %v1193, %v1225
        %v1245 = vcombine.high %v1193, %v1225
        %v1246 = vcombine.low %v1202, %v1234
        %v1247 = vcombine.high %v1202, %v1234
        %v1248 = vcombine.low %v1209, %v1241
        %v1249 = vcombine.high %v1209, %v1241
        %v1252 = vpack.i.b16 %v1242, %v1106
        %v1253 = vshrl.u32 %v1106, 16
        %v1254 = vshrl.u32 %v1242, 16
        %v1255 = vpack.i.b16 %v1254, %v1253
        %v1258 = vpack.i.b16 %v1243, %v1107
        %v1259 = vshrl.u32 %v1107, 16
        %v1260 = vshrl.u32 %v1243, 16
        %v1261 = vpack.i.b16 %v1260, %v1259
        %v1264 = vpack.i.b16 %v1244, %v1108
        %v1265 = vshrl.u32 %v1108, 16
        %v1266 = vshrl.u32 %v1244, 16
        %v1267 = vpack.i.b16 %v1266, %v1265
        %v1270 = vpack.i.b16 %v1245, %v1109
        %v1271 = vshrl.u32 %v1109, 16
        %v1272 = vshrl.u32 %v1245, 16
        %v1273 = vpack.i.b16 %v1272, %v1271
        %v1276 = vpack.i.b16 %v1246, %v1110
        %v1277 = vshrl.u32 %v1110, 16
        %v1278 = vshrl.u32 %v1246, 16
        %v1279 = vpack.i.b16 %v1278, %v1277
        %v1282 = vpack.i.b16 %v1247, %v1111
        %v1283 = vshrl.u32 %v1111, 16
        %v1284 = vshrl.u32 %v1247, 16
        %v1285 = vpack.i.b16 %v1284, %v1283
        %v1288 = vpack.i.b16 %v1248, %v1112
        %v1289 = vshrl.u32 %v1112, 16
        %v1290 = vshrl.u32 %v1248, 16
        %v1291 = vpack.i.b16 %v1290, %v1289
        %v1294 = vpack.i.b16 %v1249, %v1113
        %v1295 = vshrl.u32 %v1113, 16
        %v1296 = vshrl.u32 %v1249, 16
        %v1297 = vpack.i.b16 %v1296, %v1295
        %v1298 = vcombine.low %v530, %v534
        %v1299 = vcombine.high %v530, %v534
        %v1301 = vunpack.c.l.s4 1983009808
        %v1302 = vunpack.c.0.s8 %v1301
        %v1303 = vlaneseq
        %v1304 = vshrl.u32 %v1303, 7
        %v1305 = vsub.s32 %v1302, %v1304
        %v1306 = vrot.slane %v1298, %v1305
        %v1308 = vunpack.c.l.s4 1983009808
        %v1309 = vunpack.c.0.s8 %v1308
        %v1310 = vlaneseq
        %v1311 = vshrl.u32 %v1310, 7
        %v1312 = vsub.s32 %v1309, %v1311
        %v1313 = vrot.slane %v1299, %v1312
        %v1314 = vcombine.low %v532, %v536
        %v1315 = vcombine.high %v532, %v536
        %v1317 = vunpack.c.l.s4 1983009808
        %v1318 = vunpack.c.0.s8 %v1317
        %v1319 = vlaneseq
        %v1320 = vshrl.u32 %v1319, 7
        %v1321 = vsub.s32 %v1318, %v1320
        %v1322 = vrot.slane %v1314, %v1321
        %v1324 = vunpack.c.l.s4 1983009808
        %v1325 = vunpack.c.0.s8 %v1324
        %v1326 = vlaneseq
        %v1327 = vshrl.u32 %v1326, 7
        %v1328 = vsub.s32 %v1325, %v1327
        %v1329 = vrot.slane %v1315, %v1328
        %v1330 = vcombine.low %v538, %v542
        %v1331 = vcombine.high %v538, %v542
        %v1333 = vunpack.c.l.s4 1983009808
        %v1334 = vunpack.c.0.s8 %v1333
        %v1335 = vlaneseq
        %v1336 = vshrl.u32 %v1335, 7
        %v1337 = vsub.s32 %v1334, %v1336
        %v1338 = vrot.slane %v1330, %v1337
        %v1340 = vunpack.c.l.s4 1983009808
        %v1341 = vunpack.c.0.s8 %v1340
        %v1342 = vlaneseq
        %v1343 = vshrl.u32 %v1342, 7
        %v1344 = vsub.s32 %v1341, %v1343
        %v1345 = vrot.slane %v1331, %v1344
        %v1346 = vcombine.low %v540, %v544
        %v1347 = vcombine.high %v540, %v544
        %v1349 = vunpack.c.l.s4 1983009808
        %v1350 = vunpack.c.0.s8 %v1349
        %v1351 = vlaneseq
        %v1352 = vshrl.u32 %v1351, 7
        %v1353 = vsub.s32 %v1350, %v1352
        %v1354 = vrot.slane %v1346, %v1353
        %v1356 = vunpack.c.l.s4 1983009808
        %v1357 = vunpack.c.0.s8 %v1356
        %v1358 = vlaneseq
        %v1359 = vshrl.u32 %v1358, 7
        %v1360 = vsub.s32 %v1357, %v1359
        %v1361 = vrot.slane %v1347, %v1360
        %v1362 = vcombine.low %v1306, %v1322
        %v1363 = vcombine.high %v1306, %v1322
        %v1365 = vunpack.c.l.s4 1934713408
        %v1366 = vunpack.c.0.s8 %v1365
        %v1367 = vlaneseq
        %v1368 = vshrl.u32 %v1367, 7
        %v1369 = vsub.s32 %v1366, %v1368
        %v1370 = vrot.slane %v1362, %v1369
        %v1372 = vunpack.c.l.s4 1934713408
        %v1373 = vunpack.c.0.s8 %v1372
        %v1374 = vlaneseq
        %v1375 = vshrl.u32 %v1374, 7
        %v1376 = vsub.s32 %v1373, %v1375
        %v1377 = vrot.slane %v1363, %v1376
        %v1378 = vcombine.low %v1313, %v1329
        %v1379 = vcombine.high %v1313, %v1329
        %v1381 = vunpack.c.l.s4 1934713408
        %v1382 = vunpack.c.0.s8 %v1381
        %v1383 = vlaneseq
        %v1384 = vshrl.u32 %v1383, 7
        %v1385 = vsub.s32 %v1382, %v1384
        %v1386 = vrot.slane %v1378, %v1385
        %v1388 = vunpack.c.l.s4 1934713408
        %v1389 = vunpack.c.0.s8 %v1388
        %v1390 = vlaneseq
        %v1391 = vshrl.u32 %v1390, 7
        %v1392 = vsub.s32 %v1389, %v1391
        %v1393 = vrot.slane %v1379, %v1392
        %v1394 = vcombine.low %v1338, %v1354
        %v1395 = vcombine.high %v1338, %v1354
        %v1397 = vunpack.c.l.s4 1934713408
        %v1398 = vunpack.c.0.s8 %v1397
        %v1399 = vlaneseq
        %v1400 = vshrl.u32 %v1399, 7
        %v1401 = vsub.s32 %v1398, %v1400
        %v1402 = vrot.slane %v1394, %v1401
        %v1404 = vunpack.c.l.s4 1934713408
        %v1405 = vunpack.c.0.s8 %v1404
        %v1406 = vlaneseq
        %v1407 = vshrl.u32 %v1406, 7
        %v1408 = vsub.s32 %v1405, %v1407
        %v1409 = vrot.slane %v1395, %v1408
        %v1410 = vcombine.low %v1345, %v1361
        %v1411 = vcombine.high %v1345, %v1361
        %v1413 = vunpack.c.l.s4 1934713408
        %v1414 = vunpack.c.0.s8 %v1413
        %v1415 = vlaneseq
        %v1416 = vshrl.u32 %v1415, 7
        %v1417 = vsub.s32 %v1414, %v1416
        %v1418 = vrot.slane %v1410, %v1417
        %v1420 = vunpack.c.l.s4 1934713408
        %v1421 = vunpack.c.0.s8 %v1420
        %v1422 = vlaneseq
        %v1423 = vshrl.u32 %v1422, 7
        %v1424 = vsub.s32 %v1421, %v1423
        %v1425 = vrot.slane %v1411, %v1424
        %v1426 = vcombine.low %v1370, %v1402
        %v1427 = vcombine.high %v1370, %v1402
        %v1428 = vcombine.low %v1377, %v1409
        %v1429 = vcombine.high %v1377, %v1409
        %v1430 = vcombine.low %v1386, %v1418
        %v1431 = vcombine.high %v1386, %v1418
        %v1432 = vcombine.low %v1393, %v1425
        %v1433 = vcombine.high %v1393, %v1425
        %v1434 = vcombine.low %v531, %v535
        %v1435 = vcombine.high %v531, %v535
        %v1437 = vunpack.c.l.s4 1983009808
        %v1438 = vunpack.c.0.s8 %v1437
        %v1439 = vlaneseq
        %v1440 = vshrl.u32 %v1439, 7
        %v1441 = vsub.s32 %v1438, %v1440
        %v1442 = vrot.slane %v1434, %v1441
        %v1444 = vunpack.c.l.s4 1983009808
        %v1445 = vunpack.c.0.s8 %v1444
        %v1446 = vlaneseq
        %v1447 = vshrl.u32 %v1446, 7
        %v1448 = vsub.s32 %v1445, %v1447
        %v1449 = vrot.slane %v1435, %v1448
        %v1450 = vcombine.low %v533, %v537
        %v1451 = vcombine.high %v533, %v537
        %v1453 = vunpack.c.l.s4 1983009808
        %v1454 = vunpack.c.0.s8 %v1453
        %v1455 = vlaneseq
        %v1456 = vshrl.u32 %v1455, 7
        %v1457 = vsub.s32 %v1454, %v1456
        %v1458 = vrot.slane %v1450, %v1457
        %v1460 = vunpack.c.l.s4 1983009808
        %v1461 = vunpack.c.0.s8 %v1460
        %v1462 = vlaneseq
        %v1463 = vshrl.u32 %v1462, 7
        %v1464 = vsub.s32 %v1461, %v1463
        %v1465 = vrot.slane %v1451, %v1464
        %v1466 = vcombine.low %v539, %v543
        %v1467 = vcombine.high %v539, %v543
        %v1469 = vunpack.c.l.s4 1983009808
        %v1470 = vunpack.c.0.s8 %v1469
        %v1471 = vlaneseq
        %v1472 = vshrl.u32 %v1471, 7
        %v1473 = vsub.s32 %v1470, %v1472
        %v1474 = vrot.slane %v1466, %v1473
        %v1476 = vunpack.c.l.s4 1983009808
        %v1477 = vunpack.c.0.s8 %v1476
        %v1478 = vlaneseq
        %v1479 = vshrl.u32 %v1478, 7
        %v1480 = vsub.s32 %v1477, %v1479
        %v1481 = vrot.slane %v1467, %v1480
        %v1482 = vcombine.low %v541, %v545
        %v1483 = vcombine.high %v541, %v545
        %v1485 = vunpack.c.l.s4 1983009808
        %v1486 = vunpack.c.0.s8 %v1485
        %v1487 = vlaneseq
        %v1488 = vshrl.u32 %v1487, 7
        %v1489 = vsub.s32 %v1486, %v1488
        %v1490 = vrot.slane %v1482, %v1489
        %v1492 = vunpack.c.l.s4 1983009808
        %v1493 = vunpack.c.0.s8 %v1492
        %v1494 = vlaneseq
        %v1495 = vshrl.u32 %v1494, 7
        %v1496 = vsub.s32 %v1493, %v1495
        %v1497 = vrot.slane %v1483, %v1496
        %v1498 = vcombine.low %v1442, %v1458
        %v1499 = vcombine.high %v1442, %v1458
        %v1501 = vunpack.c.l.s4 1934713408
        %v1502 = vunpack.c.0.s8 %v1501
        %v1503 = vlaneseq
        %v1504 = vshrl.u32 %v1503, 7
        %v1505 = vsub.s32 %v1502, %v1504
        %v1506 = vrot.slane %v1498, %v1505
        %v1508 = vunpack.c.l.s4 1934713408
        %v1509 = vunpack.c.0.s8 %v1508
        %v1510 = vlaneseq
        %v1511 = vshrl.u32 %v1510, 7
        %v1512 = vsub.s32 %v1509, %v1511
        %v1513 = vrot.slane %v1499, %v1512
        %v1514 = vcombine.low %v1449, %v1465
        %v1515 = vcombine.high %v1449, %v1465
        %v1517 = vunpack.c.l.s4 1934713408
        %v1518 = vunpack.c.0.s8 %v1517
        %v1519 = vlaneseq
        %v1520 = vshrl.u32 %v1519, 7
        %v1521 = vsub.s32 %v1518, %v1520
        %v1522 = vrot.slane %v1514, %v1521
        %v1524 = vunpack.c.l.s4 1934713408
        %v1525 = vunpack.c.0.s8 %v1524
        %v1526 = vlaneseq
        %v1527 = vshrl.u32 %v1526, 7
        %v1528 = vsub.s32 %v1525, %v1527
        %v1529 = vrot.slane %v1515, %v1528
        %v1530 = vcombine.low %v1474, %v1490
        %v1531 = vcombine.high %v1474, %v1490
        %v1533 = vunpack.c.l.s4 1934713408
        %v1534 = vunpack.c.0.s8 %v1533
        %v1535 = vlaneseq
        %v1536 = vshrl.u32 %v1535, 7
        %v1537 = vsub.s32 %v1534, %v1536
        %v1538 = vrot.slane %v1530, %v1537
        %v1540 = vunpack.c.l.s4 1934713408
        %v1541 = vunpack.c.0.s8 %v1540
        %v1542 = vlaneseq
        %v1543 = vshrl.u32 %v1542, 7
        %v1544 = vsub.s32 %v1541, %v1543
        %v1545 = vrot.slane %v1531, %v1544
        %v1546 = vcombine.low %v1481, %v1497
        %v1547 = vcombine.high %v1481, %v1497
        %v1549 = vunpack.c.l.s4 1934713408
        %v1550 = vunpack.c.0.s8 %v1549
        %v1551 = vlaneseq
        %v1552 = vshrl.u32 %v1551, 7
        %v1553 = vsub.s32 %v1550, %v1552
        %v1554 = vrot.slane %v1546, %v1553
        %v1556 = vunpack.c.l.s4 1934713408
        %v1557 = vunpack.c.0.s8 %v1556
        %v1558 = vlaneseq
        %v1559 = vshrl.u32 %v1558, 7
        %v1560 = vsub.s32 %v1557, %v1559
        %v1561 = vrot.slane %v1547, %v1560
        %v1562 = vcombine.low %v1506, %v1538
        %v1563 = vcombine.high %v1506, %v1538
        %v1564 = vcombine.low %v1513, %v1545
        %v1565 = vcombine.high %v1513, %v1545
        %v1566 = vcombine.low %v1522, %v1554
        %v1567 = vcombine.high %v1522, %v1554
        %v1568 = vcombine.low %v1529, %v1561
        %v1569 = vcombine.high %v1529, %v1561
        %v1572 = vpack.i.b16 %v1562, %v1426
        %v1574 = vshrl.u32 %v1426, 16
        %v1575 = vshrl.u32 %v1562, 16
        %v1576 = vpack.i.b16 %v1575, %v1574
        %v1580 = vpack.i.b16 %v1563, %v1427
        %v1582 = vshrl.u32 %v1427, 16
        %v1583 = vshrl.u32 %v1563, 16
        %v1584 = vpack.i.b16 %v1583, %v1582
        %v1588 = vpack.i.b16 %v1564, %v1428
        %v1590 = vshrl.u32 %v1428, 16
        %v1591 = vshrl.u32 %v1564, 16
        %v1592 = vpack.i.b16 %v1591, %v1590
        %v1596 = vpack.i.b16 %v1565, %v1429
        %v1598 = vshrl.u32 %v1429, 16
        %v1599 = vshrl.u32 %v1565, 16
        %v1600 = vpack.i.b16 %v1599, %v1598
        %v1604 = vpack.i.b16 %v1566, %v1430
        %v1606 = vshrl.u32 %v1430, 16
        %v1607 = vshrl.u32 %v1566, 16
        %v1608 = vpack.i.b16 %v1607, %v1606
        %v1612 = vpack.i.b16 %v1567, %v1431
        %v1614 = vshrl.u32 %v1431, 16
        %v1615 = vshrl.u32 %v1567, 16
        %v1616 = vpack.i.b16 %v1615, %v1614
        %v1620 = vpack.i.b16 %v1568, %v1432
        %v1622 = vshrl.u32 %v1432, 16
        %v1623 = vshrl.u32 %v1568, 16
        %v1624 = vpack.i.b16 %v1623, %v1622
        %v1628 = vpack.i.b16 %v1569, %v1433
        %v1630 = vshrl.u32 %v1433, 16
        %v1631 = vshrl.u32 %v1569, 16
        %v1632 = vpack.i.b16 %v1631, %v1630
        %vm1634 = vcmask 64512
        %v1636 = vsel %vm1634, %v884, 0
        %v1639 = vsel %vm1634, %v1252, 0
        %1641 = vmatprep.subr.bf16.mxu0 0
        %1642 = vmatpush1.bf16.xpose.msra.mxu0 0
        %1643 = vmatprep.subr.bf16.mxu0 0
        %1644 = vmatpush1.bf16.xpose.msra.mxu0 0
        %1645 = vmatprep.subr.bf16.mxu0 0
        %1646 = vmatpush1.bf16.xpose.msra.mxu0 0
        %1647 = vmatprep.subr.bf16.mxu0 0
        %1648 = vmatpush1.bf16.xpose.msra.mxu0 0
        %1649 = vmatprep.subr.bf16.mxu0 0
        %1650 = vmatpush1.bf16.xpose.msra.mxu0 0
        %1651 = vmatprep.subr.bf16.mxu0 0
        %1652 = vmatpush1.bf16.xpose.msra.mxu0 0
        %1653 = vmatprep.subr.bf16.mxu0 0
        %1654 = vmatpush1.bf16.xpose.msra.mxu0 0
        %1655 = vmatprep.subr.bf16.mxu0 0
        %1656 = vmatpush1.bf16.xpose.msra.mxu0 %v1639
        %1657 = vmatprep.subr.bf16.mxu0 0
        %1658 = vmatpush2.bf16.xpose.msra.mxu0 0
        %1659 = vmatprep.subr.bf16.mxu0 0
        %1660 = vmatpush2.bf16.xpose.msra.mxu0 0
        %1661 = vmatprep.subr.bf16.mxu0 0
        %1662 = vmatpush2.bf16.xpose.msra.mxu0 0
        %1663 = vmatprep.subr.bf16.mxu0 0
        %1664 = vmatpush2.bf16.xpose.msra.mxu0 0
        %1665 = vmatprep.subr.bf16.mxu0 0
        %1666 = vmatpush2.bf16.xpose.msra.mxu0 0
        %1667 = vmatprep.subr.bf16.mxu0 0
        %1668 = vmatpush2.bf16.xpose.msra.mxu0 0
        %1669 = vmatprep.subr.bf16.mxu0 0
        %1670 = vmatpush2.bf16.xpose.msra.mxu0 0
        %1671 = vmatprep.subr.bf16.mxu0 0
        %1672 = vmatpush2.bf16.xpose.msra.mxu0 0
        %1673 = vmatprep.mubr.bf16.mxu0 0
        %1674 = vmatmul.mubr.bf16.gmra.mxu0 %v1636
        %v1675 = vpop.f32.mrf.mxu0
        %v1676 = vadd.f32 0.0, %v1675
        %v1677 = vpop.f32.mrf.mxu0
        %v1678 = vpop.f32.mrf.mxu0
        %v1679 = vadd.f32 0.0, %v1678
        %v1680 = vpop.f32.mrf.mxu0
        %1681 = vdwg.mxu0
        %v1683 = vsel %vm1634, %v887, 0
        %v1686 = vsel %vm1634, %v1255, 0
        %1688 = vmatprep.subr.bf16.mxu0 0
        %1689 = vmatpush1.bf16.xpose.msra.mxu0 0
        %1690 = vmatprep.subr.bf16.mxu0 0
        %1691 = vmatpush1.bf16.xpose.msra.mxu0 0
        %1692 = vmatprep.subr.bf16.mxu0 0
        %1693 = vmatpush1.bf16.xpose.msra.mxu0 0
        %1694 = vmatprep.subr.bf16.mxu0 0
        %1695 = vmatpush1.bf16.xpose.msra.mxu0 0
        %1696 = vmatprep.subr.bf16.mxu0 0
        %1697 = vmatpush1.bf16.xpose.msra.mxu0 0
        %1698 = vmatprep.subr.bf16.mxu0 0
        %1699 = vmatpush1.bf16.xpose.msra.mxu0 0
        %1700 = vmatprep.subr.bf16.mxu0 0
        %1701 = vmatpush1.bf16.xpose.msra.mxu0 0
        %1702 = vmatprep.subr.bf16.mxu0 0
        %1703 = vmatpush1.bf16.xpose.msra.mxu0 %v1686
        %1704 = vmatprep.subr.bf16.mxu0 0
        %1705 = vmatpush2.bf16.xpose.msra.mxu0 0
        %1706 = vmatprep.subr.bf16.mxu0 0
        %1707 = vmatpush2.bf16.xpose.msra.mxu0 0
        %1708 = vmatprep.subr.bf16.mxu0 0
        %1709 = vmatpush2.bf16.xpose.msra.mxu0 0
        %1710 = vmatprep.subr.bf16.mxu0 0
        %1711 = vmatpush2.bf16.xpose.msra.mxu0 0
        %1712 = vmatprep.subr.bf16.mxu0 0
        %1713 = vmatpush2.bf16.xpose.msra.mxu0 0
        %1714 = vmatprep.subr.bf16.mxu0 0
        %1715 = vmatpush2.bf16.xpose.msra.mxu0 0
        %1716 = vmatprep.subr.bf16.mxu0 0
        %1717 = vmatpush2.bf16.xpose.msra.mxu0 0
        %1718 = vmatprep.subr.bf16.mxu0 0
        %1719 = vmatpush2.bf16.xpose.msra.mxu0 0
        %1720 = vmatprep.mubr.bf16.mxu0 0
        %1721 = vmatmul.mubr.bf16.gmra.mxu0 %v1683
        %v1722 = vpop.f32.mrf.mxu0
        %v1723 = vadd.f32 0.0, %v1722
        %v1724 = vpop.f32.mrf.mxu0
        %v1725 = vpop.f32.mrf.mxu0
        %v1726 = vadd.f32 0.0, %v1725
        %v1727 = vpop.f32.mrf.mxu0
        %1728 = vdwg.mxu0
        %v1730 = vsel %vm1634, %v890, 0
        %v1733 = vsel %vm1634, %v1258, 0
        %1735 = vmatprep.subr.bf16.mxu0 0
        %1736 = vmatpush1.bf16.xpose.msra.mxu0 0
        %1737 = vmatprep.subr.bf16.mxu0 0
        %1738 = vmatpush1.bf16.xpose.msra.mxu0 0
        %1739 = vmatprep.subr.bf16.mxu0 0
        %1740 = vmatpush1.bf16.xpose.msra.mxu0 0
        %1741 = vmatprep.subr.bf16.mxu0 0
        %1742 = vmatpush1.bf16.xpose.msra.mxu0 0
        %1743 = vmatprep.subr.bf16.mxu0 0
        %1744 = vmatpush1.bf16.xpose.msra.mxu0 0
        %1745 = vmatprep.subr.bf16.mxu0 0
        %1746 = vmatpush1.bf16.xpose.msra.mxu0 0
        %1747 = vmatprep.subr.bf16.mxu0 0
        %1748 = vmatpush1.bf16.xpose.msra.mxu0 0
        %1749 = vmatprep.subr.bf16.mxu0 0
        %1750 = vmatpush1.bf16.xpose.msra.mxu0 %v1733
        %1751 = vmatprep.subr.bf16.mxu0 0
        %1752 = vmatpush2.bf16.xpose.msra.mxu0 0
        %1753 = vmatprep.subr.bf16.mxu0 0
        %1754 = vmatpush2.bf16.xpose.msra.mxu0 0
        %1755 = vmatprep.subr.bf16.mxu0 0
        %1756 = vmatpush2.bf16.xpose.msra.mxu0 0
        %1757 = vmatprep.subr.bf16.mxu0 0
        %1758 = vmatpush2.bf16.xpose.msra.mxu0 0
        %1759 = vmatprep.subr.bf16.mxu0 0
        %1760 = vmatpush2.bf16.xpose.msra.mxu0 0
        %1761 = vmatprep.subr.bf16.mxu0 0
        %1762 = vmatpush2.bf16.xpose.msra.mxu0 0
        %1763 = vmatprep.subr.bf16.mxu0 0
        %1764 = vmatpush2.bf16.xpose.msra.mxu0 0
        %1765 = vmatprep.subr.bf16.mxu0 0
        %1766 = vmatpush2.bf16.xpose.msra.mxu0 0
        %1767 = vmatprep.mubr.bf16.mxu0 0
        %1768 = vmatmul.mubr.bf16.gmra.mxu0 %v1730
        %v1769 = vpop.f32.mrf.mxu0
        %v1770 = vadd.f32 0.0, %v1769
        %v1771 = vpop.f32.mrf.mxu0
        %v1772 = vpop.f32.mrf.mxu0
        %v1773 = vadd.f32 0.0, %v1772
        %v1774 = vpop.f32.mrf.mxu0
        %1775 = vdwg.mxu0
        %v1777 = vsel %vm1634, %v893, 0
        %v1780 = vsel %vm1634, %v1261, 0
        %1782 = vmatprep.subr.bf16.mxu0 0
        %1783 = vmatpush1.bf16.xpose.msra.mxu0 0
        %1784 = vmatprep.subr.bf16.mxu0 0
        %1785 = vmatpush1.bf16.xpose.msra.mxu0 0
        %1786 = vmatprep.subr.bf16.mxu0 0
        %1787 = vmatpush1.bf16.xpose.msra.mxu0 0
        %1788 = vmatprep.subr.bf16.mxu0 0
        %1789 = vmatpush1.bf16.xpose.msra.mxu0 0
        %1790 = vmatprep.subr.bf16.mxu0 0
        %1791 = vmatpush1.bf16.xpose.msra.mxu0 0
        %1792 = vmatprep.subr.bf16.mxu0 0
        %1793 = vmatpush1.bf16.xpose.msra.mxu0 0
        %1794 = vmatprep.subr.bf16.mxu0 0
        %1795 = vmatpush1.bf16.xpose.msra.mxu0 0
        %1796 = vmatprep.subr.bf16.mxu0 0
        %1797 = vmatpush1.bf16.xpose.msra.mxu0 %v1780
        %1798 = vmatprep.subr.bf16.mxu0 0
        %1799 = vmatpush2.bf16.xpose.msra.mxu0 0
        %1800 = vmatprep.subr.bf16.mxu0 0
        %1801 = vmatpush2.bf16.xpose.msra.mxu0 0
        %1802 = vmatprep.subr.bf16.mxu0 0
        %1803 = vmatpush2.bf16.xpose.msra.mxu0 0
        %1804 = vmatprep.subr.bf16.mxu0 0
        %1805 = vmatpush2.bf16.xpose.msra.mxu0 0
        %1806 = vmatprep.subr.bf16.mxu0 0
        %1807 = vmatpush2.bf16.xpose.msra.mxu0 0
        %1808 = vmatprep.subr.bf16.mxu0 0
        %1809 = vmatpush2.bf16.xpose.msra.mxu0 0
        %1810 = vmatprep.subr.bf16.mxu0 0
        %1811 = vmatpush2.bf16.xpose.msra.mxu0 0
        %1812 = vmatprep.subr.bf16.mxu0 0
        %1813 = vmatpush2.bf16.xpose.msra.mxu0 0
        %1814 = vmatprep.mubr.bf16.mxu0 0
        %1815 = vmatmul.mubr.bf16.gmra.mxu0 %v1777
        %v1816 = vpop.f32.mrf.mxu0
        %v1817 = vadd.f32 0.0, %v1816
        %v1818 = vpop.f32.mrf.mxu0
        %v1819 = vpop.f32.mrf.mxu0
        %v1820 = vadd.f32 0.0, %v1819
        %v1821 = vpop.f32.mrf.mxu0
        %1822 = vdwg.mxu0
        %v1824 = vsel %vm1634, %v896, 0
        %v1827 = vsel %vm1634, %v1264, 0
        %1829 = vmatprep.subr.bf16.mxu0 0
        %1830 = vmatpush1.bf16.xpose.msra.mxu0 0
        %1831 = vmatprep.subr.bf16.mxu0 0
        %1832 = vmatpush1.bf16.xpose.msra.mxu0 0
        %1833 = vmatprep.subr.bf16.mxu0 0
        %1834 = vmatpush1.bf16.xpose.msra.mxu0 0
        %1835 = vmatprep.subr.bf16.mxu0 0
        %1836 = vmatpush1.bf16.xpose.msra.mxu0 0
        %1837 = vmatprep.subr.bf16.mxu0 0
        %1838 = vmatpush1.bf16.xpose.msra.mxu0 0
        %1839 = vmatprep.subr.bf16.mxu0 0
        %1840 = vmatpush1.bf16.xpose.msra.mxu0 0
        %1841 = vmatprep.subr.bf16.mxu0 0
        %1842 = vmatpush1.bf16.xpose.msra.mxu0 0
        %1843 = vmatprep.subr.bf16.mxu0 0
        %1844 = vmatpush1.bf16.xpose.msra.mxu0 %v1827
        %1845 = vmatprep.subr.bf16.mxu0 0
        %1846 = vmatpush2.bf16.xpose.msra.mxu0 0
        %1847 = vmatprep.subr.bf16.mxu0 0
        %1848 = vmatpush2.bf16.xpose.msra.mxu0 0
        %1849 = vmatprep.subr.bf16.mxu0 0
        %1850 = vmatpush2.bf16.xpose.msra.mxu0 0
        %1851 = vmatprep.subr.bf16.mxu0 0
        %1852 = vmatpush2.bf16.xpose.msra.mxu0 0
        %1853 = vmatprep.subr.bf16.mxu0 0
        %1854 = vmatpush2.bf16.xpose.msra.mxu0 0
        %1855 = vmatprep.subr.bf16.mxu0 0
        %1856 = vmatpush2.bf16.xpose.msra.mxu0 0
        %1857 = vmatprep.subr.bf16.mxu0 0
        %1858 = vmatpush2.bf16.xpose.msra.mxu0 0
        %1859 = vmatprep.subr.bf16.mxu0 0
        %1860 = vmatpush2.bf16.xpose.msra.mxu0 0
        %1861 = vmatprep.mubr.bf16.mxu0 0
        %1862 = vmatmul.mubr.bf16.gmra.mxu0 %v1824
        %v1863 = vpop.f32.mrf.mxu0
        %v1864 = vadd.f32 0.0, %v1863
        %v1865 = vpop.f32.mrf.mxu0
        %v1866 = vpop.f32.mrf.mxu0
        %v1867 = vadd.f32 0.0, %v1866
        %v1868 = vpop.f32.mrf.mxu0
        %1869 = vdwg.mxu0
        %v1871 = vsel %vm1634, %v899, 0
        %v1874 = vsel %vm1634, %v1267, 0
        %1876 = vmatprep.subr.bf16.mxu0 0
        %1877 = vmatpush1.bf16.xpose.msra.mxu0 0
        %1878 = vmatprep.subr.bf16.mxu0 0
        %1879 = vmatpush1.bf16.xpose.msra.mxu0 0
        %1880 = vmatprep.subr.bf16.mxu0 0
        %1881 = vmatpush1.bf16.xpose.msra.mxu0 0
        %1882 = vmatprep.subr.bf16.mxu0 0
        %1883 = vmatpush1.bf16.xpose.msra.mxu0 0
        %1884 = vmatprep.subr.bf16.mxu0 0
        %1885 = vmatpush1.bf16.xpose.msra.mxu0 0
        %1886 = vmatprep.subr.bf16.mxu0 0
        %1887 = vmatpush1.bf16.xpose.msra.mxu0 0
        %1888 = vmatprep.subr.bf16.mxu0 0
        %1889 = vmatpush1.bf16.xpose.msra.mxu0 0
        %1890 = vmatprep.subr.bf16.mxu0 0
        %1891 = vmatpush1.bf16.xpose.msra.mxu0 %v1874
        %1892 = vmatprep.subr.bf16.mxu0 0
        %1893 = vmatpush2.bf16.xpose.msra.mxu0 0
        %1894 = vmatprep.subr.bf16.mxu0 0
        %1895 = vmatpush2.bf16.xpose.msra.mxu0 0
        %1896 = vmatprep.subr.bf16.mxu0 0
        %1897 = vmatpush2.bf16.xpose.msra.mxu0 0
        %1898 = vmatprep.subr.bf16.mxu0 0
        %1899 = vmatpush2.bf16.xpose.msra.mxu0 0
        %1900 = vmatprep.subr.bf16.mxu0 0
        %1901 = vmatpush2.bf16.xpose.msra.mxu0 0
        %1902 = vmatprep.subr.bf16.mxu0 0
        %1903 = vmatpush2.bf16.xpose.msra.mxu0 0
        %1904 = vmatprep.subr.bf16.mxu0 0
        %1905 = vmatpush2.bf16.xpose.msra.mxu0 0
        %1906 = vmatprep.subr.bf16.mxu0 0
        %1907 = vmatpush2.bf16.xpose.msra.mxu0 0
        %1908 = vmatprep.mubr.bf16.mxu0 0
        %1909 = vmatmul.mubr.bf16.gmra.mxu0 %v1871
        %v1910 = vpop.f32.mrf.mxu0
        %v1911 = vadd.f32 0.0, %v1910
        %v1912 = vpop.f32.mrf.mxu0
        %v1913 = vpop.f32.mrf.mxu0
        %v1914 = vadd.f32 0.0, %v1913
        %v1915 = vpop.f32.mrf.mxu0
        %1916 = vdwg.mxu0
        %v1918 = vsel %vm1634, %v902, 0
        %v1921 = vsel %vm1634, %v1270, 0
        %1923 = vmatprep.subr.bf16.mxu0 0
        %1924 = vmatpush1.bf16.xpose.msra.mxu0 0
        %1925 = vmatprep.subr.bf16.mxu0 0
        %1926 = vmatpush1.bf16.xpose.msra.mxu0 0
        %1927 = vmatprep.subr.bf16.mxu0 0
        %1928 = vmatpush1.bf16.xpose.msra.mxu0 0
        %1929 = vmatprep.subr.bf16.mxu0 0
        %1930 = vmatpush1.bf16.xpose.msra.mxu0 0
        %1931 = vmatprep.subr.bf16.mxu0 0
        %1932 = vmatpush1.bf16.xpose.msra.mxu0 0
        %1933 = vmatprep.subr.bf16.mxu0 0
        %1934 = vmatpush1.bf16.xpose.msra.mxu0 0
        %1935 = vmatprep.subr.bf16.mxu0 0
        %1936 = vmatpush1.bf16.xpose.msra.mxu0 0
        %1937 = vmatprep.subr.bf16.mxu0 0
        %1938 = vmatpush1.bf16.xpose.msra.mxu0 %v1921
        %1939 = vmatprep.subr.bf16.mxu0 0
        %1940 = vmatpush2.bf16.xpose.msra.mxu0 0
        %1941 = vmatprep.subr.bf16.mxu0 0
        %1942 = vmatpush2.bf16.xpose.msra.mxu0 0
        %1943 = vmatprep.subr.bf16.mxu0 0
        %1944 = vmatpush2.bf16.xpose.msra.mxu0 0
        %1945 = vmatprep.subr.bf16.mxu0 0
        %1946 = vmatpush2.bf16.xpose.msra.mxu0 0
        %1947 = vmatprep.subr.bf16.mxu0 0
        %1948 = vmatpush2.bf16.xpose.msra.mxu0 0
        %1949 = vmatprep.subr.bf16.mxu0 0
        %1950 = vmatpush2.bf16.xpose.msra.mxu0 0
        %1951 = vmatprep.subr.bf16.mxu0 0
        %1952 = vmatpush2.bf16.xpose.msra.mxu0 0
        %1953 = vmatprep.subr.bf16.mxu0 0
        %1954 = vmatpush2.bf16.xpose.msra.mxu0 0
        %1955 = vmatprep.mubr.bf16.mxu0 0
        %1956 = vmatmul.mubr.bf16.gmra.mxu0 %v1918
        %v1957 = vpop.f32.mrf.mxu0
        %v1958 = vadd.f32 0.0, %v1957
        %v1959 = vpop.f32.mrf.mxu0
        %v1960 = vpop.f32.mrf.mxu0
        %v1961 = vadd.f32 0.0, %v1960
        %v1962 = vpop.f32.mrf.mxu0
        %1963 = vdwg.mxu0
        %v1965 = vsel %vm1634, %v905, 0
        %v1968 = vsel %vm1634, %v1273, 0
        %1970 = vmatprep.subr.bf16.mxu0 0
        %1971 = vmatpush1.bf16.xpose.msra.mxu0 0
        %1972 = vmatprep.subr.bf16.mxu0 0
        %1973 = vmatpush1.bf16.xpose.msra.mxu0 0
        %1974 = vmatprep.subr.bf16.mxu0 0
        %1975 = vmatpush1.bf16.xpose.msra.mxu0 0
        %1976 = vmatprep.subr.bf16.mxu0 0
        %1977 = vmatpush1.bf16.xpose.msra.mxu0 0
        %1978 = vmatprep.subr.bf16.mxu0 0
        %1979 = vmatpush1.bf16.xpose.msra.mxu0 0
        %1980 = vmatprep.subr.bf16.mxu0 0
        %1981 = vmatpush1.bf16.xpose.msra.mxu0 0
        %1982 = vmatprep.subr.bf16.mxu0 0
        %1983 = vmatpush1.bf16.xpose.msra.mxu0 0
        %1984 = vmatprep.subr.bf16.mxu0 0
        %1985 = vmatpush1.bf16.xpose.msra.mxu0 %v1968
        %1986 = vmatprep.subr.bf16.mxu0 0
        %1987 = vmatpush2.bf16.xpose.msra.mxu0 0
        %1988 = vmatprep.subr.bf16.mxu0 0
        %1989 = vmatpush2.bf16.xpose.msra.mxu0 0
        %1990 = vmatprep.subr.bf16.mxu0 0
        %1991 = vmatpush2.bf16.xpose.msra.mxu0 0
        %1992 = vmatprep.subr.bf16.mxu0 0
        %1993 = vmatpush2.bf16.xpose.msra.mxu0 0
        %1994 = vmatprep.subr.bf16.mxu0 0
        %1995 = vmatpush2.bf16.xpose.msra.mxu0 0
        %1996 = vmatprep.subr.bf16.mxu0 0
        %1997 = vmatpush2.bf16.xpose.msra.mxu0 0
        %1998 = vmatprep.subr.bf16.mxu0 0
        %1999 = vmatpush2.bf16.xpose.msra.mxu0 0
        %2000 = vmatprep.subr.bf16.mxu0 0
        %2001 = vmatpush2.bf16.xpose.msra.mxu0 0
        %2002 = vmatprep.mubr.bf16.mxu0 0
        %2003 = vmatmul.mubr.bf16.gmra.mxu0 %v1965
        %v2004 = vpop.f32.mrf.mxu0
        %v2005 = vadd.f32 0.0, %v2004
        %v2006 = vpop.f32.mrf.mxu0
        %v2007 = vpop.f32.mrf.mxu0
        %v2008 = vadd.f32 0.0, %v2007
        %v2009 = vpop.f32.mrf.mxu0
        %2010 = vdwg.mxu0
        %v2012 = vsel %vm1634, %v908, 0
        %v2015 = vsel %vm1634, %v1276, 0
        %2017 = vmatprep.subr.bf16.mxu0 0
        %2018 = vmatpush1.bf16.xpose.msra.mxu0 0
        %2019 = vmatprep.subr.bf16.mxu0 0
        %2020 = vmatpush1.bf16.xpose.msra.mxu0 0
        %2021 = vmatprep.subr.bf16.mxu0 0
        %2022 = vmatpush1.bf16.xpose.msra.mxu0 0
        %2023 = vmatprep.subr.bf16.mxu0 0
        %2024 = vmatpush1.bf16.xpose.msra.mxu0 0
        %2025 = vmatprep.subr.bf16.mxu0 0
        %2026 = vmatpush1.bf16.xpose.msra.mxu0 0
        %2027 = vmatprep.subr.bf16.mxu0 0
        %2028 = vmatpush1.bf16.xpose.msra.mxu0 0
        %2029 = vmatprep.subr.bf16.mxu0 0
        %2030 = vmatpush1.bf16.xpose.msra.mxu0 0
        %2031 = vmatprep.subr.bf16.mxu0 0
        %2032 = vmatpush1.bf16.xpose.msra.mxu0 %v2015
        %2033 = vmatprep.subr.bf16.mxu0 0
        %2034 = vmatpush2.bf16.xpose.msra.mxu0 0
        %2035 = vmatprep.subr.bf16.mxu0 0
        %2036 = vmatpush2.bf16.xpose.msra.mxu0 0
        %2037 = vmatprep.subr.bf16.mxu0 0
        %2038 = vmatpush2.bf16.xpose.msra.mxu0 0
        %2039 = vmatprep.subr.bf16.mxu0 0
        %2040 = vmatpush2.bf16.xpose.msra.mxu0 0
        %2041 = vmatprep.subr.bf16.mxu0 0
        %2042 = vmatpush2.bf16.xpose.msra.mxu0 0
        %2043 = vmatprep.subr.bf16.mxu0 0
        %2044 = vmatpush2.bf16.xpose.msra.mxu0 0
        %2045 = vmatprep.subr.bf16.mxu0 0
        %2046 = vmatpush2.bf16.xpose.msra.mxu0 0
        %2047 = vmatprep.subr.bf16.mxu0 0
        %2048 = vmatpush2.bf16.xpose.msra.mxu0 0
        %2049 = vmatprep.mubr.bf16.mxu0 0
        %2050 = vmatmul.mubr.bf16.gmra.mxu0 %v2012
        %v2051 = vpop.f32.mrf.mxu0
        %v2052 = vadd.f32 0.0, %v2051
        %v2053 = vpop.f32.mrf.mxu0
        %v2054 = vpop.f32.mrf.mxu0
        %v2055 = vadd.f32 0.0, %v2054
        %v2056 = vpop.f32.mrf.mxu0
        %2057 = vdwg.mxu0
        %v2059 = vsel %vm1634, %v911, 0
        %v2062 = vsel %vm1634, %v1279, 0
        %2064 = vmatprep.subr.bf16.mxu0 0
        %2065 = vmatpush1.bf16.xpose.msra.mxu0 0
        %2066 = vmatprep.subr.bf16.mxu0 0
        %2067 = vmatpush1.bf16.xpose.msra.mxu0 0
        %2068 = vmatprep.subr.bf16.mxu0 0
        %2069 = vmatpush1.bf16.xpose.msra.mxu0 0
        %2070 = vmatprep.subr.bf16.mxu0 0
        %2071 = vmatpush1.bf16.xpose.msra.mxu0 0
        %2072 = vmatprep.subr.bf16.mxu0 0
        %2073 = vmatpush1.bf16.xpose.msra.mxu0 0
        %2074 = vmatprep.subr.bf16.mxu0 0
        %2075 = vmatpush1.bf16.xpose.msra.mxu0 0
        %2076 = vmatprep.subr.bf16.mxu0 0
        %2077 = vmatpush1.bf16.xpose.msra.mxu0 0
        %2078 = vmatprep.subr.bf16.mxu0 0
        %2079 = vmatpush1.bf16.xpose.msra.mxu0 %v2062
        %2080 = vmatprep.subr.bf16.mxu0 0
        %2081 = vmatpush2.bf16.xpose.msra.mxu0 0
        %2082 = vmatprep.subr.bf16.mxu0 0
        %2083 = vmatpush2.bf16.xpose.msra.mxu0 0
        %2084 = vmatprep.subr.bf16.mxu0 0
        %2085 = vmatpush2.bf16.xpose.msra.mxu0 0
        %2086 = vmatprep.subr.bf16.mxu0 0
        %2087 = vmatpush2.bf16.xpose.msra.mxu0 0
        %2088 = vmatprep.subr.bf16.mxu0 0
        %2089 = vmatpush2.bf16.xpose.msra.mxu0 0
        %2090 = vmatprep.subr.bf16.mxu0 0
        %2091 = vmatpush2.bf16.xpose.msra.mxu0 0
        %2092 = vmatprep.subr.bf16.mxu0 0
        %2093 = vmatpush2.bf16.xpose.msra.mxu0 0
        %2094 = vmatprep.subr.bf16.mxu0 0
        %2095 = vmatpush2.bf16.xpose.msra.mxu0 0
        %2096 = vmatprep.mubr.bf16.mxu0 0
        %2097 = vmatmul.mubr.bf16.gmra.mxu0 %v2059
        %v2098 = vpop.f32.mrf.mxu0
        %v2099 = vadd.f32 0.0, %v2098
        %v2100 = vpop.f32.mrf.mxu0
        %v2101 = vpop.f32.mrf.mxu0
        %v2102 = vadd.f32 0.0, %v2101
        %v2103 = vpop.f32.mrf.mxu0
        %2104 = vdwg.mxu0
        %v2106 = vsel %vm1634, %v914, 0
        %v2109 = vsel %vm1634, %v1282, 0
        %2111 = vmatprep.subr.bf16.mxu0 0
        %2112 = vmatpush1.bf16.xpose.msra.mxu0 0
        %2113 = vmatprep.subr.bf16.mxu0 0
        %2114 = vmatpush1.bf16.xpose.msra.mxu0 0
        %2115 = vmatprep.subr.bf16.mxu0 0
        %2116 = vmatpush1.bf16.xpose.msra.mxu0 0
        %2117 = vmatprep.subr.bf16.mxu0 0
        %2118 = vmatpush1.bf16.xpose.msra.mxu0 0
        %2119 = vmatprep.subr.bf16.mxu0 0
        %2120 = vmatpush1.bf16.xpose.msra.mxu0 0
        %2121 = vmatprep.subr.bf16.mxu0 0
        %2122 = vmatpush1.bf16.xpose.msra.mxu0 0
        %2123 = vmatprep.subr.bf16.mxu0 0
        %2124 = vmatpush1.bf16.xpose.msra.mxu0 0
        %2125 = vmatprep.subr.bf16.mxu0 0
        %2126 = vmatpush1.bf16.xpose.msra.mxu0 %v2109
        %2127 = vmatprep.subr.bf16.mxu0 0
        %2128 = vmatpush2.bf16.xpose.msra.mxu0 0
        %2129 = vmatprep.subr.bf16.mxu0 0
        %2130 = vmatpush2.bf16.xpose.msra.mxu0 0
        %2131 = vmatprep.subr.bf16.mxu0 0
        %2132 = vmatpush2.bf16.xpose.msra.mxu0 0
        %2133 = vmatprep.subr.bf16.mxu0 0
        %2134 = vmatpush2.bf16.xpose.msra.mxu0 0
        %2135 = vmatprep.subr.bf16.mxu0 0
        %2136 = vmatpush2.bf16.xpose.msra.mxu0 0
        %2137 = vmatprep.subr.bf16.mxu0 0
        %2138 = vmatpush2.bf16.xpose.msra.mxu0 0
        %2139 = vmatprep.subr.bf16.mxu0 0
        %2140 = vmatpush2.bf16.xpose.msra.mxu0 0
        %2141 = vmatprep.subr.bf16.mxu0 0
        %2142 = vmatpush2.bf16.xpose.msra.mxu0 0
        %2143 = vmatprep.mubr.bf16.mxu0 0
        %2144 = vmatmul.mubr.bf16.gmra.mxu0 %v2106
        %v2145 = vpop.f32.mrf.mxu0
        %v2146 = vadd.f32 0.0, %v2145
        %v2147 = vpop.f32.mrf.mxu0
        %v2148 = vpop.f32.mrf.mxu0
        %v2149 = vadd.f32 0.0, %v2148
        %v2150 = vpop.f32.mrf.mxu0
        %2151 = vdwg.mxu0
        %v2153 = vsel %vm1634, %v917, 0
        %v2156 = vsel %vm1634, %v1285, 0
        %2158 = vmatprep.subr.bf16.mxu0 0
        %2159 = vmatpush1.bf16.xpose.msra.mxu0 0
        %2160 = vmatprep.subr.bf16.mxu0 0
        %2161 = vmatpush1.bf16.xpose.msra.mxu0 0
        %2162 = vmatprep.subr.bf16.mxu0 0
        %2163 = vmatpush1.bf16.xpose.msra.mxu0 0
        %2164 = vmatprep.subr.bf16.mxu0 0
        %2165 = vmatpush1.bf16.xpose.msra.mxu0 0
        %2166 = vmatprep.subr.bf16.mxu0 0
        %2167 = vmatpush1.bf16.xpose.msra.mxu0 0
        %2168 = vmatprep.subr.bf16.mxu0 0
        %2169 = vmatpush1.bf16.xpose.msra.mxu0 0
        %2170 = vmatprep.subr.bf16.mxu0 0
        %2171 = vmatpush1.bf16.xpose.msra.mxu0 0
        %2172 = vmatprep.subr.bf16.mxu0 0
        %2173 = vmatpush1.bf16.xpose.msra.mxu0 %v2156
        %2174 = vmatprep.subr.bf16.mxu0 0
        %2175 = vmatpush2.bf16.xpose.msra.mxu0 0
        %2176 = vmatprep.subr.bf16.mxu0 0
        %2177 = vmatpush2.bf16.xpose.msra.mxu0 0
        %2178 = vmatprep.subr.bf16.mxu0 0
        %2179 = vmatpush2.bf16.xpose.msra.mxu0 0
        %2180 = vmatprep.subr.bf16.mxu0 0
        %2181 = vmatpush2.bf16.xpose.msra.mxu0 0
        %2182 = vmatprep.subr.bf16.mxu0 0
        %2183 = vmatpush2.bf16.xpose.msra.mxu0 0
        %2184 = vmatprep.subr.bf16.mxu0 0
        %2185 = vmatpush2.bf16.xpose.msra.mxu0 0
        %2186 = vmatprep.subr.bf16.mxu0 0
        %2187 = vmatpush2.bf16.xpose.msra.mxu0 0
        %2188 = vmatprep.subr.bf16.mxu0 0
        %2189 = vmatpush2.bf16.xpose.msra.mxu0 0
        %2190 = vmatprep.mubr.bf16.mxu0 0
        %2191 = vmatmul.mubr.bf16.gmra.mxu0 %v2153
        %v2192 = vpop.f32.mrf.mxu0
        %v2193 = vadd.f32 0.0, %v2192
        %v2194 = vpop.f32.mrf.mxu0
        %v2195 = vpop.f32.mrf.mxu0
        %v2196 = vadd.f32 0.0, %v2195
        %v2197 = vpop.f32.mrf.mxu0
        %2198 = vdwg.mxu0
        %v2200 = vsel %vm1634, %v920, 0
        %v2203 = vsel %vm1634, %v1288, 0
        %2205 = vmatprep.subr.bf16.mxu0 0
        %2206 = vmatpush1.bf16.xpose.msra.mxu0 0
        %2207 = vmatprep.subr.bf16.mxu0 0
        %2208 = vmatpush1.bf16.xpose.msra.mxu0 0
        %2209 = vmatprep.subr.bf16.mxu0 0
        %2210 = vmatpush1.bf16.xpose.msra.mxu0 0
        %2211 = vmatprep.subr.bf16.mxu0 0
        %2212 = vmatpush1.bf16.xpose.msra.mxu0 0
        %2213 = vmatprep.subr.bf16.mxu0 0
        %2214 = vmatpush1.bf16.xpose.msra.mxu0 0
        %2215 = vmatprep.subr.bf16.mxu0 0
        %2216 = vmatpush1.bf16.xpose.msra.mxu0 0
        %2217 = vmatprep.subr.bf16.mxu0 0
        %2218 = vmatpush1.bf16.xpose.msra.mxu0 0
        %2219 = vmatprep.subr.bf16.mxu0 0
        %2220 = vmatpush1.bf16.xpose.msra.mxu0 %v2203
        %2221 = vmatprep.subr.bf16.mxu0 0
        %2222 = vmatpush2.bf16.xpose.msra.mxu0 0
        %2223 = vmatprep.subr.bf16.mxu0 0
        %2224 = vmatpush2.bf16.xpose.msra.mxu0 0
        %2225 = vmatprep.subr.bf16.mxu0 0
        %2226 = vmatpush2.bf16.xpose.msra.mxu0 0
        %2227 = vmatprep.subr.bf16.mxu0 0
        %2228 = vmatpush2.bf16.xpose.msra.mxu0 0
        %2229 = vmatprep.subr.bf16.mxu0 0
        %2230 = vmatpush2.bf16.xpose.msra.mxu0 0
        %2231 = vmatprep.subr.bf16.mxu0 0
        %2232 = vmatpush2.bf16.xpose.msra.mxu0 0
        %2233 = vmatprep.subr.bf16.mxu0 0
        %2234 = vmatpush2.bf16.xpose.msra.mxu0 0
        %2235 = vmatprep.subr.bf16.mxu0 0
        %2236 = vmatpush2.bf16.xpose.msra.mxu0 0
        %2237 = vmatprep.mubr.bf16.mxu0 0
        %2238 = vmatmul.mubr.bf16.gmra.mxu0 %v2200
        %v2239 = vpop.f32.mrf.mxu0
        %v2240 = vadd.f32 0.0, %v2239
        %v2241 = vpop.f32.mrf.mxu0
        %v2242 = vpop.f32.mrf.mxu0
        %v2243 = vadd.f32 0.0, %v2242
        %v2244 = vpop.f32.mrf.mxu0
        %2245 = vdwg.mxu0
        %v2247 = vsel %vm1634, %v923, 0
        %v2250 = vsel %vm1634, %v1291, 0
        %2252 = vmatprep.subr.bf16.mxu0 0
        %2253 = vmatpush1.bf16.xpose.msra.mxu0 0
        %2254 = vmatprep.subr.bf16.mxu0 0
        %2255 = vmatpush1.bf16.xpose.msra.mxu0 0
        %2256 = vmatprep.subr.bf16.mxu0 0
        %2257 = vmatpush1.bf16.xpose.msra.mxu0 0
        %2258 = vmatprep.subr.bf16.mxu0 0
        %2259 = vmatpush1.bf16.xpose.msra.mxu0 0
        %2260 = vmatprep.subr.bf16.mxu0 0
        %2261 = vmatpush1.bf16.xpose.msra.mxu0 0
        %2262 = vmatprep.subr.bf16.mxu0 0
        %2263 = vmatpush1.bf16.xpose.msra.mxu0 0
        %2264 = vmatprep.subr.bf16.mxu0 0
        %2265 = vmatpush1.bf16.xpose.msra.mxu0 0
        %2266 = vmatprep.subr.bf16.mxu0 0
        %2267 = vmatpush1.bf16.xpose.msra.mxu0 %v2250
        %2268 = vmatprep.subr.bf16.mxu0 0
        %2269 = vmatpush2.bf16.xpose.msra.mxu0 0
        %2270 = vmatprep.subr.bf16.mxu0 0
        %2271 = vmatpush2.bf16.xpose.msra.mxu0 0
        %2272 = vmatprep.subr.bf16.mxu0 0
        %2273 = vmatpush2.bf16.xpose.msra.mxu0 0
        %2274 = vmatprep.subr.bf16.mxu0 0
        %2275 = vmatpush2.bf16.xpose.msra.mxu0 0
        %2276 = vmatprep.subr.bf16.mxu0 0
        %2277 = vmatpush2.bf16.xpose.msra.mxu0 0
        %2278 = vmatprep.subr.bf16.mxu0 0
        %2279 = vmatpush2.bf16.xpose.msra.mxu0 0
        %2280 = vmatprep.subr.bf16.mxu0 0
        %2281 = vmatpush2.bf16.xpose.msra.mxu0 0
        %2282 = vmatprep.subr.bf16.mxu0 0
        %2283 = vmatpush2.bf16.xpose.msra.mxu0 0
        %2284 = vmatprep.mubr.bf16.mxu0 0
        %2285 = vmatmul.mubr.bf16.gmra.mxu0 %v2247
        %v2286 = vpop.f32.mrf.mxu0
        %v2287 = vadd.f32 0.0, %v2286
        %v2288 = vpop.f32.mrf.mxu0
        %v2289 = vpop.f32.mrf.mxu0
        %v2290 = vadd.f32 0.0, %v2289
        %v2291 = vpop.f32.mrf.mxu0
        %2292 = vdwg.mxu0
        %v2294 = vsel %vm1634, %v926, 0
        %v2297 = vsel %vm1634, %v1294, 0
        %2299 = vmatprep.subr.bf16.mxu0 0
        %2300 = vmatpush1.bf16.xpose.msra.mxu0 0
        %2301 = vmatprep.subr.bf16.mxu0 0
        %2302 = vmatpush1.bf16.xpose.msra.mxu0 0
        %2303 = vmatprep.subr.bf16.mxu0 0
        %2304 = vmatpush1.bf16.xpose.msra.mxu0 0
        %2305 = vmatprep.subr.bf16.mxu0 0
        %2306 = vmatpush1.bf16.xpose.msra.mxu0 0
        %2307 = vmatprep.subr.bf16.mxu0 0
        %2308 = vmatpush1.bf16.xpose.msra.mxu0 0
        %2309 = vmatprep.subr.bf16.mxu0 0
        %2310 = vmatpush1.bf16.xpose.msra.mxu0 0
        %2311 = vmatprep.subr.bf16.mxu0 0
        %2312 = vmatpush1.bf16.xpose.msra.mxu0 0
        %2313 = vmatprep.subr.bf16.mxu0 0
        %2314 = vmatpush1.bf16.xpose.msra.mxu0 %v2297
        %2315 = vmatprep.subr.bf16.mxu0 0
        %2316 = vmatpush2.bf16.xpose.msra.mxu0 0
        %2317 = vmatprep.subr.bf16.mxu0 0
        %2318 = vmatpush2.bf16.xpose.msra.mxu0 0
        %2319 = vmatprep.subr.bf16.mxu0 0
        %2320 = vmatpush2.bf16.xpose.msra.mxu0 0
        %2321 = vmatprep.subr.bf16.mxu0 0
        %2322 = vmatpush2.bf16.xpose.msra.mxu0 0
        %2323 = vmatprep.subr.bf16.mxu0 0
        %2324 = vmatpush2.bf16.xpose.msra.mxu0 0
        %2325 = vmatprep.subr.bf16.mxu0 0
        %2326 = vmatpush2.bf16.xpose.msra.mxu0 0
        %2327 = vmatprep.subr.bf16.mxu0 0
        %2328 = vmatpush2.bf16.xpose.msra.mxu0 0
        %2329 = vmatprep.subr.bf16.mxu0 0
        %2330 = vmatpush2.bf16.xpose.msra.mxu0 0
        %2331 = vmatprep.mubr.bf16.mxu0 0
        %2332 = vmatmul.mubr.bf16.gmra.mxu0 %v2294
        %v2333 = vpop.f32.mrf.mxu0
        %v2334 = vadd.f32 0.0, %v2333
        %v2335 = vpop.f32.mrf.mxu0
        %v2336 = vpop.f32.mrf.mxu0
        %v2337 = vadd.f32 0.0, %v2336
        %v2338 = vpop.f32.mrf.mxu0
        %2339 = vdwg.mxu0
        %v2341 = vsel %vm1634, %v929, 0
        %v2344 = vsel %vm1634, %v1297, 0
        %2346 = vmatprep.subr.bf16.mxu0 0
        %2347 = vmatpush1.bf16.xpose.msra.mxu0 0
        %2348 = vmatprep.subr.bf16.mxu0 0
        %2349 = vmatpush1.bf16.xpose.msra.mxu0 0
        %2350 = vmatprep.subr.bf16.mxu0 0
        %2351 = vmatpush1.bf16.xpose.msra.mxu0 0
        %2352 = vmatprep.subr.bf16.mxu0 0
        %2353 = vmatpush1.bf16.xpose.msra.mxu0 0
        %2354 = vmatprep.subr.bf16.mxu0 0
        %2355 = vmatpush1.bf16.xpose.msra.mxu0 0
        %2356 = vmatprep.subr.bf16.mxu0 0
        %2357 = vmatpush1.bf16.xpose.msra.mxu0 0
        %2358 = vmatprep.subr.bf16.mxu0 0
        %2359 = vmatpush1.bf16.xpose.msra.mxu0 0
        %2360 = vmatprep.subr.bf16.mxu0 0
        %2361 = vmatpush1.bf16.xpose.msra.mxu0 %v2344
        %2362 = vmatprep.subr.bf16.mxu0 0
        %2363 = vmatpush2.bf16.xpose.msra.mxu0 0
        %2364 = vmatprep.subr.bf16.mxu0 0
        %2365 = vmatpush2.bf16.xpose.msra.mxu0 0
        %2366 = vmatprep.subr.bf16.mxu0 0
        %2367 = vmatpush2.bf16.xpose.msra.mxu0 0
        %2368 = vmatprep.subr.bf16.mxu0 0
        %2369 = vmatpush2.bf16.xpose.msra.mxu0 0
        %2370 = vmatprep.subr.bf16.mxu0 0
        %2371 = vmatpush2.bf16.xpose.msra.mxu0 0
        %2372 = vmatprep.subr.bf16.mxu0 0
        %2373 = vmatpush2.bf16.xpose.msra.mxu0 0
        %2374 = vmatprep.subr.bf16.mxu0 0
        %2375 = vmatpush2.bf16.xpose.msra.mxu0 0
        %2376 = vmatprep.subr.bf16.mxu0 0
        %2377 = vmatpush2.bf16.xpose.msra.mxu0 0
        %2378 = vmatprep.mubr.bf16.mxu0 0
        %2379 = vmatmul.mubr.bf16.gmra.mxu0 %v2341
        %v2380 = vpop.f32.mrf.mxu0
        %v2381 = vadd.f32 0.0, %v2380
        %v2382 = vpop.f32.mrf.mxu0
        %v2383 = vpop.f32.mrf.mxu0
        %v2384 = vadd.f32 0.0, %v2383
        %v2385 = vpop.f32.mrf.mxu0
        %2386 = vdwg.mxu0
        %v2387 = vlaneseq
        %v2388 = vshrl.u32 %v2387, 7
        %v2389 = vadd.s32 %v2388, 8
        %v2390 = vlaneseq
        %v2391 = vand.u32 %v2390, 127
        %vm2392 = vcmp.eq.s32.totalorder %v2388, %v2391
        %vm2393 = vcmp.eq.s32.totalorder %v2389, %v2391
        %v2394 = vsel %vm2392, 1, 0
        %v2395 = vsel %vm2393, 1, 0
        %vm2396 = vcmp.eq.s32.totalorder %v2394, 1
        %vm2397 = vcmp.eq.s32.totalorder %v2395, 1
        %v2398 = vsel %vm2396, -1e+30, %v1676
        %v2399 = vsel %vm2397, -1e+30, %v1679
        %v2400 = vsel %vm2396, -1e+30, %v1723
        %v2401 = vsel %vm2397, -1e+30, %v1726
        %v2402 = vsel %vm2396, -1e+30, %v1770
        %v2403 = vsel %vm2397, -1e+30, %v1773
        %v2404 = vsel %vm2396, -1e+30, %v1817
        %v2405 = vsel %vm2397, -1e+30, %v1820
        %v2406 = vsel %vm2396, -1e+30, %v1864
        %v2407 = vsel %vm2397, -1e+30, %v1867
        %v2408 = vsel %vm2396, -1e+30, %v1911
        %v2409 = vsel %vm2397, -1e+30, %v1914
        %v2410 = vsel %vm2396, -1e+30, %v1958
        %v2411 = vsel %vm2397, -1e+30, %v1961
        %v2412 = vsel %vm2396, -1e+30, %v2005
        %v2413 = vsel %vm2397, -1e+30, %v2008
        %v2414 = vsel %vm2396, -1e+30, %v2052
        %v2415 = vsel %vm2397, -1e+30, %v2055
        %v2416 = vsel %vm2396, -1e+30, %v2099
        %v2417 = vsel %vm2397, -1e+30, %v2102
        %v2418 = vsel %vm2396, -1e+30, %v2146
        %v2419 = vsel %vm2397, -1e+30, %v2149
        %v2420 = vsel %vm2396, -1e+30, %v2193
        %v2421 = vsel %vm2397, -1e+30, %v2196
        %v2422 = vsel %vm2396, -1e+30, %v2240
        %v2423 = vsel %vm2397, -1e+30, %v2243
        %v2424 = vsel %vm2396, -1e+30, %v2287
        %v2425 = vsel %vm2397, -1e+30, %v2290
        %v2426 = vsel %vm2396, -1e+30, %v2334
        %v2427 = vsel %vm2397, -1e+30, %v2337
        %v2428 = vsel %vm2396, -1e+30, %v2381
        %v2429 = vsel %vm2397, -1e+30, %v2384
        %v2431 = vsel %vm1634, %v563, 0
        %v2434 = vsel %vm1634, %v931, 0
        %2436 = vmatprep.subr.bf16.mxu0 0
        %2437 = vmatpush1.bf16.xpose.msra.mxu0 0
        %2438 = vmatprep.subr.bf16.mxu0 0
        %2439 = vmatpush1.bf16.xpose.msra.mxu0 0
        %2440 = vmatprep.subr.bf16.mxu0 0
        %2441 = vmatpush1.bf16.xpose.msra.mxu0 0
        %2442 = vmatprep.subr.bf16.mxu0 0
        %2443 = vmatpush1.bf16.xpose.msra.mxu0 0
        %2444 = vmatprep.subr.bf16.mxu0 0
        %2445 = vmatpush1.bf16.xpose.msra.mxu0 0
        %2446 = vmatprep.subr.bf16.mxu0 0
        %2447 = vmatpush1.bf16.xpose.msra.mxu0 0
        %2448 = vmatprep.subr.bf16.mxu0 0
        %2449 = vmatpush1.bf16.xpose.msra.mxu0 0
        %2450 = vmatprep.subr.bf16.mxu0 0
        %2451 = vmatpush1.bf16.xpose.msra.mxu0 %v2434
        %2452 = vmatprep.subr.bf16.mxu0 0
        %2453 = vmatpush2.bf16.xpose.msra.mxu0 0
        %2454 = vmatprep.subr.bf16.mxu0 0
        %2455 = vmatpush2.bf16.xpose.msra.mxu0 0
        %2456 = vmatprep.subr.bf16.mxu0 0
        %2457 = vmatpush2.bf16.xpose.msra.mxu0 0
        %2458 = vmatprep.subr.bf16.mxu0 0
        %2459 = vmatpush2.bf16.xpose.msra.mxu0 0
        %2460 = vmatprep.subr.bf16.mxu0 0
        %2461 = vmatpush2.bf16.xpose.msra.mxu0 0
        %2462 = vmatprep.subr.bf16.mxu0 0
        %2463 = vmatpush2.bf16.xpose.msra.mxu0 0
        %2464 = vmatprep.subr.bf16.mxu0 0
        %2465 = vmatpush2.bf16.xpose.msra.mxu0 0
        %2466 = vmatprep.subr.bf16.mxu0 0
        %2467 = vmatpush2.bf16.xpose.msra.mxu0 0
        %2468 = vmatprep.mubr.bf16.mxu0 0
        %2469 = vmatmul.mubr.bf16.gmra.mxu0 %v2431
        %v2470 = vpop.f32.mrf.mxu0
        %v2471 = vadd.f32 0.0, %v2470
        %v2472 = vpop.f32.mrf.mxu0
        %v2473 = vpop.f32.mrf.mxu0
        %v2474 = vadd.f32 0.0, %v2473
        %v2475 = vpop.f32.mrf.mxu0
        %2476 = vdwg.mxu0
        %v2478 = vsel %vm1634, %v565, 0
        %v2481 = vsel %vm1634, %v933, 0
        %2483 = vmatprep.subr.bf16.mxu0 0
        %2484 = vmatpush1.bf16.xpose.msra.mxu0 0
        %2485 = vmatprep.subr.bf16.mxu0 0
        %2486 = vmatpush1.bf16.xpose.msra.mxu0 0
        %2487 = vmatprep.subr.bf16.mxu0 0
        %2488 = vmatpush1.bf16.xpose.msra.mxu0 0
        %2489 = vmatprep.subr.bf16.mxu0 0
        %2490 = vmatpush1.bf16.xpose.msra.mxu0 0
        %2491 = vmatprep.subr.bf16.mxu0 0
        %2492 = vmatpush1.bf16.xpose.msra.mxu0 0
        %2493 = vmatprep.subr.bf16.mxu0 0
        %2494 = vmatpush1.bf16.xpose.msra.mxu0 0
        %2495 = vmatprep.subr.bf16.mxu0 0
        %2496 = vmatpush1.bf16.xpose.msra.mxu0 0
        %2497 = vmatprep.subr.bf16.mxu0 0
        %2498 = vmatpush1.bf16.xpose.msra.mxu0 %v2481
        %2499 = vmatprep.subr.bf16.mxu0 0
        %2500 = vmatpush2.bf16.xpose.msra.mxu0 0
        %2501 = vmatprep.subr.bf16.mxu0 0
        %2502 = vmatpush2.bf16.xpose.msra.mxu0 0
        %2503 = vmatprep.subr.bf16.mxu0 0
        %2504 = vmatpush2.bf16.xpose.msra.mxu0 0
        %2505 = vmatprep.subr.bf16.mxu0 0
        %2506 = vmatpush2.bf16.xpose.msra.mxu0 0
        %2507 = vmatprep.subr.bf16.mxu0 0
        %2508 = vmatpush2.bf16.xpose.msra.mxu0 0
        %2509 = vmatprep.subr.bf16.mxu0 0
        %2510 = vmatpush2.bf16.xpose.msra.mxu0 0
        %2511 = vmatprep.subr.bf16.mxu0 0
        %2512 = vmatpush2.bf16.xpose.msra.mxu0 0
        %2513 = vmatprep.subr.bf16.mxu0 0
        %2514 = vmatpush2.bf16.xpose.msra.mxu0 0
        %2515 = vmatprep.mubr.bf16.mxu0 0
        %2516 = vmatmul.mubr.bf16.gmra.mxu0 %v2478
        %v2517 = vpop.f32.mrf.mxu0
        %v2518 = vadd.f32 0.0, %v2517
        %v2519 = vpop.f32.mrf.mxu0
        %v2520 = vpop.f32.mrf.mxu0
        %v2521 = vadd.f32 0.0, %v2520
        %v2522 = vpop.f32.mrf.mxu0
        %2523 = vdwg.mxu0
        %v2525 = vsel %vm1634, %v567, 0
        %v2528 = vsel %vm1634, %v935, 0
        %2530 = vmatprep.subr.bf16.mxu0 0
        %2531 = vmatpush1.bf16.xpose.msra.mxu0 0
        %2532 = vmatprep.subr.bf16.mxu0 0
        %2533 = vmatpush1.bf16.xpose.msra.mxu0 0
        %2534 = vmatprep.subr.bf16.mxu0 0
        %2535 = vmatpush1.bf16.xpose.msra.mxu0 0
        %2536 = vmatprep.subr.bf16.mxu0 0
        %2537 = vmatpush1.bf16.xpose.msra.mxu0 0
        %2538 = vmatprep.subr.bf16.mxu0 0
        %2539 = vmatpush1.bf16.xpose.msra.mxu0 0
        %2540 = vmatprep.subr.bf16.mxu0 0
        %2541 = vmatpush1.bf16.xpose.msra.mxu0 0
        %2542 = vmatprep.subr.bf16.mxu0 0
        %2543 = vmatpush1.bf16.xpose.msra.mxu0 0
        %2544 = vmatprep.subr.bf16.mxu0 0
        %2545 = vmatpush1.bf16.xpose.msra.mxu0 %v2528
        %2546 = vmatprep.subr.bf16.mxu0 0
        %2547 = vmatpush2.bf16.xpose.msra.mxu0 0
        %2548 = vmatprep.subr.bf16.mxu0 0
        %2549 = vmatpush2.bf16.xpose.msra.mxu0 0
        %2550 = vmatprep.subr.bf16.mxu0 0
        %2551 = vmatpush2.bf16.xpose.msra.mxu0 0
        %2552 = vmatprep.subr.bf16.mxu0 0
        %2553 = vmatpush2.bf16.xpose.msra.mxu0 0
        %2554 = vmatprep.subr.bf16.mxu0 0
        %2555 = vmatpush2.bf16.xpose.msra.mxu0 0
        %2556 = vmatprep.subr.bf16.mxu0 0
        %2557 = vmatpush2.bf16.xpose.msra.mxu0 0
        %2558 = vmatprep.subr.bf16.mxu0 0
        %2559 = vmatpush2.bf16.xpose.msra.mxu0 0
        %2560 = vmatprep.subr.bf16.mxu0 0
        %2561 = vmatpush2.bf16.xpose.msra.mxu0 0
        %2562 = vmatprep.mubr.bf16.mxu0 0
        %2563 = vmatmul.mubr.bf16.gmra.mxu0 %v2525
        %v2564 = vpop.f32.mrf.mxu0
        %v2565 = vadd.f32 0.0, %v2564
        %v2566 = vpop.f32.mrf.mxu0
        %v2567 = vpop.f32.mrf.mxu0
        %v2568 = vadd.f32 0.0, %v2567
        %v2569 = vpop.f32.mrf.mxu0
        %2570 = vdwg.mxu0
        %v2572 = vsel %vm1634, %v569, 0
        %v2575 = vsel %vm1634, %v937, 0
        %2577 = vmatprep.subr.bf16.mxu0 0
        %2578 = vmatpush1.bf16.xpose.msra.mxu0 0
        %2579 = vmatprep.subr.bf16.mxu0 0
        %2580 = vmatpush1.bf16.xpose.msra.mxu0 0
        %2581 = vmatprep.subr.bf16.mxu0 0
        %2582 = vmatpush1.bf16.xpose.msra.mxu0 0
        %2583 = vmatprep.subr.bf16.mxu0 0
        %2584 = vmatpush1.bf16.xpose.msra.mxu0 0
        %2585 = vmatprep.subr.bf16.mxu0 0
        %2586 = vmatpush1.bf16.xpose.msra.mxu0 0
        %2587 = vmatprep.subr.bf16.mxu0 0
        %2588 = vmatpush1.bf16.xpose.msra.mxu0 0
        %2589 = vmatprep.subr.bf16.mxu0 0
        %2590 = vmatpush1.bf16.xpose.msra.mxu0 0
        %2591 = vmatprep.subr.bf16.mxu0 0
        %2592 = vmatpush1.bf16.xpose.msra.mxu0 %v2575
        %2593 = vmatprep.subr.bf16.mxu0 0
        %2594 = vmatpush2.bf16.xpose.msra.mxu0 0
        %2595 = vmatprep.subr.bf16.mxu0 0
        %2596 = vmatpush2.bf16.xpose.msra.mxu0 0
        %2597 = vmatprep.subr.bf16.mxu0 0
        %2598 = vmatpush2.bf16.xpose.msra.mxu0 0
        %2599 = vmatprep.subr.bf16.mxu0 0
        %2600 = vmatpush2.bf16.xpose.msra.mxu0 0
        %2601 = vmatprep.subr.bf16.mxu0 0
        %2602 = vmatpush2.bf16.xpose.msra.mxu0 0
        %2603 = vmatprep.subr.bf16.mxu0 0
        %2604 = vmatpush2.bf16.xpose.msra.mxu0 0
        %2605 = vmatprep.subr.bf16.mxu0 0
        %2606 = vmatpush2.bf16.xpose.msra.mxu0 0
        %2607 = vmatprep.subr.bf16.mxu0 0
        %2608 = vmatpush2.bf16.xpose.msra.mxu0 0
        %2609 = vmatprep.mubr.bf16.mxu0 0
        %2610 = vmatmul.mubr.bf16.gmra.mxu0 %v2572
        %v2611 = vpop.f32.mrf.mxu0
        %v2612 = vadd.f32 0.0, %v2611
        %v2613 = vpop.f32.mrf.mxu0
        %v2614 = vpop.f32.mrf.mxu0
        %v2615 = vadd.f32 0.0, %v2614
        %v2616 = vpop.f32.mrf.mxu0
        %2617 = vdwg.mxu0
        %v2619 = vsel %vm1634, %v571, 0
        %v2622 = vsel %vm1634, %v939, 0
        %2624 = vmatprep.subr.bf16.mxu0 0
        %2625 = vmatpush1.bf16.xpose.msra.mxu0 0
        %2626 = vmatprep.subr.bf16.mxu0 0
        %2627 = vmatpush1.bf16.xpose.msra.mxu0 0
        %2628 = vmatprep.subr.bf16.mxu0 0
        %2629 = vmatpush1.bf16.xpose.msra.mxu0 0
        %2630 = vmatprep.subr.bf16.mxu0 0
        %2631 = vmatpush1.bf16.xpose.msra.mxu0 0
        %2632 = vmatprep.subr.bf16.mxu0 0
        %2633 = vmatpush1.bf16.xpose.msra.mxu0 0
        %2634 = vmatprep.subr.bf16.mxu0 0
        %2635 = vmatpush1.bf16.xpose.msra.mxu0 0
        %2636 = vmatprep.subr.bf16.mxu0 0
        %2637 = vmatpush1.bf16.xpose.msra.mxu0 0
        %2638 = vmatprep.subr.bf16.mxu0 0
        %2639 = vmatpush1.bf16.xpose.msra.mxu0 %v2622
        %2640 = vmatprep.subr.bf16.mxu0 0
        %2641 = vmatpush2.bf16.xpose.msra.mxu0 0
        %2642 = vmatprep.subr.bf16.mxu0 0
        %2643 = vmatpush2.bf16.xpose.msra.mxu0 0
        %2644 = vmatprep.subr.bf16.mxu0 0
        %2645 = vmatpush2.bf16.xpose.msra.mxu0 0
        %2646 = vmatprep.subr.bf16.mxu0 0
        %2647 = vmatpush2.bf16.xpose.msra.mxu0 0
        %2648 = vmatprep.subr.bf16.mxu0 0
        %2649 = vmatpush2.bf16.xpose.msra.mxu0 0
        %2650 = vmatprep.subr.bf16.mxu0 0
        %2651 = vmatpush2.bf16.xpose.msra.mxu0 0
        %2652 = vmatprep.subr.bf16.mxu0 0
        %2653 = vmatpush2.bf16.xpose.msra.mxu0 0
        %2654 = vmatprep.subr.bf16.mxu0 0
        %2655 = vmatpush2.bf16.xpose.msra.mxu0 0
        %2656 = vmatprep.mubr.bf16.mxu0 0
        %2657 = vmatmul.mubr.bf16.gmra.mxu0 %v2619
        %v2658 = vpop.f32.mrf.mxu0
        %v2659 = vadd.f32 0.0, %v2658
        %v2660 = vpop.f32.mrf.mxu0
        %v2661 = vpop.f32.mrf.mxu0
        %v2662 = vadd.f32 0.0, %v2661
        %v2663 = vpop.f32.mrf.mxu0
        %2664 = vdwg.mxu0
        %v2666 = vsel %vm1634, %v573, 0
        %v2669 = vsel %vm1634, %v941, 0
        %2671 = vmatprep.subr.bf16.mxu0 0
        %2672 = vmatpush1.bf16.xpose.msra.mxu0 0
        %2673 = vmatprep.subr.bf16.mxu0 0
        %2674 = vmatpush1.bf16.xpose.msra.mxu0 0
        %2675 = vmatprep.subr.bf16.mxu0 0
        %2676 = vmatpush1.bf16.xpose.msra.mxu0 0
        %2677 = vmatprep.subr.bf16.mxu0 0
        %2678 = vmatpush1.bf16.xpose.msra.mxu0 0
        %2679 = vmatprep.subr.bf16.mxu0 0
        %2680 = vmatpush1.bf16.xpose.msra.mxu0 0
        %2681 = vmatprep.subr.bf16.mxu0 0
        %2682 = vmatpush1.bf16.xpose.msra.mxu0 0
        %2683 = vmatprep.subr.bf16.mxu0 0
        %2684 = vmatpush1.bf16.xpose.msra.mxu0 0
        %2685 = vmatprep.subr.bf16.mxu0 0
        %2686 = vmatpush1.bf16.xpose.msra.mxu0 %v2669
        %2687 = vmatprep.subr.bf16.mxu0 0
        %2688 = vmatpush2.bf16.xpose.msra.mxu0 0
        %2689 = vmatprep.subr.bf16.mxu0 0
        %2690 = vmatpush2.bf16.xpose.msra.mxu0 0
        %2691 = vmatprep.subr.bf16.mxu0 0
        %2692 = vmatpush2.bf16.xpose.msra.mxu0 0
        %2693 = vmatprep.subr.bf16.mxu0 0
        %2694 = vmatpush2.bf16.xpose.msra.mxu0 0
        %2695 = vmatprep.subr.bf16.mxu0 0
        %2696 = vmatpush2.bf16.xpose.msra.mxu0 0
        %2697 = vmatprep.subr.bf16.mxu0 0
        %2698 = vmatpush2.bf16.xpose.msra.mxu0 0
        %2699 = vmatprep.subr.bf16.mxu0 0
        %2700 = vmatpush2.bf16.xpose.msra.mxu0 0
        %2701 = vmatprep.subr.bf16.mxu0 0
        %2702 = vmatpush2.bf16.xpose.msra.mxu0 0
        %2703 = vmatprep.mubr.bf16.mxu0 0
        %2704 = vmatmul.mubr.bf16.gmra.mxu0 %v2666
        %v2705 = vpop.f32.mrf.mxu0
        %v2706 = vadd.f32 0.0, %v2705
        %v2707 = vpop.f32.mrf.mxu0
        %v2708 = vpop.f32.mrf.mxu0
        %v2709 = vadd.f32 0.0, %v2708
        %v2710 = vpop.f32.mrf.mxu0
        %2711 = vdwg.mxu0
        %v2713 = vsel %vm1634, %v575, 0
        %v2716 = vsel %vm1634, %v943, 0
        %2718 = vmatprep.subr.bf16.mxu0 0
        %2719 = vmatpush1.bf16.xpose.msra.mxu0 0
        %2720 = vmatprep.subr.bf16.mxu0 0
        %2721 = vmatpush1.bf16.xpose.msra.mxu0 0
        %2722 = vmatprep.subr.bf16.mxu0 0
        %2723 = vmatpush1.bf16.xpose.msra.mxu0 0
        %2724 = vmatprep.subr.bf16.mxu0 0
        %2725 = vmatpush1.bf16.xpose.msra.mxu0 0
        %2726 = vmatprep.subr.bf16.mxu0 0
        %2727 = vmatpush1.bf16.xpose.msra.mxu0 0
        %2728 = vmatprep.subr.bf16.mxu0 0
        %2729 = vmatpush1.bf16.xpose.msra.mxu0 0
        %2730 = vmatprep.subr.bf16.mxu0 0
        %2731 = vmatpush1.bf16.xpose.msra.mxu0 0
        %2732 = vmatprep.subr.bf16.mxu0 0
        %2733 = vmatpush1.bf16.xpose.msra.mxu0 %v2716
        %2734 = vmatprep.subr.bf16.mxu0 0
        %2735 = vmatpush2.bf16.xpose.msra.mxu0 0
        %2736 = vmatprep.subr.bf16.mxu0 0
        %2737 = vmatpush2.bf16.xpose.msra.mxu0 0
        %2738 = vmatprep.subr.bf16.mxu0 0
        %2739 = vmatpush2.bf16.xpose.msra.mxu0 0
        %2740 = vmatprep.subr.bf16.mxu0 0
        %2741 = vmatpush2.bf16.xpose.msra.mxu0 0
        %2742 = vmatprep.subr.bf16.mxu0 0
        %2743 = vmatpush2.bf16.xpose.msra.mxu0 0
        %2744 = vmatprep.subr.bf16.mxu0 0
        %2745 = vmatpush2.bf16.xpose.msra.mxu0 0
        %2746 = vmatprep.subr.bf16.mxu0 0
        %2747 = vmatpush2.bf16.xpose.msra.mxu0 0
        %2748 = vmatprep.subr.bf16.mxu0 0
        %2749 = vmatpush2.bf16.xpose.msra.mxu0 0
        %2750 = vmatprep.mubr.bf16.mxu0 0
        %2751 = vmatmul.mubr.bf16.gmra.mxu0 %v2713
        %v2752 = vpop.f32.mrf.mxu0
        %v2753 = vadd.f32 0.0, %v2752
        %v2754 = vpop.f32.mrf.mxu0
        %v2755 = vpop.f32.mrf.mxu0
        %v2756 = vadd.f32 0.0, %v2755
        %v2757 = vpop.f32.mrf.mxu0
        %2758 = vdwg.mxu0
        %v2760 = vsel %vm1634, %v577, 0
        %v2763 = vsel %vm1634, %v945, 0
        %2765 = vmatprep.subr.bf16.mxu0 0
        %2766 = vmatpush1.bf16.xpose.msra.mxu0 0
        %2767 = vmatprep.subr.bf16.mxu0 0
        %2768 = vmatpush1.bf16.xpose.msra.mxu0 0
        %2769 = vmatprep.subr.bf16.mxu0 0
        %2770 = vmatpush1.bf16.xpose.msra.mxu0 0
        %2771 = vmatprep.subr.bf16.mxu0 0
        %2772 = vmatpush1.bf16.xpose.msra.mxu0 0
        %2773 = vmatprep.subr.bf16.mxu0 0
        %2774 = vmatpush1.bf16.xpose.msra.mxu0 0
        %2775 = vmatprep.subr.bf16.mxu0 0
        %2776 = vmatpush1.bf16.xpose.msra.mxu0 0
        %2777 = vmatprep.subr.bf16.mxu0 0
        %2778 = vmatpush1.bf16.xpose.msra.mxu0 0
        %2779 = vmatprep.subr.bf16.mxu0 0
        %2780 = vmatpush1.bf16.xpose.msra.mxu0 %v2763
        %2781 = vmatprep.subr.bf16.mxu0 0
        %2782 = vmatpush2.bf16.xpose.msra.mxu0 0
        %2783 = vmatprep.subr.bf16.mxu0 0
        %2784 = vmatpush2.bf16.xpose.msra.mxu0 0
        %2785 = vmatprep.subr.bf16.mxu0 0
        %2786 = vmatpush2.bf16.xpose.msra.mxu0 0
        %2787 = vmatprep.subr.bf16.mxu0 0
        %2788 = vmatpush2.bf16.xpose.msra.mxu0 0
        %2789 = vmatprep.subr.bf16.mxu0 0
        %2790 = vmatpush2.bf16.xpose.msra.mxu0 0
        %2791 = vmatprep.subr.bf16.mxu0 0
        %2792 = vmatpush2.bf16.xpose.msra.mxu0 0
        %2793 = vmatprep.subr.bf16.mxu0 0
        %2794 = vmatpush2.bf16.xpose.msra.mxu0 0
        %2795 = vmatprep.subr.bf16.mxu0 0
        %2796 = vmatpush2.bf16.xpose.msra.mxu0 0
        %2797 = vmatprep.mubr.bf16.mxu0 0
        %2798 = vmatmul.mubr.bf16.gmra.mxu0 %v2760
        %v2799 = vpop.f32.mrf.mxu0
        %v2800 = vadd.f32 0.0, %v2799
        %v2801 = vpop.f32.mrf.mxu0
        %v2802 = vpop.f32.mrf.mxu0
        %v2803 = vadd.f32 0.0, %v2802
        %v2804 = vpop.f32.mrf.mxu0
        %2805 = vdwg.mxu0
        %v2807 = vsel %vm1634, %v579, 0
        %v2810 = vsel %vm1634, %v947, 0
        %2812 = vmatprep.subr.bf16.mxu0 0
        %2813 = vmatpush1.bf16.xpose.msra.mxu0 0
        %2814 = vmatprep.subr.bf16.mxu0 0
        %2815 = vmatpush1.bf16.xpose.msra.mxu0 0
        %2816 = vmatprep.subr.bf16.mxu0 0
        %2817 = vmatpush1.bf16.xpose.msra.mxu0 0
        %2818 = vmatprep.subr.bf16.mxu0 0
        %2819 = vmatpush1.bf16.xpose.msra.mxu0 0
        %2820 = vmatprep.subr.bf16.mxu0 0
        %2821 = vmatpush1.bf16.xpose.msra.mxu0 0
        %2822 = vmatprep.subr.bf16.mxu0 0
        %2823 = vmatpush1.bf16.xpose.msra.mxu0 0
        %2824 = vmatprep.subr.bf16.mxu0 0
        %2825 = vmatpush1.bf16.xpose.msra.mxu0 0
        %2826 = vmatprep.subr.bf16.mxu0 0
        %2827 = vmatpush1.bf16.xpose.msra.mxu0 %v2810
        %2828 = vmatprep.subr.bf16.mxu0 0
        %2829 = vmatpush2.bf16.xpose.msra.mxu0 0
        %2830 = vmatprep.subr.bf16.mxu0 0
        %2831 = vmatpush2.bf16.xpose.msra.mxu0 0
        %2832 = vmatprep.subr.bf16.mxu0 0
        %2833 = vmatpush2.bf16.xpose.msra.mxu0 0
        %2834 = vmatprep.subr.bf16.mxu0 0
        %2835 = vmatpush2.bf16.xpose.msra.mxu0 0
        %2836 = vmatprep.subr.bf16.mxu0 0
        %2837 = vmatpush2.bf16.xpose.msra.mxu0 0
        %2838 = vmatprep.subr.bf16.mxu0 0
        %2839 = vmatpush2.bf16.xpose.msra.mxu0 0
        %2840 = vmatprep.subr.bf16.mxu0 0
        %2841 = vmatpush2.bf16.xpose.msra.mxu0 0
        %2842 = vmatprep.subr.bf16.mxu0 0
        %2843 = vmatpush2.bf16.xpose.msra.mxu0 0
        %2844 = vmatprep.mubr.bf16.mxu0 0
        %2845 = vmatmul.mubr.bf16.gmra.mxu0 %v2807
        %v2846 = vpop.f32.mrf.mxu0
        %v2847 = vadd.f32 0.0, %v2846
        %v2848 = vpop.f32.mrf.mxu0
        %v2849 = vpop.f32.mrf.mxu0
        %v2850 = vadd.f32 0.0, %v2849
        %v2851 = vpop.f32.mrf.mxu0
        %2852 = vdwg.mxu0
        %v2854 = vsel %vm1634, %v581, 0
        %v2857 = vsel %vm1634, %v949, 0
        %2859 = vmatprep.subr.bf16.mxu0 0
        %2860 = vmatpush1.bf16.xpose.msra.mxu0 0
        %2861 = vmatprep.subr.bf16.mxu0 0
        %2862 = vmatpush1.bf16.xpose.msra.mxu0 0
        %2863 = vmatprep.subr.bf16.mxu0 0
        %2864 = vmatpush1.bf16.xpose.msra.mxu0 0
        %2865 = vmatprep.subr.bf16.mxu0 0
        %2866 = vmatpush1.bf16.xpose.msra.mxu0 0
        %2867 = vmatprep.subr.bf16.mxu0 0
        %2868 = vmatpush1.bf16.xpose.msra.mxu0 0
        %2869 = vmatprep.subr.bf16.mxu0 0
        %2870 = vmatpush1.bf16.xpose.msra.mxu0 0
        %2871 = vmatprep.subr.bf16.mxu0 0
        %2872 = vmatpush1.bf16.xpose.msra.mxu0 0
        %2873 = vmatprep.subr.bf16.mxu0 0
        %2874 = vmatpush1.bf16.xpose.msra.mxu0 %v2857
        %2875 = vmatprep.subr.bf16.mxu0 0
        %2876 = vmatpush2.bf16.xpose.msra.mxu0 0
        %2877 = vmatprep.subr.bf16.mxu0 0
        %2878 = vmatpush2.bf16.xpose.msra.mxu0 0
        %2879 = vmatprep.subr.bf16.mxu0 0
        %2880 = vmatpush2.bf16.xpose.msra.mxu0 0
        %2881 = vmatprep.subr.bf16.mxu0 0
        %2882 = vmatpush2.bf16.xpose.msra.mxu0 0
        %2883 = vmatprep.subr.bf16.mxu0 0
        %2884 = vmatpush2.bf16.xpose.msra.mxu0 0
        %2885 = vmatprep.subr.bf16.mxu0 0
        %2886 = vmatpush2.bf16.xpose.msra.mxu0 0
        %2887 = vmatprep.subr.bf16.mxu0 0
        %2888 = vmatpush2.bf16.xpose.msra.mxu0 0
        %2889 = vmatprep.subr.bf16.mxu0 0
        %2890 = vmatpush2.bf16.xpose.msra.mxu0 0
        %2891 = vmatprep.mubr.bf16.mxu0 0
        %2892 = vmatmul.mubr.bf16.gmra.mxu0 %v2854
        %v2893 = vpop.f32.mrf.mxu0
        %v2894 = vadd.f32 0.0, %v2893
        %v2895 = vpop.f32.mrf.mxu0
        %v2896 = vpop.f32.mrf.mxu0
        %v2897 = vadd.f32 0.0, %v2896
        %v2898 = vpop.f32.mrf.mxu0
        %2899 = vdwg.mxu0
        %v2901 = vsel %vm1634, %v583, 0
        %v2904 = vsel %vm1634, %v951, 0
        %2906 = vmatprep.subr.bf16.mxu0 0
        %2907 = vmatpush1.bf16.xpose.msra.mxu0 0
        %2908 = vmatprep.subr.bf16.mxu0 0
        %2909 = vmatpush1.bf16.xpose.msra.mxu0 0
        %2910 = vmatprep.subr.bf16.mxu0 0
        %2911 = vmatpush1.bf16.xpose.msra.mxu0 0
        %2912 = vmatprep.subr.bf16.mxu0 0
        %2913 = vmatpush1.bf16.xpose.msra.mxu0 0
        %2914 = vmatprep.subr.bf16.mxu0 0
        %2915 = vmatpush1.bf16.xpose.msra.mxu0 0
        %2916 = vmatprep.subr.bf16.mxu0 0
        %2917 = vmatpush1.bf16.xpose.msra.mxu0 0
        %2918 = vmatprep.subr.bf16.mxu0 0
        %2919 = vmatpush1.bf16.xpose.msra.mxu0 0
        %2920 = vmatprep.subr.bf16.mxu0 0
        %2921 = vmatpush1.bf16.xpose.msra.mxu0 %v2904
        %2922 = vmatprep.subr.bf16.mxu0 0
        %2923 = vmatpush2.bf16.xpose.msra.mxu0 0
        %2924 = vmatprep.subr.bf16.mxu0 0
        %2925 = vmatpush2.bf16.xpose.msra.mxu0 0
        %2926 = vmatprep.subr.bf16.mxu0 0
        %2927 = vmatpush2.bf16.xpose.msra.mxu0 0
        %2928 = vmatprep.subr.bf16.mxu0 0
        %2929 = vmatpush2.bf16.xpose.msra.mxu0 0
        %2930 = vmatprep.subr.bf16.mxu0 0
        %2931 = vmatpush2.bf16.xpose.msra.mxu0 0
        %2932 = vmatprep.subr.bf16.mxu0 0
        %2933 = vmatpush2.bf16.xpose.msra.mxu0 0
        %2934 = vmatprep.subr.bf16.mxu0 0
        %2935 = vmatpush2.bf16.xpose.msra.mxu0 0
        %2936 = vmatprep.subr.bf16.mxu0 0
        %2937 = vmatpush2.bf16.xpose.msra.mxu0 0
        %2938 = vmatprep.mubr.bf16.mxu0 0
        %2939 = vmatmul.mubr.bf16.gmra.mxu0 %v2901
        %v2940 = vpop.f32.mrf.mxu0
        %v2941 = vadd.f32 0.0, %v2940
        %v2942 = vpop.f32.mrf.mxu0
        %v2943 = vpop.f32.mrf.mxu0
        %v2944 = vadd.f32 0.0, %v2943
        %v2945 = vpop.f32.mrf.mxu0
        %2946 = vdwg.mxu0
        %v2948 = vsel %vm1634, %v585, 0
        %v2951 = vsel %vm1634, %v953, 0
        %2953 = vmatprep.subr.bf16.mxu0 0
        %2954 = vmatpush1.bf16.xpose.msra.mxu0 0
        %2955 = vmatprep.subr.bf16.mxu0 0
        %2956 = vmatpush1.bf16.xpose.msra.mxu0 0
        %2957 = vmatprep.subr.bf16.mxu0 0
        %2958 = vmatpush1.bf16.xpose.msra.mxu0 0
        %2959 = vmatprep.subr.bf16.mxu0 0
        %2960 = vmatpush1.bf16.xpose.msra.mxu0 0
        %2961 = vmatprep.subr.bf16.mxu0 0
        %2962 = vmatpush1.bf16.xpose.msra.mxu0 0
        %2963 = vmatprep.subr.bf16.mxu0 0
        %2964 = vmatpush1.bf16.xpose.msra.mxu0 0
        %2965 = vmatprep.subr.bf16.mxu0 0
        %2966 = vmatpush1.bf16.xpose.msra.mxu0 0
        %2967 = vmatprep.subr.bf16.mxu0 0
        %2968 = vmatpush1.bf16.xpose.msra.mxu0 %v2951
        %2969 = vmatprep.subr.bf16.mxu0 0
        %2970 = vmatpush2.bf16.xpose.msra.mxu0 0
        %2971 = vmatprep.subr.bf16.mxu0 0
        %2972 = vmatpush2.bf16.xpose.msra.mxu0 0
        %2973 = vmatprep.subr.bf16.mxu0 0
        %2974 = vmatpush2.bf16.xpose.msra.mxu0 0
        %2975 = vmatprep.subr.bf16.mxu0 0
        %2976 = vmatpush2.bf16.xpose.msra.mxu0 0
        %2977 = vmatprep.subr.bf16.mxu0 0
        %2978 = vmatpush2.bf16.xpose.msra.mxu0 0
        %2979 = vmatprep.subr.bf16.mxu0 0
        %2980 = vmatpush2.bf16.xpose.msra.mxu0 0
        %2981 = vmatprep.subr.bf16.mxu0 0
        %2982 = vmatpush2.bf16.xpose.msra.mxu0 0
        %2983 = vmatprep.subr.bf16.mxu0 0
        %2984 = vmatpush2.bf16.xpose.msra.mxu0 0
        %2985 = vmatprep.mubr.bf16.mxu0 0
        %2986 = vmatmul.mubr.bf16.gmra.mxu0 %v2948
        %v2987 = vpop.f32.mrf.mxu0
        %v2988 = vadd.f32 0.0, %v2987
        %v2989 = vpop.f32.mrf.mxu0
        %v2990 = vpop.f32.mrf.mxu0
        %v2991 = vadd.f32 0.0, %v2990
        %v2992 = vpop.f32.mrf.mxu0
        %2993 = vdwg.mxu0
        %v2995 = vsel %vm1634, %v587, 0
        %v2998 = vsel %vm1634, %v955, 0
        %3000 = vmatprep.subr.bf16.mxu0 0
        %3001 = vmatpush1.bf16.xpose.msra.mxu0 0
        %3002 = vmatprep.subr.bf16.mxu0 0
        %3003 = vmatpush1.bf16.xpose.msra.mxu0 0
        %3004 = vmatprep.subr.bf16.mxu0 0
        %3005 = vmatpush1.bf16.xpose.msra.mxu0 0
        %3006 = vmatprep.subr.bf16.mxu0 0
        %3007 = vmatpush1.bf16.xpose.msra.mxu0 0
        %3008 = vmatprep.subr.bf16.mxu0 0
        %3009 = vmatpush1.bf16.xpose.msra.mxu0 0
        %3010 = vmatprep.subr.bf16.mxu0 0
        %3011 = vmatpush1.bf16.xpose.msra.mxu0 0
        %3012 = vmatprep.subr.bf16.mxu0 0
        %3013 = vmatpush1.bf16.xpose.msra.mxu0 0
        %3014 = vmatprep.subr.bf16.mxu0 0
        %3015 = vmatpush1.bf16.xpose.msra.mxu0 %v2998
        %3016 = vmatprep.subr.bf16.mxu0 0
        %3017 = vmatpush2.bf16.xpose.msra.mxu0 0
        %3018 = vmatprep.subr.bf16.mxu0 0
        %3019 = vmatpush2.bf16.xpose.msra.mxu0 0
        %3020 = vmatprep.subr.bf16.mxu0 0
        %3021 = vmatpush2.bf16.xpose.msra.mxu0 0
        %3022 = vmatprep.subr.bf16.mxu0 0
        %3023 = vmatpush2.bf16.xpose.msra.mxu0 0
        %3024 = vmatprep.subr.bf16.mxu0 0
        %3025 = vmatpush2.bf16.xpose.msra.mxu0 0
        %3026 = vmatprep.subr.bf16.mxu0 0
        %3027 = vmatpush2.bf16.xpose.msra.mxu0 0
        %3028 = vmatprep.subr.bf16.mxu0 0
        %3029 = vmatpush2.bf16.xpose.msra.mxu0 0
        %3030 = vmatprep.subr.bf16.mxu0 0
        %3031 = vmatpush2.bf16.xpose.msra.mxu0 0
        %3032 = vmatprep.mubr.bf16.mxu0 0
        %3033 = vmatmul.mubr.bf16.gmra.mxu0 %v2995
        %v3034 = vpop.f32.mrf.mxu0
        %v3035 = vadd.f32 0.0, %v3034
        %v3036 = vpop.f32.mrf.mxu0
        %v3037 = vpop.f32.mrf.mxu0
        %v3038 = vadd.f32 0.0, %v3037
        %v3039 = vpop.f32.mrf.mxu0
        %3040 = vdwg.mxu0
        %v3042 = vsel %vm1634, %v589, 0
        %v3045 = vsel %vm1634, %v957, 0
        %3047 = vmatprep.subr.bf16.mxu0 0
        %3048 = vmatpush1.bf16.xpose.msra.mxu0 0
        %3049 = vmatprep.subr.bf16.mxu0 0
        %3050 = vmatpush1.bf16.xpose.msra.mxu0 0
        %3051 = vmatprep.subr.bf16.mxu0 0
        %3052 = vmatpush1.bf16.xpose.msra.mxu0 0
        %3053 = vmatprep.subr.bf16.mxu0 0
        %3054 = vmatpush1.bf16.xpose.msra.mxu0 0
        %3055 = vmatprep.subr.bf16.mxu0 0
        %3056 = vmatpush1.bf16.xpose.msra.mxu0 0
        %3057 = vmatprep.subr.bf16.mxu0 0
        %3058 = vmatpush1.bf16.xpose.msra.mxu0 0
        %3059 = vmatprep.subr.bf16.mxu0 0
        %3060 = vmatpush1.bf16.xpose.msra.mxu0 0
        %3061 = vmatprep.subr.bf16.mxu0 0
        %3062 = vmatpush1.bf16.xpose.msra.mxu0 %v3045
        %3063 = vmatprep.subr.bf16.mxu0 0
        %3064 = vmatpush2.bf16.xpose.msra.mxu0 0
        %3065 = vmatprep.subr.bf16.mxu0 0
        %3066 = vmatpush2.bf16.xpose.msra.mxu0 0
        %3067 = vmatprep.subr.bf16.mxu0 0
        %3068 = vmatpush2.bf16.xpose.msra.mxu0 0
        %3069 = vmatprep.subr.bf16.mxu0 0
        %3070 = vmatpush2.bf16.xpose.msra.mxu0 0
        %3071 = vmatprep.subr.bf16.mxu0 0
        %3072 = vmatpush2.bf16.xpose.msra.mxu0 0
        %3073 = vmatprep.subr.bf16.mxu0 0
        %3074 = vmatpush2.bf16.xpose.msra.mxu0 0
        %3075 = vmatprep.subr.bf16.mxu0 0
        %3076 = vmatpush2.bf16.xpose.msra.mxu0 0
        %3077 = vmatprep.subr.bf16.mxu0 0
        %3078 = vmatpush2.bf16.xpose.msra.mxu0 0
        %3079 = vmatprep.mubr.bf16.mxu0 0
        %3080 = vmatmul.mubr.bf16.gmra.mxu0 %v3042
        %v3081 = vpop.f32.mrf.mxu0
        %v3082 = vadd.f32 0.0, %v3081
        %v3083 = vpop.f32.mrf.mxu0
        %v3084 = vpop.f32.mrf.mxu0
        %v3085 = vadd.f32 0.0, %v3084
        %v3086 = vpop.f32.mrf.mxu0
        %3087 = vdwg.mxu0
        %v3089 = vsel %vm1634, %v591, 0
        %v3092 = vsel %vm1634, %v959, 0
        %3094 = vmatprep.subr.bf16.mxu0 0
        %3095 = vmatpush1.bf16.xpose.msra.mxu0 0
        %3096 = vmatprep.subr.bf16.mxu0 0
        %3097 = vmatpush1.bf16.xpose.msra.mxu0 0
        %3098 = vmatprep.subr.bf16.mxu0 0
        %3099 = vmatpush1.bf16.xpose.msra.mxu0 0
        %3100 = vmatprep.subr.bf16.mxu0 0
        %3101 = vmatpush1.bf16.xpose.msra.mxu0 0
        %3102 = vmatprep.subr.bf16.mxu0 0
        %3103 = vmatpush1.bf16.xpose.msra.mxu0 0
        %3104 = vmatprep.subr.bf16.mxu0 0
        %3105 = vmatpush1.bf16.xpose.msra.mxu0 0
        %3106 = vmatprep.subr.bf16.mxu0 0
        %3107 = vmatpush1.bf16.xpose.msra.mxu0 0
        %3108 = vmatprep.subr.bf16.mxu0 0
        %3109 = vmatpush1.bf16.xpose.msra.mxu0 %v3092
        %3110 = vmatprep.subr.bf16.mxu0 0
        %3111 = vmatpush2.bf16.xpose.msra.mxu0 0
        %3112 = vmatprep.subr.bf16.mxu0 0
        %3113 = vmatpush2.bf16.xpose.msra.mxu0 0
        %3114 = vmatprep.subr.bf16.mxu0 0
        %3115 = vmatpush2.bf16.xpose.msra.mxu0 0
        %3116 = vmatprep.subr.bf16.mxu0 0
        %3117 = vmatpush2.bf16.xpose.msra.mxu0 0
        %3118 = vmatprep.subr.bf16.mxu0 0
        %3119 = vmatpush2.bf16.xpose.msra.mxu0 0
        %3120 = vmatprep.subr.bf16.mxu0 0
        %3121 = vmatpush2.bf16.xpose.msra.mxu0 0
        %3122 = vmatprep.subr.bf16.mxu0 0
        %3123 = vmatpush2.bf16.xpose.msra.mxu0 0
        %3124 = vmatprep.subr.bf16.mxu0 0
        %3125 = vmatpush2.bf16.xpose.msra.mxu0 0
        %3126 = vmatprep.mubr.bf16.mxu0 0
        %3127 = vmatmul.mubr.bf16.gmra.mxu0 %v3089
        %v3128 = vpop.f32.mrf.mxu0
        %v3129 = vadd.f32 0.0, %v3128
        %v3130 = vpop.f32.mrf.mxu0
        %v3131 = vpop.f32.mrf.mxu0
        %v3132 = vadd.f32 0.0, %v3131
        %v3133 = vpop.f32.mrf.mxu0
        %3134 = vdwg.mxu0
        %v3136 = vsel %vm1634, %v593, 0
        %v3139 = vsel %vm1634, %v961, 0
        %3141 = vmatprep.subr.bf16.mxu0 0
        %3142 = vmatpush1.bf16.xpose.msra.mxu0 0
        %3143 = vmatprep.subr.bf16.mxu0 0
        %3144 = vmatpush1.bf16.xpose.msra.mxu0 0
        %3145 = vmatprep.subr.bf16.mxu0 0
        %3146 = vmatpush1.bf16.xpose.msra.mxu0 0
        %3147 = vmatprep.subr.bf16.mxu0 0
        %3148 = vmatpush1.bf16.xpose.msra.mxu0 0
        %3149 = vmatprep.subr.bf16.mxu0 0
        %3150 = vmatpush1.bf16.xpose.msra.mxu0 0
        %3151 = vmatprep.subr.bf16.mxu0 0
        %3152 = vmatpush1.bf16.xpose.msra.mxu0 0
        %3153 = vmatprep.subr.bf16.mxu0 0
        %3154 = vmatpush1.bf16.xpose.msra.mxu0 0
        %3155 = vmatprep.subr.bf16.mxu0 0
        %3156 = vmatpush1.bf16.xpose.msra.mxu0 %v3139
        %3157 = vmatprep.subr.bf16.mxu0 0
        %3158 = vmatpush2.bf16.xpose.msra.mxu0 0
        %3159 = vmatprep.subr.bf16.mxu0 0
        %3160 = vmatpush2.bf16.xpose.msra.mxu0 0
        %3161 = vmatprep.subr.bf16.mxu0 0
        %3162 = vmatpush2.bf16.xpose.msra.mxu0 0
        %3163 = vmatprep.subr.bf16.mxu0 0
        %3164 = vmatpush2.bf16.xpose.msra.mxu0 0
        %3165 = vmatprep.subr.bf16.mxu0 0
        %3166 = vmatpush2.bf16.xpose.msra.mxu0 0
        %3167 = vmatprep.subr.bf16.mxu0 0
        %3168 = vmatpush2.bf16.xpose.msra.mxu0 0
        %3169 = vmatprep.subr.bf16.mxu0 0
        %3170 = vmatpush2.bf16.xpose.msra.mxu0 0
        %3171 = vmatprep.subr.bf16.mxu0 0
        %3172 = vmatpush2.bf16.xpose.msra.mxu0 0
        %3173 = vmatprep.mubr.bf16.mxu0 0
        %3174 = vmatmul.mubr.bf16.gmra.mxu0 %v3136
        %v3175 = vpop.f32.mrf.mxu0
        %v3176 = vadd.f32 0.0, %v3175
        %v3177 = vpop.f32.mrf.mxu0
        %v3178 = vpop.f32.mrf.mxu0
        %v3179 = vadd.f32 0.0, %v3178
        %v3180 = vpop.f32.mrf.mxu0
        %3181 = vdwg.mxu0
        %vm3182 = vcmask 130048
        %v3183 = vsel %vm3182, %v2398, -inf
        %3184 = vmax.xlane.f32.xlu0 %v3183
        %v3185 = vpop.xlane.xlu0 %3184
        %v3186 = vsel %vm3182, %v2399, -inf
        %3187 = vmax.xlane.f32.xlu0 %v3186
        %v3188 = vpop.xlane.xlu0 %3187
        %v3189 = vsel %vm3182, %v2400, -inf
        %3190 = vmax.xlane.f32.xlu0 %v3189
        %v3191 = vpop.xlane.xlu0 %3190
        %v3192 = vsel %vm3182, %v2401, -inf
        %3193 = vmax.xlane.f32.xlu0 %v3192
        %v3194 = vpop.xlane.xlu0 %3193
        %v3195 = vsel %vm3182, %v2402, -inf
        %3196 = vmax.xlane.f32.xlu0 %v3195
        %v3197 = vpop.xlane.xlu0 %3196
        %v3198 = vsel %vm3182, %v2403, -inf
        %3199 = vmax.xlane.f32.xlu0 %v3198
        %v3200 = vpop.xlane.xlu0 %3199
        %v3201 = vsel %vm3182, %v2404, -inf
        %3202 = vmax.xlane.f32.xlu0 %v3201
        %v3203 = vpop.xlane.xlu0 %3202
        %v3204 = vsel %vm3182, %v2405, -inf
        %3205 = vmax.xlane.f32.xlu0 %v3204
        %v3206 = vpop.xlane.xlu0 %3205
        %v3207 = vsel %vm3182, %v2406, -inf
        %3208 = vmax.xlane.f32.xlu0 %v3207
        %v3209 = vpop.xlane.xlu0 %3208
        %v3210 = vsel %vm3182, %v2407, -inf
        %3211 = vmax.xlane.f32.xlu0 %v3210
        %v3212 = vpop.xlane.xlu0 %3211
        %v3213 = vsel %vm3182, %v2408, -inf
        %3214 = vmax.xlane.f32.xlu0 %v3213
        %v3215 = vpop.xlane.xlu0 %3214
        %v3216 = vsel %vm3182, %v2409, -inf
        %3217 = vmax.xlane.f32.xlu0 %v3216
        %v3218 = vpop.xlane.xlu0 %3217
        %v3219 = vsel %vm3182, %v2410, -inf
        %3220 = vmax.xlane.f32.xlu0 %v3219
        %v3221 = vpop.xlane.xlu0 %3220
        %v3222 = vsel %vm3182, %v2411, -inf
        %3223 = vmax.xlane.f32.xlu0 %v3222
        %v3224 = vpop.xlane.xlu0 %3223
        %v3225 = vsel %vm3182, %v2412, -inf
        %3226 = vmax.xlane.f32.xlu0 %v3225
        %v3227 = vpop.xlane.xlu0 %3226
        %v3228 = vsel %vm3182, %v2413, -inf
        %3229 = vmax.xlane.f32.xlu0 %v3228
        %v3230 = vpop.xlane.xlu0 %3229
        %v3231 = vsel %vm3182, %v2414, -inf
        %3232 = vmax.xlane.f32.xlu0 %v3231
        %v3233 = vpop.xlane.xlu0 %3232
        %v3234 = vsel %vm3182, %v2415, -inf
        %3235 = vmax.xlane.f32.xlu0 %v3234
        %v3236 = vpop.xlane.xlu0 %3235
        %v3237 = vsel %vm3182, %v2416, -inf
        %3238 = vmax.xlane.f32.xlu0 %v3237
        %v3239 = vpop.xlane.xlu0 %3238
        %v3240 = vsel %vm3182, %v2417, -inf
        %3241 = vmax.xlane.f32.xlu0 %v3240
        %v3242 = vpop.xlane.xlu0 %3241
        %v3243 = vsel %vm3182, %v2418, -inf
        %3244 = vmax.xlane.f32.xlu0 %v3243
        %v3245 = vpop.xlane.xlu0 %3244
        %v3246 = vsel %vm3182, %v2419, -inf
        %3247 = vmax.xlane.f32.xlu0 %v3246
        %v3248 = vpop.xlane.xlu0 %3247
        %v3249 = vsel %vm3182, %v2420, -inf
        %3250 = vmax.xlane.f32.xlu0 %v3249
        %v3251 = vpop.xlane.xlu0 %3250
        %v3252 = vsel %vm3182, %v2421, -inf
        %3253 = vmax.xlane.f32.xlu0 %v3252
        %v3254 = vpop.xlane.xlu0 %3253
        %v3255 = vsel %vm3182, %v2422, -inf
        %3256 = vmax.xlane.f32.xlu0 %v3255
        %v3257 = vpop.xlane.xlu0 %3256
        %v3258 = vsel %vm3182, %v2423, -inf
        %3259 = vmax.xlane.f32.xlu0 %v3258
        %v3260 = vpop.xlane.xlu0 %3259
        %v3261 = vsel %vm3182, %v2424, -inf
        %3262 = vmax.xlane.f32.xlu0 %v3261
        %v3263 = vpop.xlane.xlu0 %3262
        %v3264 = vsel %vm3182, %v2425, -inf
        %3265 = vmax.xlane.f32.xlu0 %v3264
        %v3266 = vpop.xlane.xlu0 %3265
        %v3267 = vsel %vm3182, %v2426, -inf
        %3268 = vmax.xlane.f32.xlu0 %v3267
        %v3269 = vpop.xlane.xlu0 %3268
        %v3270 = vsel %vm3182, %v2427, -inf
        %3271 = vmax.xlane.f32.xlu0 %v3270
        %v3272 = vpop.xlane.xlu0 %3271
        %v3273 = vsel %vm3182, %v2428, -inf
        %3274 = vmax.xlane.f32.xlu0 %v3273
        %v3275 = vpop.xlane.xlu0 %3274
        %v3276 = vsel %vm3182, %v2429, -inf
        %3277 = vmax.xlane.f32.xlu0 %v3276
        %v3278 = vpop.xlane.xlu0 %3277
        %v3311 = vlaneseq
        %v3312 = vshrl.u32 %v3311, 7
        %v3313 = vsub.s32 %v2391, %v3312
        %v3314 = vrot.slane %v3185, %v3313
        %v3315 = vadd.s32 %v2391, 4294967288
        %v3316 = vlaneseq
        %v3317 = vshrl.u32 %v3316, 7
        %v3318 = vsub.s32 %v3315, %v3317
        %v3319 = vrot.slane %v3188, %v3318
        %vm3320 = vcmask 130112
        %v3321 = vsel %vm3320, %v3319, %v3314
        %v3322 = vlaneseq
        %v3323 = vshrl.u32 %v3322, 7
        %v3324 = vsub.s32 %v2391, %v3323
        %v3325 = vrot.slane %v3191, %v3324
        %v3326 = vlaneseq
        %v3327 = vshrl.u32 %v3326, 7
        %v3328 = vsub.s32 %v3315, %v3327
        %v3329 = vrot.slane %v3194, %v3328
        %v3330 = vsel %vm3320, %v3329, %v3325
        %v3331 = vlaneseq
        %v3332 = vshrl.u32 %v3331, 7
        %v3333 = vsub.s32 %v2391, %v3332
        %v3334 = vrot.slane %v3197, %v3333
        %v3335 = vlaneseq
        %v3336 = vshrl.u32 %v3335, 7
        %v3337 = vsub.s32 %v3315, %v3336
        %v3338 = vrot.slane %v3200, %v3337
        %v3339 = vsel %vm3320, %v3338, %v3334
        %v3340 = vlaneseq
        %v3341 = vshrl.u32 %v3340, 7
        %v3342 = vsub.s32 %v2391, %v3341
        %v3343 = vrot.slane %v3203, %v3342
        %v3344 = vlaneseq
        %v3345 = vshrl.u32 %v3344, 7
        %v3346 = vsub.s32 %v3315, %v3345
        %v3347 = vrot.slane %v3206, %v3346
        %v3348 = vsel %vm3320, %v3347, %v3343
        %v3349 = vlaneseq
        %v3350 = vshrl.u32 %v3349, 7
        %v3351 = vsub.s32 %v2391, %v3350
        %v3352 = vrot.slane %v3209, %v3351
        %v3353 = vlaneseq
        %v3354 = vshrl.u32 %v3353, 7
        %v3355 = vsub.s32 %v3315, %v3354
        %v3356 = vrot.slane %v3212, %v3355
        %v3357 = vsel %vm3320, %v3356, %v3352
        %v3358 = vlaneseq
        %v3359 = vshrl.u32 %v3358, 7
        %v3360 = vsub.s32 %v2391, %v3359
        %v3361 = vrot.slane %v3215, %v3360
        %v3362 = vlaneseq
        %v3363 = vshrl.u32 %v3362, 7
        %v3364 = vsub.s32 %v3315, %v3363
        %v3365 = vrot.slane %v3218, %v3364
        %v3366 = vsel %vm3320, %v3365, %v3361
        %v3367 = vlaneseq
        %v3368 = vshrl.u32 %v3367, 7
        %v3369 = vsub.s32 %v2391, %v3368
        %v3370 = vrot.slane %v3221, %v3369
        %v3371 = vlaneseq
        %v3372 = vshrl.u32 %v3371, 7
        %v3373 = vsub.s32 %v3315, %v3372
        %v3374 = vrot.slane %v3224, %v3373
        %v3375 = vsel %vm3320, %v3374, %v3370
        %v3376 = vlaneseq
        %v3377 = vshrl.u32 %v3376, 7
        %v3378 = vsub.s32 %v2391, %v3377
        %v3379 = vrot.slane %v3227, %v3378
        %v3380 = vlaneseq
        %v3381 = vshrl.u32 %v3380, 7
        %v3382 = vsub.s32 %v3315, %v3381
        %v3383 = vrot.slane %v3230, %v3382
        %v3384 = vsel %vm3320, %v3383, %v3379
        %v3385 = vlaneseq
        %v3386 = vshrl.u32 %v3385, 7
        %v3387 = vsub.s32 %v2391, %v3386
        %v3388 = vrot.slane %v3233, %v3387
        %v3389 = vlaneseq
        %v3390 = vshrl.u32 %v3389, 7
        %v3391 = vsub.s32 %v3315, %v3390
        %v3392 = vrot.slane %v3236, %v3391
        %v3393 = vsel %vm3320, %v3392, %v3388
        %v3394 = vlaneseq
        %v3395 = vshrl.u32 %v3394, 7
        %v3396 = vsub.s32 %v2391, %v3395
        %v3397 = vrot.slane %v3239, %v3396
        %v3398 = vlaneseq
        %v3399 = vshrl.u32 %v3398, 7
        %v3400 = vsub.s32 %v3315, %v3399
        %v3401 = vrot.slane %v3242, %v3400
        %v3402 = vsel %vm3320, %v3401, %v3397
        %v3403 = vlaneseq
        %v3404 = vshrl.u32 %v3403, 7
        %v3405 = vsub.s32 %v2391, %v3404
        %v3406 = vrot.slane %v3245, %v3405
        %v3407 = vlaneseq
        %v3408 = vshrl.u32 %v3407, 7
        %v3409 = vsub.s32 %v3315, %v3408
        %v3410 = vrot.slane %v3248, %v3409
        %v3411 = vsel %vm3320, %v3410, %v3406
        %v3412 = vlaneseq
        %v3413 = vshrl.u32 %v3412, 7
        %v3414 = vsub.s32 %v2391, %v3413
        %v3415 = vrot.slane %v3251, %v3414
        %v3416 = vlaneseq
        %v3417 = vshrl.u32 %v3416, 7
        %v3418 = vsub.s32 %v3315, %v3417
        %v3419 = vrot.slane %v3254, %v3418
        %v3420 = vsel %vm3320, %v3419, %v3415
        %v3421 = vlaneseq
        %v3422 = vshrl.u32 %v3421, 7
        %v3423 = vsub.s32 %v2391, %v3422
        %v3424 = vrot.slane %v3257, %v3423
        %v3425 = vlaneseq
        %v3426 = vshrl.u32 %v3425, 7
        %v3427 = vsub.s32 %v3315, %v3426
        %v3428 = vrot.slane %v3260, %v3427
        %v3429 = vsel %vm3320, %v3428, %v3424
        %v3430 = vlaneseq
        %v3431 = vshrl.u32 %v3430, 7
        %v3432 = vsub.s32 %v2391, %v3431
        %v3433 = vrot.slane %v3263, %v3432
        %v3434 = vlaneseq
        %v3435 = vshrl.u32 %v3434, 7
        %v3436 = vsub.s32 %v3315, %v3435
        %v3437 = vrot.slane %v3266, %v3436
        %v3438 = vsel %vm3320, %v3437, %v3433
        %v3439 = vlaneseq
        %v3440 = vshrl.u32 %v3439, 7
        %v3441 = vsub.s32 %v2391, %v3440
        %v3442 = vrot.slane %v3269, %v3441
        %v3443 = vlaneseq
        %v3444 = vshrl.u32 %v3443, 7
        %v3445 = vsub.s32 %v3315, %v3444
        %v3446 = vrot.slane %v3272, %v3445
        %v3447 = vsel %vm3320, %v3446, %v3442
        %v3448 = vlaneseq
        %v3449 = vshrl.u32 %v3448, 7
        %v3450 = vsub.s32 %v2391, %v3449
        %v3451 = vrot.slane %v3275, %v3450
        %v3452 = vlaneseq
        %v3453 = vshrl.u32 %v3452, 7
        %v3454 = vsub.s32 %v3315, %v3453
        %v3455 = vrot.slane %v3278, %v3454
        %v3456 = vsel %vm3320, %v3455, %v3451
        %vm3457 = vcmask 1041409
        %v3458 = vsel %vm3457, %v3330, %v3321
        %vm3459 = vcmask 1042434
        %v3460 = vsel %vm3459, %v3339, %v3458
        %vm3461 = vcmask 1043459
        %v3462 = vsel %vm3461, %v3348, %v3460
        %vm3463 = vcmask 1044484
        %v3464 = vsel %vm3463, %v3357, %v3462
        %vm3465 = vcmask 1045509
        %v3466 = vsel %vm3465, %v3366, %v3464
        %vm3467 = vcmask 1046534
        %v3468 = vsel %vm3467, %v3375, %v3466
        %vm3469 = vcmask 1047559
        %v3470 = vsel %vm3469, %v3384, %v3468
        %v3471 = vsel %vm3457, %v3402, %v3393
        %v3472 = vsel %vm3459, %v3411, %v3471
        %v3473 = vsel %vm3461, %v3420, %v3472
        %v3474 = vsel %vm3463, %v3429, %v3473
        %v3475 = vsel %vm3465, %v3438, %v3474
        %v3476 = vsel %vm3467, %v3447, %v3475
        %v3477 = vsel %vm3469, %v3456, %v3476
        %3480 = vxpose.xlu0.b32.start [1/16] %v3470, 128
        %3481 = vxpose.xlu0.b32.cont [2/16] %v3477, 128
        %3482 = vxpose.xlu0.b32.cont [3/16] 0.0, 128
        %3483 = vxpose.xlu0.b32.cont [4/16] 0.0, 128
        %3484 = vxpose.xlu0.b32.cont [5/16] 0.0, 128
        %3485 = vxpose.xlu0.b32.cont [6/16] 0.0, 128
        %3486 = vxpose.xlu0.b32.cont [7/16] 0.0, 128
        %3487 = vxpose.xlu0.b32.cont [8/16] 0.0, 128
        %3488 = vxpose.xlu0.b32.cont [9/16] 0.0, 128
        %3489 = vxpose.xlu0.b32.cont [10/16] 0.0, 128
        %3490 = vxpose.xlu0.b32.cont [11/16] 0.0, 128
        %3491 = vxpose.xlu0.b32.cont [12/16] 0.0, 128
        %3492 = vxpose.xlu0.b32.cont [13/16] 0.0, 128
        %3493 = vxpose.xlu0.b32.cont [14/16] 0.0, 128
        %3494 = vxpose.xlu0.b32.cont [15/16] 0.0, 128
        %3495 = vxpose.xlu0.b32.end [16/16] 0.0, 128
        %v3496 = vpop.trf.xlu0
        %v3497 = vpop.trf.xlu0
        %v3498 = vpop.trf.xlu0
        %v3499 = vpop.trf.xlu0
        %v3500 = vpop.trf.xlu0
        %v3501 = vpop.trf.xlu0
        %v3502 = vpop.trf.xlu0
        %v3503 = vpop.trf.xlu0
        %v3504 = vpop.trf.xlu0
        %v3505 = vpop.trf.xlu0
        %v3506 = vpop.trf.xlu0
        %v3507 = vpop.trf.xlu0
        %v3508 = vpop.trf.xlu0
        %v3509 = vpop.trf.xlu0
        %v3510 = vpop.trf.xlu0
        %v3511 = vpop.trf.xlu0
        %v3512 = vsel %vm3182, %v2471, -inf
        %3513 = vmax.xlane.f32.xlu0 %v3512
        %v3514 = vpop.xlane.xlu0 %3513
        %v3515 = vsel %vm3182, %v2474, -inf
        %3516 = vmax.xlane.f32.xlu0 %v3515
        %v3517 = vpop.xlane.xlu0 %3516
        %v3518 = vsel %vm3182, %v2518, -inf
        %3519 = vmax.xlane.f32.xlu0 %v3518
        %v3520 = vpop.xlane.xlu0 %3519
        %v3521 = vsel %vm3182, %v2521, -inf
        %3522 = vmax.xlane.f32.xlu0 %v3521
        %v3523 = vpop.xlane.xlu0 %3522
        %v3524 = vsel %vm3182, %v2565, -inf
        %3525 = vmax.xlane.f32.xlu0 %v3524
        %v3526 = vpop.xlane.xlu0 %3525
        %v3527 = vsel %vm3182, %v2568, -inf
        %3528 = vmax.xlane.f32.xlu0 %v3527
        %v3529 = vpop.xlane.xlu0 %3528
        %v3530 = vsel %vm3182, %v2612, -inf
        %3531 = vmax.xlane.f32.xlu0 %v3530
        %v3532 = vpop.xlane.xlu0 %3531
        %v3533 = vsel %vm3182, %v2615, -inf
        %3534 = vmax.xlane.f32.xlu0 %v3533
        %v3535 = vpop.xlane.xlu0 %3534
        %v3536 = vsel %vm3182, %v2659, -inf
        %3537 = vmax.xlane.f32.xlu0 %v3536
        %v3538 = vpop.xlane.xlu0 %3537
        %v3539 = vsel %vm3182, %v2662, -inf
        %3540 = vmax.xlane.f32.xlu0 %v3539
        %v3541 = vpop.xlane.xlu0 %3540
        %v3542 = vsel %vm3182, %v2706, -inf
        %3543 = vmax.xlane.f32.xlu0 %v3542
        %v3544 = vpop.xlane.xlu0 %3543
        %v3545 = vsel %vm3182, %v2709, -inf
        %3546 = vmax.xlane.f32.xlu0 %v3545
        %v3547 = vpop.xlane.xlu0 %3546
        %v3548 = vsel %vm3182, %v2753, -inf
        %3549 = vmax.xlane.f32.xlu0 %v3548
        %v3550 = vpop.xlane.xlu0 %3549
        %v3551 = vsel %vm3182, %v2756, -inf
        %3552 = vmax.xlane.f32.xlu0 %v3551
        %v3553 = vpop.xlane.xlu0 %3552
        %v3554 = vsel %vm3182, %v2800, -inf
        %3555 = vmax.xlane.f32.xlu0 %v3554
        %v3556 = vpop.xlane.xlu0 %3555
        %v3557 = vsel %vm3182, %v2803, -inf
        %3558 = vmax.xlane.f32.xlu0 %v3557
        %v3559 = vpop.xlane.xlu0 %3558
        %v3560 = vsel %vm3182, %v2847, -inf
        %3561 = vmax.xlane.f32.xlu0 %v3560
        %v3562 = vpop.xlane.xlu0 %3561
        %v3563 = vsel %vm3182, %v2850, -inf
        %3564 = vmax.xlane.f32.xlu0 %v3563
        %v3565 = vpop.xlane.xlu0 %3564
        %v3566 = vsel %vm3182, %v2894, -inf
        %3567 = vmax.xlane.f32.xlu0 %v3566
        %v3568 = vpop.xlane.xlu0 %3567
        %v3569 = vsel %vm3182, %v2897, -inf
        %3570 = vmax.xlane.f32.xlu0 %v3569
        %v3571 = vpop.xlane.xlu0 %3570
        %v3572 = vsel %vm3182, %v2941, -inf
        %3573 = vmax.xlane.f32.xlu0 %v3572
        %v3574 = vpop.xlane.xlu0 %3573
        %v3575 = vsel %vm3182, %v2944, -inf
        %3576 = vmax.xlane.f32.xlu0 %v3575
        %v3577 = vpop.xlane.xlu0 %3576
        %v3578 = vsel %vm3182, %v2988, -inf
        %3579 = vmax.xlane.f32.xlu0 %v3578
        %v3580 = vpop.xlane.xlu0 %3579
        %v3581 = vsel %vm3182, %v2991, -inf
        %3582 = vmax.xlane.f32.xlu0 %v3581
        %v3583 = vpop.xlane.xlu0 %3582
        %v3584 = vsel %vm3182, %v3035, -inf
        %3585 = vmax.xlane.f32.xlu0 %v3584
        %v3586 = vpop.xlane.xlu0 %3585
        %v3587 = vsel %vm3182, %v3038, -inf
        %3588 = vmax.xlane.f32.xlu0 %v3587
        %v3589 = vpop.xlane.xlu0 %3588
        %v3590 = vsel %vm3182, %v3082, -inf
        %3591 = vmax.xlane.f32.xlu0 %v3590
        %v3592 = vpop.xlane.xlu0 %3591
        %v3593 = vsel %vm3182, %v3085, -inf
        %3594 = vmax.xlane.f32.xlu0 %v3593
        %v3595 = vpop.xlane.xlu0 %3594
        %v3596 = vsel %vm3182, %v3129, -inf
        %3597 = vmax.xlane.f32.xlu0 %v3596
        %v3598 = vpop.xlane.xlu0 %3597
        %v3599 = vsel %vm3182, %v3132, -inf
        %3600 = vmax.xlane.f32.xlu0 %v3599
        %v3601 = vpop.xlane.xlu0 %3600
        %v3602 = vsel %vm3182, %v3176, -inf
        %3603 = vmax.xlane.f32.xlu0 %v3602
        %v3604 = vpop.xlane.xlu0 %3603
        %v3605 = vsel %vm3182, %v3179, -inf
        %3606 = vmax.xlane.f32.xlu0 %v3605
        %v3607 = vpop.xlane.xlu0 %3606
        %v3640 = vlaneseq
        %v3641 = vshrl.u32 %v3640, 7
        %v3642 = vsub.s32 %v2391, %v3641
        %v3643 = vrot.slane %v3514, %v3642
        %v3644 = vlaneseq
        %v3645 = vshrl.u32 %v3644, 7
        %v3646 = vsub.s32 %v3315, %v3645
        %v3647 = vrot.slane %v3517, %v3646
        %v3648 = vsel %vm3320, %v3647, %v3643
        %v3649 = vlaneseq
        %v3650 = vshrl.u32 %v3649, 7
        %v3651 = vsub.s32 %v2391, %v3650
        %v3652 = vrot.slane %v3520, %v3651
        %v3653 = vlaneseq
        %v3654 = vshrl.u32 %v3653, 7
        %v3655 = vsub.s32 %v3315, %v3654
        %v3656 = vrot.slane %v3523, %v3655
        %v3657 = vsel %vm3320, %v3656, %v3652
        %v3658 = vlaneseq
        %v3659 = vshrl.u32 %v3658, 7
        %v3660 = vsub.s32 %v2391, %v3659
        %v3661 = vrot.slane %v3526, %v3660
        %v3662 = vlaneseq
        %v3663 = vshrl.u32 %v3662, 7
        %v3664 = vsub.s32 %v3315, %v3663
        %v3665 = vrot.slane %v3529, %v3664
        %v3666 = vsel %vm3320, %v3665, %v3661
        %v3667 = vlaneseq
        %v3668 = vshrl.u32 %v3667, 7
        %v3669 = vsub.s32 %v2391, %v3668
        %v3670 = vrot.slane %v3532, %v3669
        %v3671 = vlaneseq
        %v3672 = vshrl.u32 %v3671, 7
        %v3673 = vsub.s32 %v3315, %v3672
        %v3674 = vrot.slane %v3535, %v3673
        %v3675 = vsel %vm3320, %v3674, %v3670
        %v3676 = vlaneseq
        %v3677 = vshrl.u32 %v3676, 7
        %v3678 = vsub.s32 %v2391, %v3677
        %v3679 = vrot.slane %v3538, %v3678
        %v3680 = vlaneseq
        %v3681 = vshrl.u32 %v3680, 7
        %v3682 = vsub.s32 %v3315, %v3681
        %v3683 = vrot.slane %v3541, %v3682
        %v3684 = vsel %vm3320, %v3683, %v3679
        %v3685 = vlaneseq
        %v3686 = vshrl.u32 %v3685, 7
        %v3687 = vsub.s32 %v2391, %v3686
        %v3688 = vrot.slane %v3544, %v3687
        %v3689 = vlaneseq
        %v3690 = vshrl.u32 %v3689, 7
        %v3691 = vsub.s32 %v3315, %v3690
        %v3692 = vrot.slane %v3547, %v3691
        %v3693 = vsel %vm3320, %v3692, %v3688
        %v3694 = vlaneseq
        %v3695 = vshrl.u32 %v3694, 7
        %v3696 = vsub.s32 %v2391, %v3695
        %v3697 = vrot.slane %v3550, %v3696
        %v3698 = vlaneseq
        %v3699 = vshrl.u32 %v3698, 7
        %v3700 = vsub.s32 %v3315, %v3699
        %v3701 = vrot.slane %v3553, %v3700
        %v3702 = vsel %vm3320, %v3701, %v3697
        %v3703 = vlaneseq
        %v3704 = vshrl.u32 %v3703, 7
        %v3705 = vsub.s32 %v2391, %v3704
        %v3706 = vrot.slane %v3556, %v3705
        %v3707 = vlaneseq
        %v3708 = vshrl.u32 %v3707, 7
        %v3709 = vsub.s32 %v3315, %v3708
        %v3710 = vrot.slane %v3559, %v3709
        %v3711 = vsel %vm3320, %v3710, %v3706
        %v3712 = vlaneseq
        %v3713 = vshrl.u32 %v3712, 7
        %v3714 = vsub.s32 %v2391, %v3713
        %v3715 = vrot.slane %v3562, %v3714
        %v3716 = vlaneseq
        %v3717 = vshrl.u32 %v3716, 7
        %v3718 = vsub.s32 %v3315, %v3717
        %v3719 = vrot.slane %v3565, %v3718
        %v3720 = vsel %vm3320, %v3719, %v3715
        %v3721 = vlaneseq
        %v3722 = vshrl.u32 %v3721, 7
        %v3723 = vsub.s32 %v2391, %v3722
        %v3724 = vrot.slane %v3568, %v3723
        %v3725 = vlaneseq
        %v3726 = vshrl.u32 %v3725, 7
        %v3727 = vsub.s32 %v3315, %v3726
        %v3728 = vrot.slane %v3571, %v3727
        %v3729 = vsel %vm3320, %v3728, %v3724
        %v3730 = vlaneseq
        %v3731 = vshrl.u32 %v3730, 7
        %v3732 = vsub.s32 %v2391, %v3731
        %v3733 = vrot.slane %v3574, %v3732
        %v3734 = vlaneseq
        %v3735 = vshrl.u32 %v3734, 7
        %v3736 = vsub.s32 %v3315, %v3735
        %v3737 = vrot.slane %v3577, %v3736
        %v3738 = vsel %vm3320, %v3737, %v3733
        %v3739 = vlaneseq
        %v3740 = vshrl.u32 %v3739, 7
        %v3741 = vsub.s32 %v2391, %v3740
        %v3742 = vrot.slane %v3580, %v3741
        %v3743 = vlaneseq
        %v3744 = vshrl.u32 %v3743, 7
        %v3745 = vsub.s32 %v3315, %v3744
        %v3746 = vrot.slane %v3583, %v3745
        %v3747 = vsel %vm3320, %v3746, %v3742
        %v3748 = vlaneseq
        %v3749 = vshrl.u32 %v3748, 7
        %v3750 = vsub.s32 %v2391, %v3749
        %v3751 = vrot.slane %v3586, %v3750
        %v3752 = vlaneseq
        %v3753 = vshrl.u32 %v3752, 7
        %v3754 = vsub.s32 %v3315, %v3753
        %v3755 = vrot.slane %v3589, %v3754
        %v3756 = vsel %vm3320, %v3755, %v3751
        %v3757 = vlaneseq
        %v3758 = vshrl.u32 %v3757, 7
        %v3759 = vsub.s32 %v2391, %v3758
        %v3760 = vrot.slane %v3592, %v3759
        %v3761 = vlaneseq
        %v3762 = vshrl.u32 %v3761, 7
        %v3763 = vsub.s32 %v3315, %v3762
        %v3764 = vrot.slane %v3595, %v3763
        %v3765 = vsel %vm3320, %v3764, %v3760
        %v3766 = vlaneseq
        %v3767 = vshrl.u32 %v3766, 7
        %v3768 = vsub.s32 %v2391, %v3767
        %v3769 = vrot.slane %v3598, %v3768
        %v3770 = vlaneseq
        %v3771 = vshrl.u32 %v3770, 7
        %v3772 = vsub.s32 %v3315, %v3771
        %v3773 = vrot.slane %v3601, %v3772
        %v3774 = vsel %vm3320, %v3773, %v3769
        %v3775 = vlaneseq
        %v3776 = vshrl.u32 %v3775, 7
        %v3777 = vsub.s32 %v2391, %v3776
        %v3778 = vrot.slane %v3604, %v3777
        %v3779 = vlaneseq
        %v3780 = vshrl.u32 %v3779, 7
        %v3781 = vsub.s32 %v3315, %v3780
        %v3782 = vrot.slane %v3607, %v3781
        %v3783 = vsel %vm3320, %v3782, %v3778
        %v3784 = vsel %vm3457, %v3657, %v3648
        %v3785 = vsel %vm3459, %v3666, %v3784
        %v3786 = vsel %vm3461, %v3675, %v3785
        %v3787 = vsel %vm3463, %v3684, %v3786
        %v3788 = vsel %vm3465, %v3693, %v3787
        %v3789 = vsel %vm3467, %v3702, %v3788
        %v3790 = vsel %vm3469, %v3711, %v3789
        %v3791 = vsel %vm3457, %v3729, %v3720
        %v3792 = vsel %vm3459, %v3738, %v3791
        %v3793 = vsel %vm3461, %v3747, %v3792
        %v3794 = vsel %vm3463, %v3756, %v3793
        %v3795 = vsel %vm3465, %v3765, %v3794
        %v3796 = vsel %vm3467, %v3774, %v3795
        %v3797 = vsel %vm3469, %v3783, %v3796
        %v3800 = vmax.f32 %v3496, %v3790
        %v3801 = vmax.f32 %v3497, %v3797
        %3802 = vxpose.xlu0.b32.start [1/16] %v3800, 128
        %3803 = vxpose.xlu0.b32.cont [2/16] %v3801, 128
        %3804 = vxpose.xlu0.b32.cont [3/16] 0.0, 128
        %3805 = vxpose.xlu0.b32.cont [4/16] 0.0, 128
        %3806 = vxpose.xlu0.b32.cont [5/16] 0.0, 128
        %3807 = vxpose.xlu0.b32.cont [6/16] 0.0, 128
        %3808 = vxpose.xlu0.b32.cont [7/16] 0.0, 128
        %3809 = vxpose.xlu0.b32.cont [8/16] 0.0, 128
        %3810 = vxpose.xlu0.b32.cont [9/16] 0.0, 128
        %3811 = vxpose.xlu0.b32.cont [10/16] 0.0, 128
        %3812 = vxpose.xlu0.b32.cont [11/16] 0.0, 128
        %3813 = vxpose.xlu0.b32.cont [12/16] 0.0, 128
        %3814 = vxpose.xlu0.b32.cont [13/16] 0.0, 128
        %3815 = vxpose.xlu0.b32.cont [14/16] 0.0, 128
        %3816 = vxpose.xlu0.b32.cont [15/16] 0.0, 128
        %3817 = vxpose.xlu0.b32.end [16/16] 0.0, 128
        %v3818 = vpop.trf.xlu0
        %v3819 = vpop.trf.xlu0
        %v3820 = vpop.trf.xlu0
        %v3821 = vpop.trf.xlu0
        %v3822 = vpop.trf.xlu0
        %v3823 = vpop.trf.xlu0
        %v3824 = vpop.trf.xlu0
        %v3825 = vpop.trf.xlu0
        %v3826 = vpop.trf.xlu0
        %v3827 = vpop.trf.xlu0
        %v3828 = vpop.trf.xlu0
        %v3829 = vpop.trf.xlu0
        %v3830 = vpop.trf.xlu0
        %v3831 = vpop.trf.xlu0
        %v3832 = vpop.trf.xlu0
        %v3833 = vpop.trf.xlu0
        %v3834 = vlaneseq
        %v3835 = vshrl.u32 %v3834, 7
        %v3836 = vsub.s32 0, %v3835
        %v3837 = vrot.slane %v3818, %v3836
        %3839 = vbcast.lane.b32.xlu0 %v3837, 256
        %v3840 = vpop.permute.xlu0 %3839
        %s3842 = sor.u32 256, 8
        %3843 = vbcast.lane.b32.xlu0 %v3837, %s3842
        %v3844 = vpop.permute.xlu0 %3843
        %v3845 = vlaneseq
        %v3846 = vshrl.u32 %v3845, 7
        %v3847 = vsub.s32 1, %v3846
        %v3848 = vrot.slane %v3818, %v3847
        %3850 = vbcast.lane.b32.xlu0 %v3848, 256
        %v3851 = vpop.permute.xlu0 %3850
        %s3853 = sor.u32 256, 8
        %3854 = vbcast.lane.b32.xlu0 %v3848, %s3853
        %v3855 = vpop.permute.xlu0 %3854
        %v3856 = vlaneseq
        %v3857 = vshrl.u32 %v3856, 7
        %v3858 = vsub.s32 2, %v3857
        %v3859 = vrot.slane %v3818, %v3858
        %3861 = vbcast.lane.b32.xlu0 %v3859, 256
        %v3862 = vpop.permute.xlu0 %3861
        %s3864 = sor.u32 256, 8
        %3865 = vbcast.lane.b32.xlu0 %v3859, %s3864
        %v3866 = vpop.permute.xlu0 %3865
        %v3867 = vlaneseq
        %v3868 = vshrl.u32 %v3867, 7
        %v3869 = vsub.s32 3, %v3868
        %v3870 = vrot.slane %v3818, %v3869
        %3872 = vbcast.lane.b32.xlu0 %v3870, 256
        %v3873 = vpop.permute.xlu0 %3872
        %s3875 = sor.u32 256, 8
        %3876 = vbcast.lane.b32.xlu0 %v3870, %s3875
        %v3877 = vpop.permute.xlu0 %3876
        %v3878 = vlaneseq
        %v3879 = vshrl.u32 %v3878, 7
        %v3880 = vsub.s32 4, %v3879
        %v3881 = vrot.slane %v3818, %v3880
        %3883 = vbcast.lane.b32.xlu0 %v3881, 256
        %v3884 = vpop.permute.xlu0 %3883
        %s3886 = sor.u32 256, 8
        %3887 = vbcast.lane.b32.xlu0 %v3881, %s3886
        %v3888 = vpop.permute.xlu0 %3887
        %v3889 = vlaneseq
        %v3890 = vshrl.u32 %v3889, 7
        %v3891 = vsub.s32 5, %v3890
        %v3892 = vrot.slane %v3818, %v3891
        %3894 = vbcast.lane.b32.xlu0 %v3892, 256
        %v3895 = vpop.permute.xlu0 %3894
        %s3897 = sor.u32 256, 8
        %3898 = vbcast.lane.b32.xlu0 %v3892, %s3897
        %v3899 = vpop.permute.xlu0 %3898
        %v3900 = vlaneseq
        %v3901 = vshrl.u32 %v3900, 7
        %v3902 = vsub.s32 6, %v3901
        %v3903 = vrot.slane %v3818, %v3902
        %3905 = vbcast.lane.b32.xlu0 %v3903, 256
        %v3906 = vpop.permute.xlu0 %3905
        %s3908 = sor.u32 256, 8
        %3909 = vbcast.lane.b32.xlu0 %v3903, %s3908
        %v3910 = vpop.permute.xlu0 %3909
        %v3911 = vlaneseq
        %v3912 = vshrl.u32 %v3911, 7
        %v3913 = vsub.s32 7, %v3912
        %v3914 = vrot.slane %v3818, %v3913
        %3916 = vbcast.lane.b32.xlu0 %v3914, 256
        %v3917 = vpop.permute.xlu0 %3916
        %s3919 = sor.u32 256, 8
        %3920 = vbcast.lane.b32.xlu0 %v3914, %s3919
        %v3921 = vpop.permute.xlu0 %3920
        %v3922 = vlaneseq
        %v3923 = vshrl.u32 %v3922, 7
        %v3924 = vsub.s32 0, %v3923
        %v3925 = vrot.slane %v3819, %v3924
        %3927 = vbcast.lane.b32.xlu0 %v3925, 256
        %v3928 = vpop.permute.xlu0 %3927
        %s3930 = sor.u32 256, 8
        %3931 = vbcast.lane.b32.xlu0 %v3925, %s3930
        %v3932 = vpop.permute.xlu0 %3931
        %v3933 = vlaneseq
        %v3934 = vshrl.u32 %v3933, 7
        %v3935 = vsub.s32 1, %v3934
        %v3936 = vrot.slane %v3819, %v3935
        %3938 = vbcast.lane.b32.xlu0 %v3936, 256
        %v3939 = vpop.permute.xlu0 %3938
        %s3941 = sor.u32 256, 8
        %3942 = vbcast.lane.b32.xlu0 %v3936, %s3941
        %v3943 = vpop.permute.xlu0 %3942
        %v3944 = vlaneseq
        %v3945 = vshrl.u32 %v3944, 7
        %v3946 = vsub.s32 2, %v3945
        %v3947 = vrot.slane %v3819, %v3946
        %3949 = vbcast.lane.b32.xlu0 %v3947, 256
        %v3950 = vpop.permute.xlu0 %3949
        %s3952 = sor.u32 256, 8
        %3953 = vbcast.lane.b32.xlu0 %v3947, %s3952
        %v3954 = vpop.permute.xlu0 %3953
        %v3955 = vlaneseq
        %v3956 = vshrl.u32 %v3955, 7
        %v3957 = vsub.s32 3, %v3956
        %v3958 = vrot.slane %v3819, %v3957
        %3960 = vbcast.lane.b32.xlu0 %v3958, 256
        %v3961 = vpop.permute.xlu0 %3960
        %s3963 = sor.u32 256, 8
        %3964 = vbcast.lane.b32.xlu0 %v3958, %s3963
        %v3965 = vpop.permute.xlu0 %3964
        %v3966 = vlaneseq
        %v3967 = vshrl.u32 %v3966, 7
        %v3968 = vsub.s32 4, %v3967
        %v3969 = vrot.slane %v3819, %v3968
        %3971 = vbcast.lane.b32.xlu0 %v3969, 256
        %v3972 = vpop.permute.xlu0 %3971
        %s3974 = sor.u32 256, 8
        %3975 = vbcast.lane.b32.xlu0 %v3969, %s3974
        %v3976 = vpop.permute.xlu0 %3975
        %v3977 = vlaneseq
        %v3978 = vshrl.u32 %v3977, 7
        %v3979 = vsub.s32 5, %v3978
        %v3980 = vrot.slane %v3819, %v3979
        %3982 = vbcast.lane.b32.xlu0 %v3980, 256
        %v3983 = vpop.permute.xlu0 %3982
        %s3985 = sor.u32 256, 8
        %3986 = vbcast.lane.b32.xlu0 %v3980, %s3985
        %v3987 = vpop.permute.xlu0 %3986
        %v3988 = vlaneseq
        %v3989 = vshrl.u32 %v3988, 7
        %v3990 = vsub.s32 6, %v3989
        %v3991 = vrot.slane %v3819, %v3990
        %3993 = vbcast.lane.b32.xlu0 %v3991, 256
        %v3994 = vpop.permute.xlu0 %3993
        %s3996 = sor.u32 256, 8
        %3997 = vbcast.lane.b32.xlu0 %v3991, %s3996
        %v3998 = vpop.permute.xlu0 %3997
        %v3999 = vlaneseq
        %v4000 = vshrl.u32 %v3999, 7
        %v4001 = vsub.s32 7, %v4000
        %v4002 = vrot.slane %v3819, %v4001
        %4004 = vbcast.lane.b32.xlu0 %v4002, 256
        %v4005 = vpop.permute.xlu0 %4004
        %s4007 = sor.u32 256, 8
        %4008 = vbcast.lane.b32.xlu0 %v4002, %s4007
        %v4009 = vpop.permute.xlu0 %4008
        %v4010 = vsub.f32 %v2398, %v3840
        %v4011 = vsub.f32 %v2399, %v3844
        %v4012 = vsub.f32 %v2400, %v3851
        %v4013 = vsub.f32 %v2401, %v3855
        %v4014 = vsub.f32 %v2402, %v3862
        %v4015 = vsub.f32 %v2403, %v3866
        %v4016 = vsub.f32 %v2404, %v3873
        %v4017 = vsub.f32 %v2405, %v3877
        %v4018 = vsub.f32 %v2406, %v3884
        %v4019 = vsub.f32 %v2407, %v3888
        %v4020 = vsub.f32 %v2408, %v3895
        %v4021 = vsub.f32 %v2409, %v3899
        %v4022 = vsub.f32 %v2410, %v3906
        %v4023 = vsub.f32 %v2411, %v3910
        %v4024 = vsub.f32 %v2412, %v3917
        %v4025 = vsub.f32 %v2413, %v3921
        %v4026 = vsub.f32 %v2414, %v3928
        %v4027 = vsub.f32 %v2415, %v3932
        %v4028 = vsub.f32 %v2416, %v3939
        %v4029 = vsub.f32 %v2417, %v3943
        %v4030 = vsub.f32 %v2418, %v3950
        %v4031 = vsub.f32 %v2419, %v3954
        %v4032 = vsub.f32 %v2420, %v3961
        %v4033 = vsub.f32 %v2421, %v3965
        %v4034 = vsub.f32 %v2422, %v3972
        %v4035 = vsub.f32 %v2423, %v3976
        %v4036 = vsub.f32 %v2424, %v3983
        %v4037 = vsub.f32 %v2425, %v3987
        %v4038 = vsub.f32 %v2426, %v3994
        %v4039 = vsub.f32 %v2427, %v3998
        %v4040 = vsub.f32 %v2428, %v4005
        %v4041 = vsub.f32 %v2429, %v4009
        %v4042 = vmul.f32 %v4010, 1.442695
        %v4043 = vpow.pop %v4042
        %v4044 = vmul.f32 %v4011, 1.442695
        %v4045 = vpow.pop %v4044
        %v4046 = vmul.f32 %v4012, 1.442695
        %v4047 = vpow.pop %v4046
        %v4048 = vmul.f32 %v4013, 1.442695
        %v4049 = vpow.pop %v4048
        %v4050 = vmul.f32 %v4014, 1.442695
        %v4051 = vpow.pop %v4050
        %v4052 = vmul.f32 %v4015, 1.442695
        %v4053 = vpow.pop %v4052
        %v4054 = vmul.f32 %v4016, 1.442695
        %v4055 = vpow.pop %v4054
        %v4056 = vmul.f32 %v4017, 1.442695
        %v4057 = vpow.pop %v4056
        %v4058 = vmul.f32 %v4018, 1.442695
        %v4059 = vpow.pop %v4058
        %v4060 = vmul.f32 %v4019, 1.442695
        %v4061 = vpow.pop %v4060
        %v4062 = vmul.f32 %v4020, 1.442695
        %v4063 = vpow.pop %v4062
        %v4064 = vmul.f32 %v4021, 1.442695
        %v4065 = vpow.pop %v4064
        %v4066 = vmul.f32 %v4022, 1.442695
        %v4067 = vpow.pop %v4066
        %v4068 = vmul.f32 %v4023, 1.442695
        %v4069 = vpow.pop %v4068
        %v4070 = vmul.f32 %v4024, 1.442695
        %v4071 = vpow.pop %v4070
        %v4072 = vmul.f32 %v4025, 1.442695
        %v4073 = vpow.pop %v4072
        %v4074 = vmul.f32 %v4026, 1.442695
        %v4075 = vpow.pop %v4074
        %v4076 = vmul.f32 %v4027, 1.442695
        %v4077 = vpow.pop %v4076
        %v4078 = vmul.f32 %v4028, 1.442695
        %v4079 = vpow.pop %v4078
        %v4080 = vmul.f32 %v4029, 1.442695
        %v4081 = vpow.pop %v4080
        %v4082 = vmul.f32 %v4030, 1.442695
        %v4083 = vpow.pop %v4082
        %v4084 = vmul.f32 %v4031, 1.442695
        %v4085 = vpow.pop %v4084
        %v4086 = vmul.f32 %v4032, 1.442695
        %v4087 = vpow.pop %v4086
        %v4088 = vmul.f32 %v4033, 1.442695
        %v4089 = vpow.pop %v4088
        %v4090 = vmul.f32 %v4034, 1.442695
        %v4091 = vpow.pop %v4090
        %v4092 = vmul.f32 %v4035, 1.442695
        %v4093 = vpow.pop %v4092
        %v4094 = vmul.f32 %v4036, 1.442695
        %v4095 = vpow.pop %v4094
        %v4096 = vmul.f32 %v4037, 1.442695
        %v4097 = vpow.pop %v4096
        %v4098 = vmul.f32 %v4038, 1.442695
        %v4099 = vpow.pop %v4098
        %v4100 = vmul.f32 %v4039, 1.442695
        %v4101 = vpow.pop %v4100
        %v4102 = vmul.f32 %v4040, 1.442695
        %v4103 = vpow.pop %v4102
        %v4104 = vmul.f32 %v4041, 1.442695
        %v4105 = vpow.pop %v4104
        %v4106 = vlaneseq
        %v4107 = vshrl.u32 %v4106, 7
        %v4108 = vsub.s32 0, %v4107
        %v4109 = vrot.slane %v3800, %v4108
        %4111 = vbcast.lane.b32.xlu0 %v4109, 256
        %v4112 = vpop.permute.xlu0 %4111
        %s4114 = sor.u32 256, 8
        %4115 = vbcast.lane.b32.xlu0 %v4109, %s4114
        %v4116 = vpop.permute.xlu0 %4115
        %v4117 = vlaneseq
        %v4118 = vshrl.u32 %v4117, 7
        %v4119 = vsub.s32 1, %v4118
        %v4120 = vrot.slane %v3800, %v4119
        %4122 = vbcast.lane.b32.xlu0 %v4120, 256
        %v4123 = vpop.permute.xlu0 %4122
        %s4125 = sor.u32 256, 8
        %4126 = vbcast.lane.b32.xlu0 %v4120, %s4125
        %v4127 = vpop.permute.xlu0 %4126
        %v4128 = vlaneseq
        %v4129 = vshrl.u32 %v4128, 7
        %v4130 = vsub.s32 2, %v4129
        %v4131 = vrot.slane %v3800, %v4130
        %4133 = vbcast.lane.b32.xlu0 %v4131, 256
        %v4134 = vpop.permute.xlu0 %4133
        %s4136 = sor.u32 256, 8
        %4137 = vbcast.lane.b32.xlu0 %v4131, %s4136
        %v4138 = vpop.permute.xlu0 %4137
        %v4139 = vlaneseq
        %v4140 = vshrl.u32 %v4139, 7
        %v4141 = vsub.s32 3, %v4140
        %v4142 = vrot.slane %v3800, %v4141
        %4144 = vbcast.lane.b32.xlu0 %v4142, 256
        %v4145 = vpop.permute.xlu0 %4144
        %s4147 = sor.u32 256, 8
        %4148 = vbcast.lane.b32.xlu0 %v4142, %s4147
        %v4149 = vpop.permute.xlu0 %4148
        %v4150 = vlaneseq
        %v4151 = vshrl.u32 %v4150, 7
        %v4152 = vsub.s32 4, %v4151
        %v4153 = vrot.slane %v3800, %v4152
        %4155 = vbcast.lane.b32.xlu0 %v4153, 256
        %v4156 = vpop.permute.xlu0 %4155
        %s4158 = sor.u32 256, 8
        %4159 = vbcast.lane.b32.xlu0 %v4153, %s4158
        %v4160 = vpop.permute.xlu0 %4159
        %v4161 = vlaneseq
        %v4162 = vshrl.u32 %v4161, 7
        %v4163 = vsub.s32 5, %v4162
        %v4164 = vrot.slane %v3800, %v4163
        %4166 = vbcast.lane.b32.xlu0 %v4164, 256
        %v4167 = vpop.permute.xlu0 %4166
        %s4169 = sor.u32 256, 8
        %4170 = vbcast.lane.b32.xlu0 %v4164, %s4169
        %v4171 = vpop.permute.xlu0 %4170
        %v4172 = vlaneseq
        %v4173 = vshrl.u32 %v4172, 7
        %v4174 = vsub.s32 6, %v4173
        %v4175 = vrot.slane %v3800, %v4174
        %4177 = vbcast.lane.b32.xlu0 %v4175, 256
        %v4178 = vpop.permute.xlu0 %4177
        %s4180 = sor.u32 256, 8
        %4181 = vbcast.lane.b32.xlu0 %v4175, %s4180
        %v4182 = vpop.permute.xlu0 %4181
        %v4183 = vlaneseq
        %v4184 = vshrl.u32 %v4183, 7
        %v4185 = vsub.s32 7, %v4184
        %v4186 = vrot.slane %v3800, %v4185
        %4188 = vbcast.lane.b32.xlu0 %v4186, 256
        %v4189 = vpop.permute.xlu0 %4188
        %s4191 = sor.u32 256, 8
        %4192 = vbcast.lane.b32.xlu0 %v4186, %s4191
        %v4193 = vpop.permute.xlu0 %4192
        %v4194 = vlaneseq
        %v4195 = vshrl.u32 %v4194, 7
        %v4196 = vsub.s32 0, %v4195
        %v4197 = vrot.slane %v3801, %v4196
        %4199 = vbcast.lane.b32.xlu0 %v4197, 256
        %v4200 = vpop.permute.xlu0 %4199
        %s4202 = sor.u32 256, 8
        %4203 = vbcast.lane.b32.xlu0 %v4197, %s4202
        %v4204 = vpop.permute.xlu0 %4203
        %v4205 = vlaneseq
        %v4206 = vshrl.u32 %v4205, 7
        %v4207 = vsub.s32 1, %v4206
        %v4208 = vrot.slane %v3801, %v4207
        %4210 = vbcast.lane.b32.xlu0 %v4208, 256
        %v4211 = vpop.permute.xlu0 %4210
        %s4213 = sor.u32 256, 8
        %4214 = vbcast.lane.b32.xlu0 %v4208, %s4213
        %v4215 = vpop.permute.xlu0 %4214
        %v4216 = vlaneseq
        %v4217 = vshrl.u32 %v4216, 7
        %v4218 = vsub.s32 2, %v4217
        %v4219 = vrot.slane %v3801, %v4218
        %4221 = vbcast.lane.b32.xlu0 %v4219, 256
        %v4222 = vpop.permute.xlu0 %4221
        %s4224 = sor.u32 256, 8
        %4225 = vbcast.lane.b32.xlu0 %v4219, %s4224
        %v4226 = vpop.permute.xlu0 %4225
        %v4227 = vlaneseq
        %v4228 = vshrl.u32 %v4227, 7
        %v4229 = vsub.s32 3, %v4228
        %v4230 = vrot.slane %v3801, %v4229
        %4232 = vbcast.lane.b32.xlu0 %v4230, 256
        %v4233 = vpop.permute.xlu0 %4232
        %s4235 = sor.u32 256, 8
        %4236 = vbcast.lane.b32.xlu0 %v4230, %s4235
        %v4237 = vpop.permute.xlu0 %4236
        %v4238 = vlaneseq
        %v4239 = vshrl.u32 %v4238, 7
        %v4240 = vsub.s32 4, %v4239
        %v4241 = vrot.slane %v3801, %v4240
        %4243 = vbcast.lane.b32.xlu0 %v4241, 256
        %v4244 = vpop.permute.xlu0 %4243
        %s4246 = sor.u32 256, 8
        %4247 = vbcast.lane.b32.xlu0 %v4241, %s4246
        %v4248 = vpop.permute.xlu0 %4247
        %v4249 = vlaneseq
        %v4250 = vshrl.u32 %v4249, 7
        %v4251 = vsub.s32 5, %v4250
        %v4252 = vrot.slane %v3801, %v4251
        %4254 = vbcast.lane.b32.xlu0 %v4252, 256
        %v4255 = vpop.permute.xlu0 %4254
        %s4257 = sor.u32 256, 8
        %4258 = vbcast.lane.b32.xlu0 %v4252, %s4257
        %v4259 = vpop.permute.xlu0 %4258
        %v4260 = vlaneseq
        %v4261 = vshrl.u32 %v4260, 7
        %v4262 = vsub.s32 6, %v4261
        %v4263 = vrot.slane %v3801, %v4262
        %4265 = vbcast.lane.b32.xlu0 %v4263, 256
        %v4266 = vpop.permute.xlu0 %4265
        %s4268 = sor.u32 256, 8
        %4269 = vbcast.lane.b32.xlu0 %v4263, %s4268
        %v4270 = vpop.permute.xlu0 %4269
        %v4271 = vlaneseq
        %v4272 = vshrl.u32 %v4271, 7
        %v4273 = vsub.s32 7, %v4272
        %v4274 = vrot.slane %v3801, %v4273
        %4276 = vbcast.lane.b32.xlu0 %v4274, 256
        %v4277 = vpop.permute.xlu0 %4276
        %s4279 = sor.u32 256, 8
        %4280 = vbcast.lane.b32.xlu0 %v4274, %s4279
        %v4281 = vpop.permute.xlu0 %4280
        %v4282 = vsub.f32 %v2471, %v4112
        %v4283 = vsub.f32 %v2474, %v4116
        %v4284 = vsub.f32 %v2518, %v4123
        %v4285 = vsub.f32 %v2521, %v4127
        %v4286 = vsub.f32 %v2565, %v4134
        %v4287 = vsub.f32 %v2568, %v4138
        %v4288 = vsub.f32 %v2612, %v4145
        %v4289 = vsub.f32 %v2615, %v4149
        %v4290 = vsub.f32 %v2659, %v4156
        %v4291 = vsub.f32 %v2662, %v4160
        %v4292 = vsub.f32 %v2706, %v4167
        %v4293 = vsub.f32 %v2709, %v4171
        %v4294 = vsub.f32 %v2753, %v4178
        %v4295 = vsub.f32 %v2756, %v4182
        %v4296 = vsub.f32 %v2800, %v4189
        %v4297 = vsub.f32 %v2803, %v4193
        %v4298 = vsub.f32 %v2847, %v4200
        %v4299 = vsub.f32 %v2850, %v4204
        %v4300 = vsub.f32 %v2894, %v4211
        %v4301 = vsub.f32 %v2897, %v4215
        %v4302 = vsub.f32 %v2941, %v4222
        %v4303 = vsub.f32 %v2944, %v4226
        %v4304 = vsub.f32 %v2988, %v4233
        %v4305 = vsub.f32 %v2991, %v4237
        %v4306 = vsub.f32 %v3035, %v4244
        %v4307 = vsub.f32 %v3038, %v4248
        %v4308 = vsub.f32 %v3082, %v4255
        %v4309 = vsub.f32 %v3085, %v4259
        %v4310 = vsub.f32 %v3129, %v4266
        %v4311 = vsub.f32 %v3132, %v4270
        %v4312 = vsub.f32 %v3176, %v4277
        %v4313 = vsub.f32 %v3179, %v4281
        %v4314 = vmul.f32 %v4282, 1.442695
        %v4315 = vpow.pop %v4314
        %v4316 = vmul.f32 %v4283, 1.442695
        %v4317 = vpow.pop %v4316
        %v4318 = vmul.f32 %v4284, 1.442695
        %v4319 = vpow.pop %v4318
        %v4320 = vmul.f32 %v4285, 1.442695
        %v4321 = vpow.pop %v4320
        %v4322 = vmul.f32 %v4286, 1.442695
        %v4323 = vpow.pop %v4322
        %v4324 = vmul.f32 %v4287, 1.442695
        %v4325 = vpow.pop %v4324
        %v4326 = vmul.f32 %v4288, 1.442695
        %v4327 = vpow.pop %v4326
        %v4328 = vmul.f32 %v4289, 1.442695
        %v4329 = vpow.pop %v4328
        %v4330 = vmul.f32 %v4290, 1.442695
        %v4331 = vpow.pop %v4330
        %v4332 = vmul.f32 %v4291, 1.442695
        %v4333 = vpow.pop %v4332
        %v4334 = vmul.f32 %v4292, 1.442695
        %v4335 = vpow.pop %v4334
        %v4336 = vmul.f32 %v4293, 1.442695
        %v4337 = vpow.pop %v4336
        %v4338 = vmul.f32 %v4294, 1.442695
        %v4339 = vpow.pop %v4338
        %v4340 = vmul.f32 %v4295, 1.442695
        %v4341 = vpow.pop %v4340
        %v4342 = vmul.f32 %v4296, 1.442695
        %v4343 = vpow.pop %v4342
        %v4344 = vmul.f32 %v4297, 1.442695
        %v4345 = vpow.pop %v4344
        %v4346 = vmul.f32 %v4298, 1.442695
        %v4347 = vpow.pop %v4346
        %v4348 = vmul.f32 %v4299, 1.442695
        %v4349 = vpow.pop %v4348
        %v4350 = vmul.f32 %v4300, 1.442695
        %v4351 = vpow.pop %v4350
        %v4352 = vmul.f32 %v4301, 1.442695
        %v4353 = vpow.pop %v4352
        %v4354 = vmul.f32 %v4302, 1.442695
        %v4355 = vpow.pop %v4354
        %v4356 = vmul.f32 %v4303, 1.442695
        %v4357 = vpow.pop %v4356
        %v4358 = vmul.f32 %v4304, 1.442695
        %v4359 = vpow.pop %v4358
        %v4360 = vmul.f32 %v4305, 1.442695
        %v4361 = vpow.pop %v4360
        %v4362 = vmul.f32 %v4306, 1.442695
        %v4363 = vpow.pop %v4362
        %v4364 = vmul.f32 %v4307, 1.442695
        %v4365 = vpow.pop %v4364
        %v4366 = vmul.f32 %v4308, 1.442695
        %v4367 = vpow.pop %v4366
        %v4368 = vmul.f32 %v4309, 1.442695
        %v4369 = vpow.pop %v4368
        %v4370 = vmul.f32 %v4310, 1.442695
        %v4371 = vpow.pop %v4370
        %v4372 = vmul.f32 %v4311, 1.442695
        %v4373 = vpow.pop %v4372
        %v4374 = vmul.f32 %v4312, 1.442695
        %v4375 = vpow.pop %v4374
        %v4376 = vmul.f32 %v4313, 1.442695
        %v4377 = vpow.pop %v4376
        %v4378 = vsel %vm3182, %v4043, 0.0
        %4379 = vadd.xlane.f32.xlu0 %v4378
        %v4380 = vpop.xlane.xlu0 %4379
        %v4381 = vsel %vm3182, %v4045, 0.0
        %4382 = vadd.xlane.f32.xlu0 %v4381
        %v4383 = vpop.xlane.xlu0 %4382
        %v4384 = vsel %vm3182, %v4047, 0.0
        %4385 = vadd.xlane.f32.xlu0 %v4384
        %v4386 = vpop.xlane.xlu0 %4385
        %v4387 = vsel %vm3182, %v4049, 0.0
        %4388 = vadd.xlane.f32.xlu0 %v4387
        %v4389 = vpop.xlane.xlu0 %4388
        %v4390 = vsel %vm3182, %v4051, 0.0
        %4391 = vadd.xlane.f32.xlu0 %v4390
        %v4392 = vpop.xlane.xlu0 %4391
        %v4393 = vsel %vm3182, %v4053, 0.0
        %4394 = vadd.xlane.f32.xlu0 %v4393
        %v4395 = vpop.xlane.xlu0 %4394
        %v4396 = vsel %vm3182, %v4055, 0.0
        %4397 = vadd.xlane.f32.xlu0 %v4396
        %v4398 = vpop.xlane.xlu0 %4397
        %v4399 = vsel %vm3182, %v4057, 0.0
        %4400 = vadd.xlane.f32.xlu0 %v4399
        %v4401 = vpop.xlane.xlu0 %4400
        %v4402 = vsel %vm3182, %v4059, 0.0
        %4403 = vadd.xlane.f32.xlu0 %v4402
        %v4404 = vpop.xlane.xlu0 %4403
        %v4405 = vsel %vm3182, %v4061, 0.0
        %4406 = vadd.xlane.f32.xlu0 %v4405
        %v4407 = vpop.xlane.xlu0 %4406
        %v4408 = vsel %vm3182, %v4063, 0.0
        %4409 = vadd.xlane.f32.xlu0 %v4408
        %v4410 = vpop.xlane.xlu0 %4409
        %v4411 = vsel %vm3182, %v4065, 0.0
        %4412 = vadd.xlane.f32.xlu0 %v4411
        %v4413 = vpop.xlane.xlu0 %4412
        %v4414 = vsel %vm3182, %v4067, 0.0
        %4415 = vadd.xlane.f32.xlu0 %v4414
        %v4416 = vpop.xlane.xlu0 %4415
        %v4417 = vsel %vm3182, %v4069, 0.0
        %4418 = vadd.xlane.f32.xlu0 %v4417
        %v4419 = vpop.xlane.xlu0 %4418
        %v4420 = vsel %vm3182, %v4071, 0.0
        %4421 = vadd.xlane.f32.xlu0 %v4420
        %v4422 = vpop.xlane.xlu0 %4421
        %v4423 = vsel %vm3182, %v4073, 0.0
        %4424 = vadd.xlane.f32.xlu0 %v4423
        %v4425 = vpop.xlane.xlu0 %4424
        %v4426 = vsel %vm3182, %v4075, 0.0
        %4427 = vadd.xlane.f32.xlu0 %v4426
        %v4428 = vpop.xlane.xlu0 %4427
        %v4429 = vsel %vm3182, %v4077, 0.0
        %4430 = vadd.xlane.f32.xlu0 %v4429
        %v4431 = vpop.xlane.xlu0 %4430
        %v4432 = vsel %vm3182, %v4079, 0.0
        %4433 = vadd.xlane.f32.xlu0 %v4432
        %v4434 = vpop.xlane.xlu0 %4433
        %v4435 = vsel %vm3182, %v4081, 0.0
        %4436 = vadd.xlane.f32.xlu0 %v4435
        %v4437 = vpop.xlane.xlu0 %4436
        %v4438 = vsel %vm3182, %v4083, 0.0
        %4439 = vadd.xlane.f32.xlu0 %v4438
        %v4440 = vpop.xlane.xlu0 %4439
        %v4441 = vsel %vm3182, %v4085, 0.0
        %4442 = vadd.xlane.f32.xlu0 %v4441
        %v4443 = vpop.xlane.xlu0 %4442
        %v4444 = vsel %vm3182, %v4087, 0.0
        %4445 = vadd.xlane.f32.xlu0 %v4444
        %v4446 = vpop.xlane.xlu0 %4445
        %v4447 = vsel %vm3182, %v4089, 0.0
        %4448 = vadd.xlane.f32.xlu0 %v4447
        %v4449 = vpop.xlane.xlu0 %4448
        %v4450 = vsel %vm3182, %v4091, 0.0
        %4451 = vadd.xlane.f32.xlu0 %v4450
        %v4452 = vpop.xlane.xlu0 %4451
        %v4453 = vsel %vm3182, %v4093, 0.0
        %4454 = vadd.xlane.f32.xlu0 %v4453
        %v4455 = vpop.xlane.xlu0 %4454
        %v4456 = vsel %vm3182, %v4095, 0.0
        %4457 = vadd.xlane.f32.xlu0 %v4456
        %v4458 = vpop.xlane.xlu0 %4457
        %v4459 = vsel %vm3182, %v4097, 0.0
        %4460 = vadd.xlane.f32.xlu0 %v4459
        %v4461 = vpop.xlane.xlu0 %4460
        %v4462 = vsel %vm3182, %v4099, 0.0
        %4463 = vadd.xlane.f32.xlu0 %v4462
        %v4464 = vpop.xlane.xlu0 %4463
        %v4465 = vsel %vm3182, %v4101, 0.0
        %4466 = vadd.xlane.f32.xlu0 %v4465
        %v4467 = vpop.xlane.xlu0 %4466
        %v4468 = vsel %vm3182, %v4103, 0.0
        %4469 = vadd.xlane.f32.xlu0 %v4468
        %v4470 = vpop.xlane.xlu0 %4469
        %v4471 = vsel %vm3182, %v4105, 0.0
        %4472 = vadd.xlane.f32.xlu0 %v4471
        %v4473 = vpop.xlane.xlu0 %4472
        %v4506 = vlaneseq
        %v4507 = vshrl.u32 %v4506, 7
        %v4508 = vsub.s32 %v2391, %v4507
        %v4509 = vrot.slane %v4380, %v4508
        %v4510 = vlaneseq
        %v4511 = vshrl.u32 %v4510, 7
        %v4512 = vsub.s32 %v3315, %v4511
        %v4513 = vrot.slane %v4383, %v4512
        %v4514 = vsel %vm3320, %v4513, %v4509
        %v4515 = vlaneseq
        %v4516 = vshrl.u32 %v4515, 7
        %v4517 = vsub.s32 %v2391, %v4516
        %v4518 = vrot.slane %v4386, %v4517
        %v4519 = vlaneseq
        %v4520 = vshrl.u32 %v4519, 7
        %v4521 = vsub.s32 %v3315, %v4520
        %v4522 = vrot.slane %v4389, %v4521
        %v4523 = vsel %vm3320, %v4522, %v4518
        %v4524 = vlaneseq
        %v4525 = vshrl.u32 %v4524, 7
        %v4526 = vsub.s32 %v2391, %v4525
        %v4527 = vrot.slane %v4392, %v4526
        %v4528 = vlaneseq
        %v4529 = vshrl.u32 %v4528, 7
        %v4530 = vsub.s32 %v3315, %v4529
        %v4531 = vrot.slane %v4395, %v4530
        %v4532 = vsel %vm3320, %v4531, %v4527
        %v4533 = vlaneseq
        %v4534 = vshrl.u32 %v4533, 7
        %v4535 = vsub.s32 %v2391, %v4534
        %v4536 = vrot.slane %v4398, %v4535
        %v4537 = vlaneseq
        %v4538 = vshrl.u32 %v4537, 7
        %v4539 = vsub.s32 %v3315, %v4538
        %v4540 = vrot.slane %v4401, %v4539
        %v4541 = vsel %vm3320, %v4540, %v4536
        %v4542 = vlaneseq
        %v4543 = vshrl.u32 %v4542, 7
        %v4544 = vsub.s32 %v2391, %v4543
        %v4545 = vrot.slane %v4404, %v4544
        %v4546 = vlaneseq
        %v4547 = vshrl.u32 %v4546, 7
        %v4548 = vsub.s32 %v3315, %v4547
        %v4549 = vrot.slane %v4407, %v4548
        %v4550 = vsel %vm3320, %v4549, %v4545
        %v4551 = vlaneseq
        %v4552 = vshrl.u32 %v4551, 7
        %v4553 = vsub.s32 %v2391, %v4552
        %v4554 = vrot.slane %v4410, %v4553
        %v4555 = vlaneseq
        %v4556 = vshrl.u32 %v4555, 7
        %v4557 = vsub.s32 %v3315, %v4556
        %v4558 = vrot.slane %v4413, %v4557
        %v4559 = vsel %vm3320, %v4558, %v4554
        %v4560 = vlaneseq
        %v4561 = vshrl.u32 %v4560, 7
        %v4562 = vsub.s32 %v2391, %v4561
        %v4563 = vrot.slane %v4416, %v4562
        %v4564 = vlaneseq
        %v4565 = vshrl.u32 %v4564, 7
        %v4566 = vsub.s32 %v3315, %v4565
        %v4567 = vrot.slane %v4419, %v4566
        %v4568 = vsel %vm3320, %v4567, %v4563
        %v4569 = vlaneseq
        %v4570 = vshrl.u32 %v4569, 7
        %v4571 = vsub.s32 %v2391, %v4570
        %v4572 = vrot.slane %v4422, %v4571
        %v4573 = vlaneseq
        %v4574 = vshrl.u32 %v4573, 7
        %v4575 = vsub.s32 %v3315, %v4574
        %v4576 = vrot.slane %v4425, %v4575
        %v4577 = vsel %vm3320, %v4576, %v4572
        %v4578 = vlaneseq
        %v4579 = vshrl.u32 %v4578, 7
        %v4580 = vsub.s32 %v2391, %v4579
        %v4581 = vrot.slane %v4428, %v4580
        %v4582 = vlaneseq
        %v4583 = vshrl.u32 %v4582, 7
        %v4584 = vsub.s32 %v3315, %v4583
        %v4585 = vrot.slane %v4431, %v4584
        %v4586 = vsel %vm3320, %v4585, %v4581
        %v4587 = vlaneseq
        %v4588 = vshrl.u32 %v4587, 7
        %v4589 = vsub.s32 %v2391, %v4588
        %v4590 = vrot.slane %v4434, %v4589
        %v4591 = vlaneseq
        %v4592 = vshrl.u32 %v4591, 7
        %v4593 = vsub.s32 %v3315, %v4592
        %v4594 = vrot.slane %v4437, %v4593
        %v4595 = vsel %vm3320, %v4594, %v4590
        %v4596 = vlaneseq
        %v4597 = vshrl.u32 %v4596, 7
        %v4598 = vsub.s32 %v2391, %v4597
        %v4599 = vrot.slane %v4440, %v4598
        %v4600 = vlaneseq
        %v4601 = vshrl.u32 %v4600, 7
        %v4602 = vsub.s32 %v3315, %v4601
        %v4603 = vrot.slane %v4443, %v4602
        %v4604 = vsel %vm3320, %v4603, %v4599
        %v4605 = vlaneseq
        %v4606 = vshrl.u32 %v4605, 7
        %v4607 = vsub.s32 %v2391, %v4606
        %v4608 = vrot.slane %v4446, %v4607
        %v4609 = vlaneseq
        %v4610 = vshrl.u32 %v4609, 7
        %v4611 = vsub.s32 %v3315, %v4610
        %v4612 = vrot.slane %v4449, %v4611
        %v4613 = vsel %vm3320, %v4612, %v4608
        %v4614 = vlaneseq
        %v4615 = vshrl.u32 %v4614, 7
        %v4616 = vsub.s32 %v2391, %v4615
        %v4617 = vrot.slane %v4452, %v4616
        %v4618 = vlaneseq
        %v4619 = vshrl.u32 %v4618, 7
        %v4620 = vsub.s32 %v3315, %v4619
        %v4621 = vrot.slane %v4455, %v4620
        %v4622 = vsel %vm3320, %v4621, %v4617
        %v4623 = vlaneseq
        %v4624 = vshrl.u32 %v4623, 7
        %v4625 = vsub.s32 %v2391, %v4624
        %v4626 = vrot.slane %v4458, %v4625
        %v4627 = vlaneseq
        %v4628 = vshrl.u32 %v4627, 7
        %v4629 = vsub.s32 %v3315, %v4628
        %v4630 = vrot.slane %v4461, %v4629
        %v4631 = vsel %vm3320, %v4630, %v4626
        %v4632 = vlaneseq
        %v4633 = vshrl.u32 %v4632, 7
        %v4634 = vsub.s32 %v2391, %v4633
        %v4635 = vrot.slane %v4464, %v4634
        %v4636 = vlaneseq
        %v4637 = vshrl.u32 %v4636, 7
        %v4638 = vsub.s32 %v3315, %v4637
        %v4639 = vrot.slane %v4467, %v4638
        %v4640 = vsel %vm3320, %v4639, %v4635
        %v4641 = vlaneseq
        %v4642 = vshrl.u32 %v4641, 7
        %v4643 = vsub.s32 %v2391, %v4642
        %v4644 = vrot.slane %v4470, %v4643
        %v4645 = vlaneseq
        %v4646 = vshrl.u32 %v4645, 7
        %v4647 = vsub.s32 %v3315, %v4646
        %v4648 = vrot.slane %v4473, %v4647
        %v4649 = vsel %vm3320, %v4648, %v4644
        %v4650 = vsel %vm3457, %v4523, %v4514
        %v4651 = vsel %vm3459, %v4532, %v4650
        %v4652 = vsel %vm3461, %v4541, %v4651
        %v4653 = vsel %vm3463, %v4550, %v4652
        %v4654 = vsel %vm3465, %v4559, %v4653
        %v4655 = vsel %vm3467, %v4568, %v4654
        %v4656 = vsel %vm3469, %v4577, %v4655
        %v4657 = vsel %vm3457, %v4595, %v4586
        %v4658 = vsel %vm3459, %v4604, %v4657
        %v4659 = vsel %vm3461, %v4613, %v4658
        %v4660 = vsel %vm3463, %v4622, %v4659
        %v4661 = vsel %vm3465, %v4631, %v4660
        %v4662 = vsel %vm3467, %v4640, %v4661
        %v4663 = vsel %vm3469, %v4649, %v4662
        %4666 = vxpose.xlu0.b32.start [1/16] %v4656, 128
        %4667 = vxpose.xlu0.b32.cont [2/16] %v4663, 128
        %4668 = vxpose.xlu0.b32.cont [3/16] 0.0, 128
        %4669 = vxpose.xlu0.b32.cont [4/16] 0.0, 128
        %4670 = vxpose.xlu0.b32.cont [5/16] 0.0, 128
        %4671 = vxpose.xlu0.b32.cont [6/16] 0.0, 128
        %4672 = vxpose.xlu0.b32.cont [7/16] 0.0, 128
        %4673 = vxpose.xlu0.b32.cont [8/16] 0.0, 128
        %4674 = vxpose.xlu0.b32.cont [9/16] 0.0, 128
        %4675 = vxpose.xlu0.b32.cont [10/16] 0.0, 128
        %4676 = vxpose.xlu0.b32.cont [11/16] 0.0, 128
        %4677 = vxpose.xlu0.b32.cont [12/16] 0.0, 128
        %4678 = vxpose.xlu0.b32.cont [13/16] 0.0, 128
        %4679 = vxpose.xlu0.b32.cont [14/16] 0.0, 128
        %4680 = vxpose.xlu0.b32.cont [15/16] 0.0, 128
        %4681 = vxpose.xlu0.b32.end [16/16] 0.0, 128
        %v4682 = vpop.trf.xlu0
        %v4683 = vpop.trf.xlu0
        %v4684 = vpop.trf.xlu0
        %v4685 = vpop.trf.xlu0
        %v4686 = vpop.trf.xlu0
        %v4687 = vpop.trf.xlu0
        %v4688 = vpop.trf.xlu0
        %v4689 = vpop.trf.xlu0
        %v4690 = vpop.trf.xlu0
        %v4691 = vpop.trf.xlu0
        %v4692 = vpop.trf.xlu0
        %v4693 = vpop.trf.xlu0
        %v4694 = vpop.trf.xlu0
        %v4695 = vpop.trf.xlu0
        %v4696 = vpop.trf.xlu0
        %v4697 = vpop.trf.xlu0
        %v4698 = vsel %vm3182, %v4315, 0.0
        %4699 = vadd.xlane.f32.xlu0 %v4698
        %v4700 = vpop.xlane.xlu0 %4699
        %v4701 = vsel %vm3182, %v4317, 0.0
        %4702 = vadd.xlane.f32.xlu0 %v4701
        %v4703 = vpop.xlane.xlu0 %4702
        %v4704 = vsel %vm3182, %v4319, 0.0
        %4705 = vadd.xlane.f32.xlu0 %v4704
        %v4706 = vpop.xlane.xlu0 %4705
        %v4707 = vsel %vm3182, %v4321, 0.0
        %4708 = vadd.xlane.f32.xlu0 %v4707
        %v4709 = vpop.xlane.xlu0 %4708
        %v4710 = vsel %vm3182, %v4323, 0.0
        %4711 = vadd.xlane.f32.xlu0 %v4710
        %v4712 = vpop.xlane.xlu0 %4711
        %v4713 = vsel %vm3182, %v4325, 0.0
        %4714 = vadd.xlane.f32.xlu0 %v4713
        %v4715 = vpop.xlane.xlu0 %4714
        %v4716 = vsel %vm3182, %v4327, 0.0
        %4717 = vadd.xlane.f32.xlu0 %v4716
        %v4718 = vpop.xlane.xlu0 %4717
        %v4719 = vsel %vm3182, %v4329, 0.0
        %4720 = vadd.xlane.f32.xlu0 %v4719
        %v4721 = vpop.xlane.xlu0 %4720
        %v4722 = vsel %vm3182, %v4331, 0.0
        %4723 = vadd.xlane.f32.xlu0 %v4722
        %v4724 = vpop.xlane.xlu0 %4723
        %v4725 = vsel %vm3182, %v4333, 0.0
        %4726 = vadd.xlane.f32.xlu0 %v4725
        %v4727 = vpop.xlane.xlu0 %4726
        %v4728 = vsel %vm3182, %v4335, 0.0
        %4729 = vadd.xlane.f32.xlu0 %v4728
        %v4730 = vpop.xlane.xlu0 %4729
        %v4731 = vsel %vm3182, %v4337, 0.0
        %4732 = vadd.xlane.f32.xlu0 %v4731
        %v4733 = vpop.xlane.xlu0 %4732
        %v4734 = vsel %vm3182, %v4339, 0.0
        %4735 = vadd.xlane.f32.xlu0 %v4734
        %v4736 = vpop.xlane.xlu0 %4735
        %v4737 = vsel %vm3182, %v4341, 0.0
        %4738 = vadd.xlane.f32.xlu0 %v4737
        %v4739 = vpop.xlane.xlu0 %4738
        %v4740 = vsel %vm3182, %v4343, 0.0
        %4741 = vadd.xlane.f32.xlu0 %v4740
        %v4742 = vpop.xlane.xlu0 %4741
        %v4743 = vsel %vm3182, %v4345, 0.0
        %4744 = vadd.xlane.f32.xlu0 %v4743
        %v4745 = vpop.xlane.xlu0 %4744
        %v4746 = vsel %vm3182, %v4347, 0.0
        %4747 = vadd.xlane.f32.xlu0 %v4746
        %v4748 = vpop.xlane.xlu0 %4747
        %v4749 = vsel %vm3182, %v4349, 0.0
        %4750 = vadd.xlane.f32.xlu0 %v4749
        %v4751 = vpop.xlane.xlu0 %4750
        %v4752 = vsel %vm3182, %v4351, 0.0
        %4753 = vadd.xlane.f32.xlu0 %v4752
        %v4754 = vpop.xlane.xlu0 %4753
        %v4755 = vsel %vm3182, %v4353, 0.0
        %4756 = vadd.xlane.f32.xlu0 %v4755
        %v4757 = vpop.xlane.xlu0 %4756
        %v4758 = vsel %vm3182, %v4355, 0.0
        %4759 = vadd.xlane.f32.xlu0 %v4758
        %v4760 = vpop.xlane.xlu0 %4759
        %v4761 = vsel %vm3182, %v4357, 0.0
        %4762 = vadd.xlane.f32.xlu0 %v4761
        %v4763 = vpop.xlane.xlu0 %4762
        %v4764 = vsel %vm3182, %v4359, 0.0
        %4765 = vadd.xlane.f32.xlu0 %v4764
        %v4766 = vpop.xlane.xlu0 %4765
        %v4767 = vsel %vm3182, %v4361, 0.0
        %4768 = vadd.xlane.f32.xlu0 %v4767
        %v4769 = vpop.xlane.xlu0 %4768
        %v4770 = vsel %vm3182, %v4363, 0.0
        %4771 = vadd.xlane.f32.xlu0 %v4770
        %v4772 = vpop.xlane.xlu0 %4771
        %v4773 = vsel %vm3182, %v4365, 0.0
        %4774 = vadd.xlane.f32.xlu0 %v4773
        %v4775 = vpop.xlane.xlu0 %4774
        %v4776 = vsel %vm3182, %v4367, 0.0
        %4777 = vadd.xlane.f32.xlu0 %v4776
        %v4778 = vpop.xlane.xlu0 %4777
        %v4779 = vsel %vm3182, %v4369, 0.0
        %4780 = vadd.xlane.f32.xlu0 %v4779
        %v4781 = vpop.xlane.xlu0 %4780
        %v4782 = vsel %vm3182, %v4371, 0.0
        %4783 = vadd.xlane.f32.xlu0 %v4782
        %v4784 = vpop.xlane.xlu0 %4783
        %v4785 = vsel %vm3182, %v4373, 0.0
        %4786 = vadd.xlane.f32.xlu0 %v4785
        %v4787 = vpop.xlane.xlu0 %4786
        %v4788 = vsel %vm3182, %v4375, 0.0
        %4789 = vadd.xlane.f32.xlu0 %v4788
        %v4790 = vpop.xlane.xlu0 %4789
        %v4791 = vsel %vm3182, %v4377, 0.0
        %4792 = vadd.xlane.f32.xlu0 %v4791
        %v4793 = vpop.xlane.xlu0 %4792
        %v4826 = vlaneseq
        %v4827 = vshrl.u32 %v4826, 7
        %v4828 = vsub.s32 %v2391, %v4827
        %v4829 = vrot.slane %v4700, %v4828
        %v4830 = vlaneseq
        %v4831 = vshrl.u32 %v4830, 7
        %v4832 = vsub.s32 %v3315, %v4831
        %v4833 = vrot.slane %v4703, %v4832
        %v4834 = vsel %vm3320, %v4833, %v4829
        %v4835 = vlaneseq
        %v4836 = vshrl.u32 %v4835, 7
        %v4837 = vsub.s32 %v2391, %v4836
        %v4838 = vrot.slane %v4706, %v4837
        %v4839 = vlaneseq
        %v4840 = vshrl.u32 %v4839, 7
        %v4841 = vsub.s32 %v3315, %v4840
        %v4842 = vrot.slane %v4709, %v4841
        %v4843 = vsel %vm3320, %v4842, %v4838
        %v4844 = vlaneseq
        %v4845 = vshrl.u32 %v4844, 7
        %v4846 = vsub.s32 %v2391, %v4845
        %v4847 = vrot.slane %v4712, %v4846
        %v4848 = vlaneseq
        %v4849 = vshrl.u32 %v4848, 7
        %v4850 = vsub.s32 %v3315, %v4849
        %v4851 = vrot.slane %v4715, %v4850
        %v4852 = vsel %vm3320, %v4851, %v4847
        %v4853 = vlaneseq
        %v4854 = vshrl.u32 %v4853, 7
        %v4855 = vsub.s32 %v2391, %v4854
        %v4856 = vrot.slane %v4718, %v4855
        %v4857 = vlaneseq
        %v4858 = vshrl.u32 %v4857, 7
        %v4859 = vsub.s32 %v3315, %v4858
        %v4860 = vrot.slane %v4721, %v4859
        %v4861 = vsel %vm3320, %v4860, %v4856
        %v4862 = vlaneseq
        %v4863 = vshrl.u32 %v4862, 7
        %v4864 = vsub.s32 %v2391, %v4863
        %v4865 = vrot.slane %v4724, %v4864
        %v4866 = vlaneseq
        %v4867 = vshrl.u32 %v4866, 7
        %v4868 = vsub.s32 %v3315, %v4867
        %v4869 = vrot.slane %v4727, %v4868
        %v4870 = vsel %vm3320, %v4869, %v4865
        %v4871 = vlaneseq
        %v4872 = vshrl.u32 %v4871, 7
        %v4873 = vsub.s32 %v2391, %v4872
        %v4874 = vrot.slane %v4730, %v4873
        %v4875 = vlaneseq
        %v4876 = vshrl.u32 %v4875, 7
        %v4877 = vsub.s32 %v3315, %v4876
        %v4878 = vrot.slane %v4733, %v4877
        %v4879 = vsel %vm3320, %v4878, %v4874
        %v4880 = vlaneseq
        %v4881 = vshrl.u32 %v4880, 7
        %v4882 = vsub.s32 %v2391, %v4881
        %v4883 = vrot.slane %v4736, %v4882
        %v4884 = vlaneseq
        %v4885 = vshrl.u32 %v4884, 7
        %v4886 = vsub.s32 %v3315, %v4885
        %v4887 = vrot.slane %v4739, %v4886
        %v4888 = vsel %vm3320, %v4887, %v4883
        %v4889 = vlaneseq
        %v4890 = vshrl.u32 %v4889, 7
        %v4891 = vsub.s32 %v2391, %v4890
        %v4892 = vrot.slane %v4742, %v4891
        %v4893 = vlaneseq
        %v4894 = vshrl.u32 %v4893, 7
        %v4895 = vsub.s32 %v3315, %v4894
        %v4896 = vrot.slane %v4745, %v4895
        %v4897 = vsel %vm3320, %v4896, %v4892
        %v4898 = vlaneseq
        %v4899 = vshrl.u32 %v4898, 7
        %v4900 = vsub.s32 %v2391, %v4899
        %v4901 = vrot.slane %v4748, %v4900
        %v4902 = vlaneseq
        %v4903 = vshrl.u32 %v4902, 7
        %v4904 = vsub.s32 %v3315, %v4903
        %v4905 = vrot.slane %v4751, %v4904
        %v4906 = vsel %vm3320, %v4905, %v4901
        %v4907 = vlaneseq
        %v4908 = vshrl.u32 %v4907, 7
        %v4909 = vsub.s32 %v2391, %v4908
        %v4910 = vrot.slane %v4754, %v4909
        %v4911 = vlaneseq
        %v4912 = vshrl.u32 %v4911, 7
        %v4913 = vsub.s32 %v3315, %v4912
        %v4914 = vrot.slane %v4757, %v4913
        %v4915 = vsel %vm3320, %v4914, %v4910
        %v4916 = vlaneseq
        %v4917 = vshrl.u32 %v4916, 7
        %v4918 = vsub.s32 %v2391, %v4917
        %v4919 = vrot.slane %v4760, %v4918
        %v4920 = vlaneseq
        %v4921 = vshrl.u32 %v4920, 7
        %v4922 = vsub.s32 %v3315, %v4921
        %v4923 = vrot.slane %v4763, %v4922
        %v4924 = vsel %vm3320, %v4923, %v4919
        %v4925 = vlaneseq
        %v4926 = vshrl.u32 %v4925, 7
        %v4927 = vsub.s32 %v2391, %v4926
        %v4928 = vrot.slane %v4766, %v4927
        %v4929 = vlaneseq
        %v4930 = vshrl.u32 %v4929, 7
        %v4931 = vsub.s32 %v3315, %v4930
        %v4932 = vrot.slane %v4769, %v4931
        %v4933 = vsel %vm3320, %v4932, %v4928
        %v4934 = vlaneseq
        %v4935 = vshrl.u32 %v4934, 7
        %v4936 = vsub.s32 %v2391, %v4935
        %v4937 = vrot.slane %v4772, %v4936
        %v4938 = vlaneseq
        %v4939 = vshrl.u32 %v4938, 7
        %v4940 = vsub.s32 %v3315, %v4939
        %v4941 = vrot.slane %v4775, %v4940
        %v4942 = vsel %vm3320, %v4941, %v4937
        %v4943 = vlaneseq
        %v4944 = vshrl.u32 %v4943, 7
        %v4945 = vsub.s32 %v2391, %v4944
        %v4946 = vrot.slane %v4778, %v4945
        %v4947 = vlaneseq
        %v4948 = vshrl.u32 %v4947, 7
        %v4949 = vsub.s32 %v3315, %v4948
        %v4950 = vrot.slane %v4781, %v4949
        %v4951 = vsel %vm3320, %v4950, %v4946
        %v4952 = vlaneseq
        %v4953 = vshrl.u32 %v4952, 7
        %v4954 = vsub.s32 %v2391, %v4953
        %v4955 = vrot.slane %v4784, %v4954
        %v4956 = vlaneseq
        %v4957 = vshrl.u32 %v4956, 7
        %v4958 = vsub.s32 %v3315, %v4957
        %v4959 = vrot.slane %v4787, %v4958
        %v4960 = vsel %vm3320, %v4959, %v4955
        %v4961 = vlaneseq
        %v4962 = vshrl.u32 %v4961, 7
        %v4963 = vsub.s32 %v2391, %v4962
        %v4964 = vrot.slane %v4790, %v4963
        %v4965 = vlaneseq
        %v4966 = vshrl.u32 %v4965, 7
        %v4967 = vsub.s32 %v3315, %v4966
        %v4968 = vrot.slane %v4793, %v4967
        %v4969 = vsel %vm3320, %v4968, %v4964
        %v4970 = vsel %vm3457, %v4843, %v4834
        %v4971 = vsel %vm3459, %v4852, %v4970
        %v4972 = vsel %vm3461, %v4861, %v4971
        %v4973 = vsel %vm3463, %v4870, %v4972
        %v4974 = vsel %vm3465, %v4879, %v4973
        %v4975 = vsel %vm3467, %v4888, %v4974
        %v4976 = vsel %vm3469, %v4897, %v4975
        %v4977 = vsel %vm3457, %v4915, %v4906
        %v4978 = vsel %vm3459, %v4924, %v4977
        %v4979 = vsel %vm3461, %v4933, %v4978
        %v4980 = vsel %vm3463, %v4942, %v4979
        %v4981 = vsel %vm3465, %v4951, %v4980
        %v4982 = vsel %vm3467, %v4960, %v4981
        %v4983 = vsel %vm3469, %v4969, %v4982
        %v4986 = vadd.f32 %v4682, %v4976
        %v4987 = vadd.f32 %v4683, %v4983
        %v4988 = vpack.c.bf16 %v4045, %v4043
        %v4989 = vpack.c.bf16 %v4049, %v4047
        %v4990 = vpack.c.bf16 %v4053, %v4051
        %v4991 = vpack.c.bf16 %v4057, %v4055
        %v4992 = vpack.c.bf16 %v4061, %v4059
        %v4993 = vpack.c.bf16 %v4065, %v4063
        %v4994 = vpack.c.bf16 %v4069, %v4067
        %v4995 = vpack.c.bf16 %v4073, %v4071
        %v4996 = vpack.c.bf16 %v4077, %v4075
        %v4997 = vpack.c.bf16 %v4081, %v4079
        %v4998 = vpack.c.bf16 %v4085, %v4083
        %v4999 = vpack.c.bf16 %v4089, %v4087
        %v5000 = vpack.c.bf16 %v4093, %v4091
        %v5001 = vpack.c.bf16 %v4097, %v4095
        %v5002 = vpack.c.bf16 %v4101, %v4099
        %v5003 = vpack.c.bf16 %v4105, %v4103
        %v5005 = vsel %vm3182, %v4988, 0
        %5007 = vmatprep.subr.bf16.mxu0 0
        %5008 = vmatpush1.bf16.msra.mxu0 0
        %5009 = vmatprep.subr.bf16.mxu0 0
        %5010 = vmatpush1.bf16.msra.mxu0 0
        %5011 = vmatprep.subr.bf16.mxu0 0
        %5012 = vmatpush1.bf16.msra.mxu0 0
        %5013 = vmatprep.subr.bf16.mxu0 0
        %5014 = vmatpush1.bf16.msra.mxu0 0
        %5015 = vmatprep.subr.bf16.mxu0 0
        %5016 = vmatpush1.bf16.msra.mxu0 0
        %5017 = vmatprep.subr.bf16.mxu0 0
        %5018 = vmatpush1.bf16.msra.mxu0 0
        %5019 = vmatprep.subr.bf16.mxu0 0
        %5020 = vmatpush1.bf16.msra.mxu0 0
        %5021 = vmatprep.subr.bf16.mxu0 0
        %5022 = vmatpush1.bf16.msra.mxu0 %v1572
        %5023 = vmatprep.subr.bf16.mxu0 0
        %5024 = vmatpush2.bf16.msra.mxu0 0
        %5025 = vmatprep.subr.bf16.mxu0 0
        %5026 = vmatpush2.bf16.msra.mxu0 0
        %5027 = vmatprep.subr.bf16.mxu0 0
        %5028 = vmatpush2.bf16.msra.mxu0 0
        %5029 = vmatprep.subr.bf16.mxu0 0
        %5030 = vmatpush2.bf16.msra.mxu0 0
        %5031 = vmatprep.subr.bf16.mxu0 0
        %5032 = vmatpush2.bf16.msra.mxu0 0
        %5033 = vmatprep.subr.bf16.mxu0 0
        %5034 = vmatpush2.bf16.msra.mxu0 0
        %5035 = vmatprep.subr.bf16.mxu0 0
        %5036 = vmatpush2.bf16.msra.mxu0 0
        %5037 = vmatprep.subr.bf16.mxu0 0
        %5038 = vmatpush2.bf16.msra.mxu0 0
        %5039 = vmatprep.mubr.bf16.mxu0 0
        %5040 = vmatmul.mubr.bf16.gmra.mxu0 %v5005
        %v5041 = vpop.f32.mrf.mxu0
        %v5042 = vadd.f32 0.0, %v5041
        %v5043 = vpop.f32.mrf.mxu0
        %v5044 = vpop.f32.mrf.mxu0
        %v5045 = vadd.f32 0.0, %v5044
        %v5046 = vpop.f32.mrf.mxu0
        %5047 = vdwg.mxu0
        %v5049 = vsel %vm3182, %v4989, 0
        %5051 = vmatprep.subr.bf16.mxu0 0
        %5052 = vmatpush1.bf16.msra.mxu0 0
        %5053 = vmatprep.subr.bf16.mxu0 0
        %5054 = vmatpush1.bf16.msra.mxu0 0
        %5055 = vmatprep.subr.bf16.mxu0 0
        %5056 = vmatpush1.bf16.msra.mxu0 0
        %5057 = vmatprep.subr.bf16.mxu0 0
        %5058 = vmatpush1.bf16.msra.mxu0 0
        %5059 = vmatprep.subr.bf16.mxu0 0
        %5060 = vmatpush1.bf16.msra.mxu0 0
        %5061 = vmatprep.subr.bf16.mxu0 0
        %5062 = vmatpush1.bf16.msra.mxu0 0
        %5063 = vmatprep.subr.bf16.mxu0 0
        %5064 = vmatpush1.bf16.msra.mxu0 0
        %5065 = vmatprep.subr.bf16.mxu0 0
        %5066 = vmatpush1.bf16.msra.mxu0 %v1576
        %5067 = vmatprep.subr.bf16.mxu0 0
        %5068 = vmatpush2.bf16.msra.mxu0 0
        %5069 = vmatprep.subr.bf16.mxu0 0
        %5070 = vmatpush2.bf16.msra.mxu0 0
        %5071 = vmatprep.subr.bf16.mxu0 0
        %5072 = vmatpush2.bf16.msra.mxu0 0
        %5073 = vmatprep.subr.bf16.mxu0 0
        %5074 = vmatpush2.bf16.msra.mxu0 0
        %5075 = vmatprep.subr.bf16.mxu0 0
        %5076 = vmatpush2.bf16.msra.mxu0 0
        %5077 = vmatprep.subr.bf16.mxu0 0
        %5078 = vmatpush2.bf16.msra.mxu0 0
        %5079 = vmatprep.subr.bf16.mxu0 0
        %5080 = vmatpush2.bf16.msra.mxu0 0
        %5081 = vmatprep.subr.bf16.mxu0 0
        %5082 = vmatpush2.bf16.msra.mxu0 0
        %5083 = vmatprep.mubr.bf16.mxu0 0
        %5084 = vmatmul.mubr.bf16.gmra.mxu0 %v5049
        %v5085 = vpop.f32.mrf.mxu0
        %v5086 = vadd.f32 0.0, %v5085
        %v5087 = vpop.f32.mrf.mxu0
        %v5088 = vpop.f32.mrf.mxu0
        %v5089 = vadd.f32 0.0, %v5088
        %v5090 = vpop.f32.mrf.mxu0
        %5091 = vdwg.mxu0
        %v5093 = vsel %vm3182, %v4990, 0
        %5095 = vmatprep.subr.bf16.mxu0 0
        %5096 = vmatpush1.bf16.msra.mxu0 0
        %5097 = vmatprep.subr.bf16.mxu0 0
        %5098 = vmatpush1.bf16.msra.mxu0 0
        %5099 = vmatprep.subr.bf16.mxu0 0
        %5100 = vmatpush1.bf16.msra.mxu0 0
        %5101 = vmatprep.subr.bf16.mxu0 0
        %5102 = vmatpush1.bf16.msra.mxu0 0
        %5103 = vmatprep.subr.bf16.mxu0 0
        %5104 = vmatpush1.bf16.msra.mxu0 0
        %5105 = vmatprep.subr.bf16.mxu0 0
        %5106 = vmatpush1.bf16.msra.mxu0 0
        %5107 = vmatprep.subr.bf16.mxu0 0
        %5108 = vmatpush1.bf16.msra.mxu0 0
        %5109 = vmatprep.subr.bf16.mxu0 0
        %5110 = vmatpush1.bf16.msra.mxu0 %v1580
        %5111 = vmatprep.subr.bf16.mxu0 0
        %5112 = vmatpush2.bf16.msra.mxu0 0
        %5113 = vmatprep.subr.bf16.mxu0 0
        %5114 = vmatpush2.bf16.msra.mxu0 0
        %5115 = vmatprep.subr.bf16.mxu0 0
        %5116 = vmatpush2.bf16.msra.mxu0 0
        %5117 = vmatprep.subr.bf16.mxu0 0
        %5118 = vmatpush2.bf16.msra.mxu0 0
        %5119 = vmatprep.subr.bf16.mxu0 0
        %5120 = vmatpush2.bf16.msra.mxu0 0
        %5121 = vmatprep.subr.bf16.mxu0 0
        %5122 = vmatpush2.bf16.msra.mxu0 0
        %5123 = vmatprep.subr.bf16.mxu0 0
        %5124 = vmatpush2.bf16.msra.mxu0 0
        %5125 = vmatprep.subr.bf16.mxu0 0
        %5126 = vmatpush2.bf16.msra.mxu0 0
        %5127 = vmatprep.mubr.bf16.mxu0 0
        %5128 = vmatmul.mubr.bf16.gmra.mxu0 %v5093
        %v5129 = vpop.f32.mrf.mxu0
        %v5130 = vadd.f32 0.0, %v5129
        %v5131 = vpop.f32.mrf.mxu0
        %v5132 = vpop.f32.mrf.mxu0
        %v5133 = vadd.f32 0.0, %v5132
        %v5134 = vpop.f32.mrf.mxu0
        %5135 = vdwg.mxu0
        %v5137 = vsel %vm3182, %v4991, 0
        %5139 = vmatprep.subr.bf16.mxu0 0
        %5140 = vmatpush1.bf16.msra.mxu0 0
        %5141 = vmatprep.subr.bf16.mxu0 0
        %5142 = vmatpush1.bf16.msra.mxu0 0
        %5143 = vmatprep.subr.bf16.mxu0 0
        %5144 = vmatpush1.bf16.msra.mxu0 0
        %5145 = vmatprep.subr.bf16.mxu0 0
        %5146 = vmatpush1.bf16.msra.mxu0 0
        %5147 = vmatprep.subr.bf16.mxu0 0
        %5148 = vmatpush1.bf16.msra.mxu0 0
        %5149 = vmatprep.subr.bf16.mxu0 0
        %5150 = vmatpush1.bf16.msra.mxu0 0
        %5151 = vmatprep.subr.bf16.mxu0 0
        %5152 = vmatpush1.bf16.msra.mxu0 0
        %5153 = vmatprep.subr.bf16.mxu0 0
        %5154 = vmatpush1.bf16.msra.mxu0 %v1584
        %5155 = vmatprep.subr.bf16.mxu0 0
        %5156 = vmatpush2.bf16.msra.mxu0 0
        %5157 = vmatprep.subr.bf16.mxu0 0
        %5158 = vmatpush2.bf16.msra.mxu0 0
        %5159 = vmatprep.subr.bf16.mxu0 0
        %5160 = vmatpush2.bf16.msra.mxu0 0
        %5161 = vmatprep.subr.bf16.mxu0 0
        %5162 = vmatpush2.bf16.msra.mxu0 0
        %5163 = vmatprep.subr.bf16.mxu0 0
        %5164 = vmatpush2.bf16.msra.mxu0 0
        %5165 = vmatprep.subr.bf16.mxu0 0
        %5166 = vmatpush2.bf16.msra.mxu0 0
        %5167 = vmatprep.subr.bf16.mxu0 0
        %5168 = vmatpush2.bf16.msra.mxu0 0
        %5169 = vmatprep.subr.bf16.mxu0 0
        %5170 = vmatpush2.bf16.msra.mxu0 0
        %5171 = vmatprep.mubr.bf16.mxu0 0
        %5172 = vmatmul.mubr.bf16.gmra.mxu0 %v5137
        %v5173 = vpop.f32.mrf.mxu0
        %v5174 = vadd.f32 0.0, %v5173
        %v5175 = vpop.f32.mrf.mxu0
        %v5176 = vpop.f32.mrf.mxu0
        %v5177 = vadd.f32 0.0, %v5176
        %v5178 = vpop.f32.mrf.mxu0
        %5179 = vdwg.mxu0
        %v5181 = vsel %vm3182, %v4992, 0
        %5183 = vmatprep.subr.bf16.mxu0 0
        %5184 = vmatpush1.bf16.msra.mxu0 0
        %5185 = vmatprep.subr.bf16.mxu0 0
        %5186 = vmatpush1.bf16.msra.mxu0 0
        %5187 = vmatprep.subr.bf16.mxu0 0
        %5188 = vmatpush1.bf16.msra.mxu0 0
        %5189 = vmatprep.subr.bf16.mxu0 0
        %5190 = vmatpush1.bf16.msra.mxu0 0
        %5191 = vmatprep.subr.bf16.mxu0 0
        %5192 = vmatpush1.bf16.msra.mxu0 0
        %5193 = vmatprep.subr.bf16.mxu0 0
        %5194 = vmatpush1.bf16.msra.mxu0 0
        %5195 = vmatprep.subr.bf16.mxu0 0
        %5196 = vmatpush1.bf16.msra.mxu0 0
        %5197 = vmatprep.subr.bf16.mxu0 0
        %5198 = vmatpush1.bf16.msra.mxu0 %v1588
        %5199 = vmatprep.subr.bf16.mxu0 0
        %5200 = vmatpush2.bf16.msra.mxu0 0
        %5201 = vmatprep.subr.bf16.mxu0 0
        %5202 = vmatpush2.bf16.msra.mxu0 0
        %5203 = vmatprep.subr.bf16.mxu0 0
        %5204 = vmatpush2.bf16.msra.mxu0 0
        %5205 = vmatprep.subr.bf16.mxu0 0
        %5206 = vmatpush2.bf16.msra.mxu0 0
        %5207 = vmatprep.subr.bf16.mxu0 0
        %5208 = vmatpush2.bf16.msra.mxu0 0
        %5209 = vmatprep.subr.bf16.mxu0 0
        %5210 = vmatpush2.bf16.msra.mxu0 0
        %5211 = vmatprep.subr.bf16.mxu0 0
        %5212 = vmatpush2.bf16.msra.mxu0 0
        %5213 = vmatprep.subr.bf16.mxu0 0
        %5214 = vmatpush2.bf16.msra.mxu0 0
        %5215 = vmatprep.mubr.bf16.mxu0 0
        %5216 = vmatmul.mubr.bf16.gmra.mxu0 %v5181
        %v5217 = vpop.f32.mrf.mxu0
        %v5218 = vadd.f32 0.0, %v5217
        %v5219 = vpop.f32.mrf.mxu0
        %v5220 = vpop.f32.mrf.mxu0
        %v5221 = vadd.f32 0.0, %v5220
        %v5222 = vpop.f32.mrf.mxu0
        %5223 = vdwg.mxu0
        %v5225 = vsel %vm3182, %v4993, 0
        %5227 = vmatprep.subr.bf16.mxu0 0
        %5228 = vmatpush1.bf16.msra.mxu0 0
        %5229 = vmatprep.subr.bf16.mxu0 0
        %5230 = vmatpush1.bf16.msra.mxu0 0
        %5231 = vmatprep.subr.bf16.mxu0 0
        %5232 = vmatpush1.bf16.msra.mxu0 0
        %5233 = vmatprep.subr.bf16.mxu0 0
        %5234 = vmatpush1.bf16.msra.mxu0 0
        %5235 = vmatprep.subr.bf16.mxu0 0
        %5236 = vmatpush1.bf16.msra.mxu0 0
        %5237 = vmatprep.subr.bf16.mxu0 0
        %5238 = vmatpush1.bf16.msra.mxu0 0
        %5239 = vmatprep.subr.bf16.mxu0 0
        %5240 = vmatpush1.bf16.msra.mxu0 0
        %5241 = vmatprep.subr.bf16.mxu0 0
        %5242 = vmatpush1.bf16.msra.mxu0 %v1592
        %5243 = vmatprep.subr.bf16.mxu0 0
        %5244 = vmatpush2.bf16.msra.mxu0 0
        %5245 = vmatprep.subr.bf16.mxu0 0
        %5246 = vmatpush2.bf16.msra.mxu0 0
        %5247 = vmatprep.subr.bf16.mxu0 0
        %5248 = vmatpush2.bf16.msra.mxu0 0
        %5249 = vmatprep.subr.bf16.mxu0 0
        %5250 = vmatpush2.bf16.msra.mxu0 0
        %5251 = vmatprep.subr.bf16.mxu0 0
        %5252 = vmatpush2.bf16.msra.mxu0 0
        %5253 = vmatprep.subr.bf16.mxu0 0
        %5254 = vmatpush2.bf16.msra.mxu0 0
        %5255 = vmatprep.subr.bf16.mxu0 0
        %5256 = vmatpush2.bf16.msra.mxu0 0
        %5257 = vmatprep.subr.bf16.mxu0 0
        %5258 = vmatpush2.bf16.msra.mxu0 0
        %5259 = vmatprep.mubr.bf16.mxu0 0
        %5260 = vmatmul.mubr.bf16.gmra.mxu0 %v5225
        %v5261 = vpop.f32.mrf.mxu0
        %v5262 = vadd.f32 0.0, %v5261
        %v5263 = vpop.f32.mrf.mxu0
        %v5264 = vpop.f32.mrf.mxu0
        %v5265 = vadd.f32 0.0, %v5264
        %v5266 = vpop.f32.mrf.mxu0
        %5267 = vdwg.mxu0
        %v5269 = vsel %vm3182, %v4994, 0
        %5271 = vmatprep.subr.bf16.mxu0 0
        %5272 = vmatpush1.bf16.msra.mxu0 0
        %5273 = vmatprep.subr.bf16.mxu0 0
        %5274 = vmatpush1.bf16.msra.mxu0 0
        %5275 = vmatprep.subr.bf16.mxu0 0
        %5276 = vmatpush1.bf16.msra.mxu0 0
        %5277 = vmatprep.subr.bf16.mxu0 0
        %5278 = vmatpush1.bf16.msra.mxu0 0
        %5279 = vmatprep.subr.bf16.mxu0 0
        %5280 = vmatpush1.bf16.msra.mxu0 0
        %5281 = vmatprep.subr.bf16.mxu0 0
        %5282 = vmatpush1.bf16.msra.mxu0 0
        %5283 = vmatprep.subr.bf16.mxu0 0
        %5284 = vmatpush1.bf16.msra.mxu0 0
        %5285 = vmatprep.subr.bf16.mxu0 0
        %5286 = vmatpush1.bf16.msra.mxu0 %v1596
        %5287 = vmatprep.subr.bf16.mxu0 0
        %5288 = vmatpush2.bf16.msra.mxu0 0
        %5289 = vmatprep.subr.bf16.mxu0 0
        %5290 = vmatpush2.bf16.msra.mxu0 0
        %5291 = vmatprep.subr.bf16.mxu0 0
        %5292 = vmatpush2.bf16.msra.mxu0 0
        %5293 = vmatprep.subr.bf16.mxu0 0
        %5294 = vmatpush2.bf16.msra.mxu0 0
        %5295 = vmatprep.subr.bf16.mxu0 0
        %5296 = vmatpush2.bf16.msra.mxu0 0
        %5297 = vmatprep.subr.bf16.mxu0 0
        %5298 = vmatpush2.bf16.msra.mxu0 0
        %5299 = vmatprep.subr.bf16.mxu0 0
        %5300 = vmatpush2.bf16.msra.mxu0 0
        %5301 = vmatprep.subr.bf16.mxu0 0
        %5302 = vmatpush2.bf16.msra.mxu0 0
        %5303 = vmatprep.mubr.bf16.mxu0 0
        %5304 = vmatmul.mubr.bf16.gmra.mxu0 %v5269
        %v5305 = vpop.f32.mrf.mxu0
        %v5306 = vadd.f32 0.0, %v5305
        %v5307 = vpop.f32.mrf.mxu0
        %v5308 = vpop.f32.mrf.mxu0
        %v5309 = vadd.f32 0.0, %v5308
        %v5310 = vpop.f32.mrf.mxu0
        %5311 = vdwg.mxu0
        %v5313 = vsel %vm3182, %v4995, 0
        %5315 = vmatprep.subr.bf16.mxu0 0
        %5316 = vmatpush1.bf16.msra.mxu0 0
        %5317 = vmatprep.subr.bf16.mxu0 0
        %5318 = vmatpush1.bf16.msra.mxu0 0
        %5319 = vmatprep.subr.bf16.mxu0 0
        %5320 = vmatpush1.bf16.msra.mxu0 0
        %5321 = vmatprep.subr.bf16.mxu0 0
        %5322 = vmatpush1.bf16.msra.mxu0 0
        %5323 = vmatprep.subr.bf16.mxu0 0
        %5324 = vmatpush1.bf16.msra.mxu0 0
        %5325 = vmatprep.subr.bf16.mxu0 0
        %5326 = vmatpush1.bf16.msra.mxu0 0
        %5327 = vmatprep.subr.bf16.mxu0 0
        %5328 = vmatpush1.bf16.msra.mxu0 0
        %5329 = vmatprep.subr.bf16.mxu0 0
        %5330 = vmatpush1.bf16.msra.mxu0 %v1600
        %5331 = vmatprep.subr.bf16.mxu0 0
        %5332 = vmatpush2.bf16.msra.mxu0 0
        %5333 = vmatprep.subr.bf16.mxu0 0
        %5334 = vmatpush2.bf16.msra.mxu0 0
        %5335 = vmatprep.subr.bf16.mxu0 0
        %5336 = vmatpush2.bf16.msra.mxu0 0
        %5337 = vmatprep.subr.bf16.mxu0 0
        %5338 = vmatpush2.bf16.msra.mxu0 0
        %5339 = vmatprep.subr.bf16.mxu0 0
        %5340 = vmatpush2.bf16.msra.mxu0 0
        %5341 = vmatprep.subr.bf16.mxu0 0
        %5342 = vmatpush2.bf16.msra.mxu0 0
        %5343 = vmatprep.subr.bf16.mxu0 0
        %5344 = vmatpush2.bf16.msra.mxu0 0
        %5345 = vmatprep.subr.bf16.mxu0 0
        %5346 = vmatpush2.bf16.msra.mxu0 0
        %5347 = vmatprep.mubr.bf16.mxu0 0
        %5348 = vmatmul.mubr.bf16.gmra.mxu0 %v5313
        %v5349 = vpop.f32.mrf.mxu0
        %v5350 = vadd.f32 0.0, %v5349
        %v5351 = vpop.f32.mrf.mxu0
        %v5352 = vpop.f32.mrf.mxu0
        %v5353 = vadd.f32 0.0, %v5352
        %v5354 = vpop.f32.mrf.mxu0
        %5355 = vdwg.mxu0
        %v5357 = vsel %vm3182, %v4996, 0
        %5359 = vmatprep.subr.bf16.mxu0 0
        %5360 = vmatpush1.bf16.msra.mxu0 0
        %5361 = vmatprep.subr.bf16.mxu0 0
        %5362 = vmatpush1.bf16.msra.mxu0 0
        %5363 = vmatprep.subr.bf16.mxu0 0
        %5364 = vmatpush1.bf16.msra.mxu0 0
        %5365 = vmatprep.subr.bf16.mxu0 0
        %5366 = vmatpush1.bf16.msra.mxu0 0
        %5367 = vmatprep.subr.bf16.mxu0 0
        %5368 = vmatpush1.bf16.msra.mxu0 0
        %5369 = vmatprep.subr.bf16.mxu0 0
        %5370 = vmatpush1.bf16.msra.mxu0 0
        %5371 = vmatprep.subr.bf16.mxu0 0
        %5372 = vmatpush1.bf16.msra.mxu0 0
        %5373 = vmatprep.subr.bf16.mxu0 0
        %5374 = vmatpush1.bf16.msra.mxu0 %v1604
        %5375 = vmatprep.subr.bf16.mxu0 0
        %5376 = vmatpush2.bf16.msra.mxu0 0
        %5377 = vmatprep.subr.bf16.mxu0 0
        %5378 = vmatpush2.bf16.msra.mxu0 0
        %5379 = vmatprep.subr.bf16.mxu0 0
        %5380 = vmatpush2.bf16.msra.mxu0 0
        %5381 = vmatprep.subr.bf16.mxu0 0
        %5382 = vmatpush2.bf16.msra.mxu0 0
        %5383 = vmatprep.subr.bf16.mxu0 0
        %5384 = vmatpush2.bf16.msra.mxu0 0
        %5385 = vmatprep.subr.bf16.mxu0 0
        %5386 = vmatpush2.bf16.msra.mxu0 0
        %5387 = vmatprep.subr.bf16.mxu0 0
        %5388 = vmatpush2.bf16.msra.mxu0 0
        %5389 = vmatprep.subr.bf16.mxu0 0
        %5390 = vmatpush2.bf16.msra.mxu0 0
        %5391 = vmatprep.mubr.bf16.mxu0 0
        %5392 = vmatmul.mubr.bf16.gmra.mxu0 %v5357
        %v5393 = vpop.f32.mrf.mxu0
        %v5394 = vadd.f32 0.0, %v5393
        %v5395 = vpop.f32.mrf.mxu0
        %v5396 = vpop.f32.mrf.mxu0
        %v5397 = vadd.f32 0.0, %v5396
        %v5398 = vpop.f32.mrf.mxu0
        %5399 = vdwg.mxu0
        %v5401 = vsel %vm3182, %v4997, 0
        %5403 = vmatprep.subr.bf16.mxu0 0
        %5404 = vmatpush1.bf16.msra.mxu0 0
        %5405 = vmatprep.subr.bf16.mxu0 0
        %5406 = vmatpush1.bf16.msra.mxu0 0
        %5407 = vmatprep.subr.bf16.mxu0 0
        %5408 = vmatpush1.bf16.msra.mxu0 0
        %5409 = vmatprep.subr.bf16.mxu0 0
        %5410 = vmatpush1.bf16.msra.mxu0 0
        %5411 = vmatprep.subr.bf16.mxu0 0
        %5412 = vmatpush1.bf16.msra.mxu0 0
        %5413 = vmatprep.subr.bf16.mxu0 0
        %5414 = vmatpush1.bf16.msra.mxu0 0
        %5415 = vmatprep.subr.bf16.mxu0 0
        %5416 = vmatpush1.bf16.msra.mxu0 0
        %5417 = vmatprep.subr.bf16.mxu0 0
        %5418 = vmatpush1.bf16.msra.mxu0 %v1608
        %5419 = vmatprep.subr.bf16.mxu0 0
        %5420 = vmatpush2.bf16.msra.mxu0 0
        %5421 = vmatprep.subr.bf16.mxu0 0
        %5422 = vmatpush2.bf16.msra.mxu0 0
        %5423 = vmatprep.subr.bf16.mxu0 0
        %5424 = vmatpush2.bf16.msra.mxu0 0
        %5425 = vmatprep.subr.bf16.mxu0 0
        %5426 = vmatpush2.bf16.msra.mxu0 0
        %5427 = vmatprep.subr.bf16.mxu0 0
        %5428 = vmatpush2.bf16.msra.mxu0 0
        %5429 = vmatprep.subr.bf16.mxu0 0
        %5430 = vmatpush2.bf16.msra.mxu0 0
        %5431 = vmatprep.subr.bf16.mxu0 0
        %5432 = vmatpush2.bf16.msra.mxu0 0
        %5433 = vmatprep.subr.bf16.mxu0 0
        %5434 = vmatpush2.bf16.msra.mxu0 0
        %5435 = vmatprep.mubr.bf16.mxu0 0
        %5436 = vmatmul.mubr.bf16.gmra.mxu0 %v5401
        %v5437 = vpop.f32.mrf.mxu0
        %v5438 = vadd.f32 0.0, %v5437
        %v5439 = vpop.f32.mrf.mxu0
        %v5440 = vpop.f32.mrf.mxu0
        %v5441 = vadd.f32 0.0, %v5440
        %v5442 = vpop.f32.mrf.mxu0
        %5443 = vdwg.mxu0
        %v5445 = vsel %vm3182, %v4998, 0
        %5447 = vmatprep.subr.bf16.mxu0 0
        %5448 = vmatpush1.bf16.msra.mxu0 0
        %5449 = vmatprep.subr.bf16.mxu0 0
        %5450 = vmatpush1.bf16.msra.mxu0 0
        %5451 = vmatprep.subr.bf16.mxu0 0
        %5452 = vmatpush1.bf16.msra.mxu0 0
        %5453 = vmatprep.subr.bf16.mxu0 0
        %5454 = vmatpush1.bf16.msra.mxu0 0
        %5455 = vmatprep.subr.bf16.mxu0 0
        %5456 = vmatpush1.bf16.msra.mxu0 0
        %5457 = vmatprep.subr.bf16.mxu0 0
        %5458 = vmatpush1.bf16.msra.mxu0 0
        %5459 = vmatprep.subr.bf16.mxu0 0
        %5460 = vmatpush1.bf16.msra.mxu0 0
        %5461 = vmatprep.subr.bf16.mxu0 0
        %5462 = vmatpush1.bf16.msra.mxu0 %v1612
        %5463 = vmatprep.subr.bf16.mxu0 0
        %5464 = vmatpush2.bf16.msra.mxu0 0
        %5465 = vmatprep.subr.bf16.mxu0 0
        %5466 = vmatpush2.bf16.msra.mxu0 0
        %5467 = vmatprep.subr.bf16.mxu0 0
        %5468 = vmatpush2.bf16.msra.mxu0 0
        %5469 = vmatprep.subr.bf16.mxu0 0
        %5470 = vmatpush2.bf16.msra.mxu0 0
        %5471 = vmatprep.subr.bf16.mxu0 0
        %5472 = vmatpush2.bf16.msra.mxu0 0
        %5473 = vmatprep.subr.bf16.mxu0 0
        %5474 = vmatpush2.bf16.msra.mxu0 0
        %5475 = vmatprep.subr.bf16.mxu0 0
        %5476 = vmatpush2.bf16.msra.mxu0 0
        %5477 = vmatprep.subr.bf16.mxu0 0
        %5478 = vmatpush2.bf16.msra.mxu0 0
        %5479 = vmatprep.mubr.bf16.mxu0 0
        %5480 = vmatmul.mubr.bf16.gmra.mxu0 %v5445
        %v5481 = vpop.f32.mrf.mxu0
        %v5482 = vadd.f32 0.0, %v5481
        %v5483 = vpop.f32.mrf.mxu0
        %v5484 = vpop.f32.mrf.mxu0
        %v5485 = vadd.f32 0.0, %v5484
        %v5486 = vpop.f32.mrf.mxu0
        %5487 = vdwg.mxu0
        %v5489 = vsel %vm3182, %v4999, 0
        %5491 = vmatprep.subr.bf16.mxu0 0
        %5492 = vmatpush1.bf16.msra.mxu0 0
        %5493 = vmatprep.subr.bf16.mxu0 0
        %5494 = vmatpush1.bf16.msra.mxu0 0
        %5495 = vmatprep.subr.bf16.mxu0 0
        %5496 = vmatpush1.bf16.msra.mxu0 0
        %5497 = vmatprep.subr.bf16.mxu0 0
        %5498 = vmatpush1.bf16.msra.mxu0 0
        %5499 = vmatprep.subr.bf16.mxu0 0
        %5500 = vmatpush1.bf16.msra.mxu0 0
        %5501 = vmatprep.subr.bf16.mxu0 0
        %5502 = vmatpush1.bf16.msra.mxu0 0
        %5503 = vmatprep.subr.bf16.mxu0 0
        %5504 = vmatpush1.bf16.msra.mxu0 0
        %5505 = vmatprep.subr.bf16.mxu0 0
        %5506 = vmatpush1.bf16.msra.mxu0 %v1616
        %5507 = vmatprep.subr.bf16.mxu0 0
        %5508 = vmatpush2.bf16.msra.mxu0 0
        %5509 = vmatprep.subr.bf16.mxu0 0
        %5510 = vmatpush2.bf16.msra.mxu0 0
        %5511 = vmatprep.subr.bf16.mxu0 0
        %5512 = vmatpush2.bf16.msra.mxu0 0
        %5513 = vmatprep.subr.bf16.mxu0 0
        %5514 = vmatpush2.bf16.msra.mxu0 0
        %5515 = vmatprep.subr.bf16.mxu0 0
        %5516 = vmatpush2.bf16.msra.mxu0 0
        %5517 = vmatprep.subr.bf16.mxu0 0
        %5518 = vmatpush2.bf16.msra.mxu0 0
        %5519 = vmatprep.subr.bf16.mxu0 0
        %5520 = vmatpush2.bf16.msra.mxu0 0
        %5521 = vmatprep.subr.bf16.mxu0 0
        %5522 = vmatpush2.bf16.msra.mxu0 0
        %5523 = vmatprep.mubr.bf16.mxu0 0
        %5524 = vmatmul.mubr.bf16.gmra.mxu0 %v5489
        %v5525 = vpop.f32.mrf.mxu0
        %v5526 = vadd.f32 0.0, %v5525
        %v5527 = vpop.f32.mrf.mxu0
        %v5528 = vpop.f32.mrf.mxu0
        %v5529 = vadd.f32 0.0, %v5528
        %v5530 = vpop.f32.mrf.mxu0
        %5531 = vdwg.mxu0
        %v5533 = vsel %vm3182, %v5000, 0
        %5535 = vmatprep.subr.bf16.mxu0 0
        %5536 = vmatpush1.bf16.msra.mxu0 0
        %5537 = vmatprep.subr.bf16.mxu0 0
        %5538 = vmatpush1.bf16.msra.mxu0 0
        %5539 = vmatprep.subr.bf16.mxu0 0
        %5540 = vmatpush1.bf16.msra.mxu0 0
        %5541 = vmatprep.subr.bf16.mxu0 0
        %5542 = vmatpush1.bf16.msra.mxu0 0
        %5543 = vmatprep.subr.bf16.mxu0 0
        %5544 = vmatpush1.bf16.msra.mxu0 0
        %5545 = vmatprep.subr.bf16.mxu0 0
        %5546 = vmatpush1.bf16.msra.mxu0 0
        %5547 = vmatprep.subr.bf16.mxu0 0
        %5548 = vmatpush1.bf16.msra.mxu0 0
        %5549 = vmatprep.subr.bf16.mxu0 0
        %5550 = vmatpush1.bf16.msra.mxu0 %v1620
        %5551 = vmatprep.subr.bf16.mxu0 0
        %5552 = vmatpush2.bf16.msra.mxu0 0
        %5553 = vmatprep.subr.bf16.mxu0 0
        %5554 = vmatpush2.bf16.msra.mxu0 0
        %5555 = vmatprep.subr.bf16.mxu0 0
        %5556 = vmatpush2.bf16.msra.mxu0 0
        %5557 = vmatprep.subr.bf16.mxu0 0
        %5558 = vmatpush2.bf16.msra.mxu0 0
        %5559 = vmatprep.subr.bf16.mxu0 0
        %5560 = vmatpush2.bf16.msra.mxu0 0
        %5561 = vmatprep.subr.bf16.mxu0 0
        %5562 = vmatpush2.bf16.msra.mxu0 0
        %5563 = vmatprep.subr.bf16.mxu0 0
        %5564 = vmatpush2.bf16.msra.mxu0 0
        %5565 = vmatprep.subr.bf16.mxu0 0
        %5566 = vmatpush2.bf16.msra.mxu0 0
        %5567 = vmatprep.mubr.bf16.mxu0 0
        %5568 = vmatmul.mubr.bf16.gmra.mxu0 %v5533
        %v5569 = vpop.f32.mrf.mxu0
        %v5570 = vadd.f32 0.0, %v5569
        %v5571 = vpop.f32.mrf.mxu0
        %v5572 = vpop.f32.mrf.mxu0
        %v5573 = vadd.f32 0.0, %v5572
        %v5574 = vpop.f32.mrf.mxu0
        %5575 = vdwg.mxu0
        %v5577 = vsel %vm3182, %v5001, 0
        %5579 = vmatprep.subr.bf16.mxu0 0
        %5580 = vmatpush1.bf16.msra.mxu0 0
        %5581 = vmatprep.subr.bf16.mxu0 0
        %5582 = vmatpush1.bf16.msra.mxu0 0
        %5583 = vmatprep.subr.bf16.mxu0 0
        %5584 = vmatpush1.bf16.msra.mxu0 0
        %5585 = vmatprep.subr.bf16.mxu0 0
        %5586 = vmatpush1.bf16.msra.mxu0 0
        %5587 = vmatprep.subr.bf16.mxu0 0
        %5588 = vmatpush1.bf16.msra.mxu0 0
        %5589 = vmatprep.subr.bf16.mxu0 0
        %5590 = vmatpush1.bf16.msra.mxu0 0
        %5591 = vmatprep.subr.bf16.mxu0 0
        %5592 = vmatpush1.bf16.msra.mxu0 0
        %5593 = vmatprep.subr.bf16.mxu0 0
        %5594 = vmatpush1.bf16.msra.mxu0 %v1624
        %5595 = vmatprep.subr.bf16.mxu0 0
        %5596 = vmatpush2.bf16.msra.mxu0 0
        %5597 = vmatprep.subr.bf16.mxu0 0
        %5598 = vmatpush2.bf16.msra.mxu0 0
        %5599 = vmatprep.subr.bf16.mxu0 0
        %5600 = vmatpush2.bf16.msra.mxu0 0
        %5601 = vmatprep.subr.bf16.mxu0 0
        %5602 = vmatpush2.bf16.msra.mxu0 0
        %5603 = vmatprep.subr.bf16.mxu0 0
        %5604 = vmatpush2.bf16.msra.mxu0 0
        %5605 = vmatprep.subr.bf16.mxu0 0
        %5606 = vmatpush2.bf16.msra.mxu0 0
        %5607 = vmatprep.subr.bf16.mxu0 0
        %5608 = vmatpush2.bf16.msra.mxu0 0
        %5609 = vmatprep.subr.bf16.mxu0 0
        %5610 = vmatpush2.bf16.msra.mxu0 0
        %5611 = vmatprep.mubr.bf16.mxu0 0
        %5612 = vmatmul.mubr.bf16.gmra.mxu0 %v5577
        %v5613 = vpop.f32.mrf.mxu0
        %v5614 = vadd.f32 0.0, %v5613
        %v5615 = vpop.f32.mrf.mxu0
        %v5616 = vpop.f32.mrf.mxu0
        %v5617 = vadd.f32 0.0, %v5616
        %v5618 = vpop.f32.mrf.mxu0
        %5619 = vdwg.mxu0
        %v5621 = vsel %vm3182, %v5002, 0
        %5623 = vmatprep.subr.bf16.mxu0 0
        %5624 = vmatpush1.bf16.msra.mxu0 0
        %5625 = vmatprep.subr.bf16.mxu0 0
        %5626 = vmatpush1.bf16.msra.mxu0 0
        %5627 = vmatprep.subr.bf16.mxu0 0
        %5628 = vmatpush1.bf16.msra.mxu0 0
        %5629 = vmatprep.subr.bf16.mxu0 0
        %5630 = vmatpush1.bf16.msra.mxu0 0
        %5631 = vmatprep.subr.bf16.mxu0 0
        %5632 = vmatpush1.bf16.msra.mxu0 0
        %5633 = vmatprep.subr.bf16.mxu0 0
        %5634 = vmatpush1.bf16.msra.mxu0 0
        %5635 = vmatprep.subr.bf16.mxu0 0
        %5636 = vmatpush1.bf16.msra.mxu0 0
        %5637 = vmatprep.subr.bf16.mxu0 0
        %5638 = vmatpush1.bf16.msra.mxu0 %v1628
        %5639 = vmatprep.subr.bf16.mxu0 0
        %5640 = vmatpush2.bf16.msra.mxu0 0
        %5641 = vmatprep.subr.bf16.mxu0 0
        %5642 = vmatpush2.bf16.msra.mxu0 0
        %5643 = vmatprep.subr.bf16.mxu0 0
        %5644 = vmatpush2.bf16.msra.mxu0 0
        %5645 = vmatprep.subr.bf16.mxu0 0
        %5646 = vmatpush2.bf16.msra.mxu0 0
        %5647 = vmatprep.subr.bf16.mxu0 0
        %5648 = vmatpush2.bf16.msra.mxu0 0
        %5649 = vmatprep.subr.bf16.mxu0 0
        %5650 = vmatpush2.bf16.msra.mxu0 0
        %5651 = vmatprep.subr.bf16.mxu0 0
        %5652 = vmatpush2.bf16.msra.mxu0 0
        %5653 = vmatprep.subr.bf16.mxu0 0
        %5654 = vmatpush2.bf16.msra.mxu0 0
        %5655 = vmatprep.mubr.bf16.mxu0 0
        %5656 = vmatmul.mubr.bf16.gmra.mxu0 %v5621
        %v5657 = vpop.f32.mrf.mxu0
        %v5658 = vadd.f32 0.0, %v5657
        %v5659 = vpop.f32.mrf.mxu0
        %v5660 = vpop.f32.mrf.mxu0
        %v5661 = vadd.f32 0.0, %v5660
        %v5662 = vpop.f32.mrf.mxu0
        %5663 = vdwg.mxu0
        %v5665 = vsel %vm3182, %v5003, 0
        %5667 = vmatprep.subr.bf16.mxu0 0
        %5668 = vmatpush1.bf16.msra.mxu0 0
        %5669 = vmatprep.subr.bf16.mxu0 0
        %5670 = vmatpush1.bf16.msra.mxu0 0
        %5671 = vmatprep.subr.bf16.mxu0 0
        %5672 = vmatpush1.bf16.msra.mxu0 0
        %5673 = vmatprep.subr.bf16.mxu0 0
        %5674 = vmatpush1.bf16.msra.mxu0 0
        %5675 = vmatprep.subr.bf16.mxu0 0
        %5676 = vmatpush1.bf16.msra.mxu0 0
        %5677 = vmatprep.subr.bf16.mxu0 0
        %5678 = vmatpush1.bf16.msra.mxu0 0
        %5679 = vmatprep.subr.bf16.mxu0 0
        %5680 = vmatpush1.bf16.msra.mxu0 0
        %5681 = vmatprep.subr.bf16.mxu0 0
        %5682 = vmatpush1.bf16.msra.mxu0 %v1632
        %5683 = vmatprep.subr.bf16.mxu0 0
        %5684 = vmatpush2.bf16.msra.mxu0 0
        %5685 = vmatprep.subr.bf16.mxu0 0
        %5686 = vmatpush2.bf16.msra.mxu0 0
        %5687 = vmatprep.subr.bf16.mxu0 0
        %5688 = vmatpush2.bf16.msra.mxu0 0
        %5689 = vmatprep.subr.bf16.mxu0 0
        %5690 = vmatpush2.bf16.msra.mxu0 0
        %5691 = vmatprep.subr.bf16.mxu0 0
        %5692 = vmatpush2.bf16.msra.mxu0 0
        %5693 = vmatprep.subr.bf16.mxu0 0
        %5694 = vmatpush2.bf16.msra.mxu0 0
        %5695 = vmatprep.subr.bf16.mxu0 0
        %5696 = vmatpush2.bf16.msra.mxu0 0
        %5697 = vmatprep.subr.bf16.mxu0 0
        %5698 = vmatpush2.bf16.msra.mxu0 0
        %5699 = vmatprep.mubr.bf16.mxu0 0
        %5700 = vmatmul.mubr.bf16.gmra.mxu0 %v5665
        %v5701 = vpop.f32.mrf.mxu0
        %v5702 = vadd.f32 0.0, %v5701
        %v5703 = vpop.f32.mrf.mxu0
        %v5704 = vpop.f32.mrf.mxu0
        %v5705 = vadd.f32 0.0, %v5704
        %v5706 = vpop.f32.mrf.mxu0
        %5707 = vdwg.mxu0
        %v5708 = vpack.c.bf16 %v4317, %v4315
        %v5709 = vpack.c.bf16 %v4321, %v4319
        %v5710 = vpack.c.bf16 %v4325, %v4323
        %v5711 = vpack.c.bf16 %v4329, %v4327
        %v5712 = vpack.c.bf16 %v4333, %v4331
        %v5713 = vpack.c.bf16 %v4337, %v4335
        %v5714 = vpack.c.bf16 %v4341, %v4339
        %v5715 = vpack.c.bf16 %v4345, %v4343
        %v5716 = vpack.c.bf16 %v4349, %v4347
        %v5717 = vpack.c.bf16 %v4353, %v4351
        %v5718 = vpack.c.bf16 %v4357, %v4355
        %v5719 = vpack.c.bf16 %v4361, %v4359
        %v5720 = vpack.c.bf16 %v4365, %v4363
        %v5721 = vpack.c.bf16 %v4369, %v4367
        %v5722 = vpack.c.bf16 %v4373, %v4371
        %v5723 = vpack.c.bf16 %v4377, %v4375
        %v5725 = vsel %vm3182, %v5708, 0
        %5727 = vmatprep.subr.bf16.mxu0 0
        %5728 = vmatpush1.bf16.msra.mxu0 0
        %5729 = vmatprep.subr.bf16.mxu0 0
        %5730 = vmatpush1.bf16.msra.mxu0 0
        %5731 = vmatprep.subr.bf16.mxu0 0
        %5732 = vmatpush1.bf16.msra.mxu0 0
        %5733 = vmatprep.subr.bf16.mxu0 0
        %5734 = vmatpush1.bf16.msra.mxu0 0
        %5735 = vmatprep.subr.bf16.mxu0 0
        %5736 = vmatpush1.bf16.msra.mxu0 0
        %5737 = vmatprep.subr.bf16.mxu0 0
        %5738 = vmatpush1.bf16.msra.mxu0 0
        %5739 = vmatprep.subr.bf16.mxu0 0
        %5740 = vmatpush1.bf16.msra.mxu0 0
        %5741 = vmatprep.subr.bf16.mxu0 0
        %5742 = vmatpush1.bf16.msra.mxu0 %v530
        %5743 = vmatprep.subr.bf16.mxu0 0
        %5744 = vmatpush2.bf16.msra.mxu0 0
        %5745 = vmatprep.subr.bf16.mxu0 0
        %5746 = vmatpush2.bf16.msra.mxu0 0
        %5747 = vmatprep.subr.bf16.mxu0 0
        %5748 = vmatpush2.bf16.msra.mxu0 0
        %5749 = vmatprep.subr.bf16.mxu0 0
        %5750 = vmatpush2.bf16.msra.mxu0 0
        %5751 = vmatprep.subr.bf16.mxu0 0
        %5752 = vmatpush2.bf16.msra.mxu0 0
        %5753 = vmatprep.subr.bf16.mxu0 0
        %5754 = vmatpush2.bf16.msra.mxu0 0
        %5755 = vmatprep.subr.bf16.mxu0 0
        %5756 = vmatpush2.bf16.msra.mxu0 0
        %5757 = vmatprep.subr.bf16.mxu0 0
        %5758 = vmatpush2.bf16.msra.mxu0 0
        %5759 = vmatprep.mubr.bf16.mxu0 0
        %5760 = vmatmul.mubr.bf16.gmra.mxu0 %v5725
        %v5761 = vpop.f32.mrf.mxu0
        %v5762 = vadd.f32 0.0, %v5761
        %v5763 = vpop.f32.mrf.mxu0
        %v5764 = vpop.f32.mrf.mxu0
        %v5765 = vadd.f32 0.0, %v5764
        %v5766 = vpop.f32.mrf.mxu0
        %5767 = vdwg.mxu0
        %v5769 = vsel %vm3182, %v5709, 0
        %5771 = vmatprep.subr.bf16.mxu0 0
        %5772 = vmatpush1.bf16.msra.mxu0 0
        %5773 = vmatprep.subr.bf16.mxu0 0
        %5774 = vmatpush1.bf16.msra.mxu0 0
        %5775 = vmatprep.subr.bf16.mxu0 0
        %5776 = vmatpush1.bf16.msra.mxu0 0
        %5777 = vmatprep.subr.bf16.mxu0 0
        %5778 = vmatpush1.bf16.msra.mxu0 0
        %5779 = vmatprep.subr.bf16.mxu0 0
        %5780 = vmatpush1.bf16.msra.mxu0 0
        %5781 = vmatprep.subr.bf16.mxu0 0
        %5782 = vmatpush1.bf16.msra.mxu0 0
        %5783 = vmatprep.subr.bf16.mxu0 0
        %5784 = vmatpush1.bf16.msra.mxu0 0
        %5785 = vmatprep.subr.bf16.mxu0 0
        %5786 = vmatpush1.bf16.msra.mxu0 %v531
        %5787 = vmatprep.subr.bf16.mxu0 0
        %5788 = vmatpush2.bf16.msra.mxu0 0
        %5789 = vmatprep.subr.bf16.mxu0 0
        %5790 = vmatpush2.bf16.msra.mxu0 0
        %5791 = vmatprep.subr.bf16.mxu0 0
        %5792 = vmatpush2.bf16.msra.mxu0 0
        %5793 = vmatprep.subr.bf16.mxu0 0
        %5794 = vmatpush2.bf16.msra.mxu0 0
        %5795 = vmatprep.subr.bf16.mxu0 0
        %5796 = vmatpush2.bf16.msra.mxu0 0
        %5797 = vmatprep.subr.bf16.mxu0 0
        %5798 = vmatpush2.bf16.msra.mxu0 0
        %5799 = vmatprep.subr.bf16.mxu0 0
        %5800 = vmatpush2.bf16.msra.mxu0 0
        %5801 = vmatprep.subr.bf16.mxu0 0
        %5802 = vmatpush2.bf16.msra.mxu0 0
        %5803 = vmatprep.mubr.bf16.mxu0 0
        %5804 = vmatmul.mubr.bf16.gmra.mxu0 %v5769
        %v5805 = vpop.f32.mrf.mxu0
        %v5806 = vadd.f32 0.0, %v5805
        %v5807 = vpop.f32.mrf.mxu0
        %v5808 = vpop.f32.mrf.mxu0
        %v5809 = vadd.f32 0.0, %v5808
        %v5810 = vpop.f32.mrf.mxu0
        %5811 = vdwg.mxu0
        %v5813 = vsel %vm3182, %v5710, 0
        %5815 = vmatprep.subr.bf16.mxu0 0
        %5816 = vmatpush1.bf16.msra.mxu0 0
        %5817 = vmatprep.subr.bf16.mxu0 0
        %5818 = vmatpush1.bf16.msra.mxu0 0
        %5819 = vmatprep.subr.bf16.mxu0 0
        %5820 = vmatpush1.bf16.msra.mxu0 0
        %5821 = vmatprep.subr.bf16.mxu0 0
        %5822 = vmatpush1.bf16.msra.mxu0 0
        %5823 = vmatprep.subr.bf16.mxu0 0
        %5824 = vmatpush1.bf16.msra.mxu0 0
        %5825 = vmatprep.subr.bf16.mxu0 0
        %5826 = vmatpush1.bf16.msra.mxu0 0
        %5827 = vmatprep.subr.bf16.mxu0 0
        %5828 = vmatpush1.bf16.msra.mxu0 0
        %5829 = vmatprep.subr.bf16.mxu0 0
        %5830 = vmatpush1.bf16.msra.mxu0 %v532
        %5831 = vmatprep.subr.bf16.mxu0 0
        %5832 = vmatpush2.bf16.msra.mxu0 0
        %5833 = vmatprep.subr.bf16.mxu0 0
        %5834 = vmatpush2.bf16.msra.mxu0 0
        %5835 = vmatprep.subr.bf16.mxu0 0
        %5836 = vmatpush2.bf16.msra.mxu0 0
        %5837 = vmatprep.subr.bf16.mxu0 0
        %5838 = vmatpush2.bf16.msra.mxu0 0
        %5839 = vmatprep.subr.bf16.mxu0 0
        %5840 = vmatpush2.bf16.msra.mxu0 0
        %5841 = vmatprep.subr.bf16.mxu0 0
        %5842 = vmatpush2.bf16.msra.mxu0 0
        %5843 = vmatprep.subr.bf16.mxu0 0
        %5844 = vmatpush2.bf16.msra.mxu0 0
        %5845 = vmatprep.subr.bf16.mxu0 0
        %5846 = vmatpush2.bf16.msra.mxu0 0
        %5847 = vmatprep.mubr.bf16.mxu0 0
        %5848 = vmatmul.mubr.bf16.gmra.mxu0 %v5813
        %v5849 = vpop.f32.mrf.mxu0
        %v5850 = vadd.f32 0.0, %v5849
        %v5851 = vpop.f32.mrf.mxu0
        %v5852 = vpop.f32.mrf.mxu0
        %v5853 = vadd.f32 0.0, %v5852
        %v5854 = vpop.f32.mrf.mxu0
        %5855 = vdwg.mxu0
        %v5857 = vsel %vm3182, %v5711, 0
        %5859 = vmatprep.subr.bf16.mxu0 0
        %5860 = vmatpush1.bf16.msra.mxu0 0
        %5861 = vmatprep.subr.bf16.mxu0 0
        %5862 = vmatpush1.bf16.msra.mxu0 0
        %5863 = vmatprep.subr.bf16.mxu0 0
        %5864 = vmatpush1.bf16.msra.mxu0 0
        %5865 = vmatprep.subr.bf16.mxu0 0
        %5866 = vmatpush1.bf16.msra.mxu0 0
        %5867 = vmatprep.subr.bf16.mxu0 0
        %5868 = vmatpush1.bf16.msra.mxu0 0
        %5869 = vmatprep.subr.bf16.mxu0 0
        %5870 = vmatpush1.bf16.msra.mxu0 0
        %5871 = vmatprep.subr.bf16.mxu0 0
        %5872 = vmatpush1.bf16.msra.mxu0 0
        %5873 = vmatprep.subr.bf16.mxu0 0
        %5874 = vmatpush1.bf16.msra.mxu0 %v533
        %5875 = vmatprep.subr.bf16.mxu0 0
        %5876 = vmatpush2.bf16.msra.mxu0 0
        %5877 = vmatprep.subr.bf16.mxu0 0
        %5878 = vmatpush2.bf16.msra.mxu0 0
        %5879 = vmatprep.subr.bf16.mxu0 0
        %5880 = vmatpush2.bf16.msra.mxu0 0
        %5881 = vmatprep.subr.bf16.mxu0 0
        %5882 = vmatpush2.bf16.msra.mxu0 0
        %5883 = vmatprep.subr.bf16.mxu0 0
        %5884 = vmatpush2.bf16.msra.mxu0 0
        %5885 = vmatprep.subr.bf16.mxu0 0
        %5886 = vmatpush2.bf16.msra.mxu0 0
        %5887 = vmatprep.subr.bf16.mxu0 0
        %5888 = vmatpush2.bf16.msra.mxu0 0
        %5889 = vmatprep.subr.bf16.mxu0 0
        %5890 = vmatpush2.bf16.msra.mxu0 0
        %5891 = vmatprep.mubr.bf16.mxu0 0
        %5892 = vmatmul.mubr.bf16.gmra.mxu0 %v5857
        %v5893 = vpop.f32.mrf.mxu0
        %v5894 = vadd.f32 0.0, %v5893
        %v5895 = vpop.f32.mrf.mxu0
        %v5896 = vpop.f32.mrf.mxu0
        %v5897 = vadd.f32 0.0, %v5896
        %v5898 = vpop.f32.mrf.mxu0
        %5899 = vdwg.mxu0
        %v5901 = vsel %vm3182, %v5712, 0
        %5903 = vmatprep.subr.bf16.mxu0 0
        %5904 = vmatpush1.bf16.msra.mxu0 0
        %5905 = vmatprep.subr.bf16.mxu0 0
        %5906 = vmatpush1.bf16.msra.mxu0 0
        %5907 = vmatprep.subr.bf16.mxu0 0
        %5908 = vmatpush1.bf16.msra.mxu0 0
        %5909 = vmatprep.subr.bf16.mxu0 0
        %5910 = vmatpush1.bf16.msra.mxu0 0
        %5911 = vmatprep.subr.bf16.mxu0 0
        %5912 = vmatpush1.bf16.msra.mxu0 0
        %5913 = vmatprep.subr.bf16.mxu0 0
        %5914 = vmatpush1.bf16.msra.mxu0 0
        %5915 = vmatprep.subr.bf16.mxu0 0
        %5916 = vmatpush1.bf16.msra.mxu0 0
        %5917 = vmatprep.subr.bf16.mxu0 0
        %5918 = vmatpush1.bf16.msra.mxu0 %v534
        %5919 = vmatprep.subr.bf16.mxu0 0
        %5920 = vmatpush2.bf16.msra.mxu0 0
        %5921 = vmatprep.subr.bf16.mxu0 0
        %5922 = vmatpush2.bf16.msra.mxu0 0
        %5923 = vmatprep.subr.bf16.mxu0 0
        %5924 = vmatpush2.bf16.msra.mxu0 0
        %5925 = vmatprep.subr.bf16.mxu0 0
        %5926 = vmatpush2.bf16.msra.mxu0 0
        %5927 = vmatprep.subr.bf16.mxu0 0
        %5928 = vmatpush2.bf16.msra.mxu0 0
        %5929 = vmatprep.subr.bf16.mxu0 0
        %5930 = vmatpush2.bf16.msra.mxu0 0
        %5931 = vmatprep.subr.bf16.mxu0 0
        %5932 = vmatpush2.bf16.msra.mxu0 0
        %5933 = vmatprep.subr.bf16.mxu0 0
        %5934 = vmatpush2.bf16.msra.mxu0 0
        %5935 = vmatprep.mubr.bf16.mxu0 0
        %5936 = vmatmul.mubr.bf16.gmra.mxu0 %v5901
        %v5937 = vpop.f32.mrf.mxu0
        %v5938 = vadd.f32 0.0, %v5937
        %v5939 = vpop.f32.mrf.mxu0
        %v5940 = vpop.f32.mrf.mxu0
        %v5941 = vadd.f32 0.0, %v5940
        %v5942 = vpop.f32.mrf.mxu0
        %5943 = vdwg.mxu0
        %v5945 = vsel %vm3182, %v5713, 0
        %5947 = vmatprep.subr.bf16.mxu0 0
        %5948 = vmatpush1.bf16.msra.mxu0 0
        %5949 = vmatprep.subr.bf16.mxu0 0
        %5950 = vmatpush1.bf16.msra.mxu0 0
        %5951 = vmatprep.subr.bf16.mxu0 0
        %5952 = vmatpush1.bf16.msra.mxu0 0
        %5953 = vmatprep.subr.bf16.mxu0 0
        %5954 = vmatpush1.bf16.msra.mxu0 0
        %5955 = vmatprep.subr.bf16.mxu0 0
        %5956 = vmatpush1.bf16.msra.mxu0 0
        %5957 = vmatprep.subr.bf16.mxu0 0
        %5958 = vmatpush1.bf16.msra.mxu0 0
        %5959 = vmatprep.subr.bf16.mxu0 0
        %5960 = vmatpush1.bf16.msra.mxu0 0
        %5961 = vmatprep.subr.bf16.mxu0 0
        %5962 = vmatpush1.bf16.msra.mxu0 %v535
        %5963 = vmatprep.subr.bf16.mxu0 0
        %5964 = vmatpush2.bf16.msra.mxu0 0
        %5965 = vmatprep.subr.bf16.mxu0 0
        %5966 = vmatpush2.bf16.msra.mxu0 0
        %5967 = vmatprep.subr.bf16.mxu0 0
        %5968 = vmatpush2.bf16.msra.mxu0 0
        %5969 = vmatprep.subr.bf16.mxu0 0
        %5970 = vmatpush2.bf16.msra.mxu0 0
        %5971 = vmatprep.subr.bf16.mxu0 0
        %5972 = vmatpush2.bf16.msra.mxu0 0
        %5973 = vmatprep.subr.bf16.mxu0 0
        %5974 = vmatpush2.bf16.msra.mxu0 0
        %5975 = vmatprep.subr.bf16.mxu0 0
        %5976 = vmatpush2.bf16.msra.mxu0 0
        %5977 = vmatprep.subr.bf16.mxu0 0
        %5978 = vmatpush2.bf16.msra.mxu0 0
        %5979 = vmatprep.mubr.bf16.mxu0 0
        %5980 = vmatmul.mubr.bf16.gmra.mxu0 %v5945
        %v5981 = vpop.f32.mrf.mxu0
        %v5982 = vadd.f32 0.0, %v5981
        %v5983 = vpop.f32.mrf.mxu0
        %v5984 = vpop.f32.mrf.mxu0
        %v5985 = vadd.f32 0.0, %v5984
        %v5986 = vpop.f32.mrf.mxu0
        %5987 = vdwg.mxu0
        %v5989 = vsel %vm3182, %v5714, 0
        %5991 = vmatprep.subr.bf16.mxu0 0
        %5992 = vmatpush1.bf16.msra.mxu0 0
        %5993 = vmatprep.subr.bf16.mxu0 0
        %5994 = vmatpush1.bf16.msra.mxu0 0
        %5995 = vmatprep.subr.bf16.mxu0 0
        %5996 = vmatpush1.bf16.msra.mxu0 0
        %5997 = vmatprep.subr.bf16.mxu0 0
        %5998 = vmatpush1.bf16.msra.mxu0 0
        %5999 = vmatprep.subr.bf16.mxu0 0
        %6000 = vmatpush1.bf16.msra.mxu0 0
        %6001 = vmatprep.subr.bf16.mxu0 0
        %6002 = vmatpush1.bf16.msra.mxu0 0
        %6003 = vmatprep.subr.bf16.mxu0 0
        %6004 = vmatpush1.bf16.msra.mxu0 0
        %6005 = vmatprep.subr.bf16.mxu0 0
        %6006 = vmatpush1.bf16.msra.mxu0 %v536
        %6007 = vmatprep.subr.bf16.mxu0 0
        %6008 = vmatpush2.bf16.msra.mxu0 0
        %6009 = vmatprep.subr.bf16.mxu0 0
        %6010 = vmatpush2.bf16.msra.mxu0 0
        %6011 = vmatprep.subr.bf16.mxu0 0
        %6012 = vmatpush2.bf16.msra.mxu0 0
        %6013 = vmatprep.subr.bf16.mxu0 0
        %6014 = vmatpush2.bf16.msra.mxu0 0
        %6015 = vmatprep.subr.bf16.mxu0 0
        %6016 = vmatpush2.bf16.msra.mxu0 0
        %6017 = vmatprep.subr.bf16.mxu0 0
        %6018 = vmatpush2.bf16.msra.mxu0 0
        %6019 = vmatprep.subr.bf16.mxu0 0
        %6020 = vmatpush2.bf16.msra.mxu0 0
        %6021 = vmatprep.subr.bf16.mxu0 0
        %6022 = vmatpush2.bf16.msra.mxu0 0
        %6023 = vmatprep.mubr.bf16.mxu0 0
        %6024 = vmatmul.mubr.bf16.gmra.mxu0 %v5989
        %v6025 = vpop.f32.mrf.mxu0
        %v6026 = vadd.f32 0.0, %v6025
        %v6027 = vpop.f32.mrf.mxu0
        %v6028 = vpop.f32.mrf.mxu0
        %v6029 = vadd.f32 0.0, %v6028
        %v6030 = vpop.f32.mrf.mxu0
        %6031 = vdwg.mxu0
        %v6033 = vsel %vm3182, %v5715, 0
        %6035 = vmatprep.subr.bf16.mxu0 0
        %6036 = vmatpush1.bf16.msra.mxu0 0
        %6037 = vmatprep.subr.bf16.mxu0 0
        %6038 = vmatpush1.bf16.msra.mxu0 0
        %6039 = vmatprep.subr.bf16.mxu0 0
        %6040 = vmatpush1.bf16.msra.mxu0 0
        %6041 = vmatprep.subr.bf16.mxu0 0
        %6042 = vmatpush1.bf16.msra.mxu0 0
        %6043 = vmatprep.subr.bf16.mxu0 0
        %6044 = vmatpush1.bf16.msra.mxu0 0
        %6045 = vmatprep.subr.bf16.mxu0 0
        %6046 = vmatpush1.bf16.msra.mxu0 0
        %6047 = vmatprep.subr.bf16.mxu0 0
        %6048 = vmatpush1.bf16.msra.mxu0 0
        %6049 = vmatprep.subr.bf16.mxu0 0
        %6050 = vmatpush1.bf16.msra.mxu0 %v537
        %6051 = vmatprep.subr.bf16.mxu0 0
        %6052 = vmatpush2.bf16.msra.mxu0 0
        %6053 = vmatprep.subr.bf16.mxu0 0
        %6054 = vmatpush2.bf16.msra.mxu0 0
        %6055 = vmatprep.subr.bf16.mxu0 0
        %6056 = vmatpush2.bf16.msra.mxu0 0
        %6057 = vmatprep.subr.bf16.mxu0 0
        %6058 = vmatpush2.bf16.msra.mxu0 0
        %6059 = vmatprep.subr.bf16.mxu0 0
        %6060 = vmatpush2.bf16.msra.mxu0 0
        %6061 = vmatprep.subr.bf16.mxu0 0
        %6062 = vmatpush2.bf16.msra.mxu0 0
        %6063 = vmatprep.subr.bf16.mxu0 0
        %6064 = vmatpush2.bf16.msra.mxu0 0
        %6065 = vmatprep.subr.bf16.mxu0 0
        %6066 = vmatpush2.bf16.msra.mxu0 0
        %6067 = vmatprep.mubr.bf16.mxu0 0
        %6068 = vmatmul.mubr.bf16.gmra.mxu0 %v6033
        %v6069 = vpop.f32.mrf.mxu0
        %v6070 = vadd.f32 0.0, %v6069
        %v6071 = vpop.f32.mrf.mxu0
        %v6072 = vpop.f32.mrf.mxu0
        %v6073 = vadd.f32 0.0, %v6072
        %v6074 = vpop.f32.mrf.mxu0
        %6075 = vdwg.mxu0
        %v6077 = vsel %vm3182, %v5716, 0
        %6079 = vmatprep.subr.bf16.mxu0 0
        %6080 = vmatpush1.bf16.msra.mxu0 0
        %6081 = vmatprep.subr.bf16.mxu0 0
        %6082 = vmatpush1.bf16.msra.mxu0 0
        %6083 = vmatprep.subr.bf16.mxu0 0
        %6084 = vmatpush1.bf16.msra.mxu0 0
        %6085 = vmatprep.subr.bf16.mxu0 0
        %6086 = vmatpush1.bf16.msra.mxu0 0
        %6087 = vmatprep.subr.bf16.mxu0 0
        %6088 = vmatpush1.bf16.msra.mxu0 0
        %6089 = vmatprep.subr.bf16.mxu0 0
        %6090 = vmatpush1.bf16.msra.mxu0 0
        %6091 = vmatprep.subr.bf16.mxu0 0
        %6092 = vmatpush1.bf16.msra.mxu0 0
        %6093 = vmatprep.subr.bf16.mxu0 0
        %6094 = vmatpush1.bf16.msra.mxu0 %v538
        %6095 = vmatprep.subr.bf16.mxu0 0
        %6096 = vmatpush2.bf16.msra.mxu0 0
        %6097 = vmatprep.subr.bf16.mxu0 0
        %6098 = vmatpush2.bf16.msra.mxu0 0
        %6099 = vmatprep.subr.bf16.mxu0 0
        %6100 = vmatpush2.bf16.msra.mxu0 0
        %6101 = vmatprep.subr.bf16.mxu0 0
        %6102 = vmatpush2.bf16.msra.mxu0 0
        %6103 = vmatprep.subr.bf16.mxu0 0
        %6104 = vmatpush2.bf16.msra.mxu0 0
        %6105 = vmatprep.subr.bf16.mxu0 0
        %6106 = vmatpush2.bf16.msra.mxu0 0
        %6107 = vmatprep.subr.bf16.mxu0 0
        %6108 = vmatpush2.bf16.msra.mxu0 0
        %6109 = vmatprep.subr.bf16.mxu0 0
        %6110 = vmatpush2.bf16.msra.mxu0 0
        %6111 = vmatprep.mubr.bf16.mxu0 0
        %6112 = vmatmul.mubr.bf16.gmra.mxu0 %v6077
        %v6113 = vpop.f32.mrf.mxu0
        %v6114 = vadd.f32 0.0, %v6113
        %v6115 = vpop.f32.mrf.mxu0
        %v6116 = vpop.f32.mrf.mxu0
        %v6117 = vadd.f32 0.0, %v6116
        %v6118 = vpop.f32.mrf.mxu0
        %6119 = vdwg.mxu0
        %v6121 = vsel %vm3182, %v5717, 0
        %6123 = vmatprep.subr.bf16.mxu0 0
        %6124 = vmatpush1.bf16.msra.mxu0 0
        %6125 = vmatprep.subr.bf16.mxu0 0
        %6126 = vmatpush1.bf16.msra.mxu0 0
        %6127 = vmatprep.subr.bf16.mxu0 0
        %6128 = vmatpush1.bf16.msra.mxu0 0
        %6129 = vmatprep.subr.bf16.mxu0 0
        %6130 = vmatpush1.bf16.msra.mxu0 0
        %6131 = vmatprep.subr.bf16.mxu0 0
        %6132 = vmatpush1.bf16.msra.mxu0 0
        %6133 = vmatprep.subr.bf16.mxu0 0
        %6134 = vmatpush1.bf16.msra.mxu0 0
        %6135 = vmatprep.subr.bf16.mxu0 0
        %6136 = vmatpush1.bf16.msra.mxu0 0
        %6137 = vmatprep.subr.bf16.mxu0 0
        %6138 = vmatpush1.bf16.msra.mxu0 %v539
        %6139 = vmatprep.subr.bf16.mxu0 0
        %6140 = vmatpush2.bf16.msra.mxu0 0
        %6141 = vmatprep.subr.bf16.mxu0 0
        %6142 = vmatpush2.bf16.msra.mxu0 0
        %6143 = vmatprep.subr.bf16.mxu0 0
        %6144 = vmatpush2.bf16.msra.mxu0 0
        %6145 = vmatprep.subr.bf16.mxu0 0
        %6146 = vmatpush2.bf16.msra.mxu0 0
        %6147 = vmatprep.subr.bf16.mxu0 0
        %6148 = vmatpush2.bf16.msra.mxu0 0
        %6149 = vmatprep.subr.bf16.mxu0 0
        %6150 = vmatpush2.bf16.msra.mxu0 0
        %6151 = vmatprep.subr.bf16.mxu0 0
        %6152 = vmatpush2.bf16.msra.mxu0 0
        %6153 = vmatprep.subr.bf16.mxu0 0
        %6154 = vmatpush2.bf16.msra.mxu0 0
        %6155 = vmatprep.mubr.bf16.mxu0 0
        %6156 = vmatmul.mubr.bf16.gmra.mxu0 %v6121
        %v6157 = vpop.f32.mrf.mxu0
        %v6158 = vadd.f32 0.0, %v6157
        %v6159 = vpop.f32.mrf.mxu0
        %v6160 = vpop.f32.mrf.mxu0
        %v6161 = vadd.f32 0.0, %v6160
        %v6162 = vpop.f32.mrf.mxu0
        %6163 = vdwg.mxu0
        %v6165 = vsel %vm3182, %v5718, 0
        %6167 = vmatprep.subr.bf16.mxu0 0
        %6168 = vmatpush1.bf16.msra.mxu0 0
        %6169 = vmatprep.subr.bf16.mxu0 0
        %6170 = vmatpush1.bf16.msra.mxu0 0
        %6171 = vmatprep.subr.bf16.mxu0 0
        %6172 = vmatpush1.bf16.msra.mxu0 0
        %6173 = vmatprep.subr.bf16.mxu0 0
        %6174 = vmatpush1.bf16.msra.mxu0 0
        %6175 = vmatprep.subr.bf16.mxu0 0
        %6176 = vmatpush1.bf16.msra.mxu0 0
        %6177 = vmatprep.subr.bf16.mxu0 0
        %6178 = vmatpush1.bf16.msra.mxu0 0
        %6179 = vmatprep.subr.bf16.mxu0 0
        %6180 = vmatpush1.bf16.msra.mxu0 0
        %6181 = vmatprep.subr.bf16.mxu0 0
        %6182 = vmatpush1.bf16.msra.mxu0 %v540
        %6183 = vmatprep.subr.bf16.mxu0 0
        %6184 = vmatpush2.bf16.msra.mxu0 0
        %6185 = vmatprep.subr.bf16.mxu0 0
        %6186 = vmatpush2.bf16.msra.mxu0 0
        %6187 = vmatprep.subr.bf16.mxu0 0
        %6188 = vmatpush2.bf16.msra.mxu0 0
        %6189 = vmatprep.subr.bf16.mxu0 0
        %6190 = vmatpush2.bf16.msra.mxu0 0
        %6191 = vmatprep.subr.bf16.mxu0 0
        %6192 = vmatpush2.bf16.msra.mxu0 0
        %6193 = vmatprep.subr.bf16.mxu0 0
        %6194 = vmatpush2.bf16.msra.mxu0 0
        %6195 = vmatprep.subr.bf16.mxu0 0
        %6196 = vmatpush2.bf16.msra.mxu0 0
        %6197 = vmatprep.subr.bf16.mxu0 0
        %6198 = vmatpush2.bf16.msra.mxu0 0
        %6199 = vmatprep.mubr.bf16.mxu0 0
        %6200 = vmatmul.mubr.bf16.gmra.mxu0 %v6165
        %v6201 = vpop.f32.mrf.mxu0
        %v6202 = vadd.f32 0.0, %v6201
        %v6203 = vpop.f32.mrf.mxu0
        %v6204 = vpop.f32.mrf.mxu0
        %v6205 = vadd.f32 0.0, %v6204
        %v6206 = vpop.f32.mrf.mxu0
        %6207 = vdwg.mxu0
        %v6209 = vsel %vm3182, %v5719, 0
        %6211 = vmatprep.subr.bf16.mxu0 0
        %6212 = vmatpush1.bf16.msra.mxu0 0
        %6213 = vmatprep.subr.bf16.mxu0 0
        %6214 = vmatpush1.bf16.msra.mxu0 0
        %6215 = vmatprep.subr.bf16.mxu0 0
        %6216 = vmatpush1.bf16.msra.mxu0 0
        %6217 = vmatprep.subr.bf16.mxu0 0
        %6218 = vmatpush1.bf16.msra.mxu0 0
        %6219 = vmatprep.subr.bf16.mxu0 0
        %6220 = vmatpush1.bf16.msra.mxu0 0
        %6221 = vmatprep.subr.bf16.mxu0 0
        %6222 = vmatpush1.bf16.msra.mxu0 0
        %6223 = vmatprep.subr.bf16.mxu0 0
        %6224 = vmatpush1.bf16.msra.mxu0 0
        %6225 = vmatprep.subr.bf16.mxu0 0
        %6226 = vmatpush1.bf16.msra.mxu0 %v541
        %6227 = vmatprep.subr.bf16.mxu0 0
        %6228 = vmatpush2.bf16.msra.mxu0 0
        %6229 = vmatprep.subr.bf16.mxu0 0
        %6230 = vmatpush2.bf16.msra.mxu0 0
        %6231 = vmatprep.subr.bf16.mxu0 0
        %6232 = vmatpush2.bf16.msra.mxu0 0
        %6233 = vmatprep.subr.bf16.mxu0 0
        %6234 = vmatpush2.bf16.msra.mxu0 0
        %6235 = vmatprep.subr.bf16.mxu0 0
        %6236 = vmatpush2.bf16.msra.mxu0 0
        %6237 = vmatprep.subr.bf16.mxu0 0
        %6238 = vmatpush2.bf16.msra.mxu0 0
        %6239 = vmatprep.subr.bf16.mxu0 0
        %6240 = vmatpush2.bf16.msra.mxu0 0
        %6241 = vmatprep.subr.bf16.mxu0 0
        %6242 = vmatpush2.bf16.msra.mxu0 0
        %6243 = vmatprep.mubr.bf16.mxu0 0
        %6244 = vmatmul.mubr.bf16.gmra.mxu0 %v6209
        %v6245 = vpop.f32.mrf.mxu0
        %v6246 = vadd.f32 0.0, %v6245
        %v6247 = vpop.f32.mrf.mxu0
        %v6248 = vpop.f32.mrf.mxu0
        %v6249 = vadd.f32 0.0, %v6248
        %v6250 = vpop.f32.mrf.mxu0
        %6251 = vdwg.mxu0
        %v6253 = vsel %vm3182, %v5720, 0
        %6255 = vmatprep.subr.bf16.mxu0 0
        %6256 = vmatpush1.bf16.msra.mxu0 0
        %6257 = vmatprep.subr.bf16.mxu0 0
        %6258 = vmatpush1.bf16.msra.mxu0 0
        %6259 = vmatprep.subr.bf16.mxu0 0
        %6260 = vmatpush1.bf16.msra.mxu0 0
        %6261 = vmatprep.subr.bf16.mxu0 0
        %6262 = vmatpush1.bf16.msra.mxu0 0
        %6263 = vmatprep.subr.bf16.mxu0 0
        %6264 = vmatpush1.bf16.msra.mxu0 0
        %6265 = vmatprep.subr.bf16.mxu0 0
        %6266 = vmatpush1.bf16.msra.mxu0 0
        %6267 = vmatprep.subr.bf16.mxu0 0
        %6268 = vmatpush1.bf16.msra.mxu0 0
        %6269 = vmatprep.subr.bf16.mxu0 0
        %6270 = vmatpush1.bf16.msra.mxu0 %v542
        %6271 = vmatprep.subr.bf16.mxu0 0
        %6272 = vmatpush2.bf16.msra.mxu0 0
        %6273 = vmatprep.subr.bf16.mxu0 0
        %6274 = vmatpush2.bf16.msra.mxu0 0
        %6275 = vmatprep.subr.bf16.mxu0 0
        %6276 = vmatpush2.bf16.msra.mxu0 0
        %6277 = vmatprep.subr.bf16.mxu0 0
        %6278 = vmatpush2.bf16.msra.mxu0 0
        %6279 = vmatprep.subr.bf16.mxu0 0
        %6280 = vmatpush2.bf16.msra.mxu0 0
        %6281 = vmatprep.subr.bf16.mxu0 0
        %6282 = vmatpush2.bf16.msra.mxu0 0
        %6283 = vmatprep.subr.bf16.mxu0 0
        %6284 = vmatpush2.bf16.msra.mxu0 0
        %6285 = vmatprep.subr.bf16.mxu0 0
        %6286 = vmatpush2.bf16.msra.mxu0 0
        %6287 = vmatprep.mubr.bf16.mxu0 0
        %6288 = vmatmul.mubr.bf16.gmra.mxu0 %v6253
        %v6289 = vpop.f32.mrf.mxu0
        %v6290 = vadd.f32 0.0, %v6289
        %v6291 = vpop.f32.mrf.mxu0
        %v6292 = vpop.f32.mrf.mxu0
        %v6293 = vadd.f32 0.0, %v6292
        %v6294 = vpop.f32.mrf.mxu0
        %6295 = vdwg.mxu0
        %v6297 = vsel %vm3182, %v5721, 0
        %6299 = vmatprep.subr.bf16.mxu0 0
        %6300 = vmatpush1.bf16.msra.mxu0 0
        %6301 = vmatprep.subr.bf16.mxu0 0
        %6302 = vmatpush1.bf16.msra.mxu0 0
        %6303 = vmatprep.subr.bf16.mxu0 0
        %6304 = vmatpush1.bf16.msra.mxu0 0
        %6305 = vmatprep.subr.bf16.mxu0 0
        %6306 = vmatpush1.bf16.msra.mxu0 0
        %6307 = vmatprep.subr.bf16.mxu0 0
        %6308 = vmatpush1.bf16.msra.mxu0 0
        %6309 = vmatprep.subr.bf16.mxu0 0
        %6310 = vmatpush1.bf16.msra.mxu0 0
        %6311 = vmatprep.subr.bf16.mxu0 0
        %6312 = vmatpush1.bf16.msra.mxu0 0
        %6313 = vmatprep.subr.bf16.mxu0 0
        %6314 = vmatpush1.bf16.msra.mxu0 %v543
        %6315 = vmatprep.subr.bf16.mxu0 0
        %6316 = vmatpush2.bf16.msra.mxu0 0
        %6317 = vmatprep.subr.bf16.mxu0 0
        %6318 = vmatpush2.bf16.msra.mxu0 0
        %6319 = vmatprep.subr.bf16.mxu0 0
        %6320 = vmatpush2.bf16.msra.mxu0 0
        %6321 = vmatprep.subr.bf16.mxu0 0
        %6322 = vmatpush2.bf16.msra.mxu0 0
        %6323 = vmatprep.subr.bf16.mxu0 0
        %6324 = vmatpush2.bf16.msra.mxu0 0
        %6325 = vmatprep.subr.bf16.mxu0 0
        %6326 = vmatpush2.bf16.msra.mxu0 0
        %6327 = vmatprep.subr.bf16.mxu0 0
        %6328 = vmatpush2.bf16.msra.mxu0 0
        %6329 = vmatprep.subr.bf16.mxu0 0
        %6330 = vmatpush2.bf16.msra.mxu0 0
        %6331 = vmatprep.mubr.bf16.mxu0 0
        %6332 = vmatmul.mubr.bf16.gmra.mxu0 %v6297
        %v6333 = vpop.f32.mrf.mxu0
        %v6334 = vadd.f32 0.0, %v6333
        %v6335 = vpop.f32.mrf.mxu0
        %v6336 = vpop.f32.mrf.mxu0
        %v6337 = vadd.f32 0.0, %v6336
        %v6338 = vpop.f32.mrf.mxu0
        %6339 = vdwg.mxu0
        %v6341 = vsel %vm3182, %v5722, 0
        %6343 = vmatprep.subr.bf16.mxu0 0
        %6344 = vmatpush1.bf16.msra.mxu0 0
        %6345 = vmatprep.subr.bf16.mxu0 0
        %6346 = vmatpush1.bf16.msra.mxu0 0
        %6347 = vmatprep.subr.bf16.mxu0 0
        %6348 = vmatpush1.bf16.msra.mxu0 0
        %6349 = vmatprep.subr.bf16.mxu0 0
        %6350 = vmatpush1.bf16.msra.mxu0 0
        %6351 = vmatprep.subr.bf16.mxu0 0
        %6352 = vmatpush1.bf16.msra.mxu0 0
        %6353 = vmatprep.subr.bf16.mxu0 0
        %6354 = vmatpush1.bf16.msra.mxu0 0
        %6355 = vmatprep.subr.bf16.mxu0 0
        %6356 = vmatpush1.bf16.msra.mxu0 0
        %6357 = vmatprep.subr.bf16.mxu0 0
        %6358 = vmatpush1.bf16.msra.mxu0 %v544
        %6359 = vmatprep.subr.bf16.mxu0 0
        %6360 = vmatpush2.bf16.msra.mxu0 0
        %6361 = vmatprep.subr.bf16.mxu0 0
        %6362 = vmatpush2.bf16.msra.mxu0 0
        %6363 = vmatprep.subr.bf16.mxu0 0
        %6364 = vmatpush2.bf16.msra.mxu0 0
        %6365 = vmatprep.subr.bf16.mxu0 0
        %6366 = vmatpush2.bf16.msra.mxu0 0
        %6367 = vmatprep.subr.bf16.mxu0 0
        %6368 = vmatpush2.bf16.msra.mxu0 0
        %6369 = vmatprep.subr.bf16.mxu0 0
        %6370 = vmatpush2.bf16.msra.mxu0 0
        %6371 = vmatprep.subr.bf16.mxu0 0
        %6372 = vmatpush2.bf16.msra.mxu0 0
        %6373 = vmatprep.subr.bf16.mxu0 0
        %6374 = vmatpush2.bf16.msra.mxu0 0
        %6375 = vmatprep.mubr.bf16.mxu0 0
        %6376 = vmatmul.mubr.bf16.gmra.mxu0 %v6341
        %v6377 = vpop.f32.mrf.mxu0
        %v6378 = vadd.f32 0.0, %v6377
        %v6379 = vpop.f32.mrf.mxu0
        %v6380 = vpop.f32.mrf.mxu0
        %v6381 = vadd.f32 0.0, %v6380
        %v6382 = vpop.f32.mrf.mxu0
        %6383 = vdwg.mxu0
        %v6385 = vsel %vm3182, %v5723, 0
        %6387 = vmatprep.subr.bf16.mxu0 0
        %6388 = vmatpush1.bf16.msra.mxu0 0
        %6389 = vmatprep.subr.bf16.mxu0 0
        %6390 = vmatpush1.bf16.msra.mxu0 0
        %6391 = vmatprep.subr.bf16.mxu0 0
        %6392 = vmatpush1.bf16.msra.mxu0 0
        %6393 = vmatprep.subr.bf16.mxu0 0
        %6394 = vmatpush1.bf16.msra.mxu0 0
        %6395 = vmatprep.subr.bf16.mxu0 0
        %6396 = vmatpush1.bf16.msra.mxu0 0
        %6397 = vmatprep.subr.bf16.mxu0 0
        %6398 = vmatpush1.bf16.msra.mxu0 0
        %6399 = vmatprep.subr.bf16.mxu0 0
        %6400 = vmatpush1.bf16.msra.mxu0 0
        %6401 = vmatprep.subr.bf16.mxu0 0
        %6402 = vmatpush1.bf16.msra.mxu0 %v545
        %6403 = vmatprep.subr.bf16.mxu0 0
        %6404 = vmatpush2.bf16.msra.mxu0 0
        %6405 = vmatprep.subr.bf16.mxu0 0
        %6406 = vmatpush2.bf16.msra.mxu0 0
        %6407 = vmatprep.subr.bf16.mxu0 0
        %6408 = vmatpush2.bf16.msra.mxu0 0
        %6409 = vmatprep.subr.bf16.mxu0 0
        %6410 = vmatpush2.bf16.msra.mxu0 0
        %6411 = vmatprep.subr.bf16.mxu0 0
        %6412 = vmatpush2.bf16.msra.mxu0 0
        %6413 = vmatprep.subr.bf16.mxu0 0
        %6414 = vmatpush2.bf16.msra.mxu0 0
        %6415 = vmatprep.subr.bf16.mxu0 0
        %6416 = vmatpush2.bf16.msra.mxu0 0
        %6417 = vmatprep.subr.bf16.mxu0 0
        %6418 = vmatpush2.bf16.msra.mxu0 0
        %6419 = vmatprep.mubr.bf16.mxu0 0
        %6420 = vmatmul.mubr.bf16.gmra.mxu0 %v6385
        %v6421 = vpop.f32.mrf.mxu0
        %v6422 = vadd.f32 0.0, %v6421
        %v6423 = vpop.f32.mrf.mxu0
        %v6424 = vpop.f32.mrf.mxu0
        %v6425 = vadd.f32 0.0, %v6424
        %v6426 = vpop.f32.mrf.mxu0
        %6427 = vdwg.mxu0
        %v6428 = vcombine.low %v5042, %v5130
        %v6429 = vcombine.high %v5042, %v5130
        %v6431 = vunpack.c.l.s4 1983009808
        %v6432 = vunpack.c.0.s8 %v6431
        %v6433 = vlaneseq
        %v6434 = vshrl.u32 %v6433, 7
        %v6435 = vsub.s32 %v6432, %v6434
        %v6436 = vrot.slane %v6428, %v6435
        %v6438 = vunpack.c.l.s4 1983009808
        %v6439 = vunpack.c.0.s8 %v6438
        %v6440 = vlaneseq
        %v6441 = vshrl.u32 %v6440, 7
        %v6442 = vsub.s32 %v6439, %v6441
        %v6443 = vrot.slane %v6429, %v6442
        %v6444 = vcombine.low %v5086, %v5174
        %v6445 = vcombine.high %v5086, %v5174
        %v6447 = vunpack.c.l.s4 1983009808
        %v6448 = vunpack.c.0.s8 %v6447
        %v6449 = vlaneseq
        %v6450 = vshrl.u32 %v6449, 7
        %v6451 = vsub.s32 %v6448, %v6450
        %v6452 = vrot.slane %v6444, %v6451
        %v6454 = vunpack.c.l.s4 1983009808
        %v6455 = vunpack.c.0.s8 %v6454
        %v6456 = vlaneseq
        %v6457 = vshrl.u32 %v6456, 7
        %v6458 = vsub.s32 %v6455, %v6457
        %v6459 = vrot.slane %v6445, %v6458
        %v6460 = vcombine.low %v5218, %v5306
        %v6461 = vcombine.high %v5218, %v5306
        %v6463 = vunpack.c.l.s4 1983009808
        %v6464 = vunpack.c.0.s8 %v6463
        %v6465 = vlaneseq
        %v6466 = vshrl.u32 %v6465, 7
        %v6467 = vsub.s32 %v6464, %v6466
        %v6468 = vrot.slane %v6460, %v6467
        %v6470 = vunpack.c.l.s4 1983009808
        %v6471 = vunpack.c.0.s8 %v6470
        %v6472 = vlaneseq
        %v6473 = vshrl.u32 %v6472, 7
        %v6474 = vsub.s32 %v6471, %v6473
        %v6475 = vrot.slane %v6461, %v6474
        %v6476 = vcombine.low %v5262, %v5350
        %v6477 = vcombine.high %v5262, %v5350
        %v6479 = vunpack.c.l.s4 1983009808
        %v6480 = vunpack.c.0.s8 %v6479
        %v6481 = vlaneseq
        %v6482 = vshrl.u32 %v6481, 7
        %v6483 = vsub.s32 %v6480, %v6482
        %v6484 = vrot.slane %v6476, %v6483
        %v6486 = vunpack.c.l.s4 1983009808
        %v6487 = vunpack.c.0.s8 %v6486
        %v6488 = vlaneseq
        %v6489 = vshrl.u32 %v6488, 7
        %v6490 = vsub.s32 %v6487, %v6489
        %v6491 = vrot.slane %v6477, %v6490
        %v6492 = vcombine.low %v6436, %v6452
        %v6493 = vcombine.high %v6436, %v6452
        %v6495 = vunpack.c.l.s4 1934713408
        %v6496 = vunpack.c.0.s8 %v6495
        %v6497 = vlaneseq
        %v6498 = vshrl.u32 %v6497, 7
        %v6499 = vsub.s32 %v6496, %v6498
        %v6500 = vrot.slane %v6492, %v6499
        %v6502 = vunpack.c.l.s4 1934713408
        %v6503 = vunpack.c.0.s8 %v6502
        %v6504 = vlaneseq
        %v6505 = vshrl.u32 %v6504, 7
        %v6506 = vsub.s32 %v6503, %v6505
        %v6507 = vrot.slane %v6493, %v6506
        %v6508 = vcombine.low %v6443, %v6459
        %v6509 = vcombine.high %v6443, %v6459
        %v6511 = vunpack.c.l.s4 1934713408
        %v6512 = vunpack.c.0.s8 %v6511
        %v6513 = vlaneseq
        %v6514 = vshrl.u32 %v6513, 7
        %v6515 = vsub.s32 %v6512, %v6514
        %v6516 = vrot.slane %v6508, %v6515
        %v6518 = vunpack.c.l.s4 1934713408
        %v6519 = vunpack.c.0.s8 %v6518
        %v6520 = vlaneseq
        %v6521 = vshrl.u32 %v6520, 7
        %v6522 = vsub.s32 %v6519, %v6521
        %v6523 = vrot.slane %v6509, %v6522
        %v6524 = vcombine.low %v6468, %v6484
        %v6525 = vcombine.high %v6468, %v6484
        %v6527 = vunpack.c.l.s4 1934713408
        %v6528 = vunpack.c.0.s8 %v6527
        %v6529 = vlaneseq
        %v6530 = vshrl.u32 %v6529, 7
        %v6531 = vsub.s32 %v6528, %v6530
        %v6532 = vrot.slane %v6524, %v6531
        %v6534 = vunpack.c.l.s4 1934713408
        %v6535 = vunpack.c.0.s8 %v6534
        %v6536 = vlaneseq
        %v6537 = vshrl.u32 %v6536, 7
        %v6538 = vsub.s32 %v6535, %v6537
        %v6539 = vrot.slane %v6525, %v6538
        %v6540 = vcombine.low %v6475, %v6491
        %v6541 = vcombine.high %v6475, %v6491
        %v6543 = vunpack.c.l.s4 1934713408
        %v6544 = vunpack.c.0.s8 %v6543
        %v6545 = vlaneseq
        %v6546 = vshrl.u32 %v6545, 7
        %v6547 = vsub.s32 %v6544, %v6546
        %v6548 = vrot.slane %v6540, %v6547
        %v6550 = vunpack.c.l.s4 1934713408
        %v6551 = vunpack.c.0.s8 %v6550
        %v6552 = vlaneseq
        %v6553 = vshrl.u32 %v6552, 7
        %v6554 = vsub.s32 %v6551, %v6553
        %v6555 = vrot.slane %v6541, %v6554
        %v6556 = vcombine.low %v6500, %v6532
        %v6557 = vcombine.high %v6500, %v6532
        %v6558 = vcombine.low %v6507, %v6539
        %v6559 = vcombine.high %v6507, %v6539
        %v6560 = vcombine.low %v6516, %v6548
        %v6561 = vcombine.high %v6516, %v6548
        %v6562 = vcombine.low %v6523, %v6555
        %v6563 = vcombine.high %v6523, %v6555
        %v6564 = vcombine.low %v5394, %v5482
        %v6565 = vcombine.high %v5394, %v5482
        %v6567 = vunpack.c.l.s4 1983009808
        %v6568 = vunpack.c.0.s8 %v6567
        %v6569 = vlaneseq
        %v6570 = vshrl.u32 %v6569, 7
        %v6571 = vsub.s32 %v6568, %v6570
        %v6572 = vrot.slane %v6564, %v6571
        %v6574 = vunpack.c.l.s4 1983009808
        %v6575 = vunpack.c.0.s8 %v6574
        %v6576 = vlaneseq
        %v6577 = vshrl.u32 %v6576, 7
        %v6578 = vsub.s32 %v6575, %v6577
        %v6579 = vrot.slane %v6565, %v6578
        %v6580 = vcombine.low %v5438, %v5526
        %v6581 = vcombine.high %v5438, %v5526
        %v6583 = vunpack.c.l.s4 1983009808
        %v6584 = vunpack.c.0.s8 %v6583
        %v6585 = vlaneseq
        %v6586 = vshrl.u32 %v6585, 7
        %v6587 = vsub.s32 %v6584, %v6586
        %v6588 = vrot.slane %v6580, %v6587
        %v6590 = vunpack.c.l.s4 1983009808
        %v6591 = vunpack.c.0.s8 %v6590
        %v6592 = vlaneseq
        %v6593 = vshrl.u32 %v6592, 7
        %v6594 = vsub.s32 %v6591, %v6593
        %v6595 = vrot.slane %v6581, %v6594
        %v6596 = vcombine.low %v5570, %v5658
        %v6597 = vcombine.high %v5570, %v5658
        %v6599 = vunpack.c.l.s4 1983009808
        %v6600 = vunpack.c.0.s8 %v6599
        %v6601 = vlaneseq
        %v6602 = vshrl.u32 %v6601, 7
        %v6603 = vsub.s32 %v6600, %v6602
        %v6604 = vrot.slane %v6596, %v6603
        %v6606 = vunpack.c.l.s4 1983009808
        %v6607 = vunpack.c.0.s8 %v6606
        %v6608 = vlaneseq
        %v6609 = vshrl.u32 %v6608, 7
        %v6610 = vsub.s32 %v6607, %v6609
        %v6611 = vrot.slane %v6597, %v6610
        %v6612 = vcombine.low %v5614, %v5702
        %v6613 = vcombine.high %v5614, %v5702
        %v6615 = vunpack.c.l.s4 1983009808
        %v6616 = vunpack.c.0.s8 %v6615
        %v6617 = vlaneseq
        %v6618 = vshrl.u32 %v6617, 7
        %v6619 = vsub.s32 %v6616, %v6618
        %v6620 = vrot.slane %v6612, %v6619
        %v6622 = vunpack.c.l.s4 1983009808
        %v6623 = vunpack.c.0.s8 %v6622
        %v6624 = vlaneseq
        %v6625 = vshrl.u32 %v6624, 7
        %v6626 = vsub.s32 %v6623, %v6625
        %v6627 = vrot.slane %v6613, %v6626
        %v6628 = vcombine.low %v6572, %v6588
        %v6629 = vcombine.high %v6572, %v6588
        %v6631 = vunpack.c.l.s4 1934713408
        %v6632 = vunpack.c.0.s8 %v6631
        %v6633 = vlaneseq
        %v6634 = vshrl.u32 %v6633, 7
        %v6635 = vsub.s32 %v6632, %v6634
        %v6636 = vrot.slane %v6628, %v6635
        %v6638 = vunpack.c.l.s4 1934713408
        %v6639 = vunpack.c.0.s8 %v6638
        %v6640 = vlaneseq
        %v6641 = vshrl.u32 %v6640, 7
        %v6642 = vsub.s32 %v6639, %v6641
        %v6643 = vrot.slane %v6629, %v6642
        %v6644 = vcombine.low %v6579, %v6595
        %v6645 = vcombine.high %v6579, %v6595
        %v6647 = vunpack.c.l.s4 1934713408
        %v6648 = vunpack.c.0.s8 %v6647
        %v6649 = vlaneseq
        %v6650 = vshrl.u32 %v6649, 7
        %v6651 = vsub.s32 %v6648, %v6650
        %v6652 = vrot.slane %v6644, %v6651
        %v6654 = vunpack.c.l.s4 1934713408
        %v6655 = vunpack.c.0.s8 %v6654
        %v6656 = vlaneseq
        %v6657 = vshrl.u32 %v6656, 7
        %v6658 = vsub.s32 %v6655, %v6657
        %v6659 = vrot.slane %v6645, %v6658
        %v6660 = vcombine.low %v6604, %v6620
        %v6661 = vcombine.high %v6604, %v6620
        %v6663 = vunpack.c.l.s4 1934713408
        %v6664 = vunpack.c.0.s8 %v6663
        %v6665 = vlaneseq
        %v6666 = vshrl.u32 %v6665, 7
        %v6667 = vsub.s32 %v6664, %v6666
        %v6668 = vrot.slane %v6660, %v6667
        %v6670 = vunpack.c.l.s4 1934713408
        %v6671 = vunpack.c.0.s8 %v6670
        %v6672 = vlaneseq
        %v6673 = vshrl.u32 %v6672, 7
        %v6674 = vsub.s32 %v6671, %v6673
        %v6675 = vrot.slane %v6661, %v6674
        %v6676 = vcombine.low %v6611, %v6627
        %v6677 = vcombine.high %v6611, %v6627
        %v6679 = vunpack.c.l.s4 1934713408
        %v6680 = vunpack.c.0.s8 %v6679
        %v6681 = vlaneseq
        %v6682 = vshrl.u32 %v6681, 7
        %v6683 = vsub.s32 %v6680, %v6682
        %v6684 = vrot.slane %v6676, %v6683
        %v6686 = vunpack.c.l.s4 1934713408
        %v6687 = vunpack.c.0.s8 %v6686
        %v6688 = vlaneseq
        %v6689 = vshrl.u32 %v6688, 7
        %v6690 = vsub.s32 %v6687, %v6689
        %v6691 = vrot.slane %v6677, %v6690
        %v6692 = vcombine.low %v6636, %v6668
        %v6693 = vcombine.high %v6636, %v6668
        %v6694 = vcombine.low %v6643, %v6675
        %v6695 = vcombine.high %v6643, %v6675
        %v6696 = vcombine.low %v6652, %v6684
        %v6697 = vcombine.high %v6652, %v6684
        %v6698 = vcombine.low %v6659, %v6691
        %v6699 = vcombine.high %v6659, %v6691
        %v6700 = vcombine.low %v5045, %v5133
        %v6701 = vcombine.high %v5045, %v5133
        %v6703 = vunpack.c.l.s4 1983009808
        %v6704 = vunpack.c.0.s8 %v6703
        %v6705 = vlaneseq
        %v6706 = vshrl.u32 %v6705, 7
        %v6707 = vsub.s32 %v6704, %v6706
        %v6708 = vrot.slane %v6700, %v6707
        %v6710 = vunpack.c.l.s4 1983009808
        %v6711 = vunpack.c.0.s8 %v6710
        %v6712 = vlaneseq
        %v6713 = vshrl.u32 %v6712, 7
        %v6714 = vsub.s32 %v6711, %v6713
        %v6715 = vrot.slane %v6701, %v6714
        %v6716 = vcombine.low %v5089, %v5177
        %v6717 = vcombine.high %v5089, %v5177
        %v6719 = vunpack.c.l.s4 1983009808
        %v6720 = vunpack.c.0.s8 %v6719
        %v6721 = vlaneseq
        %v6722 = vshrl.u32 %v6721, 7
        %v6723 = vsub.s32 %v6720, %v6722
        %v6724 = vrot.slane %v6716, %v6723
        %v6726 = vunpack.c.l.s4 1983009808
        %v6727 = vunpack.c.0.s8 %v6726
        %v6728 = vlaneseq
        %v6729 = vshrl.u32 %v6728, 7
        %v6730 = vsub.s32 %v6727, %v6729
        %v6731 = vrot.slane %v6717, %v6730
        %v6732 = vcombine.low %v5221, %v5309
        %v6733 = vcombine.high %v5221, %v5309
        %v6735 = vunpack.c.l.s4 1983009808
        %v6736 = vunpack.c.0.s8 %v6735
        %v6737 = vlaneseq
        %v6738 = vshrl.u32 %v6737, 7
        %v6739 = vsub.s32 %v6736, %v6738
        %v6740 = vrot.slane %v6732, %v6739
        %v6742 = vunpack.c.l.s4 1983009808
        %v6743 = vunpack.c.0.s8 %v6742
        %v6744 = vlaneseq
        %v6745 = vshrl.u32 %v6744, 7
        %v6746 = vsub.s32 %v6743, %v6745
        %v6747 = vrot.slane %v6733, %v6746
        %v6748 = vcombine.low %v5265, %v5353
        %v6749 = vcombine.high %v5265, %v5353
        %v6751 = vunpack.c.l.s4 1983009808
        %v6752 = vunpack.c.0.s8 %v6751
        %v6753 = vlaneseq
        %v6754 = vshrl.u32 %v6753, 7
        %v6755 = vsub.s32 %v6752, %v6754
        %v6756 = vrot.slane %v6748, %v6755
        %v6758 = vunpack.c.l.s4 1983009808
        %v6759 = vunpack.c.0.s8 %v6758
        %v6760 = vlaneseq
        %v6761 = vshrl.u32 %v6760, 7
        %v6762 = vsub.s32 %v6759, %v6761
        %v6763 = vrot.slane %v6749, %v6762
        %v6764 = vcombine.low %v6708, %v6724
        %v6765 = vcombine.high %v6708, %v6724
        %v6767 = vunpack.c.l.s4 1934713408
        %v6768 = vunpack.c.0.s8 %v6767
        %v6769 = vlaneseq
        %v6770 = vshrl.u32 %v6769, 7
        %v6771 = vsub.s32 %v6768, %v6770
        %v6772 = vrot.slane %v6764, %v6771
        %v6774 = vunpack.c.l.s4 1934713408
        %v6775 = vunpack.c.0.s8 %v6774
        %v6776 = vlaneseq
        %v6777 = vshrl.u32 %v6776, 7
        %v6778 = vsub.s32 %v6775, %v6777
        %v6779 = vrot.slane %v6765, %v6778
        %v6780 = vcombine.low %v6715, %v6731
        %v6781 = vcombine.high %v6715, %v6731
        %v6783 = vunpack.c.l.s4 1934713408
        %v6784 = vunpack.c.0.s8 %v6783
        %v6785 = vlaneseq
        %v6786 = vshrl.u32 %v6785, 7
        %v6787 = vsub.s32 %v6784, %v6786
        %v6788 = vrot.slane %v6780, %v6787
        %v6790 = vunpack.c.l.s4 1934713408
        %v6791 = vunpack.c.0.s8 %v6790
        %v6792 = vlaneseq
        %v6793 = vshrl.u32 %v6792, 7
        %v6794 = vsub.s32 %v6791, %v6793
        %v6795 = vrot.slane %v6781, %v6794
        %v6796 = vcombine.low %v6740, %v6756
        %v6797 = vcombine.high %v6740, %v6756
        %v6799 = vunpack.c.l.s4 1934713408
        %v6800 = vunpack.c.0.s8 %v6799
        %v6801 = vlaneseq
        %v6802 = vshrl.u32 %v6801, 7
        %v6803 = vsub.s32 %v6800, %v6802
        %v6804 = vrot.slane %v6796, %v6803
        %v6806 = vunpack.c.l.s4 1934713408
        %v6807 = vunpack.c.0.s8 %v6806
        %v6808 = vlaneseq
        %v6809 = vshrl.u32 %v6808, 7
        %v6810 = vsub.s32 %v6807, %v6809
        %v6811 = vrot.slane %v6797, %v6810
        %v6812 = vcombine.low %v6747, %v6763
        %v6813 = vcombine.high %v6747, %v6763
        %v6815 = vunpack.c.l.s4 1934713408
        %v6816 = vunpack.c.0.s8 %v6815
        %v6817 = vlaneseq
        %v6818 = vshrl.u32 %v6817, 7
        %v6819 = vsub.s32 %v6816, %v6818
        %v6820 = vrot.slane %v6812, %v6819
        %v6822 = vunpack.c.l.s4 1934713408
        %v6823 = vunpack.c.0.s8 %v6822
        %v6824 = vlaneseq
        %v6825 = vshrl.u32 %v6824, 7
        %v6826 = vsub.s32 %v6823, %v6825
        %v6827 = vrot.slane %v6813, %v6826
        %v6828 = vcombine.low %v6772, %v6804
        %v6829 = vcombine.high %v6772, %v6804
        %v6830 = vcombine.low %v6779, %v6811
        %v6831 = vcombine.high %v6779, %v6811
        %v6832 = vcombine.low %v6788, %v6820
        %v6833 = vcombine.high %v6788, %v6820
        %v6834 = vcombine.low %v6795, %v6827
        %v6835 = vcombine.high %v6795, %v6827
        %v6836 = vcombine.low %v5397, %v5485
        %v6837 = vcombine.high %v5397, %v5485
        %v6839 = vunpack.c.l.s4 1983009808
        %v6840 = vunpack.c.0.s8 %v6839
        %v6841 = vlaneseq
        %v6842 = vshrl.u32 %v6841, 7
        %v6843 = vsub.s32 %v6840, %v6842
        %v6844 = vrot.slane %v6836, %v6843
        %v6846 = vunpack.c.l.s4 1983009808
        %v6847 = vunpack.c.0.s8 %v6846
        %v6848 = vlaneseq
        %v6849 = vshrl.u32 %v6848, 7
        %v6850 = vsub.s32 %v6847, %v6849
        %v6851 = vrot.slane %v6837, %v6850
        %v6852 = vcombine.low %v5441, %v5529
        %v6853 = vcombine.high %v5441, %v5529
        %v6855 = vunpack.c.l.s4 1983009808
        %v6856 = vunpack.c.0.s8 %v6855
        %v6857 = vlaneseq
        %v6858 = vshrl.u32 %v6857, 7
        %v6859 = vsub.s32 %v6856, %v6858
        %v6860 = vrot.slane %v6852, %v6859
        %v6862 = vunpack.c.l.s4 1983009808
        %v6863 = vunpack.c.0.s8 %v6862
        %v6864 = vlaneseq
        %v6865 = vshrl.u32 %v6864, 7
        %v6866 = vsub.s32 %v6863, %v6865
        %v6867 = vrot.slane %v6853, %v6866
        %v6868 = vcombine.low %v5573, %v5661
        %v6869 = vcombine.high %v5573, %v5661
        %v6871 = vunpack.c.l.s4 1983009808
        %v6872 = vunpack.c.0.s8 %v6871
        %v6873 = vlaneseq
        %v6874 = vshrl.u32 %v6873, 7
        %v6875 = vsub.s32 %v6872, %v6874
        %v6876 = vrot.slane %v6868, %v6875
        %v6878 = vunpack.c.l.s4 1983009808
        %v6879 = vunpack.c.0.s8 %v6878
        %v6880 = vlaneseq
        %v6881 = vshrl.u32 %v6880, 7
        %v6882 = vsub.s32 %v6879, %v6881
        %v6883 = vrot.slane %v6869, %v6882
        %v6884 = vcombine.low %v5617, %v5705
        %v6885 = vcombine.high %v5617, %v5705
        %v6887 = vunpack.c.l.s4 1983009808
        %v6888 = vunpack.c.0.s8 %v6887
        %v6889 = vlaneseq
        %v6890 = vshrl.u32 %v6889, 7
        %v6891 = vsub.s32 %v6888, %v6890
        %v6892 = vrot.slane %v6884, %v6891
        %v6894 = vunpack.c.l.s4 1983009808
        %v6895 = vunpack.c.0.s8 %v6894
        %v6896 = vlaneseq
        %v6897 = vshrl.u32 %v6896, 7
        %v6898 = vsub.s32 %v6895, %v6897
        %v6899 = vrot.slane %v6885, %v6898
        %v6900 = vcombine.low %v6844, %v6860
        %v6901 = vcombine.high %v6844, %v6860
        %v6903 = vunpack.c.l.s4 1934713408
        %v6904 = vunpack.c.0.s8 %v6903
        %v6905 = vlaneseq
        %v6906 = vshrl.u32 %v6905, 7
        %v6907 = vsub.s32 %v6904, %v6906
        %v6908 = vrot.slane %v6900, %v6907
        %v6910 = vunpack.c.l.s4 1934713408
        %v6911 = vunpack.c.0.s8 %v6910
        %v6912 = vlaneseq
        %v6913 = vshrl.u32 %v6912, 7
        %v6914 = vsub.s32 %v6911, %v6913
        %v6915 = vrot.slane %v6901, %v6914
        %v6916 = vcombine.low %v6851, %v6867
        %v6917 = vcombine.high %v6851, %v6867
        %v6919 = vunpack.c.l.s4 1934713408
        %v6920 = vunpack.c.0.s8 %v6919
        %v6921 = vlaneseq
        %v6922 = vshrl.u32 %v6921, 7
        %v6923 = vsub.s32 %v6920, %v6922
        %v6924 = vrot.slane %v6916, %v6923
        %v6926 = vunpack.c.l.s4 1934713408
        %v6927 = vunpack.c.0.s8 %v6926
        %v6928 = vlaneseq
        %v6929 = vshrl.u32 %v6928, 7
        %v6930 = vsub.s32 %v6927, %v6929
        %v6931 = vrot.slane %v6917, %v6930
        %v6932 = vcombine.low %v6876, %v6892
        %v6933 = vcombine.high %v6876, %v6892
        %v6935 = vunpack.c.l.s4 1934713408
        %v6936 = vunpack.c.0.s8 %v6935
        %v6937 = vlaneseq
        %v6938 = vshrl.u32 %v6937, 7
        %v6939 = vsub.s32 %v6936, %v6938
        %v6940 = vrot.slane %v6932, %v6939
        %v6942 = vunpack.c.l.s4 1934713408
        %v6943 = vunpack.c.0.s8 %v6942
        %v6944 = vlaneseq
        %v6945 = vshrl.u32 %v6944, 7
        %v6946 = vsub.s32 %v6943, %v6945
        %v6947 = vrot.slane %v6933, %v6946
        %v6948 = vcombine.low %v6883, %v6899
        %v6949 = vcombine.high %v6883, %v6899
        %v6951 = vunpack.c.l.s4 1934713408
        %v6952 = vunpack.c.0.s8 %v6951
        %v6953 = vlaneseq
        %v6954 = vshrl.u32 %v6953, 7
        %v6955 = vsub.s32 %v6952, %v6954
        %v6956 = vrot.slane %v6948, %v6955
        %v6958 = vunpack.c.l.s4 1934713408
        %v6959 = vunpack.c.0.s8 %v6958
        %v6960 = vlaneseq
        %v6961 = vshrl.u32 %v6960, 7
        %v6962 = vsub.s32 %v6959, %v6961
        %v6963 = vrot.slane %v6949, %v6962
        %v6964 = vcombine.low %v6908, %v6940
        %v6965 = vcombine.high %v6908, %v6940
        %v6966 = vcombine.low %v6915, %v6947
        %v6967 = vcombine.high %v6915, %v6947
        %v6968 = vcombine.low %v6924, %v6956
        %v6969 = vcombine.high %v6924, %v6956
        %v6970 = vcombine.low %v6931, %v6963
        %v6971 = vcombine.high %v6931, %v6963
        %v6972 = vadd.f32 %v6556, %v5762
        %v6973 = vadd.f32 %v6692, %v5765
        %v6974 = vadd.f32 %v6557, %v5806
        %v6975 = vadd.f32 %v6693, %v5809
        %v6976 = vadd.f32 %v6558, %v5850
        %v6977 = vadd.f32 %v6694, %v5853
        %v6978 = vadd.f32 %v6559, %v5894
        %v6979 = vadd.f32 %v6695, %v5897
        %v6980 = vadd.f32 %v6560, %v5938
        %v6981 = vadd.f32 %v6696, %v5941
        %v6982 = vadd.f32 %v6561, %v5982
        %v6983 = vadd.f32 %v6697, %v5985
        %v6984 = vadd.f32 %v6562, %v6026
        %v6985 = vadd.f32 %v6698, %v6029
        %v6986 = vadd.f32 %v6563, %v6070
        %v6987 = vadd.f32 %v6699, %v6073
        %v6988 = vadd.f32 %v6828, %v6114
        %v6989 = vadd.f32 %v6964, %v6117
        %v6990 = vadd.f32 %v6829, %v6158
        %v6991 = vadd.f32 %v6965, %v6161
        %v6992 = vadd.f32 %v6830, %v6202
        %v6993 = vadd.f32 %v6966, %v6205
        %v6994 = vadd.f32 %v6831, %v6246
        %v6995 = vadd.f32 %v6967, %v6249
        %v6996 = vadd.f32 %v6832, %v6290
        %v6997 = vadd.f32 %v6968, %v6293
        %v6998 = vadd.f32 %v6833, %v6334
        %v6999 = vadd.f32 %v6969, %v6337
        %v7000 = vadd.f32 %v6834, %v6378
        %v7001 = vadd.f32 %v6970, %v6381
        %v7002 = vadd.f32 %v6835, %v6422
        %v7003 = vadd.f32 %v6971, %v6425
        %v7004 = vrcp.pop %v4986
        %v7005 = vrcp.pop %v4987
        %s7006 = sld [smem:[#allocation2]]
        %v7007 = vlaneseq
        %v7008 = vshrl.u32 %v7007, 7
        %v7009 = vsub.s32 0, %v7008
        %v7010 = vrot.slane %v7004, %v7009
        %7012 = vbcast.lane.b32.xlu0 %v7010, 256
        %v7013 = vpop.permute.xlu0 %7012
        %s7015 = sor.u32 256, 8
        %7016 = vbcast.lane.b32.xlu0 %v7010, %s7015
        %v7017 = vpop.permute.xlu0 %7016
        %v7018 = vlaneseq
        %v7019 = vshrl.u32 %v7018, 7
        %v7020 = vsub.s32 1, %v7019
        %v7021 = vrot.slane %v7004, %v7020
        %7023 = vbcast.lane.b32.xlu0 %v7021, 256
        %v7024 = vpop.permute.xlu0 %7023
        %s7026 = sor.u32 256, 8
        %7027 = vbcast.lane.b32.xlu0 %v7021, %s7026
        %v7028 = vpop.permute.xlu0 %7027
        %v7029 = vlaneseq
        %v7030 = vshrl.u32 %v7029, 7
        %v7031 = vsub.s32 2, %v7030
        %v7032 = vrot.slane %v7004, %v7031
        %7034 = vbcast.lane.b32.xlu0 %v7032, 256
        %v7035 = vpop.permute.xlu0 %7034
        %s7037 = sor.u32 256, 8
        %7038 = vbcast.lane.b32.xlu0 %v7032, %s7037
        %v7039 = vpop.permute.xlu0 %7038
        %v7040 = vlaneseq
        %v7041 = vshrl.u32 %v7040, 7
        %v7042 = vsub.s32 3, %v7041
        %v7043 = vrot.slane %v7004, %v7042
        %7045 = vbcast.lane.b32.xlu0 %v7043, 256
        %v7046 = vpop.permute.xlu0 %7045
        %s7048 = sor.u32 256, 8
        %7049 = vbcast.lane.b32.xlu0 %v7043, %s7048
        %v7050 = vpop.permute.xlu0 %7049
        %v7051 = vlaneseq
        %v7052 = vshrl.u32 %v7051, 7
        %v7053 = vsub.s32 4, %v7052
        %v7054 = vrot.slane %v7004, %v7053
        %7056 = vbcast.lane.b32.xlu0 %v7054, 256
        %v7057 = vpop.permute.xlu0 %7056
        %s7059 = sor.u32 256, 8
        %7060 = vbcast.lane.b32.xlu0 %v7054, %s7059
        %v7061 = vpop.permute.xlu0 %7060
        %v7062 = vlaneseq
        %v7063 = vshrl.u32 %v7062, 7
        %v7064 = vsub.s32 5, %v7063
        %v7065 = vrot.slane %v7004, %v7064
        %7067 = vbcast.lane.b32.xlu0 %v7065, 256
        %v7068 = vpop.permute.xlu0 %7067
        %s7070 = sor.u32 256, 8
        %7071 = vbcast.lane.b32.xlu0 %v7065, %s7070
        %v7072 = vpop.permute.xlu0 %7071
        %v7073 = vlaneseq
        %v7074 = vshrl.u32 %v7073, 7
        %v7075 = vsub.s32 6, %v7074
        %v7076 = vrot.slane %v7004, %v7075
        %7078 = vbcast.lane.b32.xlu0 %v7076, 256
        %v7079 = vpop.permute.xlu0 %7078
        %s7081 = sor.u32 256, 8
        %7082 = vbcast.lane.b32.xlu0 %v7076, %s7081
        %v7083 = vpop.permute.xlu0 %7082
        %v7084 = vlaneseq
        %v7085 = vshrl.u32 %v7084, 7
        %v7086 = vsub.s32 7, %v7085
        %v7087 = vrot.slane %v7004, %v7086
        %7089 = vbcast.lane.b32.xlu0 %v7087, 256
        %v7090 = vpop.permute.xlu0 %7089
        %s7092 = sor.u32 256, 8
        %7093 = vbcast.lane.b32.xlu0 %v7087, %s7092
        %v7094 = vpop.permute.xlu0 %7093
        %v7095 = vlaneseq
        %v7096 = vshrl.u32 %v7095, 7
        %v7097 = vsub.s32 0, %v7096
        %v7098 = vrot.slane %v7005, %v7097
        %7100 = vbcast.lane.b32.xlu0 %v7098, 256
        %v7101 = vpop.permute.xlu0 %7100
        %s7103 = sor.u32 256, 8
        %7104 = vbcast.lane.b32.xlu0 %v7098, %s7103
        %v7105 = vpop.permute.xlu0 %7104
        %v7106 = vlaneseq
        %v7107 = vshrl.u32 %v7106, 7
        %v7108 = vsub.s32 1, %v7107
        %v7109 = vrot.slane %v7005, %v7108
        %7111 = vbcast.lane.b32.xlu0 %v7109, 256
        %v7112 = vpop.permute.xlu0 %7111
        %s7114 = sor.u32 256, 8
        %7115 = vbcast.lane.b32.xlu0 %v7109, %s7114
        %v7116 = vpop.permute.xlu0 %7115
        %v7117 = vlaneseq
        %v7118 = vshrl.u32 %v7117, 7
        %v7119 = vsub.s32 2, %v7118
        %v7120 = vrot.slane %v7005, %v7119
        %7122 = vbcast.lane.b32.xlu0 %v7120, 256
        %v7123 = vpop.permute.xlu0 %7122
        %s7125 = sor.u32 256, 8
        %7126 = vbcast.lane.b32.xlu0 %v7120, %s7125
        %v7127 = vpop.permute.xlu0 %7126
        %v7128 = vlaneseq
        %v7129 = vshrl.u32 %v7128, 7
        %v7130 = vsub.s32 3, %v7129
        %v7131 = vrot.slane %v7005, %v7130
        %7133 = vbcast.lane.b32.xlu0 %v7131, 256
        %v7134 = vpop.permute.xlu0 %7133
        %s7136 = sor.u32 256, 8
        %7137 = vbcast.lane.b32.xlu0 %v7131, %s7136
        %v7138 = vpop.permute.xlu0 %7137
        %v7139 = vlaneseq
        %v7140 = vshrl.u32 %v7139, 7
        %v7141 = vsub.s32 4, %v7140
        %v7142 = vrot.slane %v7005, %v7141
        %7144 = vbcast.lane.b32.xlu0 %v7142, 256
        %v7145 = vpop.permute.xlu0 %7144
        %s7147 = sor.u32 256, 8
        %7148 = vbcast.lane.b32.xlu0 %v7142, %s7147
        %v7149 = vpop.permute.xlu0 %7148
        %v7150 = vlaneseq
        %v7151 = vshrl.u32 %v7150, 7
        %v7152 = vsub.s32 5, %v7151
        %v7153 = vrot.slane %v7005, %v7152
        %7155 = vbcast.lane.b32.xlu0 %v7153, 256
        %v7156 = vpop.permute.xlu0 %7155
        %s7158 = sor.u32 256, 8
        %7159 = vbcast.lane.b32.xlu0 %v7153, %s7158
        %v7160 = vpop.permute.xlu0 %7159
        %v7161 = vlaneseq
        %v7162 = vshrl.u32 %v7161, 7
        %v7163 = vsub.s32 6, %v7162
        %v7164 = vrot.slane %v7005, %v7163
        %7166 = vbcast.lane.b32.xlu0 %v7164, 256
        %v7167 = vpop.permute.xlu0 %7166
        %s7169 = sor.u32 256, 8
        %7170 = vbcast.lane.b32.xlu0 %v7164, %s7169
        %v7171 = vpop.permute.xlu0 %7170
        %v7172 = vlaneseq
        %v7173 = vshrl.u32 %v7172, 7
        %v7174 = vsub.s32 7, %v7173
        %v7175 = vrot.slane %v7005, %v7174
        %7177 = vbcast.lane.b32.xlu0 %v7175, 256
        %v7178 = vpop.permute.xlu0 %7177
        %s7180 = sor.u32 256, 8
        %7181 = vbcast.lane.b32.xlu0 %v7175, %s7180
        %v7182 = vpop.permute.xlu0 %7181
        %v7183 = vmul.f32 %v6972, %v7013
        %v7184 = vmul.f32 %v6973, %v7017
        %v7185 = vmul.f32 %v6974, %v7024
        %v7186 = vmul.f32 %v6975, %v7028
        %v7187 = vmul.f32 %v6976, %v7035
        %v7188 = vmul.f32 %v6977, %v7039
        %v7189 = vmul.f32 %v6978, %v7046
        %v7190 = vmul.f32 %v6979, %v7050
        %v7191 = vmul.f32 %v6980, %v7057
        %v7192 = vmul.f32 %v6981, %v7061
        %v7193 = vmul.f32 %v6982, %v7068
        %v7194 = vmul.f32 %v6983, %v7072
        %v7195 = vmul.f32 %v6984, %v7079
        %v7196 = vmul.f32 %v6985, %v7083
        %v7197 = vmul.f32 %v6986, %v7090
        %v7198 = vmul.f32 %v6987, %v7094
        %v7199 = vmul.f32 %v6988, %v7101
        %v7200 = vmul.f32 %v6989, %v7105
        %v7201 = vmul.f32 %v6990, %v7112
        %v7202 = vmul.f32 %v6991, %v7116
        %v7203 = vmul.f32 %v6992, %v7123
        %v7204 = vmul.f32 %v6993, %v7127
        %v7205 = vmul.f32 %v6994, %v7134
        %v7206 = vmul.f32 %v6995, %v7138
        %v7207 = vmul.f32 %v6996, %v7145
        %v7208 = vmul.f32 %v6997, %v7149
        %v7209 = vmul.f32 %v6998, %v7156
        %v7210 = vmul.f32 %v6999, %v7160
        %v7211 = vmul.f32 %v7000, %v7167
        %v7212 = vmul.f32 %v7001, %v7171
        %v7213 = vmul.f32 %v7002, %v7178
        %v7214 = vmul.f32 %v7003, %v7182
        %v7215 = vstv %s7006
        %v7216 = vmul.f32 %v7215, %v7183
        %v7217 = vmul.f32 %v7215, %v7184
        %v7218 = vmul.f32 %v7215, %v7185
        %v7219 = vmul.f32 %v7215, %v7186
        %v7220 = vmul.f32 %v7215, %v7187
        %v7221 = vmul.f32 %v7215, %v7188
        %v7222 = vmul.f32 %v7215, %v7189
        %v7223 = vmul.f32 %v7215, %v7190
        %v7224 = vmul.f32 %v7215, %v7191
        %v7225 = vmul.f32 %v7215, %v7192
        %v7226 = vmul.f32 %v7215, %v7193
        %v7227 = vmul.f32 %v7215, %v7194
        %v7228 = vmul.f32 %v7215, %v7195
        %v7229 = vmul.f32 %v7215, %v7196
        %v7230 = vmul.f32 %v7215, %v7197
        %v7231 = vmul.f32 %v7215, %v7198
        %v7232 = vmul.f32 %v7215, %v7199
        %v7233 = vmul.f32 %v7215, %v7200
        %v7234 = vmul.f32 %v7215, %v7201
        %v7235 = vmul.f32 %v7215, %v7202
        %v7236 = vmul.f32 %v7215, %v7203
        %v7237 = vmul.f32 %v7215, %v7204
        %v7238 = vmul.f32 %v7215, %v7205
        %v7239 = vmul.f32 %v7215, %v7206
        %v7240 = vmul.f32 %v7215, %v7207
        %v7241 = vmul.f32 %v7215, %v7208
        %v7242 = vmul.f32 %v7215, %v7209
        %v7243 = vmul.f32 %v7215, %v7210
        %v7244 = vmul.f32 %v7215, %v7211
        %v7245 = vmul.f32 %v7215, %v7212
        %v7246 = vmul.f32 %v7215, %v7213
        %v7247 = vmul.f32 %v7215, %v7214
        %v7248 = vadd.f32 %v7216, %v233
        %v7249 = vadd.f32 %v7217, %v234
        %v7250 = vadd.f32 %v7218, %v235
        %v7251 = vadd.f32 %v7219, %v236
        %v7252 = vadd.f32 %v7220, %v237
        %v7253 = vadd.f32 %v7221, %v238
        %v7254 = vadd.f32 %v7222, %v239
        %v7255 = vadd.f32 %v7223, %v240
        %v7256 = vadd.f32 %v7224, %v241
        %v7257 = vadd.f32 %v7225, %v242
        %v7258 = vadd.f32 %v7226, %v243
        %v7259 = vadd.f32 %v7227, %v244
        %v7260 = vadd.f32 %v7228, %v245
        %v7261 = vadd.f32 %v7229, %v246
        %v7262 = vadd.f32 %v7230, %v247
        %v7263 = vadd.f32 %v7231, %v248
        %v7264 = vadd.f32 %v7232, %v249
        %v7265 = vadd.f32 %v7233, %v250
        %v7266 = vadd.f32 %v7234, %v251
        %v7267 = vadd.f32 %v7235, %v252
        %v7268 = vadd.f32 %v7236, %v253
        %v7269 = vadd.f32 %v7237, %v254
        %v7270 = vadd.f32 %v7238, %v255
        %v7271 = vadd.f32 %v7239, %v256
        %v7272 = vadd.f32 %v7240, %v257
        %v7273 = vadd.f32 %v7241, %v258
        %v7274 = vadd.f32 %v7242, %v259
        %v7275 = vadd.f32 %v7243, %v260
        %v7276 = vadd.f32 %v7244, %v261
        %v7277 = vadd.f32 %v7245, %v262
        %v7278 = vadd.f32 %v7246, %v263
        %v7279 = vadd.f32 %v7247, %v264
        %7280 = vst.msk [vmem:[%s231] sm:$0xff] %vm320, %v7248
        %7281 = vst.msk [vmem:[%s231 + $0x8] sm:$0xff] %vm320, %v7249
        %7282 = vst.msk [vmem:[%s231 + $0x10] sm:$0xff] %vm320, %v7250
        %7283 = vst.msk [vmem:[%s231 + $0x18] sm:$0xff] %vm320, %v7251
        %7284 = vst.msk [vmem:[%s231 + $0x20] sm:$0xff] %vm320, %v7252
        %7285 = vst.msk [vmem:[%s231 + $0x28] sm:$0xff] %vm320, %v7253
        %7286 = vst.msk [vmem:[%s231 + $0x30] sm:$0xff] %vm320, %v7254
        %7287 = vst.msk [vmem:[%s231 + $0x38] sm:$0xff] %vm320, %v7255
        %7288 = vst.msk [vmem:[%s231 + $0x40] sm:$0xff] %vm320, %v7256
        %7289 = vst.msk [vmem:[%s231 + $0x48] sm:$0xff] %vm320, %v7257
        %7290 = vst.msk [vmem:[%s231 + $0x50] sm:$0xff] %vm320, %v7258
        %7291 = vst.msk [vmem:[%s231 + $0x58] sm:$0xff] %vm320, %v7259
        %7292 = vst.msk [vmem:[%s231 + $0x60] sm:$0xff] %vm320, %v7260
        %7293 = vst.msk [vmem:[%s231 + $0x68] sm:$0xff] %vm320, %v7261
        %7294 = vst.msk [vmem:[%s231 + $0x70] sm:$0xff] %vm320, %v7262
        %7295 = vst.msk [vmem:[%s231 + $0x78] sm:$0xff] %vm320, %v7263
        %7296 = vst.msk [vmem:[%s231 + $0x80] sm:$0xff] %vm320, %v7264
        %7297 = vst.msk [vmem:[%s231 + $0x88] sm:$0xff] %vm320, %v7265
        %7298 = vst.msk [vmem:[%s231 + $0x90] sm:$0xff] %vm320, %v7266
        %7299 = vst.msk [vmem:[%s231 + $0x98] sm:$0xff] %vm320, %v7267
        %7300 = vst.msk [vmem:[%s231 + $0xa0] sm:$0xff] %vm320, %v7268
        %7301 = vst.msk [vmem:[%s231 + $0xa8] sm:$0xff] %vm320, %v7269
        %7302 = vst.msk [vmem:[%s231 + $0xb0] sm:$0xff] %vm320, %v7270
        %7303 = vst.msk [vmem:[%s231 + $0xb8] sm:$0xff] %vm320, %v7271
        %7304 = vst.msk [vmem:[%s231 + $0xc0] sm:$0xff] %vm320, %v7272
        %7305 = vst.msk [vmem:[%s231 + $0xc8] sm:$0xff] %vm320, %v7273
        %7306 = vst.msk [vmem:[%s231 + $0xd0] sm:$0xff] %vm320, %v7274
        %7307 = vst.msk [vmem:[%s231 + $0xd8] sm:$0xff] %vm320, %v7275
        %7308 = vst.msk [vmem:[%s231 + $0xe0] sm:$0xff] %vm320, %v7276
        %7309 = vst.msk [vmem:[%s231 + $0xe8] sm:$0xff] %vm320, %v7277
        %7310 = vst.msk [vmem:[%s231 + $0xf0] sm:$0xff] %vm320, %v7278
        %7311 = vst.msk [vmem:[%s231 + $0xf8] sm:$0xff] %vm320, %v7279
        %s7312 = sand.u32 %s120, 1
        %s7313 = scalar_lea.sflag [#allocation5], %s7312
        %s7314 = sand.u32 %s120, 1
        %s7315 = smul.addr %s7314, 256
        %s7316 = scalar_lea.vmem [#allocation8], %s7315
        // Predicated region
        $region45: #{tpu_custom_call.1} parent=35 // pred_check
          %p7317 = pneg %p130
        $region46: #{tpu_custom_call.1} parent=35 // pred_check_branch
          %7319 = sbr.rel (%p7317) target = $region48
        $region47: #{tpu_custom_call.1} parent=35 // pred_region
          %s7321 = ssub.s32 4096, 4096
          %7322 = vsyncadd %s7313, %s7321
          %s7323 = smul.addr %s23, 32
          %s7324 = smul.addr %s7323, 128
          %s7325 = scalar_lea.hbm %s4, %s7324
          %s7326 = sshll.u32 %s7316, 4
          %s7327 = int_to_ptr.vmem [resolvable:$true] %s7326
          %7332 = dma.vmem_to_hbm [thread:$0]  %s7327, 4096, %s7325, %s7313, 128, 128, 8
        $region48: #{tpu_custom_call.1} parent=35 // pred_fallthru
          _
      $region36: #{tpu_custom_call.1} parent=5 // pred_fallthru
        _
      %p7333 = scmp.le.s32.totalorder 2, %s18
      // Predicated region
      $region49: #{tpu_custom_call.1} parent=5 // pred_check
        %p7334 = pneg %p7333
      $region50: #{tpu_custom_call.1} parent=5 // pred_check_branch
        %7336 = sbr.rel (%p7334) target = $region52
      $region51: #{tpu_custom_call.1} parent=5 // pred_region
        %s7337 = ssub.s32 %s18, 2
        // Predicated region
        $region53: #{tpu_custom_call.1} parent=51 // pred_check
          %p7338 = pneg %p136
        $region54: #{tpu_custom_call.1} parent=51 // pred_check_branch
          %7340 = sbr.rel (%p7338) target = $region56
        $region55: #{tpu_custom_call.1} parent=51 // pred_region
          %s7341 = sand.u32 %s121, 1
          %s7342 = scalar_lea.sflag [#allocation5], %s7341
          %s7343 = sand.u32 %s121, 1
          %s7344 = smul.addr %s7343, 256
          %s7345 = scalar_lea.vmem [#allocation8], %s7344
          %7346 = dma.done %s7342, 4096
        $region56: #{tpu_custom_call.1} parent=51 // pred_fallthru
          _
      $region52: #{tpu_custom_call.1} parent=5 // pred_fallthru
        _
    $region6: #{tpu_custom_call.1} parent=1 // loop_footer
      %s22 = sadd.s32 1, %s18
    $region7: #{tpu_custom_call.1} parent=1 // loop_footer_branch
      %17 = sbr.rel target = $region3
    $region8: #{tpu_custom_call.1} parent=1 // loop_exit
      _
    %7347 = vsyncpa [#allocation4], 1
    %s7348 = scalar_lea.sflag [#allocation4], 1
    %7349 = vsyncpa %s7348, 1
    %7350 = vsyncpa [#allocation7], 1
    %7351 = vsyncpa [#allocation5], 1
    %s7352 = scalar_lea.sflag [#allocation5], 1
    %7353 = vsyncpa %s7352, 1

</llo_original>
